<compile_context>
chip_gen: v7x
topology: tpu7x:2x2x1
jax: 0.10.0
libtpu: 0.0.40
codegen_flags: <defaults>
</compile_context>

<pallas_src>
import math
import numpy as np
import jax
import jax.numpy as jnp
from jax.experimental import pallas as pl
from jax.experimental.pallas import tpu as pltpu


# ----------------------------------------------------------------------------
# Pallas kernel
# ----------------------------------------------------------------------------
def gnn_kernel(x_ref, e_ref, wn_ref, we_ref, bnv_ref, bne_ref, xo_ref, eo_ref):
    # x_ref  : (1, BS, N,  L)   node features, L = lp*C lane-packed batch
    # e_ref  : (1, BS, N2, L)   edge features, flat edge index e = i*N + j
    # wn_ref : (2, L, 4L)       per layer: [A|B|V|U] block-diag weights (y = x @ W)
    # we_ref : (2, L, L)        per layer: E block-diag weight
    # bnv_ref: (4, N, L)        [s1, b1, s2, b2] lane-dense node-BN maps
    # bne_ref: (4, N, N, L)     [s1, b1, s2, b2] lane-dense edge-BN maps
    _, BS, N, L = x_ref.shape
    N2 = e_ref.shape[2]

    x = x_ref[0].astype(jnp.float32)                            # (BS, N, L)
    edge = e_ref[0].astype(jnp.float32).reshape(BS, N, N, L)    # (BS, i, j, L)
    inv_n = 1.0 / float(N)

    def layer(x, edge, li):
        res = x
        # One lane-dense MXU pass for all four node projections: [A|B|V|U].
        proj = jnp.dot(x.reshape(BS * N, L), wn_ref[li],
                       preferred_element_type=jnp.float32).reshape(BS, N, 4 * L)
        Vix = proj[:, :, 0 * L:1 * L]      # A(x), gathered by edge end-node i
        Vjx = proj[:, :, 1 * L:2 * L]      # B(x), gathered by edge start-node j
        Ujx = proj[:, :, 2 * L:3 * L]      # V(x)
        Uix = proj[:, :, 3 * L:4 * L]      # U(x)

        e_lin = jnp.dot(edge.reshape(BS * N2, L), we_ref[li],
                        preferred_element_type=jnp.float32).reshape(BS, N, N, L)

        # edge update: edge += ReLU(BN(Vix[i] + Vjx[j] + E(edge)))
        pre = Vix[:, :, None, :] + Vjx[:, None, :, :] + e_lin
        edge = edge + jnp.maximum(pre * bne_ref[2 * li] + bne_ref[2 * li + 1], 0.0)

        # sigmoid, then softmax over the start-node axis j (axis=2)
        sig = 1.0 / (1.0 + jnp.exp(-edge))
        ex = jnp.exp(sig - jnp.max(sig, axis=2, keepdims=True))
        # approx=False keeps full f32 accuracy; flip to approx=True to offload
        # the reciprocal to the EUP if ~1e-3 relative error is acceptable.
        attn = ex * pl.reciprocal(jnp.sum(ex, axis=2, keepdims=True), approx=False)

        # x_i <- ReLU(res_i + BN(U(x)_i + (1/N) * sum_j attn[i,j] * V(x)_j))
        agg = jnp.sum(attn * Ujx[:, None, :, :], axis=2)         # (BS, N, L)
        x_new = Uix + agg * inv_n
        x_new = x_new * bnv_ref[2 * li] + bnv_ref[2 * li + 1]
        return jnp.maximum(res + x_new, 0.0), edge

    x, edge = layer(x, edge, 0)   # layer 1: A1,B1,E1,V1,U1, bnv1, bne1
    x, edge = layer(x, edge, 1)   # layer 2: A2,B2,E2,V2,U2, bnv2, bne2

    xo_ref[0] = x.astype(xo_ref.dtype)
    eo_ref[0] = edge.reshape(BS, N2, L).astype(eo_ref.dtype)


# ----------------------------------------------------------------------------
# Wrapper: layout plumbing + pallas_call
# ----------------------------------------------------------------------------
def _pick_sublane_batch(nsuper):
    # Up to 16 row-groups of N=8 rows (matmul M ~ 128) per grid step; prefer an
    # even number of grid steps so v7x's two TensorCores both get work.
    for bbs in (16, 8, 4, 2, 1):
        if nsuper % bbs == 0 and (nsuper // bbs) % 2 == 0:
            return bbs
    for bbs in (16, 8, 4, 2, 1):
        if nsuper % bbs == 0:
            return bbs
    return 1


@jax.jit
def gnn_forward(x, edge, weights, bnv_scale, bnv_bias, bne_scale, bne_bias):
    # x: (B, N, C); edge: (B, N*N, C)
    # weights: (10, C, C) = [A1,B1,E1,V1,U1, A2,B2,E2,V2,U2], pre-transposed (y = x @ W)
    # bnv_scale/bias: (2, N); bne_scale/bias: (2, N*N)  -- folded eval-mode BN
    B, N, C = x.shape
    N2 = N * N

    # ---- lane packing: put `lp` batch elements side by side in the lane dim ----
    lp = 128 // C if (C < 128 and 128 % C == 0) else 1
    if B % lp != 0:
        lp = 1   # TODO(synk): pad the batch instead of disabling lane packing
    L = lp * C
    nsuper = B // lp
    bbs = _pick_sublane_batch(nsuper)     # extra batch stacked along rows
    nb = nsuper // bbs                    # number of grid steps

    def to_packed(t, rows):
        # (B, rows, C) -> (nb, bbs, rows, lp*C); lane index = p*C + c
        t = t.reshape(nb, bbs, lp, rows, C)
        t = jnp.transpose(t, (0, 1, 3, 2, 4))
        return t.reshape(nb, bbs, rows, L)

    def from_packed(t, rows):
        t = t.reshape(nb, bbs, rows, lp, C)
        t = jnp.transpose(t, (0, 1, 3, 2, 4))
        return t.reshape(B, rows, C)

    xp = to_packed(x, N)
    ep = to_packed(edge, N2)

    # Block-diagonal (kron) weights keep lane-packed batches independent.
    eye = jnp.eye(lp, dtype=weights.dtype)

    def bd(w):                      # (C, C) -> (L, L)
        return jnp.kron(eye, w)

    wnode = jnp.stack([
        jnp.concatenate([bd(weights[5 * li + 0]),   # A
                         bd(weights[5 * li + 1]),   # B
                         bd(weights[5 * li + 3]),   # V
                         bd(weights[5 * li + 4])],  # U
                        axis=1)
        for li in range(2)])                                   # (2, L, 4L)
    wedge = jnp.stack([bd(weights[5 * li + 2]) for li in range(2)])  # (2, L, L)

    # Lane-dense BN maps (per-row scale/bias broadcast over the 128 lanes).
    def bmap(v, rows):
        return jnp.broadcast_to(v[:, None], (rows, L)).astype(jnp.float32)

    bnv = jnp.stack([bmap(bnv_scale[0], N), bmap(bnv_bias[0], N),
                     bmap(bnv_scale[1], N), bmap(bnv_bias[1], N)])        # (4, N, L)
    bne = jnp.stack([bmap(bne_scale[0], N2), bmap(bne_bias[0], N2),
                     bmap(bne_scale[1], N2), bmap(bne_bias[1], N2)])      # (4, N2, L)
    bne = bne.reshape(4, N, N, L)

    xo, eo = pl.pallas_call(
        gnn_kernel,
        out_shape=(
            jax.ShapeDtypeStruct((nb, bbs, N, L), x.dtype),
            jax.ShapeDtypeStruct((nb, bbs, N2, L), edge.dtype),
        ),
        grid_spec=pltpu.PrefetchScalarGridSpec(
            num_scalar_prefetch=0,
            grid=(nb,),
            in_specs=[
                pl.BlockSpec((1, bbs, N, L), lambda b: (b, 0, 0, 0)),
                pl.BlockSpec((1, bbs, N2, L), lambda b: (b, 0, 0, 0)),
                pl.BlockSpec((2, L, 4 * L), lambda b: (0, 0, 0)),
                pl.BlockSpec((2, L, L), lambda b: (0, 0, 0)),
                pl.BlockSpec((4, N, L), lambda b: (0, 0, 0)),
                pl.BlockSpec((4, N, N, L), lambda b: (0, 0, 0, 0)),
            ],
            out_specs=[
                pl.BlockSpec((1, bbs, N, L), lambda b: (b, 0, 0, 0)),
                pl.BlockSpec((1, bbs, N2, L), lambda b: (b, 0, 0, 0)),
            ],
        ),
        compiler_params=pltpu.CompilerParams(
            dimension_semantics=("parallel",)),
    )(xp, ep, wnode, wedge, bnv, bne)

    return from_packed(xo, N), from_packed(eo, N2)


# ----------------------------------------------------------------------------
# Pure-JAX reference (mirrors the torch forward exactly, using start/end mats)
# ----------------------------------------------------------------------------
def create_e_matrix_np(n):
    end = np.zeros((n * n, n), dtype=np.float32)
    for i in range(n):
        end[i * n:(i + 1) * n, i] = 1.0
    start = np.tile(np.eye(n, dtype=np.float32), (n, 1))
    return start, end


def gnn_reference(x, edge, weights, bnv_scale, bnv_bias, bne_scale, bne_bias):
    B, N, C = x.shape
    start, end = create_e_matrix_np(N)
    start = jnp.asarray(start)
    end = jnp.asarray(end)

    def relu(v):
        return jnp.maximum(v, 0.0)

    def layer(x, edge, WA, WB, WE, WV, WU, sv, bv, se, be):
        res = x
        Vix = x @ WA
        Vjx = x @ WB
        e = edge @ WE
        pre = (jnp.einsum('ev,bvc->bec', end, Vix)
               + jnp.einsum('ev,bvc->bec', start, Vjx) + e)
        edge = edge + relu(pre * se[None, :, None] + be[None, :, None])
        s = jax.nn.sigmoid(edge).reshape(B, N, N, C)
        s = jax.nn.softmax(s, axis=2).reshape(B, N * N, C)
        Ujx = jnp.einsum('ev,bvc->bec', start, x @ WV)
        Uix = x @ WU
        x = Uix + jnp.einsum('ve,bec->bvc', end.T, s * Ujx) / N
        x = relu(res + x * sv[None, :, None] + bv[None, :, None])
        return x, edge

    x, edge = layer(x, edge, weights[0], weights[1], weights[2], weights[3],
                    weights[4], bnv_scale[0], bnv_bias[0], bne_scale[0], bne_bias[0])
    x, edge = layer(x, edge, weights[5], weights[6], weights[7], weights[8],
                    weights[9], bnv_scale[1], bnv_bias[1], bne_scale[1], bne_bias[1])
    return x, edge


# ----------------------------------------------------------------------------
# Main
# ----------------------------------------------------------------------------
if __name__ == "__main__":
    # Use full-f32 matmuls on both the XLA reference path and inside the Pallas
    # kernel so the tightened tolerance compares like against like.
    jax.config.update("jax_default_matmul_precision", "highest")

    B = 16          # batch (multiple grid blocks; even block count for v7x)
    N = 8           # num_classes (graph nodes)
    C = 32          # in_channels
    N2 = N * N

    key = jax.random.PRNGKey(0)
    kx, ke, kw, k1, k2, k3, k4 = jax.random.split(key, 7)

    x = jax.random.normal(kx, (B, N, C), dtype=jnp.float32)
    edge = jax.random.normal(ke, (B, N2, C), dtype=jnp.float32)

    # Linear weights: normal(0, sqrt(2/dim_in)), stored pre-transposed (y = x @ W).
    w_scale = math.sqrt(2.0 / C)
    weights = jax.random.normal(kw, (10, C, C), dtype=jnp.float32) * w_scale

    # Folded eval-mode BatchNorm: scale = gamma/sqrt(var+eps), bias = beta - mean*scale.
    # Random per-row values so the per-node / per-edge-row BN axis is actually exercised
    # (default torch init would reduce both axes to the same scalar).
    bnv_scale = jax.random.uniform(k1, (2, N), jnp.float32, 0.5, 1.5)
    bnv_bias = 0.2 * jax.random.normal(k2, (2, N), dtype=jnp.float32)
    bne_scale = jax.random.uniform(k3, (2, N2), jnp.float32, 0.5, 1.5)
    bne_bias = 0.2 * jax.random.normal(k4, (2, N2), dtype=jnp.float32)

    x_out, edge_out = gnn_forward(x, edge, weights,
                                  bnv_scale, bnv_bias, bne_scale, bne_bias)
    jax.block_until_ready((x_out, edge_out))

    # correctness check against a pure-JAX reference (100x tighter than before)
    x_ref, e_ref = gnn_reference(x, edge, weights,
                                 bnv_scale, bnv_bias, bne_scale, bne_bias)
    np.testing.assert_allclose(np.asarray(x_out), np.asarray(x_ref),
                               rtol=1e-4, atol=1e-5)
    np.testing.assert_allclose(np.asarray(edge_out), np.asarray(e_ref),
                               rtol=1e-4, atol=1e-5)

    print("KERNEL_OK")
</pallas_src>

<mosaic_0001>
module attributes {stable_mosaic.version = 11 : i64} {
  func.func @gnn_kernel(%arg0: i32, %arg1: memref<1x2x8x128xf32, #tpu.memory_space<vmem>>, %arg2: memref<1x2x64x128xf32, #tpu.memory_space<vmem>>, %arg3: memref<2x128x512xf32, #tpu.memory_space<vmem>>, %arg4: memref<2x128x128xf32, #tpu.memory_space<vmem>>, %arg5: memref<4x8x128xf32, #tpu.memory_space<vmem>>, %arg6: memref<4x8x8x128xf32, #tpu.memory_space<vmem>>, %arg7: memref<1x2x8x128xf32, #tpu.memory_space<vmem>>, %arg8: memref<1x2x64x128xf32, #tpu.memory_space<vmem>>) attributes {dimension_semantics = [#tpu.dimension_semantics<parallel>], iteration_bounds = array<i64: 2>, scalar_prefetch = 0 : i64, scratch_operands = 0 : i64, tpu.core_type = #tpu.core_type<tc>, window_params = [{transform_indices = @transform_0, window_bounds = array<i64: 1, 2, 8, 128>}, {transform_indices = @transform_1, window_bounds = array<i64: 1, 2, 64, 128>}, {pipeline_mode = #tpu.pipeline_mode<synchronous>, transform_indices = @transform_2, window_bounds = array<i64: 2, 128, 512>}, {pipeline_mode = #tpu.pipeline_mode<synchronous>, transform_indices = @transform_3, window_bounds = array<i64: 2, 128, 128>}, {pipeline_mode = #tpu.pipeline_mode<synchronous>, transform_indices = @transform_4, window_bounds = array<i64: 4, 8, 128>}, {pipeline_mode = #tpu.pipeline_mode<synchronous>, transform_indices = @transform_5, window_bounds = array<i64: 4, 8, 8, 128>}, {transform_indices = @transform_6, window_bounds = array<i64: 1, 2, 8, 128>}, {transform_indices = @transform_7, window_bounds = array<i64: 1, 2, 64, 128>}]} {
    %c0 = arith.constant 0 : index
    %c0_0 = arith.constant 0 : index
    %c0_1 = arith.constant 0 : index
    %c0_2 = arith.constant 0 : index
    %0 = vector.load %arg1[%c0, %c0_0, %c0_1, %c0_2] : memref<1x2x8x128xf32, #tpu.memory_space<vmem>>, vector<1x2x8x128xf32>
    %1 = vector.shape_cast %0 : vector<1x2x8x128xf32> to vector<2x8x128xf32>
    %c0_3 = arith.constant 0 : index
    %c0_4 = arith.constant 0 : index
    %c0_5 = arith.constant 0 : index
    %c0_6 = arith.constant 0 : index
    %2 = vector.load %arg2[%c0_3, %c0_4, %c0_5, %c0_6] : memref<1x2x64x128xf32, #tpu.memory_space<vmem>>, vector<1x2x64x128xf32>
    %3 = vector.shape_cast %2 : vector<1x2x64x128xf32> to vector<2x64x128xf32>
    %4 = vector.shape_cast %3 : vector<2x64x128xf32> to vector<2x8x8x128xf32>
    %5 = vector.shape_cast %1 : vector<2x8x128xf32> to vector<16x128xf32>
    %c0_7 = arith.constant 0 : index
    %c0_8 = arith.constant 0 : index
    %c0_9 = arith.constant 0 : index
    %6 = vector.load %arg3[%c0_7, %c0_8, %c0_9] : memref<2x128x512xf32, #tpu.memory_space<vmem>>, vector<1x128x512xf32>
    %7 = vector.shape_cast %6 : vector<1x128x512xf32> to vector<128x512xf32>
    %cst = arith.constant dense<0.000000e+00> : vector<16x512xf32>
    %8 = tpu.matmul %5, %7, %cst {dimension_numbers = #tpu.dot_dimension_numbers<[1], [0], [0], [1], [0, 0, 1, 1], [], []>, precision = #tpu.contract_precision<fp32>} : vector<16x128xf32>, vector<128x512xf32>, vector<16x512xf32> -> vector<16x512xf32>
    %9 = vector.shape_cast %8 : vector<16x512xf32> to vector<2x8x512xf32>
    %10 = vector.extract_strided_slice %9 {offsets = [0, 0, 0], sizes = [2, 8, 128], strides = [1, 1, 1]} : vector<2x8x512xf32> to vector<2x8x128xf32>
    %11 = vector.extract_strided_slice %9 {offsets = [0, 0, 128], sizes = [2, 8, 128], strides = [1, 1, 1]} : vector<2x8x512xf32> to vector<2x8x128xf32>
    %12 = vector.extract_strided_slice %9 {offsets = [0, 0, 256], sizes = [2, 8, 128], strides = [1, 1, 1]} : vector<2x8x512xf32> to vector<2x8x128xf32>
    %13 = vector.extract_strided_slice %9 {offsets = [0, 0, 384], sizes = [2, 8, 128], strides = [1, 1, 1]} : vector<2x8x512xf32> to vector<2x8x128xf32>
    %14 = vector.shape_cast %4 : vector<2x8x8x128xf32> to vector<128x128xf32>
    %c0_10 = arith.constant 0 : index
    %c0_11 = arith.constant 0 : index
    %c0_12 = arith.constant 0 : index
    %15 = vector.load %arg4[%c0_10, %c0_11, %c0_12] : memref<2x128x128xf32, #tpu.memory_space<vmem>>, vector<1x128x128xf32>
    %16 = vector.shape_cast %15 : vector<1x128x128xf32> to vector<128x128xf32>
    %cst_13 = arith.constant dense<0.000000e+00> : vector<128x128xf32>
    %17 = tpu.matmul %14, %16, %cst_13 {dimension_numbers = #tpu.dot_dimension_numbers<[1], [0], [0], [1], [0, 0, 1, 1], [], []>, precision = #tpu.contract_precision<fp32>} : vector<128x128xf32>, vector<128x128xf32>, vector<128x128xf32> -> vector<128x128xf32>
    %18 = vector.shape_cast %17 : vector<128x128xf32> to vector<2x8x8x128xf32>
    %19 = vector.shape_cast %10 : vector<2x8x128xf32> to vector<2x8x1x128xf32>
    %20 = vector.shape_cast %11 : vector<2x8x128xf32> to vector<2x1x8x128xf32>
    %21 = vector.broadcast %19 : vector<2x8x1x128xf32> to vector<2x8x8x128xf32>
    %22 = vector.broadcast %20 : vector<2x1x8x128xf32> to vector<2x8x8x128xf32>
    %23 = arith.addf %21, %22 : vector<2x8x8x128xf32>
    %24 = arith.addf %23, %18 : vector<2x8x8x128xf32>
    %c0_14 = arith.constant 0 : index
    %c0_15 = arith.constant 0 : index
    %c0_16 = arith.constant 0 : index
    %c0_17 = arith.constant 0 : index
    %25 = vector.load %arg6[%c0_14, %c0_15, %c0_16, %c0_17] : memref<4x8x8x128xf32, #tpu.memory_space<vmem>>, vector<1x8x8x128xf32>
    %26 = vector.shape_cast %25 : vector<1x8x8x128xf32> to vector<8x8x128xf32>
    %27 = vector.shape_cast %26 : vector<8x8x128xf32> to vector<1x8x8x128xf32>
    %28 = vector.broadcast %27 : vector<1x8x8x128xf32> to vector<2x8x8x128xf32>
    %29 = arith.mulf %24, %28 : vector<2x8x8x128xf32>
    %c1 = arith.constant 1 : index
    %c0_18 = arith.constant 0 : index
    %c0_19 = arith.constant 0 : index
    %c0_20 = arith.constant 0 : index
    %30 = vector.load %arg6[%c1, %c0_18, %c0_19, %c0_20] : memref<4x8x8x128xf32, #tpu.memory_space<vmem>>, vector<1x8x8x128xf32>
    %31 = vector.shape_cast %30 : vector<1x8x8x128xf32> to vector<8x8x128xf32>
    %32 = vector.shape_cast %31 : vector<8x8x128xf32> to vector<1x8x8x128xf32>
    %33 = vector.broadcast %32 : vector<1x8x8x128xf32> to vector<2x8x8x128xf32>
    %34 = arith.addf %29, %33 : vector<2x8x8x128xf32>
    %cst_21 = arith.constant 0.000000e+00 : f32
    %35 = vector.broadcast %cst_21 : f32 to vector<2x8x8x128xf32>
    %36 = arith.maximumf %34, %35 : vector<2x8x8x128xf32>
    %37 = arith.addf %4, %36 : vector<2x8x8x128xf32>
    %cst_22 = arith.constant 0.000000e+00 : f32
    %38 = vector.broadcast %cst_22 : f32 to vector<2x8x8x128xf32>
    %39 = arith.subf %38, %37 : vector<2x8x8x128xf32>
    %40 = math.exp %39 : vector<2x8x8x128xf32>
    %cst_23 = arith.constant 1.000000e+00 : f32
    %41 = vector.broadcast %cst_23 : f32 to vector<2x8x8x128xf32>
    %42 = arith.addf %41, %40 : vector<2x8x8x128xf32>
    %cst_24 = arith.constant 1.000000e+00 : f32
    %43 = vector.broadcast %cst_24 : f32 to vector<2x8x8x128xf32>
    %44 = arith.divf %43, %42 : vector<2x8x8x128xf32>
    %cst_25 = arith.constant dense<0xFF800000> : vector<2x8x128xf32>
    %45 = vector.multi_reduction <maximumf>, %44, %cst_25 [2] : vector<2x8x8x128xf32> to vector<2x8x128xf32>
    %46 = vector.shape_cast %45 : vector<2x8x128xf32> to vector<2x8x1x128xf32>
    %47 = vector.broadcast %46 : vector<2x8x1x128xf32> to vector<2x8x8x128xf32>
    %48 = arith.subf %44, %47 : vector<2x8x8x128xf32>
    %49 = math.exp %48 : vector<2x8x8x128xf32>
    %cst_26 = arith.constant dense<0.000000e+00> : vector<2x8x128xf32>
    %50 = vector.multi_reduction <add>, %49, %cst_26 [2] : vector<2x8x8x128xf32> to vector<2x8x128xf32>
    %51 = vector.shape_cast %50 : vector<2x8x128xf32> to vector<2x8x1x128xf32>
    %52 = tpu.reciprocal %51 : vector<2x8x1x128xf32> -> vector<2x8x1x128xf32>
    %53 = vector.broadcast %52 : vector<2x8x1x128xf32> to vector<2x8x8x128xf32>
    %54 = arith.mulf %49, %53 : vector<2x8x8x128xf32>
    %55 = vector.shape_cast %12 : vector<2x8x128xf32> to vector<2x1x8x128xf32>
    %56 = vector.broadcast %55 : vector<2x1x8x128xf32> to vector<2x8x8x128xf32>
    %57 = arith.mulf %54, %56 : vector<2x8x8x128xf32>
    %cst_27 = arith.constant dense<0.000000e+00> : vector<2x8x128xf32>
    %58 = vector.multi_reduction <add>, %57, %cst_27 [2] : vector<2x8x8x128xf32> to vector<2x8x128xf32>
    %cst_28 = arith.constant 1.250000e-01 : f32
    %59 = vector.broadcast %cst_28 : f32 to vector<2x8x128xf32>
    %60 = arith.mulf %58, %59 : vector<2x8x128xf32>
    %61 = arith.addf %13, %60 : vector<2x8x128xf32>
    %c0_29 = arith.constant 0 : index
    %c0_30 = arith.constant 0 : index
    %c0_31 = arith.constant 0 : index
    %62 = vector.load %arg5[%c0_29, %c0_30, %c0_31] : memref<4x8x128xf32, #tpu.memory_space<vmem>>, vector<1x8x128xf32>
    %63 = vector.shape_cast %62 : vector<1x8x128xf32> to vector<8x128xf32>
    %64 = vector.shape_cast %63 : vector<8x128xf32> to vector<1x8x128xf32>
    %65 = vector.broadcast %64 : vector<1x8x128xf32> to vector<2x8x128xf32>
    %66 = arith.mulf %61, %65 : vector<2x8x128xf32>
    %c1_32 = arith.constant 1 : index
    %c0_33 = arith.constant 0 : index
    %c0_34 = arith.constant 0 : index
    %67 = vector.load %arg5[%c1_32, %c0_33, %c0_34] : memref<4x8x128xf32, #tpu.memory_space<vmem>>, vector<1x8x128xf32>
    %68 = vector.shape_cast %67 : vector<1x8x128xf32> to vector<8x128xf32>
    %69 = vector.shape_cast %68 : vector<8x128xf32> to vector<1x8x128xf32>
    %70 = vector.broadcast %69 : vector<1x8x128xf32> to vector<2x8x128xf32>
    %71 = arith.addf %66, %70 : vector<2x8x128xf32>
    %72 = arith.addf %1, %71 : vector<2x8x128xf32>
    %cst_35 = arith.constant 0.000000e+00 : f32
    %73 = vector.broadcast %cst_35 : f32 to vector<2x8x128xf32>
    %74 = arith.maximumf %72, %73 : vector<2x8x128xf32>
    %75 = vector.shape_cast %74 : vector<2x8x128xf32> to vector<16x128xf32>
    %c1_36 = arith.constant 1 : index
    %c0_37 = arith.constant 0 : index
    %c0_38 = arith.constant 0 : index
    %76 = vector.load %arg3[%c1_36, %c0_37, %c0_38] : memref<2x128x512xf32, #tpu.memory_space<vmem>>, vector<1x128x512xf32>
    %77 = vector.shape_cast %76 : vector<1x128x512xf32> to vector<128x512xf32>
    %cst_39 = arith.constant dense<0.000000e+00> : vector<16x512xf32>
    %78 = tpu.matmul %75, %77, %cst_39 {dimension_numbers = #tpu.dot_dimension_numbers<[1], [0], [0], [1], [0, 0, 1, 1], [], []>, precision = #tpu.contract_precision<fp32>} : vector<16x128xf32>, vector<128x512xf32>, vector<16x512xf32> -> vector<16x512xf32>
    %79 = vector.shape_cast %78 : vector<16x512xf32> to vector<2x8x512xf32>
    %80 = vector.extract_strided_slice %79 {offsets = [0, 0, 0], sizes = [2, 8, 128], strides = [1, 1, 1]} : vector<2x8x512xf32> to vector<2x8x128xf32>
    %81 = vector.extract_strided_slice %79 {offsets = [0, 0, 128], sizes = [2, 8, 128], strides = [1, 1, 1]} : vector<2x8x512xf32> to vector<2x8x128xf32>
    %82 = vector.extract_strided_slice %79 {offsets = [0, 0, 256], sizes = [2, 8, 128], strides = [1, 1, 1]} : vector<2x8x512xf32> to vector<2x8x128xf32>
    %83 = vector.extract_strided_slice %79 {offsets = [0, 0, 384], sizes = [2, 8, 128], strides = [1, 1, 1]} : vector<2x8x512xf32> to vector<2x8x128xf32>
    %84 = vector.shape_cast %37 : vector<2x8x8x128xf32> to vector<128x128xf32>
    %c1_40 = arith.constant 1 : index
    %c0_41 = arith.constant 0 : index
    %c0_42 = arith.constant 0 : index
    %85 = vector.load %arg4[%c1_40, %c0_41, %c0_42] : memref<2x128x128xf32, #tpu.memory_space<vmem>>, vector<1x128x128xf32>
    %86 = vector.shape_cast %85 : vector<1x128x128xf32> to vector<128x128xf32>
    %cst_43 = arith.constant dense<0.000000e+00> : vector<128x128xf32>
    %87 = tpu.matmul %84, %86, %cst_43 {dimension_numbers = #tpu.dot_dimension_numbers<[1], [0], [0], [1], [0, 0, 1, 1], [], []>, precision = #tpu.contract_precision<fp32>} : vector<128x128xf32>, vector<128x128xf32>, vector<128x128xf32> -> vector<128x128xf32>
    %88 = vector.shape_cast %87 : vector<128x128xf32> to vector<2x8x8x128xf32>
    %89 = vector.shape_cast %80 : vector<2x8x128xf32> to vector<2x8x1x128xf32>
    %90 = vector.shape_cast %81 : vector<2x8x128xf32> to vector<2x1x8x128xf32>
    %91 = vector.broadcast %89 : vector<2x8x1x128xf32> to vector<2x8x8x128xf32>
    %92 = vector.broadcast %90 : vector<2x1x8x128xf32> to vector<2x8x8x128xf32>
    %93 = arith.addf %91, %92 : vector<2x8x8x128xf32>
    %94 = arith.addf %93, %88 : vector<2x8x8x128xf32>
    %c2 = arith.constant 2 : index
    %c0_44 = arith.constant 0 : index
    %c0_45 = arith.constant 0 : index
    %c0_46 = arith.constant 0 : index
    %95 = vector.load %arg6[%c2, %c0_44, %c0_45, %c0_46] : memref<4x8x8x128xf32, #tpu.memory_space<vmem>>, vector<1x8x8x128xf32>
    %96 = vector.shape_cast %95 : vector<1x8x8x128xf32> to vector<8x8x128xf32>
    %97 = vector.shape_cast %96 : vector<8x8x128xf32> to vector<1x8x8x128xf32>
    %98 = vector.broadcast %97 : vector<1x8x8x128xf32> to vector<2x8x8x128xf32>
    %99 = arith.mulf %94, %98 : vector<2x8x8x128xf32>
    %c3 = arith.constant 3 : index
    %c0_47 = arith.constant 0 : index
    %c0_48 = arith.constant 0 : index
    %c0_49 = arith.constant 0 : index
    %100 = vector.load %arg6[%c3, %c0_47, %c0_48, %c0_49] : memref<4x8x8x128xf32, #tpu.memory_space<vmem>>, vector<1x8x8x128xf32>
    %101 = vector.shape_cast %100 : vector<1x8x8x128xf32> to vector<8x8x128xf32>
    %102 = vector.shape_cast %101 : vector<8x8x128xf32> to vector<1x8x8x128xf32>
    %103 = vector.broadcast %102 : vector<1x8x8x128xf32> to vector<2x8x8x128xf32>
    %104 = arith.addf %99, %103 : vector<2x8x8x128xf32>
    %cst_50 = arith.constant 0.000000e+00 : f32
    %105 = vector.broadcast %cst_50 : f32 to vector<2x8x8x128xf32>
    %106 = arith.maximumf %104, %105 : vector<2x8x8x128xf32>
    %107 = arith.addf %37, %106 : vector<2x8x8x128xf32>
    %cst_51 = arith.constant 0.000000e+00 : f32
    %108 = vector.broadcast %cst_51 : f32 to vector<2x8x8x128xf32>
    %109 = arith.subf %108, %107 : vector<2x8x8x128xf32>
    %110 = math.exp %109 : vector<2x8x8x128xf32>
    %cst_52 = arith.constant 1.000000e+00 : f32
    %111 = vector.broadcast %cst_52 : f32 to vector<2x8x8x128xf32>
    %112 = arith.addf %111, %110 : vector<2x8x8x128xf32>
    %cst_53 = arith.constant 1.000000e+00 : f32
    %113 = vector.broadcast %cst_53 : f32 to vector<2x8x8x128xf32>
    %114 = arith.divf %113, %112 : vector<2x8x8x128xf32>
    %cst_54 = arith.constant dense<0xFF800000> : vector<2x8x128xf32>
    %115 = vector.multi_reduction <maximumf>, %114, %cst_54 [2] : vector<2x8x8x128xf32> to vector<2x8x128xf32>
    %116 = vector.shape_cast %115 : vector<2x8x128xf32> to vector<2x8x1x128xf32>
    %117 = vector.broadcast %116 : vector<2x8x1x128xf32> to vector<2x8x8x128xf32>
    %118 = arith.subf %114, %117 : vector<2x8x8x128xf32>
    %119 = math.exp %118 : vector<2x8x8x128xf32>
    %cst_55 = arith.constant dense<0.000000e+00> : vector<2x8x128xf32>
    %120 = vector.multi_reduction <add>, %119, %cst_55 [2] : vector<2x8x8x128xf32> to vector<2x8x128xf32>
    %121 = vector.shape_cast %120 : vector<2x8x128xf32> to vector<2x8x1x128xf32>
    %122 = tpu.reciprocal %121 : vector<2x8x1x128xf32> -> vector<2x8x1x128xf32>
    %123 = vector.broadcast %122 : vector<2x8x1x128xf32> to vector<2x8x8x128xf32>
    %124 = arith.mulf %119, %123 : vector<2x8x8x128xf32>
    %125 = vector.shape_cast %82 : vector<2x8x128xf32> to vector<2x1x8x128xf32>
    %126 = vector.broadcast %125 : vector<2x1x8x128xf32> to vector<2x8x8x128xf32>
    %127 = arith.mulf %124, %126 : vector<2x8x8x128xf32>
    %cst_56 = arith.constant dense<0.000000e+00> : vector<2x8x128xf32>
    %128 = vector.multi_reduction <add>, %127, %cst_56 [2] : vector<2x8x8x128xf32> to vector<2x8x128xf32>
    %cst_57 = arith.constant 1.250000e-01 : f32
    %129 = vector.broadcast %cst_57 : f32 to vector<2x8x128xf32>
    %130 = arith.mulf %128, %129 : vector<2x8x128xf32>
    %131 = arith.addf %83, %130 : vector<2x8x128xf32>
    %c2_58 = arith.constant 2 : index
    %c0_59 = arith.constant 0 : index
    %c0_60 = arith.constant 0 : index
    %132 = vector.load %arg5[%c2_58, %c0_59, %c0_60] : memref<4x8x128xf32, #tpu.memory_space<vmem>>, vector<1x8x128xf32>
    %133 = vector.shape_cast %132 : vector<1x8x128xf32> to vector<8x128xf32>
    %134 = vector.shape_cast %133 : vector<8x128xf32> to vector<1x8x128xf32>
    %135 = vector.broadcast %134 : vector<1x8x128xf32> to vector<2x8x128xf32>
    %136 = arith.mulf %131, %135 : vector<2x8x128xf32>
    %c3_61 = arith.constant 3 : index
    %c0_62 = arith.constant 0 : index
    %c0_63 = arith.constant 0 : index
    %137 = vector.load %arg5[%c3_61, %c0_62, %c0_63] : memref<4x8x128xf32, #tpu.memory_space<vmem>>, vector<1x8x128xf32>
    %138 = vector.shape_cast %137 : vector<1x8x128xf32> to vector<8x128xf32>
    %139 = vector.shape_cast %138 : vector<8x128xf32> to vector<1x8x128xf32>
    %140 = vector.broadcast %139 : vector<1x8x128xf32> to vector<2x8x128xf32>
    %141 = arith.addf %136, %140 : vector<2x8x128xf32>
    %142 = arith.addf %74, %141 : vector<2x8x128xf32>
    %cst_64 = arith.constant 0.000000e+00 : f32
    %143 = vector.broadcast %cst_64 : f32 to vector<2x8x128xf32>
    %144 = arith.maximumf %142, %143 : vector<2x8x128xf32>
    %c0_65 = arith.constant 0 : index
    %c0_66 = arith.constant 0 : index
    %c0_67 = arith.constant 0 : index
    %c0_68 = arith.constant 0 : index
    %145 = vector.load %arg7[%c0_65, %c0_66, %c0_67, %c0_68] : memref<1x2x8x128xf32, #tpu.memory_space<vmem>>, vector<1x2x8x128xf32>
    %146 = vector.shape_cast %145 : vector<1x2x8x128xf32> to vector<2x8x128xf32>
    %147 = vector.shape_cast %144 : vector<2x8x128xf32> to vector<1x2x8x128xf32>
    tpu.vector_store %arg7[%c0_65, %c0_66, %c0_67, %c0_68], %147 {strides = array<i32>} : memref<1x2x8x128xf32, #tpu.memory_space<vmem>>, vector<1x2x8x128xf32>,
    %148 = vector.shape_cast %107 : vector<2x8x8x128xf32> to vector<2x64x128xf32>
    %c0_69 = arith.constant 0 : index
    %c0_70 = arith.constant 0 : index
    %c0_71 = arith.constant 0 : index
    %c0_72 = arith.constant 0 : index
    %149 = vector.load %arg8[%c0_69, %c0_70, %c0_71, %c0_72] : memref<1x2x64x128xf32, #tpu.memory_space<vmem>>, vector<1x2x64x128xf32>
    %150 = vector.shape_cast %149 : vector<1x2x64x128xf32> to vector<2x64x128xf32>
    %151 = vector.shape_cast %148 : vector<2x64x128xf32> to vector<1x2x64x128xf32>
    tpu.vector_store %arg8[%c0_69, %c0_70, %c0_71, %c0_72], %151 {strides = array<i32>} : memref<1x2x64x128xf32, #tpu.memory_space<vmem>>, vector<1x2x64x128xf32>,
    return
  }
  func.func @transform_0(%arg0: i32) -> (i32, i32, i32, i32) {
    %c0_i32 = arith.constant 0 : i32
    %c0_i32_0 = arith.constant 0 : i32
    %c0_i32_1 = arith.constant 0 : i32
    %c0_i32_2 = arith.constant 0 : i32
    return %arg0, %c0_i32, %c0_i32_0, %c0_i32_1 : i32, i32, i32, i32
  }
  func.func @transform_1(%arg0: i32) -> (i32, i32, i32, i32) {
    %c0_i32 = arith.constant 0 : i32
    %c0_i32_0 = arith.constant 0 : i32
    %c0_i32_1 = arith.constant 0 : i32
    %c0_i32_2 = arith.constant 0 : i32
    return %arg0, %c0_i32, %c0_i32_0, %c0_i32_1 : i32, i32, i32, i32
  }
  func.func @transform_2(%arg0: i32) -> (i32, i32, i32) {
    %c0_i32 = arith.constant 0 : i32
    %c0_i32_0 = arith.constant 0 : i32
    %c0_i32_1 = arith.constant 0 : i32
    %c0_i32_2 = arith.constant 0 : i32
    return %c0_i32, %c0_i32_0, %c0_i32_1 : i32, i32, i32
  }
  func.func @transform_3(%arg0: i32) -> (i32, i32, i32) {
    %c0_i32 = arith.constant 0 : i32
    %c0_i32_0 = arith.constant 0 : i32
    %c0_i32_1 = arith.constant 0 : i32
    %c0_i32_2 = arith.constant 0 : i32
    return %c0_i32, %c0_i32_0, %c0_i32_1 : i32, i32, i32
  }
  func.func @transform_4(%arg0: i32) -> (i32, i32, i32) {
    %c0_i32 = arith.constant 0 : i32
    %c0_i32_0 = arith.constant 0 : i32
    %c0_i32_1 = arith.constant 0 : i32
    %c0_i32_2 = arith.constant 0 : i32
    return %c0_i32, %c0_i32_0, %c0_i32_1 : i32, i32, i32
  }
  func.func @transform_5(%arg0: i32) -> (i32, i32, i32, i32) {
    %c0_i32 = arith.constant 0 : i32
    %c0_i32_0 = arith.constant 0 : i32
    %c0_i32_1 = arith.constant 0 : i32
    %c0_i32_2 = arith.constant 0 : i32
    %c0_i32_3 = arith.constant 0 : i32
    return %c0_i32, %c0_i32_0, %c0_i32_1, %c0_i32_2 : i32, i32, i32, i32
  }
  func.func @transform_6(%arg0: i32) -> (i32, i32, i32, i32) {
    %c0_i32 = arith.constant 0 : i32
    %c0_i32_0 = arith.constant 0 : i32
    %c0_i32_1 = arith.constant 0 : i32
    %c0_i32_2 = arith.constant 0 : i32
    return %arg0, %c0_i32, %c0_i32_0, %c0_i32_1 : i32, i32, i32, i32
  }
  func.func @transform_7(%arg0: i32) -> (i32, i32, i32, i32) {
    %c0_i32 = arith.constant 0 : i32
    %c0_i32_0 = arith.constant 0 : i32
    %c0_i32_1 = arith.constant 0 : i32
    %c0_i32_2 = arith.constant 0 : i32
    return %arg0, %c0_i32, %c0_i32_0, %c0_i32_1 : i32, i32, i32, i32
  }
}

</mosaic_0001>

<llo_original>
// kernel: gnn_forward.1
$region0: #{gnn_forward.1}
  #allocation0 [shape = 'u32[]', space=smem, size = 0x4, offset = 0x4, fixed_abs, tag = 'smem constant byte address 0x4 - core index']
  #allocation1 [shape = 'u32[144,128]{1,0:T(1,128)}', space=vmem, size = 0x12000, scoped, tag = 'internal scratch']
  %s0 = inlined_call_operand.vmem [shape: f32[2,2,8,128], index: 0, kind: input, shape index: {}]
  %s1 = inlined_call_operand.vmem [shape: f32[2,2,64,128], index: 1, kind: input, shape index: {}]
  %s2 = inlined_call_operand.vmem [shape: f32[2,128,512], index: 2, kind: input, shape index: {}]
  %s3 = inlined_call_operand.vmem [shape: f32[2,128,128], index: 3, kind: input, shape index: {}]
  %s4 = inlined_call_operand.vmem [shape: f32[4,8,128], index: 4, kind: input, shape index: {}]
  %s5 = inlined_call_operand.vmem [shape: f32[4,8,8,128], index: 5, kind: input, shape index: {}]
  %s6 = inlined_call_operand.vmem [shape: f32[2,2,8,128], index: 6, kind: output, shape index: {0}]
  %s7 = inlined_call_operand.vmem [shape: f32[2,2,64,128], index: 7, kind: output, shape index: {1}]
  %8 = xla_tuple %s6, %s7
  %s9 = sld [smem:[#allocation0]]
  $region65: #{gnn_forward.1} parent=0
    _
  %s11 = ssub.s32 1, %s9
  %s12 = scalar_select 0, %s11, %s9
  loop: start=0, step=1, limit=4
  $region2: #{gnn_forward.1} parent=0 // loop_pre_header
    _
  $region3: #{gnn_forward.1} parent=0 // loop_header
    %s14 = sphi 0, %s18
    %p15 = scmp.ge.s32.totalorder %s14, 4
    %s24 = sphi 0, %s26
    %s27 = sphi 0, %s24
    %s28 = sphi 0, %s27
    %s44 = sphi 0, %s28
    %s50 = sphi 0, %s52
    %s53 = sphi 0, %s50
    %s54 = sphi 0, %s53
    %s70 = sphi 0, %s54
    %s74 = sphi 0, %s74
    %s76 = sphi 0, %s74
    %s77 = sphi 0, %s76
    %s91 = sphi 0, %s77
    %s95 = sphi 0, %s95
    %s97 = sphi 0, %s95
    %s98 = sphi 0, %s97
    %s112 = sphi 0, %s98
    %s116 = sphi 0, %s116
    %s118 = sphi 0, %s116
    %s119 = sphi 0, %s118
    %s133 = sphi 0, %s119
    %s137 = sphi 0, %s137
    %s139 = sphi 0, %s137
    %s140 = sphi 0, %s139
    %s154 = sphi 0, %s140
    %s160 = sphi 0, %s162
    %s163 = sphi 0, %s160
    %s164 = sphi 0, %s163
    %s180 = sphi 0, %s164
    %s186 = sphi 0, %s188
    %s189 = sphi 0, %s186
    %s190 = sphi 0, %s189
    %s206 = sphi 0, %s190
  $region4: #{gnn_forward.1} parent=0 // loop_header_branch
    %17 = sbr.rel (%p15) target = $region8
  $region5: #{gnn_forward.1} parent=0 // loop_body
    %s19 = ssub.s32 %s14, 1
    %s20 = ssub.s32 %s14, 2
    %s21 = sadd.s32 %s14, 1
    %s22 = ssub.s32 %s14, %s21
    %p23 = scmp.eq.s32.totalorder %s22, 0
    %s25 = sadd.s32 %s24, 1
    %s26 = scalar_select %p23, %s24, %s25
    %p29 = pneg %p23
    %p30 = scmp.eq.s32.totalorder %s14, 1
    %p31 = por %p29, %p30
    %p32 = scmp.ne.s32.totalorder %s24, %s27
    %p33 = scmp.eq.s32.totalorder %s14, 0
    %p34 = por %p32, %p33
    %p35 = scmp.ne.s32.totalorder %s24, %s27
    %p36 = scmp.eq.s32.totalorder %s19, 1
    %p37 = por %p35, %p36
    %p38 = scmp.ne.s32.totalorder %s27, %s28
    %p39 = scmp.eq.s32.totalorder %s19, 0
    %p40 = por %p38, %p39
    %p41 = scmp.ne.s32.totalorder %s27, %s28
    %p42 = scmp.eq.s32.totalorder %s20, 1
    %p43 = por %p41, %p42
    %p45 = scmp.ne.s32.totalorder %s28, %s44
    %p46 = scmp.eq.s32.totalorder %s20, 0
    %p47 = por %p45, %p46
    %s48 = ssub.s32 %s14, %s21
    %p49 = scmp.eq.s32.totalorder %s48, 0
    %s51 = sadd.s32 %s50, 1
    %s52 = scalar_select %p49, %s50, %s51
    %p55 = pneg %p49
    %p56 = scmp.eq.s32.totalorder %s14, 1
    %p57 = por %p55, %p56
    %p58 = scmp.ne.s32.totalorder %s50, %s53
    %p59 = scmp.eq.s32.totalorder %s14, 0
    %p60 = por %p58, %p59
    %p61 = scmp.ne.s32.totalorder %s50, %s53
    %p62 = scmp.eq.s32.totalorder %s19, 1
    %p63 = por %p61, %p62
    %p64 = scmp.ne.s32.totalorder %s53, %s54
    %p65 = scmp.eq.s32.totalorder %s19, 0
    %p66 = por %p64, %p65
    %p67 = scmp.ne.s32.totalorder %s53, %s54
    %p68 = scmp.eq.s32.totalorder %s20, 1
    %p69 = por %p67, %p68
    %p71 = scmp.ne.s32.totalorder %s54, %s70
    %p72 = scmp.eq.s32.totalorder %s20, 0
    %p73 = por %p71, %p72
    %s75 = sadd.s32 %s74, 1
    %p78 = scmp.eq.s32.totalorder %s14, 1
    %p79 = scmp.ne.s32.totalorder %s74, %s76
    %p80 = scmp.eq.s32.totalorder %s14, 0
    %p81 = por %p79, %p80
    %p82 = scmp.ne.s32.totalorder %s74, %s76
    %p83 = scmp.eq.s32.totalorder %s19, 1
    %p84 = por %p82, %p83
    %p85 = scmp.ne.s32.totalorder %s76, %s77
    %p86 = scmp.eq.s32.totalorder %s19, 0
    %p87 = por %p85, %p86
    %p88 = scmp.ne.s32.totalorder %s76, %s77
    %p89 = scmp.eq.s32.totalorder %s20, 1
    %p90 = por %p88, %p89
    %p92 = scmp.ne.s32.totalorder %s77, %s91
    %p93 = scmp.eq.s32.totalorder %s20, 0
    %p94 = por %p92, %p93
    %s96 = sadd.s32 %s95, 1
    %p99 = scmp.eq.s32.totalorder %s14, 1
    %p100 = scmp.ne.s32.totalorder %s95, %s97
    %p101 = scmp.eq.s32.totalorder %s14, 0
    %p102 = por %p100, %p101
    %p103 = scmp.ne.s32.totalorder %s95, %s97
    %p104 = scmp.eq.s32.totalorder %s19, 1
    %p105 = por %p103, %p104
    %p106 = scmp.ne.s32.totalorder %s97, %s98
    %p107 = scmp.eq.s32.totalorder %s19, 0
    %p108 = por %p106, %p107
    %p109 = scmp.ne.s32.totalorder %s97, %s98
    %p110 = scmp.eq.s32.totalorder %s20, 1
    %p111 = por %p109, %p110
    %p113 = scmp.ne.s32.totalorder %s98, %s112
    %p114 = scmp.eq.s32.totalorder %s20, 0
    %p115 = por %p113, %p114
    %s117 = sadd.s32 %s116, 1
    %p120 = scmp.eq.s32.totalorder %s14, 1
    %p121 = scmp.ne.s32.totalorder %s116, %s118
    %p122 = scmp.eq.s32.totalorder %s14, 0
    %p123 = por %p121, %p122
    %p124 = scmp.ne.s32.totalorder %s116, %s118
    %p125 = scmp.eq.s32.totalorder %s19, 1
    %p126 = por %p124, %p125
    %p127 = scmp.ne.s32.totalorder %s118, %s119
    %p128 = scmp.eq.s32.totalorder %s19, 0
    %p129 = por %p127, %p128
    %p130 = scmp.ne.s32.totalorder %s118, %s119
    %p131 = scmp.eq.s32.totalorder %s20, 1
    %p132 = por %p130, %p131
    %p134 = scmp.ne.s32.totalorder %s119, %s133
    %p135 = scmp.eq.s32.totalorder %s20, 0
    %p136 = por %p134, %p135
    %s138 = sadd.s32 %s137, 1
    %p141 = scmp.eq.s32.totalorder %s14, 1
    %p142 = scmp.ne.s32.totalorder %s137, %s139
    %p143 = scmp.eq.s32.totalorder %s14, 0
    %p144 = por %p142, %p143
    %p145 = scmp.ne.s32.totalorder %s137, %s139
    %p146 = scmp.eq.s32.totalorder %s19, 1
    %p147 = por %p145, %p146
    %p148 = scmp.ne.s32.totalorder %s139, %s140
    %p149 = scmp.eq.s32.totalorder %s19, 0
    %p150 = por %p148, %p149
    %p151 = scmp.ne.s32.totalorder %s139, %s140
    %p152 = scmp.eq.s32.totalorder %s20, 1
    %p153 = por %p151, %p152
    %p155 = scmp.ne.s32.totalorder %s140, %s154
    %p156 = scmp.eq.s32.totalorder %s20, 0
    %p157 = por %p155, %p156
    %s158 = ssub.s32 %s14, %s21
    %p159 = scmp.eq.s32.totalorder %s158, 0
    %s161 = sadd.s32 %s160, 1
    %s162 = scalar_select %p159, %s160, %s161
    %p165 = pneg %p159
    %p166 = scmp.eq.s32.totalorder %s14, 1
    %p167 = por %p165, %p166
    %p168 = scmp.ne.s32.totalorder %s160, %s163
    %p169 = scmp.eq.s32.totalorder %s14, 0
    %p170 = por %p168, %p169
    %p171 = scmp.ne.s32.totalorder %s160, %s163
    %p172 = scmp.eq.s32.totalorder %s19, 1
    %p173 = por %p171, %p172
    %p174 = scmp.ne.s32.totalorder %s163, %s164
    %p175 = scmp.eq.s32.totalorder %s19, 0
    %p176 = por %p174, %p175
    %p177 = scmp.ne.s32.totalorder %s163, %s164
    %p178 = scmp.eq.s32.totalorder %s20, 1
    %p179 = por %p177, %p178
    %p181 = scmp.ne.s32.totalorder %s164, %s180
    %p182 = scmp.eq.s32.totalorder %s20, 0
    %p183 = por %p181, %p182
    %s184 = ssub.s32 %s14, %s21
    %p185 = scmp.eq.s32.totalorder %s184, 0
    %s187 = sadd.s32 %s186, 1
    %s188 = scalar_select %p185, %s186, %s187
    %p191 = pneg %p185
    %p192 = scmp.eq.s32.totalorder %s14, 1
    %p193 = por %p191, %p192
    %p194 = scmp.ne.s32.totalorder %s186, %s189
    %p195 = scmp.eq.s32.totalorder %s14, 0
    %p196 = por %p194, %p195
    %p197 = scmp.ne.s32.totalorder %s186, %s189
    %p198 = scmp.eq.s32.totalorder %s19, 1
    %p199 = por %p197, %p198
    %p200 = scmp.ne.s32.totalorder %s189, %s190
    %p201 = scmp.eq.s32.totalorder %s19, 0
    %p202 = por %p200, %p201
    %p203 = scmp.ne.s32.totalorder %s189, %s190
    %p204 = scmp.eq.s32.totalorder %s20, 1
    %p205 = por %p203, %p204
    %p207 = scmp.ne.s32.totalorder %s190, %s206
    %p208 = scmp.eq.s32.totalorder %s20, 0
    %p209 = por %p207, %p208
    %p210 = scmp.le.s32.totalorder 1, %s14
    %p211 = scmp.lt.s32.totalorder %s14, 3
    %p212 = pnand %p210, %p211
    %p213 = pneg %p212
    // Predicated region
    $region9: #{gnn_forward.1} parent=5 // pred_check
      _
    $region10: #{gnn_forward.1} parent=5 // pred_check_branch
      %215 = sbr.rel (%p212) target = $region12
    $region11: #{gnn_forward.1} parent=5 // pred_region
      %s216 = ssub.s32 %s14, 1
      // Predicated region
      $region13: #{gnn_forward.1} parent=11 // pred_check
        %p217 = pneg %p87
      $region14: #{gnn_forward.1} parent=11 // pred_check_branch
        %219 = sbr.rel (%p217) target = $region16
      $region15: #{gnn_forward.1} parent=11 // pred_region
        _
      $region16: #{gnn_forward.1} parent=11 // pred_fallthru
        _
      // Predicated region
      $region17: #{gnn_forward.1} parent=11 // pred_check
        %p220 = pneg %p108
      $region18: #{gnn_forward.1} parent=11 // pred_check_branch
        %222 = sbr.rel (%p220) target = $region20
      $region19: #{gnn_forward.1} parent=11 // pred_region
        _
      $region20: #{gnn_forward.1} parent=11 // pred_fallthru
        _
      // Predicated region
      $region21: #{gnn_forward.1} parent=11 // pred_check
        %p223 = pneg %p129
      $region22: #{gnn_forward.1} parent=11 // pred_check_branch
        %225 = sbr.rel (%p223) target = $region24
      $region23: #{gnn_forward.1} parent=11 // pred_region
        _
      $region24: #{gnn_forward.1} parent=11 // pred_fallthru
        _
      // Predicated region
      $region25: #{gnn_forward.1} parent=11 // pred_check
        %p226 = pneg %p150
      $region26: #{gnn_forward.1} parent=11 // pred_check_branch
        %228 = sbr.rel (%p226) target = $region28
      $region27: #{gnn_forward.1} parent=11 // pred_region
        _
      $region28: #{gnn_forward.1} parent=11 // pred_fallthru
        _
    $region12: #{gnn_forward.1} parent=5 // pred_fallthru
      _
    %p229 = scmp.lt.s32.totalorder %s14, 2
    // Predicated region
    $region29: #{gnn_forward.1} parent=5 // pred_check
      %p230 = pneg %p229
    $region30: #{gnn_forward.1} parent=5 // pred_check_branch
      %232 = sbr.rel (%p230) target = $region32
    $region31: #{gnn_forward.1} parent=5 // pred_region
      // Predicated region
      $region33: #{gnn_forward.1} parent=31 // pred_check
        %p233 = pneg %p34
      $region34: #{gnn_forward.1} parent=31 // pred_check_branch
        %235 = sbr.rel (%p233) target = $region36
      $region35: #{gnn_forward.1} parent=31 // pred_region
        %p236 = scmp.lt.s32.totalorder %s14, 1
        %s237 = scalar_select %p236, %s14, 1
        %s238 = smul.addr %s237, 2
        %s239 = smul.addr %s238, 8
        %s240 = scalar_lea.vmem %s0, %s239
      $region36: #{gnn_forward.1} parent=31 // pred_fallthru
        _
      // Predicated region
      $region37: #{gnn_forward.1} parent=31 // pred_check
        %p241 = pneg %p60
      $region38: #{gnn_forward.1} parent=31 // pred_check_branch
        %243 = sbr.rel (%p241) target = $region40
      $region39: #{gnn_forward.1} parent=31 // pred_region
        %p244 = scmp.lt.s32.totalorder %s14, 1
        %s245 = scalar_select %p244, %s14, 1
        %s246 = smul.addr %s245, 16
        %s247 = smul.addr %s246, 8
        %s248 = scalar_lea.vmem %s1, %s247
      $region40: #{gnn_forward.1} parent=31 // pred_fallthru
        _
    $region32: #{gnn_forward.1} parent=5 // pred_fallthru
      _
    %p249 = scmp.le.s32.totalorder 1, %s14
    %p250 = scmp.lt.s32.totalorder %s14, 3
    %p251 = pnand %p249, %p250
    %p252 = pneg %p251
    // Predicated region
    $region41: #{gnn_forward.1} parent=5 // pred_check
      _
    $region42: #{gnn_forward.1} parent=5 // pred_check_branch
      %254 = sbr.rel (%p251) target = $region44
    $region43: #{gnn_forward.1} parent=5 // pred_region
      %s255 = ssub.s32 %s14, 1
      %p256 = scmp.lt.s32.totalorder %s19, 1
      %s257 = scalar_select %p256, %s19, 1
      %s258 = smul.addr %s257, 2
      %s259 = smul.addr %s258, 8
      %s260 = scalar_lea.vmem %s0, %s259
      %p261 = pneg %p40
      %p262 = pneg %p37
      %p263 = scmp.lt.s32.totalorder %s19, 1
      %s264 = scalar_select %p263, %s19, 1
      %s265 = smul.addr %s264, 16
      %s266 = smul.addr %s265, 8
      %s267 = scalar_lea.vmem %s1, %s266
      %p268 = pneg %p66
      %p269 = pneg %p63
      %p270 = pneg %p87
      %p271 = pneg %p84
      %p272 = pneg %p108
      %p273 = pneg %p105
      %p274 = pneg %p129
      %p275 = pneg %p126
      %p276 = pneg %p150
      %p277 = pneg %p147
      %p278 = pneg %p176
      %p279 = pneg %p173
      %p280 = scmp.lt.s32.totalorder %s19, 1
      %s281 = scalar_select %p280, %s19, 1
      %s282 = smul.addr %s281, 2
      %s283 = smul.addr %s282, 8
      %s284 = scalar_lea.vmem %s6, %s283
      %p285 = pneg %p202
      %p286 = pneg %p199
      %p287 = scmp.lt.s32.totalorder %s19, 1
      %s288 = scalar_select %p287, %s19, 1
      %s289 = smul.addr %s288, 16
      %s290 = smul.addr %s289, 8
      %s291 = scalar_lea.vmem %s7, %s290
      %p292 = scmp.lt.s32.totalorder %s19, 1
      %s293 = scalar_select %p292, %s19, 1
      %s294 = smul.addr %s293, 2
      %s295 = smul.addr %s294, 8
      %s296 = scalar_lea.vmem %s0, %s295
      %p297 = scmp.lt.s32.totalorder %s19, 1
      %s298 = scalar_select %p297, %s19, 1
      %s299 = smul.addr %s298, 16
      %s300 = smul.addr %s299, 8
      %s301 = scalar_lea.vmem %s1, %s300
      %p302 = scmp.lt.s32.totalorder %s19, 1
      %s303 = scalar_select %p302, %s19, 1
      %s304 = smul.addr %s303, 2
      %s305 = smul.addr %s304, 8
      %s306 = scalar_lea.vmem %s6, %s305
      %p307 = scmp.lt.s32.totalorder %s19, 1
      %s308 = scalar_select %p307, %s19, 1
      %s309 = smul.addr %s308, 16
      %s310 = smul.addr %s309, 8
      %s311 = scalar_lea.vmem %s7, %s310
      %v312 = vld [vmem:[%s296] sm:$0xff]
      %v313 = vld [vmem:[%s296 + $0x8] sm:$0xff]
      %v314 = vld [vmem:[%s301] sm:$0xff]
      %v315 = vld [vmem:[%s301 + $0x8] sm:$0xff]
      %v316 = vld [vmem:[%s301 + $0x10] sm:$0xff]
      %v317 = vld [vmem:[%s301 + $0x18] sm:$0xff]
      %v318 = vld [vmem:[%s301 + $0x20] sm:$0xff]
      %v319 = vld [vmem:[%s301 + $0x28] sm:$0xff]
      %v320 = vld [vmem:[%s301 + $0x30] sm:$0xff]
      %v321 = vld [vmem:[%s301 + $0x38] sm:$0xff]
      %v322 = vld [vmem:[%s301 + $0x40] sm:$0xff]
      %v323 = vld [vmem:[%s301 + $0x48] sm:$0xff]
      %v324 = vld [vmem:[%s301 + $0x50] sm:$0xff]
      %v325 = vld [vmem:[%s301 + $0x58] sm:$0xff]
      %v326 = vld [vmem:[%s301 + $0x60] sm:$0xff]
      %v327 = vld [vmem:[%s301 + $0x68] sm:$0xff]
      %v328 = vld [vmem:[%s301 + $0x70] sm:$0xff]
      %v329 = vld [vmem:[%s301 + $0x78] sm:$0xff]
      %v330 = vld [vmem:[%s2] sm:$0xff]
      %v331 = vld [vmem:[%s2 + $0x8] sm:$0xff]
      %v332 = vld [vmem:[%s2 + $0x10] sm:$0xff]
      %v333 = vld [vmem:[%s2 + $0x18] sm:$0xff]
      %v334 = vld [vmem:[%s2 + $0x20] sm:$0xff]
      %v335 = vld [vmem:[%s2 + $0x28] sm:$0xff]
      %v336 = vld [vmem:[%s2 + $0x30] sm:$0xff]
      %v337 = vld [vmem:[%s2 + $0x38] sm:$0xff]
      %v338 = vld [vmem:[%s2 + $0x40] sm:$0xff]
      %v339 = vld [vmem:[%s2 + $0x48] sm:$0xff]
      %v340 = vld [vmem:[%s2 + $0x50] sm:$0xff]
      %v341 = vld [vmem:[%s2 + $0x58] sm:$0xff]
      %v342 = vld [vmem:[%s2 + $0x60] sm:$0xff]
      %v343 = vld [vmem:[%s2 + $0x68] sm:$0xff]
      %v344 = vld [vmem:[%s2 + $0x70] sm:$0xff]
      %v345 = vld [vmem:[%s2 + $0x78] sm:$0xff]
      %v346 = vld [vmem:[%s2 + $0x80] sm:$0xff]
      %v347 = vld [vmem:[%s2 + $0x88] sm:$0xff]
      %v348 = vld [vmem:[%s2 + $0x90] sm:$0xff]
      %v349 = vld [vmem:[%s2 + $0x98] sm:$0xff]
      %v350 = vld [vmem:[%s2 + $0xa0] sm:$0xff]
      %v351 = vld [vmem:[%s2 + $0xa8] sm:$0xff]
      %v352 = vld [vmem:[%s2 + $0xb0] sm:$0xff]
      %v353 = vld [vmem:[%s2 + $0xb8] sm:$0xff]
      %v354 = vld [vmem:[%s2 + $0xc0] sm:$0xff]
      %v355 = vld [vmem:[%s2 + $0xc8] sm:$0xff]
      %v356 = vld [vmem:[%s2 + $0xd0] sm:$0xff]
      %v357 = vld [vmem:[%s2 + $0xd8] sm:$0xff]
      %v358 = vld [vmem:[%s2 + $0xe0] sm:$0xff]
      %v359 = vld [vmem:[%s2 + $0xe8] sm:$0xff]
      %v360 = vld [vmem:[%s2 + $0xf0] sm:$0xff]
      %v361 = vld [vmem:[%s2 + $0xf8] sm:$0xff]
      %v362 = vld [vmem:[%s2 + $0x100] sm:$0xff]
      %v363 = vld [vmem:[%s2 + $0x108] sm:$0xff]
      %v364 = vld [vmem:[%s2 + $0x110] sm:$0xff]
      %v365 = vld [vmem:[%s2 + $0x118] sm:$0xff]
      %v366 = vld [vmem:[%s2 + $0x120] sm:$0xff]
      %v367 = vld [vmem:[%s2 + $0x128] sm:$0xff]
      %v368 = vld [vmem:[%s2 + $0x130] sm:$0xff]
      %v369 = vld [vmem:[%s2 + $0x138] sm:$0xff]
      %v370 = vld [vmem:[%s2 + $0x140] sm:$0xff]
      %v371 = vld [vmem:[%s2 + $0x148] sm:$0xff]
      %v372 = vld [vmem:[%s2 + $0x150] sm:$0xff]
      %v373 = vld [vmem:[%s2 + $0x158] sm:$0xff]
      %v374 = vld [vmem:[%s2 + $0x160] sm:$0xff]
      %v375 = vld [vmem:[%s2 + $0x168] sm:$0xff]
      %v376 = vld [vmem:[%s2 + $0x170] sm:$0xff]
      %v377 = vld [vmem:[%s2 + $0x178] sm:$0xff]
      %v378 = vld [vmem:[%s2 + $0x180] sm:$0xff]
      %v379 = vld [vmem:[%s2 + $0x188] sm:$0xff]
      %v380 = vld [vmem:[%s2 + $0x190] sm:$0xff]
      %v381 = vld [vmem:[%s2 + $0x198] sm:$0xff]
      %v382 = vld [vmem:[%s2 + $0x1a0] sm:$0xff]
      %v383 = vld [vmem:[%s2 + $0x1a8] sm:$0xff]
      %v384 = vld [vmem:[%s2 + $0x1b0] sm:$0xff]
      %v385 = vld [vmem:[%s2 + $0x1b8] sm:$0xff]
      %v386 = vld [vmem:[%s2 + $0x1c0] sm:$0xff]
      %v387 = vld [vmem:[%s2 + $0x1c8] sm:$0xff]
      %v388 = vld [vmem:[%s2 + $0x1d0] sm:$0xff]
      %v389 = vld [vmem:[%s2 + $0x1d8] sm:$0xff]
      %v390 = vld [vmem:[%s2 + $0x1e0] sm:$0xff]
      %v391 = vld [vmem:[%s2 + $0x1e8] sm:$0xff]
      %v392 = vld [vmem:[%s2 + $0x1f0] sm:$0xff]
      %v393 = vld [vmem:[%s2 + $0x1f8] sm:$0xff]
      %v394 = vand.u32 %v331, 4294901760
      %395 = vmatprep.subr.mxu0 %v394
      %v396 = vand.u32 %v330, 4294901760
      %397 = vmatpush1.msra.mxu0 %v396
      %v398 = vand.u32 %v335, 4294901760
      %399 = vmatprep.subr.mxu0 %v398
      %v400 = vand.u32 %v334, 4294901760
      %401 = vmatpush1.msra.mxu0 %v400
      %v402 = vand.u32 %v339, 4294901760
      %403 = vmatprep.subr.mxu0 %v402
      %v404 = vand.u32 %v338, 4294901760
      %405 = vmatpush1.msra.mxu0 %v404
      %v406 = vand.u32 %v343, 4294901760
      %407 = vmatprep.subr.mxu0 %v406
      %v408 = vand.u32 %v342, 4294901760
      %409 = vmatpush1.msra.mxu0 %v408
      %v410 = vand.u32 %v347, 4294901760
      %411 = vmatprep.subr.mxu0 %v410
      %v412 = vand.u32 %v346, 4294901760
      %413 = vmatpush1.msra.mxu0 %v412
      %v414 = vand.u32 %v351, 4294901760
      %415 = vmatprep.subr.mxu0 %v414
      %v416 = vand.u32 %v350, 4294901760
      %417 = vmatpush1.msra.mxu0 %v416
      %v418 = vand.u32 %v355, 4294901760
      %419 = vmatprep.subr.mxu0 %v418
      %v420 = vand.u32 %v354, 4294901760
      %421 = vmatpush1.msra.mxu0 %v420
      %v422 = vand.u32 %v359, 4294901760
      %423 = vmatprep.subr.mxu0 %v422
      %v424 = vand.u32 %v358, 4294901760
      %425 = vmatpush1.msra.mxu0 %v424
      %v426 = vand.u32 %v363, 4294901760
      %427 = vmatprep.subr.mxu0 %v426
      %v428 = vand.u32 %v362, 4294901760
      %429 = vmatpush1.msra.mxu0 %v428
      %v430 = vand.u32 %v367, 4294901760
      %431 = vmatprep.subr.mxu0 %v430
      %v432 = vand.u32 %v366, 4294901760
      %433 = vmatpush1.msra.mxu0 %v432
      %v434 = vand.u32 %v371, 4294901760
      %435 = vmatprep.subr.mxu0 %v434
      %v436 = vand.u32 %v370, 4294901760
      %437 = vmatpush1.msra.mxu0 %v436
      %v438 = vand.u32 %v375, 4294901760
      %439 = vmatprep.subr.mxu0 %v438
      %v440 = vand.u32 %v374, 4294901760
      %441 = vmatpush1.msra.mxu0 %v440
      %v442 = vand.u32 %v379, 4294901760
      %443 = vmatprep.subr.mxu0 %v442
      %v444 = vand.u32 %v378, 4294901760
      %445 = vmatpush1.msra.mxu0 %v444
      %v446 = vand.u32 %v383, 4294901760
      %447 = vmatprep.subr.mxu0 %v446
      %v448 = vand.u32 %v382, 4294901760
      %449 = vmatpush1.msra.mxu0 %v448
      %v450 = vand.u32 %v387, 4294901760
      %451 = vmatprep.subr.mxu0 %v450
      %v452 = vand.u32 %v386, 4294901760
      %453 = vmatpush1.msra.mxu0 %v452
      %v454 = vand.u32 %v391, 4294901760
      %455 = vmatprep.subr.mxu0 %v454
      %v456 = vand.u32 %v390, 4294901760
      %457 = vmatpush1.msra.mxu0 %v456
      %458 = vmatprep.subr.mxu0 0.0
      %459 = vmatpush1.msra.mxu0 0.0
      %460 = vmatprep.subr.mxu0 0.0
      %461 = vmatpush1.msra.mxu0 0.0
      %462 = vmatprep.subr.mxu0 0.0
      %463 = vmatpush1.msra.mxu0 0.0
      %464 = vmatprep.subr.mxu0 0.0
      %465 = vmatpush1.msra.mxu0 0.0
      %466 = vmatprep.subr.mxu0 0.0
      %467 = vmatpush1.msra.mxu0 0.0
      %468 = vmatprep.subr.mxu0 0.0
      %469 = vmatpush1.msra.mxu0 0.0
      %470 = vmatprep.subr.mxu0 0.0
      %471 = vmatpush1.msra.mxu0 0.0
      %472 = vmatprep.subr.mxu0 0.0
      %473 = vmatpush1.msra.mxu0 0.0
      %474 = vmatprep.subr.mxu0 0.0
      %475 = vmatpush1.msra.mxu0 0.0
      %476 = vmatprep.subr.mxu0 0.0
      %477 = vmatpush1.msra.mxu0 0.0
      %478 = vmatprep.subr.mxu0 0.0
      %479 = vmatpush1.msra.mxu0 0.0
      %480 = vmatprep.subr.mxu0 0.0
      %481 = vmatpush1.msra.mxu0 0.0
      %482 = vmatprep.subr.mxu0 0.0
      %483 = vmatpush1.msra.mxu0 0.0
      %484 = vmatprep.subr.mxu0 0.0
      %485 = vmatpush1.msra.mxu0 0.0
      %486 = vmatprep.subr.mxu0 0.0
      %487 = vmatpush1.msra.mxu0 0.0
      %488 = vmatprep.subr.mxu0 0.0
      %489 = vmatpush1.msra.mxu0 0.0
      %490 = vmatprep.mubr.f32.mxu0 0.0
      %v491 = vand.u32 %v312, 4294901760
      %v492 = vsub.f32 %v312, %v491
      %v493 = vand.u32 %v492, 4294901760
      %v494 = vsub.f32 %v492, %v493
      %v495 = vand.u32 %v494, 4294901760
      %496 = vmatmul.mubr.f32.gmra.mrb[0].mxu0 %v495
      %v497 = vpop.f32.mrb[0].mxu0
      %v498 = vadd.f32 0.0, %v497
      %v499 = vpop.f32.mrb[0].mxu0
      %v500 = vadd.f32 0.0, %v499
      %501 = vmatprep.mubr.f32.mxu0 0.0
      %v502 = vand.u32 %v313, 4294901760
      %v503 = vsub.f32 %v313, %v502
      %v504 = vand.u32 %v503, 4294901760
      %v505 = vsub.f32 %v503, %v504
      %v506 = vand.u32 %v505, 4294901760
      %507 = vmatmul.mubr.f32.gmra.mrb[0].mxu0 %v506
      %v508 = vpop.f32.mrb[0].mxu0
      %v509 = vadd.f32 0.0, %v508
      %v510 = vpop.f32.mrb[0].mxu0
      %v511 = vadd.f32 0.0, %v510
      %512 = vdwg.mxu0
      %v513 = vand.u32 %v331, 4294901760
      %v514 = vsub.f32 %v331, %v513
      %v515 = vand.u32 %v514, 4294901760
      %v516 = vsub.f32 %v514, %v515
      %v517 = vand.u32 %v516, 4294901760
      %518 = vmatprep.subr.mxu0 %v517
      %v519 = vand.u32 %v330, 4294901760
      %v520 = vsub.f32 %v330, %v519
      %v521 = vand.u32 %v520, 4294901760
      %v522 = vsub.f32 %v520, %v521
      %v523 = vand.u32 %v522, 4294901760
      %524 = vmatpush1.msra.mxu0 %v523
      %v525 = vand.u32 %v335, 4294901760
      %v526 = vsub.f32 %v335, %v525
      %v527 = vand.u32 %v526, 4294901760
      %v528 = vsub.f32 %v526, %v527
      %v529 = vand.u32 %v528, 4294901760
      %530 = vmatprep.subr.mxu0 %v529
      %v531 = vand.u32 %v334, 4294901760
      %v532 = vsub.f32 %v334, %v531
      %v533 = vand.u32 %v532, 4294901760
      %v534 = vsub.f32 %v532, %v533
      %v535 = vand.u32 %v534, 4294901760
      %536 = vmatpush1.msra.mxu0 %v535
      %v537 = vand.u32 %v339, 4294901760
      %v538 = vsub.f32 %v339, %v537
      %v539 = vand.u32 %v538, 4294901760
      %v540 = vsub.f32 %v538, %v539
      %v541 = vand.u32 %v540, 4294901760
      %542 = vmatprep.subr.mxu0 %v541
      %v543 = vand.u32 %v338, 4294901760
      %v544 = vsub.f32 %v338, %v543
      %v545 = vand.u32 %v544, 4294901760
      %v546 = vsub.f32 %v544, %v545
      %v547 = vand.u32 %v546, 4294901760
      %548 = vmatpush1.msra.mxu0 %v547
      %v549 = vand.u32 %v343, 4294901760
      %v550 = vsub.f32 %v343, %v549
      %v551 = vand.u32 %v550, 4294901760
      %v552 = vsub.f32 %v550, %v551
      %v553 = vand.u32 %v552, 4294901760
      %554 = vmatprep.subr.mxu0 %v553
      %v555 = vand.u32 %v342, 4294901760
      %v556 = vsub.f32 %v342, %v555
      %v557 = vand.u32 %v556, 4294901760
      %v558 = vsub.f32 %v556, %v557
      %v559 = vand.u32 %v558, 4294901760
      %560 = vmatpush1.msra.mxu0 %v559
      %v561 = vand.u32 %v347, 4294901760
      %v562 = vsub.f32 %v347, %v561
      %v563 = vand.u32 %v562, 4294901760
      %v564 = vsub.f32 %v562, %v563
      %v565 = vand.u32 %v564, 4294901760
      %566 = vmatprep.subr.mxu0 %v565
      %v567 = vand.u32 %v346, 4294901760
      %v568 = vsub.f32 %v346, %v567
      %v569 = vand.u32 %v568, 4294901760
      %v570 = vsub.f32 %v568, %v569
      %v571 = vand.u32 %v570, 4294901760
      %572 = vmatpush1.msra.mxu0 %v571
      %v573 = vand.u32 %v351, 4294901760
      %v574 = vsub.f32 %v351, %v573
      %v575 = vand.u32 %v574, 4294901760
      %v576 = vsub.f32 %v574, %v575
      %v577 = vand.u32 %v576, 4294901760
      %578 = vmatprep.subr.mxu0 %v577
      %v579 = vand.u32 %v350, 4294901760
      %v580 = vsub.f32 %v350, %v579
      %v581 = vand.u32 %v580, 4294901760
      %v582 = vsub.f32 %v580, %v581
      %v583 = vand.u32 %v582, 4294901760
      %584 = vmatpush1.msra.mxu0 %v583
      %v585 = vand.u32 %v355, 4294901760
      %v586 = vsub.f32 %v355, %v585
      %v587 = vand.u32 %v586, 4294901760
      %v588 = vsub.f32 %v586, %v587
      %v589 = vand.u32 %v588, 4294901760
      %590 = vmatprep.subr.mxu0 %v589
      %v591 = vand.u32 %v354, 4294901760
      %v592 = vsub.f32 %v354, %v591
      %v593 = vand.u32 %v592, 4294901760
      %v594 = vsub.f32 %v592, %v593
      %v595 = vand.u32 %v594, 4294901760
      %596 = vmatpush1.msra.mxu0 %v595
      %v597 = vand.u32 %v359, 4294901760
      %v598 = vsub.f32 %v359, %v597
      %v599 = vand.u32 %v598, 4294901760
      %v600 = vsub.f32 %v598, %v599
      %v601 = vand.u32 %v600, 4294901760
      %602 = vmatprep.subr.mxu0 %v601
      %v603 = vand.u32 %v358, 4294901760
      %v604 = vsub.f32 %v358, %v603
      %v605 = vand.u32 %v604, 4294901760
      %v606 = vsub.f32 %v604, %v605
      %v607 = vand.u32 %v606, 4294901760
      %608 = vmatpush1.msra.mxu0 %v607
      %v609 = vand.u32 %v363, 4294901760
      %v610 = vsub.f32 %v363, %v609
      %v611 = vand.u32 %v610, 4294901760
      %v612 = vsub.f32 %v610, %v611
      %v613 = vand.u32 %v612, 4294901760
      %614 = vmatprep.subr.mxu0 %v613
      %v615 = vand.u32 %v362, 4294901760
      %v616 = vsub.f32 %v362, %v615
      %v617 = vand.u32 %v616, 4294901760
      %v618 = vsub.f32 %v616, %v617
      %v619 = vand.u32 %v618, 4294901760
      %620 = vmatpush1.msra.mxu0 %v619
      %v621 = vand.u32 %v367, 4294901760
      %v622 = vsub.f32 %v367, %v621
      %v623 = vand.u32 %v622, 4294901760
      %v624 = vsub.f32 %v622, %v623
      %v625 = vand.u32 %v624, 4294901760
      %626 = vmatprep.subr.mxu0 %v625
      %v627 = vand.u32 %v366, 4294901760
      %v628 = vsub.f32 %v366, %v627
      %v629 = vand.u32 %v628, 4294901760
      %v630 = vsub.f32 %v628, %v629
      %v631 = vand.u32 %v630, 4294901760
      %632 = vmatpush1.msra.mxu0 %v631
      %v633 = vand.u32 %v371, 4294901760
      %v634 = vsub.f32 %v371, %v633
      %v635 = vand.u32 %v634, 4294901760
      %v636 = vsub.f32 %v634, %v635
      %v637 = vand.u32 %v636, 4294901760
      %638 = vmatprep.subr.mxu0 %v637
      %v639 = vand.u32 %v370, 4294901760
      %v640 = vsub.f32 %v370, %v639
      %v641 = vand.u32 %v640, 4294901760
      %v642 = vsub.f32 %v640, %v641
      %v643 = vand.u32 %v642, 4294901760
      %644 = vmatpush1.msra.mxu0 %v643
      %v645 = vand.u32 %v375, 4294901760
      %v646 = vsub.f32 %v375, %v645
      %v647 = vand.u32 %v646, 4294901760
      %v648 = vsub.f32 %v646, %v647
      %v649 = vand.u32 %v648, 4294901760
      %650 = vmatprep.subr.mxu0 %v649
      %v651 = vand.u32 %v374, 4294901760
      %v652 = vsub.f32 %v374, %v651
      %v653 = vand.u32 %v652, 4294901760
      %v654 = vsub.f32 %v652, %v653
      %v655 = vand.u32 %v654, 4294901760
      %656 = vmatpush1.msra.mxu0 %v655
      %v657 = vand.u32 %v379, 4294901760
      %v658 = vsub.f32 %v379, %v657
      %v659 = vand.u32 %v658, 4294901760
      %v660 = vsub.f32 %v658, %v659
      %v661 = vand.u32 %v660, 4294901760
      %662 = vmatprep.subr.mxu0 %v661
      %v663 = vand.u32 %v378, 4294901760
      %v664 = vsub.f32 %v378, %v663
      %v665 = vand.u32 %v664, 4294901760
      %v666 = vsub.f32 %v664, %v665
      %v667 = vand.u32 %v666, 4294901760
      %668 = vmatpush1.msra.mxu0 %v667
      %v669 = vand.u32 %v383, 4294901760
      %v670 = vsub.f32 %v383, %v669
      %v671 = vand.u32 %v670, 4294901760
      %v672 = vsub.f32 %v670, %v671
      %v673 = vand.u32 %v672, 4294901760
      %674 = vmatprep.subr.mxu0 %v673
      %v675 = vand.u32 %v382, 4294901760
      %v676 = vsub.f32 %v382, %v675
      %v677 = vand.u32 %v676, 4294901760
      %v678 = vsub.f32 %v676, %v677
      %v679 = vand.u32 %v678, 4294901760
      %680 = vmatpush1.msra.mxu0 %v679
      %v681 = vand.u32 %v387, 4294901760
      %v682 = vsub.f32 %v387, %v681
      %v683 = vand.u32 %v682, 4294901760
      %v684 = vsub.f32 %v682, %v683
      %v685 = vand.u32 %v684, 4294901760
      %686 = vmatprep.subr.mxu0 %v685
      %v687 = vand.u32 %v386, 4294901760
      %v688 = vsub.f32 %v386, %v687
      %v689 = vand.u32 %v688, 4294901760
      %v690 = vsub.f32 %v688, %v689
      %v691 = vand.u32 %v690, 4294901760
      %692 = vmatpush1.msra.mxu0 %v691
      %v693 = vand.u32 %v391, 4294901760
      %v694 = vsub.f32 %v391, %v693
      %v695 = vand.u32 %v694, 4294901760
      %v696 = vsub.f32 %v694, %v695
      %v697 = vand.u32 %v696, 4294901760
      %698 = vmatprep.subr.mxu0 %v697
      %v699 = vand.u32 %v390, 4294901760
      %v700 = vsub.f32 %v390, %v699
      %v701 = vand.u32 %v700, 4294901760
      %v702 = vsub.f32 %v700, %v701
      %v703 = vand.u32 %v702, 4294901760
      %704 = vmatpush1.msra.mxu0 %v703
      %705 = vmatprep.subr.mxu0 0.0
      %706 = vmatpush1.msra.mxu0 0.0
      %707 = vmatprep.subr.mxu0 0.0
      %708 = vmatpush1.msra.mxu0 0.0
      %709 = vmatprep.subr.mxu0 0.0
      %710 = vmatpush1.msra.mxu0 0.0
      %711 = vmatprep.subr.mxu0 0.0
      %712 = vmatpush1.msra.mxu0 0.0
      %713 = vmatprep.subr.mxu0 0.0
      %714 = vmatpush1.msra.mxu0 0.0
      %715 = vmatprep.subr.mxu0 0.0
      %716 = vmatpush1.msra.mxu0 0.0
      %717 = vmatprep.subr.mxu0 0.0
      %718 = vmatpush1.msra.mxu0 0.0
      %719 = vmatprep.subr.mxu0 0.0
      %720 = vmatpush1.msra.mxu0 0.0
      %721 = vmatprep.subr.mxu0 0.0
      %722 = vmatpush1.msra.mxu0 0.0
      %723 = vmatprep.subr.mxu0 0.0
      %724 = vmatpush1.msra.mxu0 0.0
      %725 = vmatprep.subr.mxu0 0.0
      %726 = vmatpush1.msra.mxu0 0.0
      %727 = vmatprep.subr.mxu0 0.0
      %728 = vmatpush1.msra.mxu0 0.0
      %729 = vmatprep.subr.mxu0 0.0
      %730 = vmatpush1.msra.mxu0 0.0
      %731 = vmatprep.subr.mxu0 0.0
      %732 = vmatpush1.msra.mxu0 0.0
      %733 = vmatprep.subr.mxu0 0.0
      %734 = vmatpush1.msra.mxu0 0.0
      %735 = vmatprep.subr.mxu0 0.0
      %736 = vmatpush1.msra.mxu0 0.0
      %737 = vmatprep.mubr.f32.mxu0 0.0
      %v738 = vand.u32 %v312, 4294901760
      %739 = vmatmul.mubr.f32.gmra.mrb[0].mxu0 %v738
      %v740 = vpop.f32.mrb[0].mxu0
      %v741 = vadd.f32 %v498, %v740
      %v742 = vpop.f32.mrb[0].mxu0
      %v743 = vadd.f32 %v500, %v742
      %744 = vmatprep.mubr.f32.mxu0 0.0
      %v745 = vand.u32 %v313, 4294901760
      %746 = vmatmul.mubr.f32.gmra.mrb[0].mxu0 %v745
      %v747 = vpop.f32.mrb[0].mxu0
      %v748 = vadd.f32 %v509, %v747
      %v749 = vpop.f32.mrb[0].mxu0
      %v750 = vadd.f32 %v511, %v749
      %751 = vdwg.mxu0
      %v752 = vand.u32 %v331, 4294901760
      %v753 = vsub.f32 %v331, %v752
      %754 = vmatprep.subr.mxu0 %v753
      %v755 = vand.u32 %v330, 4294901760
      %v756 = vsub.f32 %v330, %v755
      %757 = vmatpush1.msra.mxu0 %v756
      %v758 = vand.u32 %v335, 4294901760
      %v759 = vsub.f32 %v335, %v758
      %760 = vmatprep.subr.mxu0 %v759
      %v761 = vand.u32 %v334, 4294901760
      %v762 = vsub.f32 %v334, %v761
      %763 = vmatpush1.msra.mxu0 %v762
      %v764 = vand.u32 %v339, 4294901760
      %v765 = vsub.f32 %v339, %v764
      %766 = vmatprep.subr.mxu0 %v765
      %v767 = vand.u32 %v338, 4294901760
      %v768 = vsub.f32 %v338, %v767
      %769 = vmatpush1.msra.mxu0 %v768
      %v770 = vand.u32 %v343, 4294901760
      %v771 = vsub.f32 %v343, %v770
      %772 = vmatprep.subr.mxu0 %v771
      %v773 = vand.u32 %v342, 4294901760
      %v774 = vsub.f32 %v342, %v773
      %775 = vmatpush1.msra.mxu0 %v774
      %v776 = vand.u32 %v347, 4294901760
      %v777 = vsub.f32 %v347, %v776
      %778 = vmatprep.subr.mxu0 %v777
      %v779 = vand.u32 %v346, 4294901760
      %v780 = vsub.f32 %v346, %v779
      %781 = vmatpush1.msra.mxu0 %v780
      %v782 = vand.u32 %v351, 4294901760
      %v783 = vsub.f32 %v351, %v782
      %784 = vmatprep.subr.mxu0 %v783
      %v785 = vand.u32 %v350, 4294901760
      %v786 = vsub.f32 %v350, %v785
      %787 = vmatpush1.msra.mxu0 %v786
      %v788 = vand.u32 %v355, 4294901760
      %v789 = vsub.f32 %v355, %v788
      %790 = vmatprep.subr.mxu0 %v789
      %v791 = vand.u32 %v354, 4294901760
      %v792 = vsub.f32 %v354, %v791
      %793 = vmatpush1.msra.mxu0 %v792
      %v794 = vand.u32 %v359, 4294901760
      %v795 = vsub.f32 %v359, %v794
      %796 = vmatprep.subr.mxu0 %v795
      %v797 = vand.u32 %v358, 4294901760
      %v798 = vsub.f32 %v358, %v797
      %799 = vmatpush1.msra.mxu0 %v798
      %v800 = vand.u32 %v363, 4294901760
      %v801 = vsub.f32 %v363, %v800
      %802 = vmatprep.subr.mxu0 %v801
      %v803 = vand.u32 %v362, 4294901760
      %v804 = vsub.f32 %v362, %v803
      %805 = vmatpush1.msra.mxu0 %v804
      %v806 = vand.u32 %v367, 4294901760
      %v807 = vsub.f32 %v367, %v806
      %808 = vmatprep.subr.mxu0 %v807
      %v809 = vand.u32 %v366, 4294901760
      %v810 = vsub.f32 %v366, %v809
      %811 = vmatpush1.msra.mxu0 %v810
      %v812 = vand.u32 %v371, 4294901760
      %v813 = vsub.f32 %v371, %v812
      %814 = vmatprep.subr.mxu0 %v813
      %v815 = vand.u32 %v370, 4294901760
      %v816 = vsub.f32 %v370, %v815
      %817 = vmatpush1.msra.mxu0 %v816
      %v818 = vand.u32 %v375, 4294901760
      %v819 = vsub.f32 %v375, %v818
      %820 = vmatprep.subr.mxu0 %v819
      %v821 = vand.u32 %v374, 4294901760
      %v822 = vsub.f32 %v374, %v821
      %823 = vmatpush1.msra.mxu0 %v822
      %v824 = vand.u32 %v379, 4294901760
      %v825 = vsub.f32 %v379, %v824
      %826 = vmatprep.subr.mxu0 %v825
      %v827 = vand.u32 %v378, 4294901760
      %v828 = vsub.f32 %v378, %v827
      %829 = vmatpush1.msra.mxu0 %v828
      %v830 = vand.u32 %v383, 4294901760
      %v831 = vsub.f32 %v383, %v830
      %832 = vmatprep.subr.mxu0 %v831
      %v833 = vand.u32 %v382, 4294901760
      %v834 = vsub.f32 %v382, %v833
      %835 = vmatpush1.msra.mxu0 %v834
      %v836 = vand.u32 %v387, 4294901760
      %v837 = vsub.f32 %v387, %v836
      %838 = vmatprep.subr.mxu0 %v837
      %v839 = vand.u32 %v386, 4294901760
      %v840 = vsub.f32 %v386, %v839
      %841 = vmatpush1.msra.mxu0 %v840
      %v842 = vand.u32 %v391, 4294901760
      %v843 = vsub.f32 %v391, %v842
      %844 = vmatprep.subr.mxu0 %v843
      %v845 = vand.u32 %v390, 4294901760
      %v846 = vsub.f32 %v390, %v845
      %847 = vmatpush1.msra.mxu0 %v846
      %848 = vmatprep.subr.mxu0 0.0
      %849 = vmatpush1.msra.mxu0 0.0
      %850 = vmatprep.subr.mxu0 0.0
      %851 = vmatpush1.msra.mxu0 0.0
      %852 = vmatprep.subr.mxu0 0.0
      %853 = vmatpush1.msra.mxu0 0.0
      %854 = vmatprep.subr.mxu0 0.0
      %855 = vmatpush1.msra.mxu0 0.0
      %856 = vmatprep.subr.mxu0 0.0
      %857 = vmatpush1.msra.mxu0 0.0
      %858 = vmatprep.subr.mxu0 0.0
      %859 = vmatpush1.msra.mxu0 0.0
      %860 = vmatprep.subr.mxu0 0.0
      %861 = vmatpush1.msra.mxu0 0.0
      %862 = vmatprep.subr.mxu0 0.0
      %863 = vmatpush1.msra.mxu0 0.0
      %864 = vmatprep.subr.mxu0 0.0
      %865 = vmatpush1.msra.mxu0 0.0
      %866 = vmatprep.subr.mxu0 0.0
      %867 = vmatpush1.msra.mxu0 0.0
      %868 = vmatprep.subr.mxu0 0.0
      %869 = vmatpush1.msra.mxu0 0.0
      %870 = vmatprep.subr.mxu0 0.0
      %871 = vmatpush1.msra.mxu0 0.0
      %872 = vmatprep.subr.mxu0 0.0
      %873 = vmatpush1.msra.mxu0 0.0
      %874 = vmatprep.subr.mxu0 0.0
      %875 = vmatpush1.msra.mxu0 0.0
      %876 = vmatprep.subr.mxu0 0.0
      %877 = vmatpush1.msra.mxu0 0.0
      %878 = vmatprep.subr.mxu0 0.0
      %879 = vmatpush1.msra.mxu0 0.0
      %880 = vmatprep.mubr.f32.mxu0 0.0
      %v881 = vand.u32 %v312, 4294901760
      %v882 = vsub.f32 %v312, %v881
      %883 = vmatmul.mubr.f32.gmra.mrb[0].mxu0 %v882
      %v884 = vpop.f32.mrb[0].mxu0
      %v885 = vadd.f32 %v741, %v884
      %v886 = vpop.f32.mrb[0].mxu0
      %v887 = vadd.f32 %v743, %v886
      %888 = vmatprep.mubr.f32.mxu0 0.0
      %v889 = vand.u32 %v313, 4294901760
      %v890 = vsub.f32 %v313, %v889
      %891 = vmatmul.mubr.f32.gmra.mrb[0].mxu0 %v890
      %v892 = vpop.f32.mrb[0].mxu0
      %v893 = vadd.f32 %v748, %v892
      %v894 = vpop.f32.mrb[0].mxu0
      %v895 = vadd.f32 %v750, %v894
      %896 = vdwg.mxu0
      %v897 = vand.u32 %v331, 4294901760
      %898 = vmatprep.subr.mxu0 %v897
      %v899 = vand.u32 %v330, 4294901760
      %900 = vmatpush1.msra.mxu0 %v899
      %v901 = vand.u32 %v335, 4294901760
      %902 = vmatprep.subr.mxu0 %v901
      %v903 = vand.u32 %v334, 4294901760
      %904 = vmatpush1.msra.mxu0 %v903
      %v905 = vand.u32 %v339, 4294901760
      %906 = vmatprep.subr.mxu0 %v905
      %v907 = vand.u32 %v338, 4294901760
      %908 = vmatpush1.msra.mxu0 %v907
      %v909 = vand.u32 %v343, 4294901760
      %910 = vmatprep.subr.mxu0 %v909
      %v911 = vand.u32 %v342, 4294901760
      %912 = vmatpush1.msra.mxu0 %v911
      %v913 = vand.u32 %v347, 4294901760
      %914 = vmatprep.subr.mxu0 %v913
      %v915 = vand.u32 %v346, 4294901760
      %916 = vmatpush1.msra.mxu0 %v915
      %v917 = vand.u32 %v351, 4294901760
      %918 = vmatprep.subr.mxu0 %v917
      %v919 = vand.u32 %v350, 4294901760
      %920 = vmatpush1.msra.mxu0 %v919
      %v921 = vand.u32 %v355, 4294901760
      %922 = vmatprep.subr.mxu0 %v921
      %v923 = vand.u32 %v354, 4294901760
      %924 = vmatpush1.msra.mxu0 %v923
      %v925 = vand.u32 %v359, 4294901760
      %926 = vmatprep.subr.mxu0 %v925
      %v927 = vand.u32 %v358, 4294901760
      %928 = vmatpush1.msra.mxu0 %v927
      %v929 = vand.u32 %v363, 4294901760
      %930 = vmatprep.subr.mxu0 %v929
      %v931 = vand.u32 %v362, 4294901760
      %932 = vmatpush1.msra.mxu0 %v931
      %v933 = vand.u32 %v367, 4294901760
      %934 = vmatprep.subr.mxu0 %v933
      %v935 = vand.u32 %v366, 4294901760
      %936 = vmatpush1.msra.mxu0 %v935
      %v937 = vand.u32 %v371, 4294901760
      %938 = vmatprep.subr.mxu0 %v937
      %v939 = vand.u32 %v370, 4294901760
      %940 = vmatpush1.msra.mxu0 %v939
      %v941 = vand.u32 %v375, 4294901760
      %942 = vmatprep.subr.mxu0 %v941
      %v943 = vand.u32 %v374, 4294901760
      %944 = vmatpush1.msra.mxu0 %v943
      %v945 = vand.u32 %v379, 4294901760
      %946 = vmatprep.subr.mxu0 %v945
      %v947 = vand.u32 %v378, 4294901760
      %948 = vmatpush1.msra.mxu0 %v947
      %v949 = vand.u32 %v383, 4294901760
      %950 = vmatprep.subr.mxu0 %v949
      %v951 = vand.u32 %v382, 4294901760
      %952 = vmatpush1.msra.mxu0 %v951
      %v953 = vand.u32 %v387, 4294901760
      %954 = vmatprep.subr.mxu0 %v953
      %v955 = vand.u32 %v386, 4294901760
      %956 = vmatpush1.msra.mxu0 %v955
      %v957 = vand.u32 %v391, 4294901760
      %958 = vmatprep.subr.mxu0 %v957
      %v959 = vand.u32 %v390, 4294901760
      %960 = vmatpush1.msra.mxu0 %v959
      %961 = vmatprep.subr.mxu0 0.0
      %962 = vmatpush1.msra.mxu0 0.0
      %963 = vmatprep.subr.mxu0 0.0
      %964 = vmatpush1.msra.mxu0 0.0
      %965 = vmatprep.subr.mxu0 0.0
      %966 = vmatpush1.msra.mxu0 0.0
      %967 = vmatprep.subr.mxu0 0.0
      %968 = vmatpush1.msra.mxu0 0.0
      %969 = vmatprep.subr.mxu0 0.0
      %970 = vmatpush1.msra.mxu0 0.0
      %971 = vmatprep.subr.mxu0 0.0
      %972 = vmatpush1.msra.mxu0 0.0
      %973 = vmatprep.subr.mxu0 0.0
      %974 = vmatpush1.msra.mxu0 0.0
      %975 = vmatprep.subr.mxu0 0.0
      %976 = vmatpush1.msra.mxu0 0.0
      %977 = vmatprep.subr.mxu0 0.0
      %978 = vmatpush1.msra.mxu0 0.0
      %979 = vmatprep.subr.mxu0 0.0
      %980 = vmatpush1.msra.mxu0 0.0
      %981 = vmatprep.subr.mxu0 0.0
      %982 = vmatpush1.msra.mxu0 0.0
      %983 = vmatprep.subr.mxu0 0.0
      %984 = vmatpush1.msra.mxu0 0.0
      %985 = vmatprep.subr.mxu0 0.0
      %986 = vmatpush1.msra.mxu0 0.0
      %987 = vmatprep.subr.mxu0 0.0
      %988 = vmatpush1.msra.mxu0 0.0
      %989 = vmatprep.subr.mxu0 0.0
      %990 = vmatpush1.msra.mxu0 0.0
      %991 = vmatprep.subr.mxu0 0.0
      %992 = vmatpush1.msra.mxu0 0.0
      %993 = vmatprep.mubr.f32.mxu0 0.0
      %v994 = vand.u32 %v312, 4294901760
      %v995 = vsub.f32 %v312, %v994
      %v996 = vand.u32 %v995, 4294901760
      %997 = vmatmul.mubr.f32.gmra.mrb[0].mxu0 %v996
      %v998 = vpop.f32.mrb[0].mxu0
      %v999 = vadd.f32 %v885, %v998
      %v1000 = vpop.f32.mrb[0].mxu0
      %v1001 = vadd.f32 %v887, %v1000
      %1002 = vmatprep.mubr.f32.mxu0 0.0
      %v1003 = vand.u32 %v313, 4294901760
      %v1004 = vsub.f32 %v313, %v1003
      %v1005 = vand.u32 %v1004, 4294901760
      %1006 = vmatmul.mubr.f32.gmra.mrb[0].mxu0 %v1005
      %v1007 = vpop.f32.mrb[0].mxu0
      %v1008 = vadd.f32 %v893, %v1007
      %v1009 = vpop.f32.mrb[0].mxu0
      %v1010 = vadd.f32 %v895, %v1009
      %1011 = vdwg.mxu0
      %v1012 = vand.u32 %v331, 4294901760
      %v1013 = vsub.f32 %v331, %v1012
      %v1014 = vand.u32 %v1013, 4294901760
      %1015 = vmatprep.subr.mxu0 %v1014
      %v1016 = vand.u32 %v330, 4294901760
      %v1017 = vsub.f32 %v330, %v1016
      %v1018 = vand.u32 %v1017, 4294901760
      %1019 = vmatpush1.msra.mxu0 %v1018
      %v1020 = vand.u32 %v335, 4294901760
      %v1021 = vsub.f32 %v335, %v1020
      %v1022 = vand.u32 %v1021, 4294901760
      %1023 = vmatprep.subr.mxu0 %v1022
      %v1024 = vand.u32 %v334, 4294901760
      %v1025 = vsub.f32 %v334, %v1024
      %v1026 = vand.u32 %v1025, 4294901760
      %1027 = vmatpush1.msra.mxu0 %v1026
      %v1028 = vand.u32 %v339, 4294901760
      %v1029 = vsub.f32 %v339, %v1028
      %v1030 = vand.u32 %v1029, 4294901760
      %1031 = vmatprep.subr.mxu0 %v1030
      %v1032 = vand.u32 %v338, 4294901760
      %v1033 = vsub.f32 %v338, %v1032
      %v1034 = vand.u32 %v1033, 4294901760
      %1035 = vmatpush1.msra.mxu0 %v1034
      %v1036 = vand.u32 %v343, 4294901760
      %v1037 = vsub.f32 %v343, %v1036
      %v1038 = vand.u32 %v1037, 4294901760
      %1039 = vmatprep.subr.mxu0 %v1038
      %v1040 = vand.u32 %v342, 4294901760
      %v1041 = vsub.f32 %v342, %v1040
      %v1042 = vand.u32 %v1041, 4294901760
      %1043 = vmatpush1.msra.mxu0 %v1042
      %v1044 = vand.u32 %v347, 4294901760
      %v1045 = vsub.f32 %v347, %v1044
      %v1046 = vand.u32 %v1045, 4294901760
      %1047 = vmatprep.subr.mxu0 %v1046
      %v1048 = vand.u32 %v346, 4294901760
      %v1049 = vsub.f32 %v346, %v1048
      %v1050 = vand.u32 %v1049, 4294901760
      %1051 = vmatpush1.msra.mxu0 %v1050
      %v1052 = vand.u32 %v351, 4294901760
      %v1053 = vsub.f32 %v351, %v1052
      %v1054 = vand.u32 %v1053, 4294901760
      %1055 = vmatprep.subr.mxu0 %v1054
      %v1056 = vand.u32 %v350, 4294901760
      %v1057 = vsub.f32 %v350, %v1056
      %v1058 = vand.u32 %v1057, 4294901760
      %1059 = vmatpush1.msra.mxu0 %v1058
      %v1060 = vand.u32 %v355, 4294901760
      %v1061 = vsub.f32 %v355, %v1060
      %v1062 = vand.u32 %v1061, 4294901760
      %1063 = vmatprep.subr.mxu0 %v1062
      %v1064 = vand.u32 %v354, 4294901760
      %v1065 = vsub.f32 %v354, %v1064
      %v1066 = vand.u32 %v1065, 4294901760
      %1067 = vmatpush1.msra.mxu0 %v1066
      %v1068 = vand.u32 %v359, 4294901760
      %v1069 = vsub.f32 %v359, %v1068
      %v1070 = vand.u32 %v1069, 4294901760
      %1071 = vmatprep.subr.mxu0 %v1070
      %v1072 = vand.u32 %v358, 4294901760
      %v1073 = vsub.f32 %v358, %v1072
      %v1074 = vand.u32 %v1073, 4294901760
      %1075 = vmatpush1.msra.mxu0 %v1074
      %v1076 = vand.u32 %v363, 4294901760
      %v1077 = vsub.f32 %v363, %v1076
      %v1078 = vand.u32 %v1077, 4294901760
      %1079 = vmatprep.subr.mxu0 %v1078
      %v1080 = vand.u32 %v362, 4294901760
      %v1081 = vsub.f32 %v362, %v1080
      %v1082 = vand.u32 %v1081, 4294901760
      %1083 = vmatpush1.msra.mxu0 %v1082
      %v1084 = vand.u32 %v367, 4294901760
      %v1085 = vsub.f32 %v367, %v1084
      %v1086 = vand.u32 %v1085, 4294901760
      %1087 = vmatprep.subr.mxu0 %v1086
      %v1088 = vand.u32 %v366, 4294901760
      %v1089 = vsub.f32 %v366, %v1088
      %v1090 = vand.u32 %v1089, 4294901760
      %1091 = vmatpush1.msra.mxu0 %v1090
      %v1092 = vand.u32 %v371, 4294901760
      %v1093 = vsub.f32 %v371, %v1092
      %v1094 = vand.u32 %v1093, 4294901760
      %1095 = vmatprep.subr.mxu0 %v1094
      %v1096 = vand.u32 %v370, 4294901760
      %v1097 = vsub.f32 %v370, %v1096
      %v1098 = vand.u32 %v1097, 4294901760
      %1099 = vmatpush1.msra.mxu0 %v1098
      %v1100 = vand.u32 %v375, 4294901760
      %v1101 = vsub.f32 %v375, %v1100
      %v1102 = vand.u32 %v1101, 4294901760
      %1103 = vmatprep.subr.mxu0 %v1102
      %v1104 = vand.u32 %v374, 4294901760
      %v1105 = vsub.f32 %v374, %v1104
      %v1106 = vand.u32 %v1105, 4294901760
      %1107 = vmatpush1.msra.mxu0 %v1106
      %v1108 = vand.u32 %v379, 4294901760
      %v1109 = vsub.f32 %v379, %v1108
      %v1110 = vand.u32 %v1109, 4294901760
      %1111 = vmatprep.subr.mxu0 %v1110
      %v1112 = vand.u32 %v378, 4294901760
      %v1113 = vsub.f32 %v378, %v1112
      %v1114 = vand.u32 %v1113, 4294901760
      %1115 = vmatpush1.msra.mxu0 %v1114
      %v1116 = vand.u32 %v383, 4294901760
      %v1117 = vsub.f32 %v383, %v1116
      %v1118 = vand.u32 %v1117, 4294901760
      %1119 = vmatprep.subr.mxu0 %v1118
      %v1120 = vand.u32 %v382, 4294901760
      %v1121 = vsub.f32 %v382, %v1120
      %v1122 = vand.u32 %v1121, 4294901760
      %1123 = vmatpush1.msra.mxu0 %v1122
      %v1124 = vand.u32 %v387, 4294901760
      %v1125 = vsub.f32 %v387, %v1124
      %v1126 = vand.u32 %v1125, 4294901760
      %1127 = vmatprep.subr.mxu0 %v1126
      %v1128 = vand.u32 %v386, 4294901760
      %v1129 = vsub.f32 %v386, %v1128
      %v1130 = vand.u32 %v1129, 4294901760
      %1131 = vmatpush1.msra.mxu0 %v1130
      %v1132 = vand.u32 %v391, 4294901760
      %v1133 = vsub.f32 %v391, %v1132
      %v1134 = vand.u32 %v1133, 4294901760
      %1135 = vmatprep.subr.mxu0 %v1134
      %v1136 = vand.u32 %v390, 4294901760
      %v1137 = vsub.f32 %v390, %v1136
      %v1138 = vand.u32 %v1137, 4294901760
      %1139 = vmatpush1.msra.mxu0 %v1138
      %1140 = vmatprep.subr.mxu0 0.0
      %1141 = vmatpush1.msra.mxu0 0.0
      %1142 = vmatprep.subr.mxu0 0.0
      %1143 = vmatpush1.msra.mxu0 0.0
      %1144 = vmatprep.subr.mxu0 0.0
      %1145 = vmatpush1.msra.mxu0 0.0
      %1146 = vmatprep.subr.mxu0 0.0
      %1147 = vmatpush1.msra.mxu0 0.0
      %1148 = vmatprep.subr.mxu0 0.0
      %1149 = vmatpush1.msra.mxu0 0.0
      %1150 = vmatprep.subr.mxu0 0.0
      %1151 = vmatpush1.msra.mxu0 0.0
      %1152 = vmatprep.subr.mxu0 0.0
      %1153 = vmatpush1.msra.mxu0 0.0
      %1154 = vmatprep.subr.mxu0 0.0
      %1155 = vmatpush1.msra.mxu0 0.0
      %1156 = vmatprep.subr.mxu0 0.0
      %1157 = vmatpush1.msra.mxu0 0.0
      %1158 = vmatprep.subr.mxu0 0.0
      %1159 = vmatpush1.msra.mxu0 0.0
      %1160 = vmatprep.subr.mxu0 0.0
      %1161 = vmatpush1.msra.mxu0 0.0
      %1162 = vmatprep.subr.mxu0 0.0
      %1163 = vmatpush1.msra.mxu0 0.0
      %1164 = vmatprep.subr.mxu0 0.0
      %1165 = vmatpush1.msra.mxu0 0.0
      %1166 = vmatprep.subr.mxu0 0.0
      %1167 = vmatpush1.msra.mxu0 0.0
      %1168 = vmatprep.subr.mxu0 0.0
      %1169 = vmatpush1.msra.mxu0 0.0
      %1170 = vmatprep.subr.mxu0 0.0
      %1171 = vmatpush1.msra.mxu0 0.0
      %1172 = vmatprep.mubr.f32.mxu0 0.0
      %v1173 = vand.u32 %v312, 4294901760
      %1174 = vmatmul.mubr.f32.gmra.mrb[0].mxu0 %v1173
      %v1175 = vpop.f32.mrb[0].mxu0
      %v1176 = vadd.f32 %v999, %v1175
      %v1177 = vpop.f32.mrb[0].mxu0
      %v1178 = vadd.f32 %v1001, %v1177
      %1179 = vmatprep.mubr.f32.mxu0 0.0
      %v1180 = vand.u32 %v313, 4294901760
      %1181 = vmatmul.mubr.f32.gmra.mrb[0].mxu0 %v1180
      %v1182 = vpop.f32.mrb[0].mxu0
      %v1183 = vadd.f32 %v1008, %v1182
      %v1184 = vpop.f32.mrb[0].mxu0
      %v1185 = vadd.f32 %v1010, %v1184
      %1186 = vdwg.mxu0
      %v1187 = vand.u32 %v331, 4294901760
      %1188 = vmatprep.subr.mxu0 %v1187
      %v1189 = vand.u32 %v330, 4294901760
      %1190 = vmatpush1.msra.mxu0 %v1189
      %v1191 = vand.u32 %v335, 4294901760
      %1192 = vmatprep.subr.mxu0 %v1191
      %v1193 = vand.u32 %v334, 4294901760
      %1194 = vmatpush1.msra.mxu0 %v1193
      %v1195 = vand.u32 %v339, 4294901760
      %1196 = vmatprep.subr.mxu0 %v1195
      %v1197 = vand.u32 %v338, 4294901760
      %1198 = vmatpush1.msra.mxu0 %v1197
      %v1199 = vand.u32 %v343, 4294901760
      %1200 = vmatprep.subr.mxu0 %v1199
      %v1201 = vand.u32 %v342, 4294901760
      %1202 = vmatpush1.msra.mxu0 %v1201
      %v1203 = vand.u32 %v347, 4294901760
      %1204 = vmatprep.subr.mxu0 %v1203
      %v1205 = vand.u32 %v346, 4294901760
      %1206 = vmatpush1.msra.mxu0 %v1205
      %v1207 = vand.u32 %v351, 4294901760
      %1208 = vmatprep.subr.mxu0 %v1207
      %v1209 = vand.u32 %v350, 4294901760
      %1210 = vmatpush1.msra.mxu0 %v1209
      %v1211 = vand.u32 %v355, 4294901760
      %1212 = vmatprep.subr.mxu0 %v1211
      %v1213 = vand.u32 %v354, 4294901760
      %1214 = vmatpush1.msra.mxu0 %v1213
      %v1215 = vand.u32 %v359, 4294901760
      %1216 = vmatprep.subr.mxu0 %v1215
      %v1217 = vand.u32 %v358, 4294901760
      %1218 = vmatpush1.msra.mxu0 %v1217
      %v1219 = vand.u32 %v363, 4294901760
      %1220 = vmatprep.subr.mxu0 %v1219
      %v1221 = vand.u32 %v362, 4294901760
      %1222 = vmatpush1.msra.mxu0 %v1221
      %v1223 = vand.u32 %v367, 4294901760
      %1224 = vmatprep.subr.mxu0 %v1223
      %v1225 = vand.u32 %v366, 4294901760
      %1226 = vmatpush1.msra.mxu0 %v1225
      %v1227 = vand.u32 %v371, 4294901760
      %1228 = vmatprep.subr.mxu0 %v1227
      %v1229 = vand.u32 %v370, 4294901760
      %1230 = vmatpush1.msra.mxu0 %v1229
      %v1231 = vand.u32 %v375, 4294901760
      %1232 = vmatprep.subr.mxu0 %v1231
      %v1233 = vand.u32 %v374, 4294901760
      %1234 = vmatpush1.msra.mxu0 %v1233
      %v1235 = vand.u32 %v379, 4294901760
      %1236 = vmatprep.subr.mxu0 %v1235
      %v1237 = vand.u32 %v378, 4294901760
      %1238 = vmatpush1.msra.mxu0 %v1237
      %v1239 = vand.u32 %v383, 4294901760
      %1240 = vmatprep.subr.mxu0 %v1239
      %v1241 = vand.u32 %v382, 4294901760
      %1242 = vmatpush1.msra.mxu0 %v1241
      %v1243 = vand.u32 %v387, 4294901760
      %1244 = vmatprep.subr.mxu0 %v1243
      %v1245 = vand.u32 %v386, 4294901760
      %1246 = vmatpush1.msra.mxu0 %v1245
      %v1247 = vand.u32 %v391, 4294901760
      %1248 = vmatprep.subr.mxu0 %v1247
      %v1249 = vand.u32 %v390, 4294901760
      %1250 = vmatpush1.msra.mxu0 %v1249
      %1251 = vmatprep.subr.mxu0 0.0
      %1252 = vmatpush1.msra.mxu0 0.0
      %1253 = vmatprep.subr.mxu0 0.0
      %1254 = vmatpush1.msra.mxu0 0.0
      %1255 = vmatprep.subr.mxu0 0.0
      %1256 = vmatpush1.msra.mxu0 0.0
      %1257 = vmatprep.subr.mxu0 0.0
      %1258 = vmatpush1.msra.mxu0 0.0
      %1259 = vmatprep.subr.mxu0 0.0
      %1260 = vmatpush1.msra.mxu0 0.0
      %1261 = vmatprep.subr.mxu0 0.0
      %1262 = vmatpush1.msra.mxu0 0.0
      %1263 = vmatprep.subr.mxu0 0.0
      %1264 = vmatpush1.msra.mxu0 0.0
      %1265 = vmatprep.subr.mxu0 0.0
      %1266 = vmatpush1.msra.mxu0 0.0
      %1267 = vmatprep.subr.mxu0 0.0
      %1268 = vmatpush1.msra.mxu0 0.0
      %1269 = vmatprep.subr.mxu0 0.0
      %1270 = vmatpush1.msra.mxu0 0.0
      %1271 = vmatprep.subr.mxu0 0.0
      %1272 = vmatpush1.msra.mxu0 0.0
      %1273 = vmatprep.subr.mxu0 0.0
      %1274 = vmatpush1.msra.mxu0 0.0
      %1275 = vmatprep.subr.mxu0 0.0
      %1276 = vmatpush1.msra.mxu0 0.0
      %1277 = vmatprep.subr.mxu0 0.0
      %1278 = vmatpush1.msra.mxu0 0.0
      %1279 = vmatprep.subr.mxu0 0.0
      %1280 = vmatpush1.msra.mxu0 0.0
      %1281 = vmatprep.subr.mxu0 0.0
      %1282 = vmatpush1.msra.mxu0 0.0
      %1283 = vmatprep.mubr.f32.mxu0 0.0
      %v1284 = vand.u32 %v312, 4294901760
      %1285 = vmatmul.mubr.f32.gmra.mrb[0].mxu0 %v1284
      %v1286 = vpop.f32.mrb[0].mxu0
      %v1287 = vadd.f32 %v1176, %v1286
      %v1288 = vpop.f32.mrb[0].mxu0
      %v1289 = vadd.f32 %v1178, %v1288
      %1290 = vmatprep.mubr.f32.mxu0 0.0
      %v1291 = vand.u32 %v313, 4294901760
      %1292 = vmatmul.mubr.f32.gmra.mrb[0].mxu0 %v1291
      %v1293 = vpop.f32.mrb[0].mxu0
      %v1294 = vadd.f32 %v1183, %v1293
      %v1295 = vpop.f32.mrb[0].mxu0
      %v1296 = vadd.f32 %v1185, %v1295
      %1297 = vdwg.mxu0
      %v1298 = vand.u32 %v333, 4294901760
      %1299 = vmatprep.subr.mxu0 %v1298
      %v1300 = vand.u32 %v332, 4294901760
      %1301 = vmatpush1.msra.mxu0 %v1300
      %v1302 = vand.u32 %v337, 4294901760
      %1303 = vmatprep.subr.mxu0 %v1302
      %v1304 = vand.u32 %v336, 4294901760
      %1305 = vmatpush1.msra.mxu0 %v1304
      %v1306 = vand.u32 %v341, 4294901760
      %1307 = vmatprep.subr.mxu0 %v1306
      %v1308 = vand.u32 %v340, 4294901760
      %1309 = vmatpush1.msra.mxu0 %v1308
      %v1310 = vand.u32 %v345, 4294901760
      %1311 = vmatprep.subr.mxu0 %v1310
      %v1312 = vand.u32 %v344, 4294901760
      %1313 = vmatpush1.msra.mxu0 %v1312
      %v1314 = vand.u32 %v349, 4294901760
      %1315 = vmatprep.subr.mxu0 %v1314
      %v1316 = vand.u32 %v348, 4294901760
      %1317 = vmatpush1.msra.mxu0 %v1316
      %v1318 = vand.u32 %v353, 4294901760
      %1319 = vmatprep.subr.mxu0 %v1318
      %v1320 = vand.u32 %v352, 4294901760
      %1321 = vmatpush1.msra.mxu0 %v1320
      %v1322 = vand.u32 %v357, 4294901760
      %1323 = vmatprep.subr.mxu0 %v1322
      %v1324 = vand.u32 %v356, 4294901760
      %1325 = vmatpush1.msra.mxu0 %v1324
      %v1326 = vand.u32 %v361, 4294901760
      %1327 = vmatprep.subr.mxu0 %v1326
      %v1328 = vand.u32 %v360, 4294901760
      %1329 = vmatpush1.msra.mxu0 %v1328
      %v1330 = vand.u32 %v365, 4294901760
      %1331 = vmatprep.subr.mxu0 %v1330
      %v1332 = vand.u32 %v364, 4294901760
      %1333 = vmatpush1.msra.mxu0 %v1332
      %v1334 = vand.u32 %v369, 4294901760
      %1335 = vmatprep.subr.mxu0 %v1334
      %v1336 = vand.u32 %v368, 4294901760
      %1337 = vmatpush1.msra.mxu0 %v1336
      %v1338 = vand.u32 %v373, 4294901760
      %1339 = vmatprep.subr.mxu0 %v1338
      %v1340 = vand.u32 %v372, 4294901760
      %1341 = vmatpush1.msra.mxu0 %v1340
      %v1342 = vand.u32 %v377, 4294901760
      %1343 = vmatprep.subr.mxu0 %v1342
      %v1344 = vand.u32 %v376, 4294901760
      %1345 = vmatpush1.msra.mxu0 %v1344
      %v1346 = vand.u32 %v381, 4294901760
      %1347 = vmatprep.subr.mxu0 %v1346
      %v1348 = vand.u32 %v380, 4294901760
      %1349 = vmatpush1.msra.mxu0 %v1348
      %v1350 = vand.u32 %v385, 4294901760
      %1351 = vmatprep.subr.mxu0 %v1350
      %v1352 = vand.u32 %v384, 4294901760
      %1353 = vmatpush1.msra.mxu0 %v1352
      %v1354 = vand.u32 %v389, 4294901760
      %1355 = vmatprep.subr.mxu0 %v1354
      %v1356 = vand.u32 %v388, 4294901760
      %1357 = vmatpush1.msra.mxu0 %v1356
      %v1358 = vand.u32 %v393, 4294901760
      %1359 = vmatprep.subr.mxu0 %v1358
      %v1360 = vand.u32 %v392, 4294901760
      %1361 = vmatpush1.msra.mxu0 %v1360
      %1362 = vmatprep.subr.mxu0 0.0
      %1363 = vmatpush1.msra.mxu0 0.0
      %1364 = vmatprep.subr.mxu0 0.0
      %1365 = vmatpush1.msra.mxu0 0.0
      %1366 = vmatprep.subr.mxu0 0.0
      %1367 = vmatpush1.msra.mxu0 0.0
      %1368 = vmatprep.subr.mxu0 0.0
      %1369 = vmatpush1.msra.mxu0 0.0
      %1370 = vmatprep.subr.mxu0 0.0
      %1371 = vmatpush1.msra.mxu0 0.0
      %1372 = vmatprep.subr.mxu0 0.0
      %1373 = vmatpush1.msra.mxu0 0.0
      %1374 = vmatprep.subr.mxu0 0.0
      %1375 = vmatpush1.msra.mxu0 0.0
      %1376 = vmatprep.subr.mxu0 0.0
      %1377 = vmatpush1.msra.mxu0 0.0
      %1378 = vmatprep.subr.mxu0 0.0
      %1379 = vmatpush1.msra.mxu0 0.0
      %1380 = vmatprep.subr.mxu0 0.0
      %1381 = vmatpush1.msra.mxu0 0.0
      %1382 = vmatprep.subr.mxu0 0.0
      %1383 = vmatpush1.msra.mxu0 0.0
      %1384 = vmatprep.subr.mxu0 0.0
      %1385 = vmatpush1.msra.mxu0 0.0
      %1386 = vmatprep.subr.mxu0 0.0
      %1387 = vmatpush1.msra.mxu0 0.0
      %1388 = vmatprep.subr.mxu0 0.0
      %1389 = vmatpush1.msra.mxu0 0.0
      %1390 = vmatprep.subr.mxu0 0.0
      %1391 = vmatpush1.msra.mxu0 0.0
      %1392 = vmatprep.subr.mxu0 0.0
      %1393 = vmatpush1.msra.mxu0 0.0
      %1394 = vmatprep.mubr.f32.mxu0 0.0
      %v1395 = vand.u32 %v312, 4294901760
      %v1396 = vsub.f32 %v312, %v1395
      %v1397 = vand.u32 %v1396, 4294901760
      %v1398 = vsub.f32 %v1396, %v1397
      %v1399 = vand.u32 %v1398, 4294901760
      %1400 = vmatmul.mubr.f32.gmra.mrb[0].mxu0 %v1399
      %v1401 = vpop.f32.mrb[0].mxu0
      %v1402 = vadd.f32 0.0, %v1401
      %v1403 = vpop.f32.mrb[0].mxu0
      %v1404 = vadd.f32 0.0, %v1403
      %1405 = vmatprep.mubr.f32.mxu0 0.0
      %v1406 = vand.u32 %v313, 4294901760
      %v1407 = vsub.f32 %v313, %v1406
      %v1408 = vand.u32 %v1407, 4294901760
      %v1409 = vsub.f32 %v1407, %v1408
      %v1410 = vand.u32 %v1409, 4294901760
      %1411 = vmatmul.mubr.f32.gmra.mrb[0].mxu0 %v1410
      %v1412 = vpop.f32.mrb[0].mxu0
      %v1413 = vadd.f32 0.0, %v1412
      %v1414 = vpop.f32.mrb[0].mxu0
      %v1415 = vadd.f32 0.0, %v1414
      %1416 = vdwg.mxu0
      %v1417 = vand.u32 %v333, 4294901760
      %v1418 = vsub.f32 %v333, %v1417
      %v1419 = vand.u32 %v1418, 4294901760
      %v1420 = vsub.f32 %v1418, %v1419
      %v1421 = vand.u32 %v1420, 4294901760
      %1422 = vmatprep.subr.mxu0 %v1421
      %v1423 = vand.u32 %v332, 4294901760
      %v1424 = vsub.f32 %v332, %v1423
      %v1425 = vand.u32 %v1424, 4294901760
      %v1426 = vsub.f32 %v1424, %v1425
      %v1427 = vand.u32 %v1426, 4294901760
      %1428 = vmatpush1.msra.mxu0 %v1427
      %v1429 = vand.u32 %v337, 4294901760
      %v1430 = vsub.f32 %v337, %v1429
      %v1431 = vand.u32 %v1430, 4294901760
      %v1432 = vsub.f32 %v1430, %v1431
      %v1433 = vand.u32 %v1432, 4294901760
      %1434 = vmatprep.subr.mxu0 %v1433
      %v1435 = vand.u32 %v336, 4294901760
      %v1436 = vsub.f32 %v336, %v1435
      %v1437 = vand.u32 %v1436, 4294901760
      %v1438 = vsub.f32 %v1436, %v1437
      %v1439 = vand.u32 %v1438, 4294901760
      %1440 = vmatpush1.msra.mxu0 %v1439
      %v1441 = vand.u32 %v341, 4294901760
      %v1442 = vsub.f32 %v341, %v1441
      %v1443 = vand.u32 %v1442, 4294901760
      %v1444 = vsub.f32 %v1442, %v1443
      %v1445 = vand.u32 %v1444, 4294901760
      %1446 = vmatprep.subr.mxu0 %v1445
      %v1447 = vand.u32 %v340, 4294901760
      %v1448 = vsub.f32 %v340, %v1447
      %v1449 = vand.u32 %v1448, 4294901760
      %v1450 = vsub.f32 %v1448, %v1449
      %v1451 = vand.u32 %v1450, 4294901760
      %1452 = vmatpush1.msra.mxu0 %v1451
      %v1453 = vand.u32 %v345, 4294901760
      %v1454 = vsub.f32 %v345, %v1453
      %v1455 = vand.u32 %v1454, 4294901760
      %v1456 = vsub.f32 %v1454, %v1455
      %v1457 = vand.u32 %v1456, 4294901760
      %1458 = vmatprep.subr.mxu0 %v1457
      %v1459 = vand.u32 %v344, 4294901760
      %v1460 = vsub.f32 %v344, %v1459
      %v1461 = vand.u32 %v1460, 4294901760
      %v1462 = vsub.f32 %v1460, %v1461
      %v1463 = vand.u32 %v1462, 4294901760
      %1464 = vmatpush1.msra.mxu0 %v1463
      %v1465 = vand.u32 %v349, 4294901760
      %v1466 = vsub.f32 %v349, %v1465
      %v1467 = vand.u32 %v1466, 4294901760
      %v1468 = vsub.f32 %v1466, %v1467
      %v1469 = vand.u32 %v1468, 4294901760
      %1470 = vmatprep.subr.mxu0 %v1469
      %v1471 = vand.u32 %v348, 4294901760
      %v1472 = vsub.f32 %v348, %v1471
      %v1473 = vand.u32 %v1472, 4294901760
      %v1474 = vsub.f32 %v1472, %v1473
      %v1475 = vand.u32 %v1474, 4294901760
      %1476 = vmatpush1.msra.mxu0 %v1475
      %v1477 = vand.u32 %v353, 4294901760
      %v1478 = vsub.f32 %v353, %v1477
      %v1479 = vand.u32 %v1478, 4294901760
      %v1480 = vsub.f32 %v1478, %v1479
      %v1481 = vand.u32 %v1480, 4294901760
      %1482 = vmatprep.subr.mxu0 %v1481
      %v1483 = vand.u32 %v352, 4294901760
      %v1484 = vsub.f32 %v352, %v1483
      %v1485 = vand.u32 %v1484, 4294901760
      %v1486 = vsub.f32 %v1484, %v1485
      %v1487 = vand.u32 %v1486, 4294901760
      %1488 = vmatpush1.msra.mxu0 %v1487
      %v1489 = vand.u32 %v357, 4294901760
      %v1490 = vsub.f32 %v357, %v1489
      %v1491 = vand.u32 %v1490, 4294901760
      %v1492 = vsub.f32 %v1490, %v1491
      %v1493 = vand.u32 %v1492, 4294901760
      %1494 = vmatprep.subr.mxu0 %v1493
      %v1495 = vand.u32 %v356, 4294901760
      %v1496 = vsub.f32 %v356, %v1495
      %v1497 = vand.u32 %v1496, 4294901760
      %v1498 = vsub.f32 %v1496, %v1497
      %v1499 = vand.u32 %v1498, 4294901760
      %1500 = vmatpush1.msra.mxu0 %v1499
      %v1501 = vand.u32 %v361, 4294901760
      %v1502 = vsub.f32 %v361, %v1501
      %v1503 = vand.u32 %v1502, 4294901760
      %v1504 = vsub.f32 %v1502, %v1503
      %v1505 = vand.u32 %v1504, 4294901760
      %1506 = vmatprep.subr.mxu0 %v1505
      %v1507 = vand.u32 %v360, 4294901760
      %v1508 = vsub.f32 %v360, %v1507
      %v1509 = vand.u32 %v1508, 4294901760
      %v1510 = vsub.f32 %v1508, %v1509
      %v1511 = vand.u32 %v1510, 4294901760
      %1512 = vmatpush1.msra.mxu0 %v1511
      %v1513 = vand.u32 %v365, 4294901760
      %v1514 = vsub.f32 %v365, %v1513
      %v1515 = vand.u32 %v1514, 4294901760
      %v1516 = vsub.f32 %v1514, %v1515
      %v1517 = vand.u32 %v1516, 4294901760
      %1518 = vmatprep.subr.mxu0 %v1517
      %v1519 = vand.u32 %v364, 4294901760
      %v1520 = vsub.f32 %v364, %v1519
      %v1521 = vand.u32 %v1520, 4294901760
      %v1522 = vsub.f32 %v1520, %v1521
      %v1523 = vand.u32 %v1522, 4294901760
      %1524 = vmatpush1.msra.mxu0 %v1523
      %v1525 = vand.u32 %v369, 4294901760
      %v1526 = vsub.f32 %v369, %v1525
      %v1527 = vand.u32 %v1526, 4294901760
      %v1528 = vsub.f32 %v1526, %v1527
      %v1529 = vand.u32 %v1528, 4294901760
      %1530 = vmatprep.subr.mxu0 %v1529
      %v1531 = vand.u32 %v368, 4294901760
      %v1532 = vsub.f32 %v368, %v1531
      %v1533 = vand.u32 %v1532, 4294901760
      %v1534 = vsub.f32 %v1532, %v1533
      %v1535 = vand.u32 %v1534, 4294901760
      %1536 = vmatpush1.msra.mxu0 %v1535
      %v1537 = vand.u32 %v373, 4294901760
      %v1538 = vsub.f32 %v373, %v1537
      %v1539 = vand.u32 %v1538, 4294901760
      %v1540 = vsub.f32 %v1538, %v1539
      %v1541 = vand.u32 %v1540, 4294901760
      %1542 = vmatprep.subr.mxu0 %v1541
      %v1543 = vand.u32 %v372, 4294901760
      %v1544 = vsub.f32 %v372, %v1543
      %v1545 = vand.u32 %v1544, 4294901760
      %v1546 = vsub.f32 %v1544, %v1545
      %v1547 = vand.u32 %v1546, 4294901760
      %1548 = vmatpush1.msra.mxu0 %v1547
      %v1549 = vand.u32 %v377, 4294901760
      %v1550 = vsub.f32 %v377, %v1549
      %v1551 = vand.u32 %v1550, 4294901760
      %v1552 = vsub.f32 %v1550, %v1551
      %v1553 = vand.u32 %v1552, 4294901760
      %1554 = vmatprep.subr.mxu0 %v1553
      %v1555 = vand.u32 %v376, 4294901760
      %v1556 = vsub.f32 %v376, %v1555
      %v1557 = vand.u32 %v1556, 4294901760
      %v1558 = vsub.f32 %v1556, %v1557
      %v1559 = vand.u32 %v1558, 4294901760
      %1560 = vmatpush1.msra.mxu0 %v1559
      %v1561 = vand.u32 %v381, 4294901760
      %v1562 = vsub.f32 %v381, %v1561
      %v1563 = vand.u32 %v1562, 4294901760
      %v1564 = vsub.f32 %v1562, %v1563
      %v1565 = vand.u32 %v1564, 4294901760
      %1566 = vmatprep.subr.mxu0 %v1565
      %v1567 = vand.u32 %v380, 4294901760
      %v1568 = vsub.f32 %v380, %v1567
      %v1569 = vand.u32 %v1568, 4294901760
      %v1570 = vsub.f32 %v1568, %v1569
      %v1571 = vand.u32 %v1570, 4294901760
      %1572 = vmatpush1.msra.mxu0 %v1571
      %v1573 = vand.u32 %v385, 4294901760
      %v1574 = vsub.f32 %v385, %v1573
      %v1575 = vand.u32 %v1574, 4294901760
      %v1576 = vsub.f32 %v1574, %v1575
      %v1577 = vand.u32 %v1576, 4294901760
      %1578 = vmatprep.subr.mxu0 %v1577
      %v1579 = vand.u32 %v384, 4294901760
      %v1580 = vsub.f32 %v384, %v1579
      %v1581 = vand.u32 %v1580, 4294901760
      %v1582 = vsub.f32 %v1580, %v1581
      %v1583 = vand.u32 %v1582, 4294901760
      %1584 = vmatpush1.msra.mxu0 %v1583
      %v1585 = vand.u32 %v389, 4294901760
      %v1586 = vsub.f32 %v389, %v1585
      %v1587 = vand.u32 %v1586, 4294901760
      %v1588 = vsub.f32 %v1586, %v1587
      %v1589 = vand.u32 %v1588, 4294901760
      %1590 = vmatprep.subr.mxu0 %v1589
      %v1591 = vand.u32 %v388, 4294901760
      %v1592 = vsub.f32 %v388, %v1591
      %v1593 = vand.u32 %v1592, 4294901760
      %v1594 = vsub.f32 %v1592, %v1593
      %v1595 = vand.u32 %v1594, 4294901760
      %1596 = vmatpush1.msra.mxu0 %v1595
      %v1597 = vand.u32 %v393, 4294901760
      %v1598 = vsub.f32 %v393, %v1597
      %v1599 = vand.u32 %v1598, 4294901760
      %v1600 = vsub.f32 %v1598, %v1599
      %v1601 = vand.u32 %v1600, 4294901760
      %1602 = vmatprep.subr.mxu0 %v1601
      %v1603 = vand.u32 %v392, 4294901760
      %v1604 = vsub.f32 %v392, %v1603
      %v1605 = vand.u32 %v1604, 4294901760
      %v1606 = vsub.f32 %v1604, %v1605
      %v1607 = vand.u32 %v1606, 4294901760
      %1608 = vmatpush1.msra.mxu0 %v1607
      %1609 = vmatprep.subr.mxu0 0.0
      %1610 = vmatpush1.msra.mxu0 0.0
      %1611 = vmatprep.subr.mxu0 0.0
      %1612 = vmatpush1.msra.mxu0 0.0
      %1613 = vmatprep.subr.mxu0 0.0
      %1614 = vmatpush1.msra.mxu0 0.0
      %1615 = vmatprep.subr.mxu0 0.0
      %1616 = vmatpush1.msra.mxu0 0.0
      %1617 = vmatprep.subr.mxu0 0.0
      %1618 = vmatpush1.msra.mxu0 0.0
      %1619 = vmatprep.subr.mxu0 0.0
      %1620 = vmatpush1.msra.mxu0 0.0
      %1621 = vmatprep.subr.mxu0 0.0
      %1622 = vmatpush1.msra.mxu0 0.0
      %1623 = vmatprep.subr.mxu0 0.0
      %1624 = vmatpush1.msra.mxu0 0.0
      %1625 = vmatprep.subr.mxu0 0.0
      %1626 = vmatpush1.msra.mxu0 0.0
      %1627 = vmatprep.subr.mxu0 0.0
      %1628 = vmatpush1.msra.mxu0 0.0
      %1629 = vmatprep.subr.mxu0 0.0
      %1630 = vmatpush1.msra.mxu0 0.0
      %1631 = vmatprep.subr.mxu0 0.0
      %1632 = vmatpush1.msra.mxu0 0.0
      %1633 = vmatprep.subr.mxu0 0.0
      %1634 = vmatpush1.msra.mxu0 0.0
      %1635 = vmatprep.subr.mxu0 0.0
      %1636 = vmatpush1.msra.mxu0 0.0
      %1637 = vmatprep.subr.mxu0 0.0
      %1638 = vmatpush1.msra.mxu0 0.0
      %1639 = vmatprep.subr.mxu0 0.0
      %1640 = vmatpush1.msra.mxu0 0.0
      %1641 = vmatprep.mubr.f32.mxu0 0.0
      %v1642 = vand.u32 %v312, 4294901760
      %1643 = vmatmul.mubr.f32.gmra.mrb[0].mxu0 %v1642
      %v1644 = vpop.f32.mrb[0].mxu0
      %v1645 = vadd.f32 %v1402, %v1644
      %v1646 = vpop.f32.mrb[0].mxu0
      %v1647 = vadd.f32 %v1404, %v1646
      %1648 = vmatprep.mubr.f32.mxu0 0.0
      %v1649 = vand.u32 %v313, 4294901760
      %1650 = vmatmul.mubr.f32.gmra.mrb[0].mxu0 %v1649
      %v1651 = vpop.f32.mrb[0].mxu0
      %v1652 = vadd.f32 %v1413, %v1651
      %v1653 = vpop.f32.mrb[0].mxu0
      %v1654 = vadd.f32 %v1415, %v1653
      %1655 = vdwg.mxu0
      %v1656 = vand.u32 %v333, 4294901760
      %v1657 = vsub.f32 %v333, %v1656
      %1658 = vmatprep.subr.mxu0 %v1657
      %v1659 = vand.u32 %v332, 4294901760
      %v1660 = vsub.f32 %v332, %v1659
      %1661 = vmatpush1.msra.mxu0 %v1660
      %v1662 = vand.u32 %v337, 4294901760
      %v1663 = vsub.f32 %v337, %v1662
      %1664 = vmatprep.subr.mxu0 %v1663
      %v1665 = vand.u32 %v336, 4294901760
      %v1666 = vsub.f32 %v336, %v1665
      %1667 = vmatpush1.msra.mxu0 %v1666
      %v1668 = vand.u32 %v341, 4294901760
      %v1669 = vsub.f32 %v341, %v1668
      %1670 = vmatprep.subr.mxu0 %v1669
      %v1671 = vand.u32 %v340, 4294901760
      %v1672 = vsub.f32 %v340, %v1671
      %1673 = vmatpush1.msra.mxu0 %v1672
      %v1674 = vand.u32 %v345, 4294901760
      %v1675 = vsub.f32 %v345, %v1674
      %1676 = vmatprep.subr.mxu0 %v1675
      %v1677 = vand.u32 %v344, 4294901760
      %v1678 = vsub.f32 %v344, %v1677
      %1679 = vmatpush1.msra.mxu0 %v1678
      %v1680 = vand.u32 %v349, 4294901760
      %v1681 = vsub.f32 %v349, %v1680
      %1682 = vmatprep.subr.mxu0 %v1681
      %v1683 = vand.u32 %v348, 4294901760
      %v1684 = vsub.f32 %v348, %v1683
      %1685 = vmatpush1.msra.mxu0 %v1684
      %v1686 = vand.u32 %v353, 4294901760
      %v1687 = vsub.f32 %v353, %v1686
      %1688 = vmatprep.subr.mxu0 %v1687
      %v1689 = vand.u32 %v352, 4294901760
      %v1690 = vsub.f32 %v352, %v1689
      %1691 = vmatpush1.msra.mxu0 %v1690
      %v1692 = vand.u32 %v357, 4294901760
      %v1693 = vsub.f32 %v357, %v1692
      %1694 = vmatprep.subr.mxu0 %v1693
      %v1695 = vand.u32 %v356, 4294901760
      %v1696 = vsub.f32 %v356, %v1695
      %1697 = vmatpush1.msra.mxu0 %v1696
      %v1698 = vand.u32 %v361, 4294901760
      %v1699 = vsub.f32 %v361, %v1698
      %1700 = vmatprep.subr.mxu0 %v1699
      %v1701 = vand.u32 %v360, 4294901760
      %v1702 = vsub.f32 %v360, %v1701
      %1703 = vmatpush1.msra.mxu0 %v1702
      %v1704 = vand.u32 %v365, 4294901760
      %v1705 = vsub.f32 %v365, %v1704
      %1706 = vmatprep.subr.mxu0 %v1705
      %v1707 = vand.u32 %v364, 4294901760
      %v1708 = vsub.f32 %v364, %v1707
      %1709 = vmatpush1.msra.mxu0 %v1708
      %v1710 = vand.u32 %v369, 4294901760
      %v1711 = vsub.f32 %v369, %v1710
      %1712 = vmatprep.subr.mxu0 %v1711
      %v1713 = vand.u32 %v368, 4294901760
      %v1714 = vsub.f32 %v368, %v1713
      %1715 = vmatpush1.msra.mxu0 %v1714
      %v1716 = vand.u32 %v373, 4294901760
      %v1717 = vsub.f32 %v373, %v1716
      %1718 = vmatprep.subr.mxu0 %v1717
      %v1719 = vand.u32 %v372, 4294901760
      %v1720 = vsub.f32 %v372, %v1719
      %1721 = vmatpush1.msra.mxu0 %v1720
      %v1722 = vand.u32 %v377, 4294901760
      %v1723 = vsub.f32 %v377, %v1722
      %1724 = vmatprep.subr.mxu0 %v1723
      %v1725 = vand.u32 %v376, 4294901760
      %v1726 = vsub.f32 %v376, %v1725
      %1727 = vmatpush1.msra.mxu0 %v1726
      %v1728 = vand.u32 %v381, 4294901760
      %v1729 = vsub.f32 %v381, %v1728
      %1730 = vmatprep.subr.mxu0 %v1729
      %v1731 = vand.u32 %v380, 4294901760
      %v1732 = vsub.f32 %v380, %v1731
      %1733 = vmatpush1.msra.mxu0 %v1732
      %v1734 = vand.u32 %v385, 4294901760
      %v1735 = vsub.f32 %v385, %v1734
      %1736 = vmatprep.subr.mxu0 %v1735
      %v1737 = vand.u32 %v384, 4294901760
      %v1738 = vsub.f32 %v384, %v1737
      %1739 = vmatpush1.msra.mxu0 %v1738
      %v1740 = vand.u32 %v389, 4294901760
      %v1741 = vsub.f32 %v389, %v1740
      %1742 = vmatprep.subr.mxu0 %v1741
      %v1743 = vand.u32 %v388, 4294901760
      %v1744 = vsub.f32 %v388, %v1743
      %1745 = vmatpush1.msra.mxu0 %v1744
      %v1746 = vand.u32 %v393, 4294901760
      %v1747 = vsub.f32 %v393, %v1746
      %1748 = vmatprep.subr.mxu0 %v1747
      %v1749 = vand.u32 %v392, 4294901760
      %v1750 = vsub.f32 %v392, %v1749
      %1751 = vmatpush1.msra.mxu0 %v1750
      %1752 = vmatprep.subr.mxu0 0.0
      %1753 = vmatpush1.msra.mxu0 0.0
      %1754 = vmatprep.subr.mxu0 0.0
      %1755 = vmatpush1.msra.mxu0 0.0
      %1756 = vmatprep.subr.mxu0 0.0
      %1757 = vmatpush1.msra.mxu0 0.0
      %1758 = vmatprep.subr.mxu0 0.0
      %1759 = vmatpush1.msra.mxu0 0.0
      %1760 = vmatprep.subr.mxu0 0.0
      %1761 = vmatpush1.msra.mxu0 0.0
      %1762 = vmatprep.subr.mxu0 0.0
      %1763 = vmatpush1.msra.mxu0 0.0
      %1764 = vmatprep.subr.mxu0 0.0
      %1765 = vmatpush1.msra.mxu0 0.0
      %1766 = vmatprep.subr.mxu0 0.0
      %1767 = vmatpush1.msra.mxu0 0.0
      %1768 = vmatprep.subr.mxu0 0.0
      %1769 = vmatpush1.msra.mxu0 0.0
      %1770 = vmatprep.subr.mxu0 0.0
      %1771 = vmatpush1.msra.mxu0 0.0
      %1772 = vmatprep.subr.mxu0 0.0
      %1773 = vmatpush1.msra.mxu0 0.0
      %1774 = vmatprep.subr.mxu0 0.0
      %1775 = vmatpush1.msra.mxu0 0.0
      %1776 = vmatprep.subr.mxu0 0.0
      %1777 = vmatpush1.msra.mxu0 0.0
      %1778 = vmatprep.subr.mxu0 0.0
      %1779 = vmatpush1.msra.mxu0 0.0
      %1780 = vmatprep.subr.mxu0 0.0
      %1781 = vmatpush1.msra.mxu0 0.0
      %1782 = vmatprep.subr.mxu0 0.0
      %1783 = vmatpush1.msra.mxu0 0.0
      %1784 = vmatprep.mubr.f32.mxu0 0.0
      %v1785 = vand.u32 %v312, 4294901760
      %v1786 = vsub.f32 %v312, %v1785
      %1787 = vmatmul.mubr.f32.gmra.mrb[0].mxu0 %v1786
      %v1788 = vpop.f32.mrb[0].mxu0
      %v1789 = vadd.f32 %v1645, %v1788
      %v1790 = vpop.f32.mrb[0].mxu0
      %v1791 = vadd.f32 %v1647, %v1790
      %1792 = vmatprep.mubr.f32.mxu0 0.0
      %v1793 = vand.u32 %v313, 4294901760
      %v1794 = vsub.f32 %v313, %v1793
      %1795 = vmatmul.mubr.f32.gmra.mrb[0].mxu0 %v1794
      %v1796 = vpop.f32.mrb[0].mxu0
      %v1797 = vadd.f32 %v1652, %v1796
      %v1798 = vpop.f32.mrb[0].mxu0
      %v1799 = vadd.f32 %v1654, %v1798
      %1800 = vdwg.mxu0
      %v1801 = vand.u32 %v333, 4294901760
      %1802 = vmatprep.subr.mxu0 %v1801
      %v1803 = vand.u32 %v332, 4294901760
      %1804 = vmatpush1.msra.mxu0 %v1803
      %v1805 = vand.u32 %v337, 4294901760
      %1806 = vmatprep.subr.mxu0 %v1805
      %v1807 = vand.u32 %v336, 4294901760
      %1808 = vmatpush1.msra.mxu0 %v1807
      %v1809 = vand.u32 %v341, 4294901760
      %1810 = vmatprep.subr.mxu0 %v1809
      %v1811 = vand.u32 %v340, 4294901760
      %1812 = vmatpush1.msra.mxu0 %v1811
      %v1813 = vand.u32 %v345, 4294901760
      %1814 = vmatprep.subr.mxu0 %v1813
      %v1815 = vand.u32 %v344, 4294901760
      %1816 = vmatpush1.msra.mxu0 %v1815
      %v1817 = vand.u32 %v349, 4294901760
      %1818 = vmatprep.subr.mxu0 %v1817
      %v1819 = vand.u32 %v348, 4294901760
      %1820 = vmatpush1.msra.mxu0 %v1819
      %v1821 = vand.u32 %v353, 4294901760
      %1822 = vmatprep.subr.mxu0 %v1821
      %v1823 = vand.u32 %v352, 4294901760
      %1824 = vmatpush1.msra.mxu0 %v1823
      %v1825 = vand.u32 %v357, 4294901760
      %1826 = vmatprep.subr.mxu0 %v1825
      %v1827 = vand.u32 %v356, 4294901760
      %1828 = vmatpush1.msra.mxu0 %v1827
      %v1829 = vand.u32 %v361, 4294901760
      %1830 = vmatprep.subr.mxu0 %v1829
      %v1831 = vand.u32 %v360, 4294901760
      %1832 = vmatpush1.msra.mxu0 %v1831
      %v1833 = vand.u32 %v365, 4294901760
      %1834 = vmatprep.subr.mxu0 %v1833
      %v1835 = vand.u32 %v364, 4294901760
      %1836 = vmatpush1.msra.mxu0 %v1835
      %v1837 = vand.u32 %v369, 4294901760
      %1838 = vmatprep.subr.mxu0 %v1837
      %v1839 = vand.u32 %v368, 4294901760
      %1840 = vmatpush1.msra.mxu0 %v1839
      %v1841 = vand.u32 %v373, 4294901760
      %1842 = vmatprep.subr.mxu0 %v1841
      %v1843 = vand.u32 %v372, 4294901760
      %1844 = vmatpush1.msra.mxu0 %v1843
      %v1845 = vand.u32 %v377, 4294901760
      %1846 = vmatprep.subr.mxu0 %v1845
      %v1847 = vand.u32 %v376, 4294901760
      %1848 = vmatpush1.msra.mxu0 %v1847
      %v1849 = vand.u32 %v381, 4294901760
      %1850 = vmatprep.subr.mxu0 %v1849
      %v1851 = vand.u32 %v380, 4294901760
      %1852 = vmatpush1.msra.mxu0 %v1851
      %v1853 = vand.u32 %v385, 4294901760
      %1854 = vmatprep.subr.mxu0 %v1853
      %v1855 = vand.u32 %v384, 4294901760
      %1856 = vmatpush1.msra.mxu0 %v1855
      %v1857 = vand.u32 %v389, 4294901760
      %1858 = vmatprep.subr.mxu0 %v1857
      %v1859 = vand.u32 %v388, 4294901760
      %1860 = vmatpush1.msra.mxu0 %v1859
      %v1861 = vand.u32 %v393, 4294901760
      %1862 = vmatprep.subr.mxu0 %v1861
      %v1863 = vand.u32 %v392, 4294901760
      %1864 = vmatpush1.msra.mxu0 %v1863
      %1865 = vmatprep.subr.mxu0 0.0
      %1866 = vmatpush1.msra.mxu0 0.0
      %1867 = vmatprep.subr.mxu0 0.0
      %1868 = vmatpush1.msra.mxu0 0.0
      %1869 = vmatprep.subr.mxu0 0.0
      %1870 = vmatpush1.msra.mxu0 0.0
      %1871 = vmatprep.subr.mxu0 0.0
      %1872 = vmatpush1.msra.mxu0 0.0
      %1873 = vmatprep.subr.mxu0 0.0
      %1874 = vmatpush1.msra.mxu0 0.0
      %1875 = vmatprep.subr.mxu0 0.0
      %1876 = vmatpush1.msra.mxu0 0.0
      %1877 = vmatprep.subr.mxu0 0.0
      %1878 = vmatpush1.msra.mxu0 0.0
      %1879 = vmatprep.subr.mxu0 0.0
      %1880 = vmatpush1.msra.mxu0 0.0
      %1881 = vmatprep.subr.mxu0 0.0
      %1882 = vmatpush1.msra.mxu0 0.0
      %1883 = vmatprep.subr.mxu0 0.0
      %1884 = vmatpush1.msra.mxu0 0.0
      %1885 = vmatprep.subr.mxu0 0.0
      %1886 = vmatpush1.msra.mxu0 0.0
      %1887 = vmatprep.subr.mxu0 0.0
      %1888 = vmatpush1.msra.mxu0 0.0
      %1889 = vmatprep.subr.mxu0 0.0
      %1890 = vmatpush1.msra.mxu0 0.0
      %1891 = vmatprep.subr.mxu0 0.0
      %1892 = vmatpush1.msra.mxu0 0.0
      %1893 = vmatprep.subr.mxu0 0.0
      %1894 = vmatpush1.msra.mxu0 0.0
      %1895 = vmatprep.subr.mxu0 0.0
      %1896 = vmatpush1.msra.mxu0 0.0
      %1897 = vmatprep.mubr.f32.mxu0 0.0
      %v1898 = vand.u32 %v312, 4294901760
      %v1899 = vsub.f32 %v312, %v1898
      %v1900 = vand.u32 %v1899, 4294901760
      %1901 = vmatmul.mubr.f32.gmra.mrb[0].mxu0 %v1900
      %v1902 = vpop.f32.mrb[0].mxu0
      %v1903 = vadd.f32 %v1789, %v1902
      %v1904 = vpop.f32.mrb[0].mxu0
      %v1905 = vadd.f32 %v1791, %v1904
      %1906 = vmatprep.mubr.f32.mxu0 0.0
      %v1907 = vand.u32 %v313, 4294901760
      %v1908 = vsub.f32 %v313, %v1907
      %v1909 = vand.u32 %v1908, 4294901760
      %1910 = vmatmul.mubr.f32.gmra.mrb[0].mxu0 %v1909
      %v1911 = vpop.f32.mrb[0].mxu0
      %v1912 = vadd.f32 %v1797, %v1911
      %v1913 = vpop.f32.mrb[0].mxu0
      %v1914 = vadd.f32 %v1799, %v1913
      %1915 = vdwg.mxu0
      %v1916 = vand.u32 %v333, 4294901760
      %v1917 = vsub.f32 %v333, %v1916
      %v1918 = vand.u32 %v1917, 4294901760
      %1919 = vmatprep.subr.mxu0 %v1918
      %v1920 = vand.u32 %v332, 4294901760
      %v1921 = vsub.f32 %v332, %v1920
      %v1922 = vand.u32 %v1921, 4294901760
      %1923 = vmatpush1.msra.mxu0 %v1922
      %v1924 = vand.u32 %v337, 4294901760
      %v1925 = vsub.f32 %v337, %v1924
      %v1926 = vand.u32 %v1925, 4294901760
      %1927 = vmatprep.subr.mxu0 %v1926
      %v1928 = vand.u32 %v336, 4294901760
      %v1929 = vsub.f32 %v336, %v1928
      %v1930 = vand.u32 %v1929, 4294901760
      %1931 = vmatpush1.msra.mxu0 %v1930
      %v1932 = vand.u32 %v341, 4294901760
      %v1933 = vsub.f32 %v341, %v1932
      %v1934 = vand.u32 %v1933, 4294901760
      %1935 = vmatprep.subr.mxu0 %v1934
      %v1936 = vand.u32 %v340, 4294901760
      %v1937 = vsub.f32 %v340, %v1936
      %v1938 = vand.u32 %v1937, 4294901760
      %1939 = vmatpush1.msra.mxu0 %v1938
      %v1940 = vand.u32 %v345, 4294901760
      %v1941 = vsub.f32 %v345, %v1940
      %v1942 = vand.u32 %v1941, 4294901760
      %1943 = vmatprep.subr.mxu0 %v1942
      %v1944 = vand.u32 %v344, 4294901760
      %v1945 = vsub.f32 %v344, %v1944
      %v1946 = vand.u32 %v1945, 4294901760
      %1947 = vmatpush1.msra.mxu0 %v1946
      %v1948 = vand.u32 %v349, 4294901760
      %v1949 = vsub.f32 %v349, %v1948
      %v1950 = vand.u32 %v1949, 4294901760
      %1951 = vmatprep.subr.mxu0 %v1950
      %v1952 = vand.u32 %v348, 4294901760
      %v1953 = vsub.f32 %v348, %v1952
      %v1954 = vand.u32 %v1953, 4294901760
      %1955 = vmatpush1.msra.mxu0 %v1954
      %v1956 = vand.u32 %v353, 4294901760
      %v1957 = vsub.f32 %v353, %v1956
      %v1958 = vand.u32 %v1957, 4294901760
      %1959 = vmatprep.subr.mxu0 %v1958
      %v1960 = vand.u32 %v352, 4294901760
      %v1961 = vsub.f32 %v352, %v1960
      %v1962 = vand.u32 %v1961, 4294901760
      %1963 = vmatpush1.msra.mxu0 %v1962
      %v1964 = vand.u32 %v357, 4294901760
      %v1965 = vsub.f32 %v357, %v1964
      %v1966 = vand.u32 %v1965, 4294901760
      %1967 = vmatprep.subr.mxu0 %v1966
      %v1968 = vand.u32 %v356, 4294901760
      %v1969 = vsub.f32 %v356, %v1968
      %v1970 = vand.u32 %v1969, 4294901760
      %1971 = vmatpush1.msra.mxu0 %v1970
      %v1972 = vand.u32 %v361, 4294901760
      %v1973 = vsub.f32 %v361, %v1972
      %v1974 = vand.u32 %v1973, 4294901760
      %1975 = vmatprep.subr.mxu0 %v1974
      %v1976 = vand.u32 %v360, 4294901760
      %v1977 = vsub.f32 %v360, %v1976
      %v1978 = vand.u32 %v1977, 4294901760
      %1979 = vmatpush1.msra.mxu0 %v1978
      %v1980 = vand.u32 %v365, 4294901760
      %v1981 = vsub.f32 %v365, %v1980
      %v1982 = vand.u32 %v1981, 4294901760
      %1983 = vmatprep.subr.mxu0 %v1982
      %v1984 = vand.u32 %v364, 4294901760
      %v1985 = vsub.f32 %v364, %v1984
      %v1986 = vand.u32 %v1985, 4294901760
      %1987 = vmatpush1.msra.mxu0 %v1986
      %v1988 = vand.u32 %v369, 4294901760
      %v1989 = vsub.f32 %v369, %v1988
      %v1990 = vand.u32 %v1989, 4294901760
      %1991 = vmatprep.subr.mxu0 %v1990
      %v1992 = vand.u32 %v368, 4294901760
      %v1993 = vsub.f32 %v368, %v1992
      %v1994 = vand.u32 %v1993, 4294901760
      %1995 = vmatpush1.msra.mxu0 %v1994
      %v1996 = vand.u32 %v373, 4294901760
      %v1997 = vsub.f32 %v373, %v1996
      %v1998 = vand.u32 %v1997, 4294901760
      %1999 = vmatprep.subr.mxu0 %v1998
      %v2000 = vand.u32 %v372, 4294901760
      %v2001 = vsub.f32 %v372, %v2000
      %v2002 = vand.u32 %v2001, 4294901760
      %2003 = vmatpush1.msra.mxu0 %v2002
      %v2004 = vand.u32 %v377, 4294901760
      %v2005 = vsub.f32 %v377, %v2004
      %v2006 = vand.u32 %v2005, 4294901760
      %2007 = vmatprep.subr.mxu0 %v2006
      %v2008 = vand.u32 %v376, 4294901760
      %v2009 = vsub.f32 %v376, %v2008
      %v2010 = vand.u32 %v2009, 4294901760
      %2011 = vmatpush1.msra.mxu0 %v2010
      %v2012 = vand.u32 %v381, 4294901760
      %v2013 = vsub.f32 %v381, %v2012
      %v2014 = vand.u32 %v2013, 4294901760
      %2015 = vmatprep.subr.mxu0 %v2014
      %v2016 = vand.u32 %v380, 4294901760
      %v2017 = vsub.f32 %v380, %v2016
      %v2018 = vand.u32 %v2017, 4294901760
      %2019 = vmatpush1.msra.mxu0 %v2018
      %v2020 = vand.u32 %v385, 4294901760
      %v2021 = vsub.f32 %v385, %v2020
      %v2022 = vand.u32 %v2021, 4294901760
      %2023 = vmatprep.subr.mxu0 %v2022
      %v2024 = vand.u32 %v384, 4294901760
      %v2025 = vsub.f32 %v384, %v2024
      %v2026 = vand.u32 %v2025, 4294901760
      %2027 = vmatpush1.msra.mxu0 %v2026
      %v2028 = vand.u32 %v389, 4294901760
      %v2029 = vsub.f32 %v389, %v2028
      %v2030 = vand.u32 %v2029, 4294901760
      %2031 = vmatprep.subr.mxu0 %v2030
      %v2032 = vand.u32 %v388, 4294901760
      %v2033 = vsub.f32 %v388, %v2032
      %v2034 = vand.u32 %v2033, 4294901760
      %2035 = vmatpush1.msra.mxu0 %v2034
      %v2036 = vand.u32 %v393, 4294901760
      %v2037 = vsub.f32 %v393, %v2036
      %v2038 = vand.u32 %v2037, 4294901760
      %2039 = vmatprep.subr.mxu0 %v2038
      %v2040 = vand.u32 %v392, 4294901760
      %v2041 = vsub.f32 %v392, %v2040
      %v2042 = vand.u32 %v2041, 4294901760
      %2043 = vmatpush1.msra.mxu0 %v2042
      %2044 = vmatprep.subr.mxu0 0.0
      %2045 = vmatpush1.msra.mxu0 0.0
      %2046 = vmatprep.subr.mxu0 0.0
      %2047 = vmatpush1.msra.mxu0 0.0
      %2048 = vmatprep.subr.mxu0 0.0
      %2049 = vmatpush1.msra.mxu0 0.0
      %2050 = vmatprep.subr.mxu0 0.0
      %2051 = vmatpush1.msra.mxu0 0.0
      %2052 = vmatprep.subr.mxu0 0.0
      %2053 = vmatpush1.msra.mxu0 0.0
      %2054 = vmatprep.subr.mxu0 0.0
      %2055 = vmatpush1.msra.mxu0 0.0
      %2056 = vmatprep.subr.mxu0 0.0
      %2057 = vmatpush1.msra.mxu0 0.0
      %2058 = vmatprep.subr.mxu0 0.0
      %2059 = vmatpush1.msra.mxu0 0.0
      %2060 = vmatprep.subr.mxu0 0.0
      %2061 = vmatpush1.msra.mxu0 0.0
      %2062 = vmatprep.subr.mxu0 0.0
      %2063 = vmatpush1.msra.mxu0 0.0
      %2064 = vmatprep.subr.mxu0 0.0
      %2065 = vmatpush1.msra.mxu0 0.0
      %2066 = vmatprep.subr.mxu0 0.0
      %2067 = vmatpush1.msra.mxu0 0.0
      %2068 = vmatprep.subr.mxu0 0.0
      %2069 = vmatpush1.msra.mxu0 0.0
      %2070 = vmatprep.subr.mxu0 0.0
      %2071 = vmatpush1.msra.mxu0 0.0
      %2072 = vmatprep.subr.mxu0 0.0
      %2073 = vmatpush1.msra.mxu0 0.0
      %2074 = vmatprep.subr.mxu0 0.0
      %2075 = vmatpush1.msra.mxu0 0.0
      %2076 = vmatprep.mubr.f32.mxu0 0.0
      %v2077 = vand.u32 %v312, 4294901760
      %2078 = vmatmul.mubr.f32.gmra.mrb[0].mxu0 %v2077
      %v2079 = vpop.f32.mrb[0].mxu0
      %v2080 = vadd.f32 %v1903, %v2079
      %v2081 = vpop.f32.mrb[0].mxu0
      %v2082 = vadd.f32 %v1905, %v2081
      %2083 = vmatprep.mubr.f32.mxu0 0.0
      %v2084 = vand.u32 %v313, 4294901760
      %2085 = vmatmul.mubr.f32.gmra.mrb[0].mxu0 %v2084
      %v2086 = vpop.f32.mrb[0].mxu0
      %v2087 = vadd.f32 %v1912, %v2086
      %v2088 = vpop.f32.mrb[0].mxu0
      %v2089 = vadd.f32 %v1914, %v2088
      %2090 = vdwg.mxu0
      %v2091 = vand.u32 %v333, 4294901760
      %2092 = vmatprep.subr.mxu0 %v2091
      %v2093 = vand.u32 %v332, 4294901760
      %2094 = vmatpush1.msra.mxu0 %v2093
      %v2095 = vand.u32 %v337, 4294901760
      %2096 = vmatprep.subr.mxu0 %v2095
      %v2097 = vand.u32 %v336, 4294901760
      %2098 = vmatpush1.msra.mxu0 %v2097
      %v2099 = vand.u32 %v341, 4294901760
      %2100 = vmatprep.subr.mxu0 %v2099
      %v2101 = vand.u32 %v340, 4294901760
      %2102 = vmatpush1.msra.mxu0 %v2101
      %v2103 = vand.u32 %v345, 4294901760
      %2104 = vmatprep.subr.mxu0 %v2103
      %v2105 = vand.u32 %v344, 4294901760
      %2106 = vmatpush1.msra.mxu0 %v2105
      %v2107 = vand.u32 %v349, 4294901760
      %2108 = vmatprep.subr.mxu0 %v2107
      %v2109 = vand.u32 %v348, 4294901760
      %2110 = vmatpush1.msra.mxu0 %v2109
      %v2111 = vand.u32 %v353, 4294901760
      %2112 = vmatprep.subr.mxu0 %v2111
      %v2113 = vand.u32 %v352, 4294901760
      %2114 = vmatpush1.msra.mxu0 %v2113
      %v2115 = vand.u32 %v357, 4294901760
      %2116 = vmatprep.subr.mxu0 %v2115
      %v2117 = vand.u32 %v356, 4294901760
      %2118 = vmatpush1.msra.mxu0 %v2117
      %v2119 = vand.u32 %v361, 4294901760
      %2120 = vmatprep.subr.mxu0 %v2119
      %v2121 = vand.u32 %v360, 4294901760
      %2122 = vmatpush1.msra.mxu0 %v2121
      %v2123 = vand.u32 %v365, 4294901760
      %2124 = vmatprep.subr.mxu0 %v2123
      %v2125 = vand.u32 %v364, 4294901760
      %2126 = vmatpush1.msra.mxu0 %v2125
      %v2127 = vand.u32 %v369, 4294901760
      %2128 = vmatprep.subr.mxu0 %v2127
      %v2129 = vand.u32 %v368, 4294901760
      %2130 = vmatpush1.msra.mxu0 %v2129
      %v2131 = vand.u32 %v373, 4294901760
      %2132 = vmatprep.subr.mxu0 %v2131
      %v2133 = vand.u32 %v372, 4294901760
      %2134 = vmatpush1.msra.mxu0 %v2133
      %v2135 = vand.u32 %v377, 4294901760
      %2136 = vmatprep.subr.mxu0 %v2135
      %v2137 = vand.u32 %v376, 4294901760
      %2138 = vmatpush1.msra.mxu0 %v2137
      %v2139 = vand.u32 %v381, 4294901760
      %2140 = vmatprep.subr.mxu0 %v2139
      %v2141 = vand.u32 %v380, 4294901760
      %2142 = vmatpush1.msra.mxu0 %v2141
      %v2143 = vand.u32 %v385, 4294901760
      %2144 = vmatprep.subr.mxu0 %v2143
      %v2145 = vand.u32 %v384, 4294901760
      %2146 = vmatpush1.msra.mxu0 %v2145
      %v2147 = vand.u32 %v389, 4294901760
      %2148 = vmatprep.subr.mxu0 %v2147
      %v2149 = vand.u32 %v388, 4294901760
      %2150 = vmatpush1.msra.mxu0 %v2149
      %v2151 = vand.u32 %v393, 4294901760
      %2152 = vmatprep.subr.mxu0 %v2151
      %v2153 = vand.u32 %v392, 4294901760
      %2154 = vmatpush1.msra.mxu0 %v2153
      %2155 = vmatprep.subr.mxu0 0.0
      %2156 = vmatpush1.msra.mxu0 0.0
      %2157 = vmatprep.subr.mxu0 0.0
      %2158 = vmatpush1.msra.mxu0 0.0
      %2159 = vmatprep.subr.mxu0 0.0
      %2160 = vmatpush1.msra.mxu0 0.0
      %2161 = vmatprep.subr.mxu0 0.0
      %2162 = vmatpush1.msra.mxu0 0.0
      %2163 = vmatprep.subr.mxu0 0.0
      %2164 = vmatpush1.msra.mxu0 0.0
      %2165 = vmatprep.subr.mxu0 0.0
      %2166 = vmatpush1.msra.mxu0 0.0
      %2167 = vmatprep.subr.mxu0 0.0
      %2168 = vmatpush1.msra.mxu0 0.0
      %2169 = vmatprep.subr.mxu0 0.0
      %2170 = vmatpush1.msra.mxu0 0.0
      %2171 = vmatprep.subr.mxu0 0.0
      %2172 = vmatpush1.msra.mxu0 0.0
      %2173 = vmatprep.subr.mxu0 0.0
      %2174 = vmatpush1.msra.mxu0 0.0
      %2175 = vmatprep.subr.mxu0 0.0
      %2176 = vmatpush1.msra.mxu0 0.0
      %2177 = vmatprep.subr.mxu0 0.0
      %2178 = vmatpush1.msra.mxu0 0.0
      %2179 = vmatprep.subr.mxu0 0.0
      %2180 = vmatpush1.msra.mxu0 0.0
      %2181 = vmatprep.subr.mxu0 0.0
      %2182 = vmatpush1.msra.mxu0 0.0
      %2183 = vmatprep.subr.mxu0 0.0
      %2184 = vmatpush1.msra.mxu0 0.0
      %2185 = vmatprep.subr.mxu0 0.0
      %2186 = vmatpush1.msra.mxu0 0.0
      %2187 = vmatprep.mubr.f32.mxu0 0.0
      %v2188 = vand.u32 %v312, 4294901760
      %2189 = vmatmul.mubr.f32.gmra.mrb[0].mxu0 %v2188
      %v2190 = vpop.f32.mrb[0].mxu0
      %v2191 = vadd.f32 %v2080, %v2190
      %v2192 = vpop.f32.mrb[0].mxu0
      %v2193 = vadd.f32 %v2082, %v2192
      %2194 = vmatprep.mubr.f32.mxu0 0.0
      %v2195 = vand.u32 %v313, 4294901760
      %2196 = vmatmul.mubr.f32.gmra.mrb[0].mxu0 %v2195
      %v2197 = vpop.f32.mrb[0].mxu0
      %v2198 = vadd.f32 %v2087, %v2197
      %v2199 = vpop.f32.mrb[0].mxu0
      %v2200 = vadd.f32 %v2089, %v2199
      %2201 = vdwg.mxu0
      %v2202 = vld [vmem:[%s3] sm:$0xff]
      %v2203 = vld [vmem:[%s3 + $0x8] sm:$0xff]
      %v2204 = vld [vmem:[%s3 + $0x10] sm:$0xff]
      %v2205 = vld [vmem:[%s3 + $0x18] sm:$0xff]
      %v2206 = vld [vmem:[%s3 + $0x20] sm:$0xff]
      %v2207 = vld [vmem:[%s3 + $0x28] sm:$0xff]
      %v2208 = vld [vmem:[%s3 + $0x30] sm:$0xff]
      %v2209 = vld [vmem:[%s3 + $0x38] sm:$0xff]
      %v2210 = vld [vmem:[%s3 + $0x40] sm:$0xff]
      %v2211 = vld [vmem:[%s3 + $0x48] sm:$0xff]
      %v2212 = vld [vmem:[%s3 + $0x50] sm:$0xff]
      %v2213 = vld [vmem:[%s3 + $0x58] sm:$0xff]
      %v2214 = vld [vmem:[%s3 + $0x60] sm:$0xff]
      %v2215 = vld [vmem:[%s3 + $0x68] sm:$0xff]
      %v2216 = vld [vmem:[%s3 + $0x70] sm:$0xff]
      %v2217 = vld [vmem:[%s3 + $0x78] sm:$0xff]
      %2218 = vmatprep.subr.mxu0 0.0
      %v2219 = vand.u32 %v2202, 4294901760
      %2220 = vmatpush1.msra.mxu0 %v2219
      %2221 = vmatprep.subr.mxu0 0.0
      %v2222 = vand.u32 %v2203, 4294901760
      %2223 = vmatpush1.msra.mxu0 %v2222
      %2224 = vmatprep.subr.mxu0 0.0
      %v2225 = vand.u32 %v2204, 4294901760
      %2226 = vmatpush1.msra.mxu0 %v2225
      %2227 = vmatprep.subr.mxu0 0.0
      %v2228 = vand.u32 %v2205, 4294901760
      %2229 = vmatpush1.msra.mxu0 %v2228
      %2230 = vmatprep.subr.mxu0 0.0
      %v2231 = vand.u32 %v2206, 4294901760
      %2232 = vmatpush1.msra.mxu0 %v2231
      %2233 = vmatprep.subr.mxu0 0.0
      %v2234 = vand.u32 %v2207, 4294901760
      %2235 = vmatpush1.msra.mxu0 %v2234
      %2236 = vmatprep.subr.mxu0 0.0
      %v2237 = vand.u32 %v2208, 4294901760
      %2238 = vmatpush1.msra.mxu0 %v2237
      %2239 = vmatprep.subr.mxu0 0.0
      %v2240 = vand.u32 %v2209, 4294901760
      %2241 = vmatpush1.msra.mxu0 %v2240
      %2242 = vmatprep.subr.mxu0 0.0
      %v2243 = vand.u32 %v2210, 4294901760
      %2244 = vmatpush1.msra.mxu0 %v2243
      %2245 = vmatprep.subr.mxu0 0.0
      %v2246 = vand.u32 %v2211, 4294901760
      %2247 = vmatpush1.msra.mxu0 %v2246
      %2248 = vmatprep.subr.mxu0 0.0
      %v2249 = vand.u32 %v2212, 4294901760
      %2250 = vmatpush1.msra.mxu0 %v2249
      %2251 = vmatprep.subr.mxu0 0.0
      %v2252 = vand.u32 %v2213, 4294901760
      %2253 = vmatpush1.msra.mxu0 %v2252
      %2254 = vmatprep.subr.mxu0 0.0
      %v2255 = vand.u32 %v2214, 4294901760
      %2256 = vmatpush1.msra.mxu0 %v2255
      %2257 = vmatprep.subr.mxu0 0.0
      %v2258 = vand.u32 %v2215, 4294901760
      %2259 = vmatpush1.msra.mxu0 %v2258
      %2260 = vmatprep.subr.mxu0 0.0
      %v2261 = vand.u32 %v2216, 4294901760
      %2262 = vmatpush1.msra.mxu0 %v2261
      %2263 = vmatprep.subr.mxu0 0.0
      %v2264 = vand.u32 %v2217, 4294901760
      %2265 = vmatpush1.msra.mxu0 %v2264
      %2266 = vmatprep.subr.mxu0 0.0
      %2267 = vmatpush1.msra.mxu0 0.0
      %2268 = vmatprep.subr.mxu0 0.0
      %2269 = vmatpush1.msra.mxu0 0.0
      %2270 = vmatprep.subr.mxu0 0.0
      %2271 = vmatpush1.msra.mxu0 0.0
      %2272 = vmatprep.subr.mxu0 0.0
      %2273 = vmatpush1.msra.mxu0 0.0
      %2274 = vmatprep.subr.mxu0 0.0
      %2275 = vmatpush1.msra.mxu0 0.0
      %2276 = vmatprep.subr.mxu0 0.0
      %2277 = vmatpush1.msra.mxu0 0.0
      %2278 = vmatprep.subr.mxu0 0.0
      %2279 = vmatpush1.msra.mxu0 0.0
      %2280 = vmatprep.subr.mxu0 0.0
      %2281 = vmatpush1.msra.mxu0 0.0
      %2282 = vmatprep.subr.mxu0 0.0
      %2283 = vmatpush1.msra.mxu0 0.0
      %2284 = vmatprep.subr.mxu0 0.0
      %2285 = vmatpush1.msra.mxu0 0.0
      %2286 = vmatprep.subr.mxu0 0.0
      %2287 = vmatpush1.msra.mxu0 0.0
      %2288 = vmatprep.subr.mxu0 0.0
      %2289 = vmatpush1.msra.mxu0 0.0
      %2290 = vmatprep.subr.mxu0 0.0
      %2291 = vmatpush1.msra.mxu0 0.0
      %2292 = vmatprep.subr.mxu0 0.0
      %2293 = vmatpush1.msra.mxu0 0.0
      %2294 = vmatprep.subr.mxu0 0.0
      %2295 = vmatpush1.msra.mxu0 0.0
      %2296 = vmatprep.subr.mxu0 0.0
      %2297 = vmatpush1.msra.mxu0 0.0
      %2298 = vmatprep.mubr.f32.mxu0 0.0
      %v2299 = vand.u32 %v314, 4294901760
      %v2300 = vsub.f32 %v314, %v2299
      %v2301 = vand.u32 %v2300, 4294901760
      %v2302 = vsub.f32 %v2300, %v2301
      %v2303 = vand.u32 %v2302, 4294901760
      %2304 = vmatmul.mubr.f32.gmra.mrb[0].mxu0 %v2303
      %v2305 = vpop.f32.mrb[0].mxu0
      %v2306 = vadd.f32 0.0, %v2305
      %v2307 = vpop.f32.mrb[0].mxu0
      %2308 = vmatprep.mubr.f32.mxu0 0.0
      %v2309 = vand.u32 %v315, 4294901760
      %v2310 = vsub.f32 %v315, %v2309
      %v2311 = vand.u32 %v2310, 4294901760
      %v2312 = vsub.f32 %v2310, %v2311
      %v2313 = vand.u32 %v2312, 4294901760
      %2314 = vmatmul.mubr.f32.gmra.mrb[0].mxu0 %v2313
      %v2315 = vpop.f32.mrb[0].mxu0
      %v2316 = vadd.f32 0.0, %v2315
      %v2317 = vpop.f32.mrb[0].mxu0
      %2318 = vmatprep.mubr.f32.mxu0 0.0
      %v2319 = vand.u32 %v316, 4294901760
      %v2320 = vsub.f32 %v316, %v2319
      %v2321 = vand.u32 %v2320, 4294901760
      %v2322 = vsub.f32 %v2320, %v2321
      %v2323 = vand.u32 %v2322, 4294901760
      %2324 = vmatmul.mubr.f32.gmra.mrb[0].mxu0 %v2323
      %v2325 = vpop.f32.mrb[0].mxu0
      %v2326 = vadd.f32 0.0, %v2325
      %v2327 = vpop.f32.mrb[0].mxu0
      %2328 = vmatprep.mubr.f32.mxu0 0.0
      %v2329 = vand.u32 %v317, 4294901760
      %v2330 = vsub.f32 %v317, %v2329
      %v2331 = vand.u32 %v2330, 4294901760
      %v2332 = vsub.f32 %v2330, %v2331
      %v2333 = vand.u32 %v2332, 4294901760
      %2334 = vmatmul.mubr.f32.gmra.mrb[0].mxu0 %v2333
      %v2335 = vpop.f32.mrb[0].mxu0
      %v2336 = vadd.f32 0.0, %v2335
      %v2337 = vpop.f32.mrb[0].mxu0
      %2338 = vmatprep.mubr.f32.mxu0 0.0
      %v2339 = vand.u32 %v318, 4294901760
      %v2340 = vsub.f32 %v318, %v2339
      %v2341 = vand.u32 %v2340, 4294901760
      %v2342 = vsub.f32 %v2340, %v2341
      %v2343 = vand.u32 %v2342, 4294901760
      %2344 = vmatmul.mubr.f32.gmra.mrb[0].mxu0 %v2343
      %v2345 = vpop.f32.mrb[0].mxu0
      %v2346 = vadd.f32 0.0, %v2345
      %v2347 = vpop.f32.mrb[0].mxu0
      %2348 = vmatprep.mubr.f32.mxu0 0.0
      %v2349 = vand.u32 %v319, 4294901760
      %v2350 = vsub.f32 %v319, %v2349
      %v2351 = vand.u32 %v2350, 4294901760
      %v2352 = vsub.f32 %v2350, %v2351
      %v2353 = vand.u32 %v2352, 4294901760
      %2354 = vmatmul.mubr.f32.gmra.mrb[0].mxu0 %v2353
      %v2355 = vpop.f32.mrb[0].mxu0
      %v2356 = vadd.f32 0.0, %v2355
      %v2357 = vpop.f32.mrb[0].mxu0
      %2358 = vmatprep.mubr.f32.mxu0 0.0
      %v2359 = vand.u32 %v320, 4294901760
      %v2360 = vsub.f32 %v320, %v2359
      %v2361 = vand.u32 %v2360, 4294901760
      %v2362 = vsub.f32 %v2360, %v2361
      %v2363 = vand.u32 %v2362, 4294901760
      %2364 = vmatmul.mubr.f32.gmra.mrb[0].mxu0 %v2363
      %v2365 = vpop.f32.mrb[0].mxu0
      %v2366 = vadd.f32 0.0, %v2365
      %v2367 = vpop.f32.mrb[0].mxu0
      %2368 = vmatprep.mubr.f32.mxu0 0.0
      %v2369 = vand.u32 %v321, 4294901760
      %v2370 = vsub.f32 %v321, %v2369
      %v2371 = vand.u32 %v2370, 4294901760
      %v2372 = vsub.f32 %v2370, %v2371
      %v2373 = vand.u32 %v2372, 4294901760
      %2374 = vmatmul.mubr.f32.gmra.mrb[0].mxu0 %v2373
      %v2375 = vpop.f32.mrb[0].mxu0
      %v2376 = vadd.f32 0.0, %v2375
      %v2377 = vpop.f32.mrb[0].mxu0
      %2378 = vmatprep.mubr.f32.mxu0 0.0
      %v2379 = vand.u32 %v322, 4294901760
      %v2380 = vsub.f32 %v322, %v2379
      %v2381 = vand.u32 %v2380, 4294901760
      %v2382 = vsub.f32 %v2380, %v2381
      %v2383 = vand.u32 %v2382, 4294901760
      %2384 = vmatmul.mubr.f32.gmra.mrb[0].mxu0 %v2383
      %v2385 = vpop.f32.mrb[0].mxu0
      %v2386 = vadd.f32 0.0, %v2385
      %v2387 = vpop.f32.mrb[0].mxu0
      %2388 = vmatprep.mubr.f32.mxu0 0.0
      %v2389 = vand.u32 %v323, 4294901760
      %v2390 = vsub.f32 %v323, %v2389
      %v2391 = vand.u32 %v2390, 4294901760
      %v2392 = vsub.f32 %v2390, %v2391
      %v2393 = vand.u32 %v2392, 4294901760
      %2394 = vmatmul.mubr.f32.gmra.mrb[0].mxu0 %v2393
      %v2395 = vpop.f32.mrb[0].mxu0
      %v2396 = vadd.f32 0.0, %v2395
      %v2397 = vpop.f32.mrb[0].mxu0
      %2398 = vmatprep.mubr.f32.mxu0 0.0
      %v2399 = vand.u32 %v324, 4294901760
      %v2400 = vsub.f32 %v324, %v2399
      %v2401 = vand.u32 %v2400, 4294901760
      %v2402 = vsub.f32 %v2400, %v2401
      %v2403 = vand.u32 %v2402, 4294901760
      %2404 = vmatmul.mubr.f32.gmra.mrb[0].mxu0 %v2403
      %v2405 = vpop.f32.mrb[0].mxu0
      %v2406 = vadd.f32 0.0, %v2405
      %v2407 = vpop.f32.mrb[0].mxu0
      %2408 = vmatprep.mubr.f32.mxu0 0.0
      %v2409 = vand.u32 %v325, 4294901760
      %v2410 = vsub.f32 %v325, %v2409
      %v2411 = vand.u32 %v2410, 4294901760
      %v2412 = vsub.f32 %v2410, %v2411
      %v2413 = vand.u32 %v2412, 4294901760
      %2414 = vmatmul.mubr.f32.gmra.mrb[0].mxu0 %v2413
      %v2415 = vpop.f32.mrb[0].mxu0
      %v2416 = vadd.f32 0.0, %v2415
      %v2417 = vpop.f32.mrb[0].mxu0
      %2418 = vmatprep.mubr.f32.mxu0 0.0
      %v2419 = vand.u32 %v326, 4294901760
      %v2420 = vsub.f32 %v326, %v2419
      %v2421 = vand.u32 %v2420, 4294901760
      %v2422 = vsub.f32 %v2420, %v2421
      %v2423 = vand.u32 %v2422, 4294901760
      %2424 = vmatmul.mubr.f32.gmra.mrb[0].mxu0 %v2423
      %v2425 = vpop.f32.mrb[0].mxu0
      %v2426 = vadd.f32 0.0, %v2425
      %v2427 = vpop.f32.mrb[0].mxu0
      %2428 = vmatprep.mubr.f32.mxu0 0.0
      %v2429 = vand.u32 %v327, 4294901760
      %v2430 = vsub.f32 %v327, %v2429
      %v2431 = vand.u32 %v2430, 4294901760
      %v2432 = vsub.f32 %v2430, %v2431
      %v2433 = vand.u32 %v2432, 4294901760
      %2434 = vmatmul.mubr.f32.gmra.mrb[0].mxu0 %v2433
      %v2435 = vpop.f32.mrb[0].mxu0
      %v2436 = vadd.f32 0.0, %v2435
      %v2437 = vpop.f32.mrb[0].mxu0
      %2438 = vmatprep.mubr.f32.mxu0 0.0
      %v2439 = vand.u32 %v328, 4294901760
      %v2440 = vsub.f32 %v328, %v2439
      %v2441 = vand.u32 %v2440, 4294901760
      %v2442 = vsub.f32 %v2440, %v2441
      %v2443 = vand.u32 %v2442, 4294901760
      %2444 = vmatmul.mubr.f32.gmra.mrb[0].mxu0 %v2443
      %v2445 = vpop.f32.mrb[0].mxu0
      %v2446 = vadd.f32 0.0, %v2445
      %v2447 = vpop.f32.mrb[0].mxu0
      %2448 = vmatprep.mubr.f32.mxu0 0.0
      %v2449 = vand.u32 %v329, 4294901760
      %v2450 = vsub.f32 %v329, %v2449
      %v2451 = vand.u32 %v2450, 4294901760
      %v2452 = vsub.f32 %v2450, %v2451
      %v2453 = vand.u32 %v2452, 4294901760
      %2454 = vmatmul.mubr.f32.gmra.mrb[0].mxu0 %v2453
      %v2455 = vpop.f32.mrb[0].mxu0
      %v2456 = vadd.f32 0.0, %v2455
      %v2457 = vpop.f32.mrb[0].mxu0
      %2458 = vdwg.mxu0
      %2459 = vmatprep.subr.mxu0 0.0
      %v2460 = vand.u32 %v2202, 4294901760
      %v2461 = vsub.f32 %v2202, %v2460
      %v2462 = vand.u32 %v2461, 4294901760
      %v2463 = vsub.f32 %v2461, %v2462
      %v2464 = vand.u32 %v2463, 4294901760
      %2465 = vmatpush1.msra.mxu0 %v2464
      %2466 = vmatprep.subr.mxu0 0.0
      %v2467 = vand.u32 %v2203, 4294901760
      %v2468 = vsub.f32 %v2203, %v2467
      %v2469 = vand.u32 %v2468, 4294901760
      %v2470 = vsub.f32 %v2468, %v2469
      %v2471 = vand.u32 %v2470, 4294901760
      %2472 = vmatpush1.msra.mxu0 %v2471
      %2473 = vmatprep.subr.mxu0 0.0
      %v2474 = vand.u32 %v2204, 4294901760
      %v2475 = vsub.f32 %v2204, %v2474
      %v2476 = vand.u32 %v2475, 4294901760
      %v2477 = vsub.f32 %v2475, %v2476
      %v2478 = vand.u32 %v2477, 4294901760
      %2479 = vmatpush1.msra.mxu0 %v2478
      %2480 = vmatprep.subr.mxu0 0.0
      %v2481 = vand.u32 %v2205, 4294901760
      %v2482 = vsub.f32 %v2205, %v2481
      %v2483 = vand.u32 %v2482, 4294901760
      %v2484 = vsub.f32 %v2482, %v2483
      %v2485 = vand.u32 %v2484, 4294901760
      %2486 = vmatpush1.msra.mxu0 %v2485
      %2487 = vmatprep.subr.mxu0 0.0
      %v2488 = vand.u32 %v2206, 4294901760
      %v2489 = vsub.f32 %v2206, %v2488
      %v2490 = vand.u32 %v2489, 4294901760
      %v2491 = vsub.f32 %v2489, %v2490
      %v2492 = vand.u32 %v2491, 4294901760
      %2493 = vmatpush1.msra.mxu0 %v2492
      %2494 = vmatprep.subr.mxu0 0.0
      %v2495 = vand.u32 %v2207, 4294901760
      %v2496 = vsub.f32 %v2207, %v2495
      %v2497 = vand.u32 %v2496, 4294901760
      %v2498 = vsub.f32 %v2496, %v2497
      %v2499 = vand.u32 %v2498, 4294901760
      %2500 = vmatpush1.msra.mxu0 %v2499
      %2501 = vmatprep.subr.mxu0 0.0
      %v2502 = vand.u32 %v2208, 4294901760
      %v2503 = vsub.f32 %v2208, %v2502
      %v2504 = vand.u32 %v2503, 4294901760
      %v2505 = vsub.f32 %v2503, %v2504
      %v2506 = vand.u32 %v2505, 4294901760
      %2507 = vmatpush1.msra.mxu0 %v2506
      %2508 = vmatprep.subr.mxu0 0.0
      %v2509 = vand.u32 %v2209, 4294901760
      %v2510 = vsub.f32 %v2209, %v2509
      %v2511 = vand.u32 %v2510, 4294901760
      %v2512 = vsub.f32 %v2510, %v2511
      %v2513 = vand.u32 %v2512, 4294901760
      %2514 = vmatpush1.msra.mxu0 %v2513
      %2515 = vmatprep.subr.mxu0 0.0
      %v2516 = vand.u32 %v2210, 4294901760
      %v2517 = vsub.f32 %v2210, %v2516
      %v2518 = vand.u32 %v2517, 4294901760
      %v2519 = vsub.f32 %v2517, %v2518
      %v2520 = vand.u32 %v2519, 4294901760
      %2521 = vmatpush1.msra.mxu0 %v2520
      %2522 = vmatprep.subr.mxu0 0.0
      %v2523 = vand.u32 %v2211, 4294901760
      %v2524 = vsub.f32 %v2211, %v2523
      %v2525 = vand.u32 %v2524, 4294901760
      %v2526 = vsub.f32 %v2524, %v2525
      %v2527 = vand.u32 %v2526, 4294901760
      %2528 = vmatpush1.msra.mxu0 %v2527
      %2529 = vmatprep.subr.mxu0 0.0
      %v2530 = vand.u32 %v2212, 4294901760
      %v2531 = vsub.f32 %v2212, %v2530
      %v2532 = vand.u32 %v2531, 4294901760
      %v2533 = vsub.f32 %v2531, %v2532
      %v2534 = vand.u32 %v2533, 4294901760
      %2535 = vmatpush1.msra.mxu0 %v2534
      %2536 = vmatprep.subr.mxu0 0.0
      %v2537 = vand.u32 %v2213, 4294901760
      %v2538 = vsub.f32 %v2213, %v2537
      %v2539 = vand.u32 %v2538, 4294901760
      %v2540 = vsub.f32 %v2538, %v2539
      %v2541 = vand.u32 %v2540, 4294901760
      %2542 = vmatpush1.msra.mxu0 %v2541
      %2543 = vmatprep.subr.mxu0 0.0
      %v2544 = vand.u32 %v2214, 4294901760
      %v2545 = vsub.f32 %v2214, %v2544
      %v2546 = vand.u32 %v2545, 4294901760
      %v2547 = vsub.f32 %v2545, %v2546
      %v2548 = vand.u32 %v2547, 4294901760
      %2549 = vmatpush1.msra.mxu0 %v2548
      %2550 = vmatprep.subr.mxu0 0.0
      %v2551 = vand.u32 %v2215, 4294901760
      %v2552 = vsub.f32 %v2215, %v2551
      %v2553 = vand.u32 %v2552, 4294901760
      %v2554 = vsub.f32 %v2552, %v2553
      %v2555 = vand.u32 %v2554, 4294901760
      %2556 = vmatpush1.msra.mxu0 %v2555
      %2557 = vmatprep.subr.mxu0 0.0
      %v2558 = vand.u32 %v2216, 4294901760
      %v2559 = vsub.f32 %v2216, %v2558
      %v2560 = vand.u32 %v2559, 4294901760
      %v2561 = vsub.f32 %v2559, %v2560
      %v2562 = vand.u32 %v2561, 4294901760
      %2563 = vmatpush1.msra.mxu0 %v2562
      %2564 = vmatprep.subr.mxu0 0.0
      %v2565 = vand.u32 %v2217, 4294901760
      %v2566 = vsub.f32 %v2217, %v2565
      %v2567 = vand.u32 %v2566, 4294901760
      %v2568 = vsub.f32 %v2566, %v2567
      %v2569 = vand.u32 %v2568, 4294901760
      %2570 = vmatpush1.msra.mxu0 %v2569
      %2571 = vmatprep.subr.mxu0 0.0
      %2572 = vmatpush1.msra.mxu0 0.0
      %2573 = vmatprep.subr.mxu0 0.0
      %2574 = vmatpush1.msra.mxu0 0.0
      %2575 = vmatprep.subr.mxu0 0.0
      %2576 = vmatpush1.msra.mxu0 0.0
      %2577 = vmatprep.subr.mxu0 0.0
      %2578 = vmatpush1.msra.mxu0 0.0
      %2579 = vmatprep.subr.mxu0 0.0
      %2580 = vmatpush1.msra.mxu0 0.0
      %2581 = vmatprep.subr.mxu0 0.0
      %2582 = vmatpush1.msra.mxu0 0.0
      %2583 = vmatprep.subr.mxu0 0.0
      %2584 = vmatpush1.msra.mxu0 0.0
      %2585 = vmatprep.subr.mxu0 0.0
      %2586 = vmatpush1.msra.mxu0 0.0
      %2587 = vmatprep.subr.mxu0 0.0
      %2588 = vmatpush1.msra.mxu0 0.0
      %2589 = vmatprep.subr.mxu0 0.0
      %2590 = vmatpush1.msra.mxu0 0.0
      %2591 = vmatprep.subr.mxu0 0.0
      %2592 = vmatpush1.msra.mxu0 0.0
      %2593 = vmatprep.subr.mxu0 0.0
      %2594 = vmatpush1.msra.mxu0 0.0
      %2595 = vmatprep.subr.mxu0 0.0
      %2596 = vmatpush1.msra.mxu0 0.0
      %2597 = vmatprep.subr.mxu0 0.0
      %2598 = vmatpush1.msra.mxu0 0.0
      %2599 = vmatprep.subr.mxu0 0.0
      %2600 = vmatpush1.msra.mxu0 0.0
      %2601 = vmatprep.subr.mxu0 0.0
      %2602 = vmatpush1.msra.mxu0 0.0
      %2603 = vmatprep.mubr.f32.mxu0 0.0
      %v2604 = vand.u32 %v314, 4294901760
      %2605 = vmatmul.mubr.f32.gmra.mrb[0].mxu0 %v2604
      %v2606 = vpop.f32.mrb[0].mxu0
      %v2607 = vadd.f32 %v2306, %v2606
      %v2608 = vpop.f32.mrb[0].mxu0
      %2609 = vmatprep.mubr.f32.mxu0 0.0
      %v2610 = vand.u32 %v315, 4294901760
      %2611 = vmatmul.mubr.f32.gmra.mrb[0].mxu0 %v2610
      %v2612 = vpop.f32.mrb[0].mxu0
      %v2613 = vadd.f32 %v2316, %v2612
      %v2614 = vpop.f32.mrb[0].mxu0
      %2615 = vmatprep.mubr.f32.mxu0 0.0
      %v2616 = vand.u32 %v316, 4294901760
      %2617 = vmatmul.mubr.f32.gmra.mrb[0].mxu0 %v2616
      %v2618 = vpop.f32.mrb[0].mxu0
      %v2619 = vadd.f32 %v2326, %v2618
      %v2620 = vpop.f32.mrb[0].mxu0
      %2621 = vmatprep.mubr.f32.mxu0 0.0
      %v2622 = vand.u32 %v317, 4294901760
      %2623 = vmatmul.mubr.f32.gmra.mrb[0].mxu0 %v2622
      %v2624 = vpop.f32.mrb[0].mxu0
      %v2625 = vadd.f32 %v2336, %v2624
      %v2626 = vpop.f32.mrb[0].mxu0
      %2627 = vmatprep.mubr.f32.mxu0 0.0
      %v2628 = vand.u32 %v318, 4294901760
      %2629 = vmatmul.mubr.f32.gmra.mrb[0].mxu0 %v2628
      %v2630 = vpop.f32.mrb[0].mxu0
      %v2631 = vadd.f32 %v2346, %v2630
      %v2632 = vpop.f32.mrb[0].mxu0
      %2633 = vmatprep.mubr.f32.mxu0 0.0
      %v2634 = vand.u32 %v319, 4294901760
      %2635 = vmatmul.mubr.f32.gmra.mrb[0].mxu0 %v2634
      %v2636 = vpop.f32.mrb[0].mxu0
      %v2637 = vadd.f32 %v2356, %v2636
      %v2638 = vpop.f32.mrb[0].mxu0
      %2639 = vmatprep.mubr.f32.mxu0 0.0
      %v2640 = vand.u32 %v320, 4294901760
      %2641 = vmatmul.mubr.f32.gmra.mrb[0].mxu0 %v2640
      %v2642 = vpop.f32.mrb[0].mxu0
      %v2643 = vadd.f32 %v2366, %v2642
      %v2644 = vpop.f32.mrb[0].mxu0
      %2645 = vmatprep.mubr.f32.mxu0 0.0
      %v2646 = vand.u32 %v321, 4294901760
      %2647 = vmatmul.mubr.f32.gmra.mrb[0].mxu0 %v2646
      %v2648 = vpop.f32.mrb[0].mxu0
      %v2649 = vadd.f32 %v2376, %v2648
      %v2650 = vpop.f32.mrb[0].mxu0
      %2651 = vmatprep.mubr.f32.mxu0 0.0
      %v2652 = vand.u32 %v322, 4294901760
      %2653 = vmatmul.mubr.f32.gmra.mrb[0].mxu0 %v2652
      %v2654 = vpop.f32.mrb[0].mxu0
      %v2655 = vadd.f32 %v2386, %v2654
      %v2656 = vpop.f32.mrb[0].mxu0
      %2657 = vmatprep.mubr.f32.mxu0 0.0
      %v2658 = vand.u32 %v323, 4294901760
      %2659 = vmatmul.mubr.f32.gmra.mrb[0].mxu0 %v2658
      %v2660 = vpop.f32.mrb[0].mxu0
      %v2661 = vadd.f32 %v2396, %v2660
      %v2662 = vpop.f32.mrb[0].mxu0
      %2663 = vmatprep.mubr.f32.mxu0 0.0
      %v2664 = vand.u32 %v324, 4294901760
      %2665 = vmatmul.mubr.f32.gmra.mrb[0].mxu0 %v2664
      %v2666 = vpop.f32.mrb[0].mxu0
      %v2667 = vadd.f32 %v2406, %v2666
      %v2668 = vpop.f32.mrb[0].mxu0
      %2669 = vmatprep.mubr.f32.mxu0 0.0
      %v2670 = vand.u32 %v325, 4294901760
      %2671 = vmatmul.mubr.f32.gmra.mrb[0].mxu0 %v2670
      %v2672 = vpop.f32.mrb[0].mxu0
      %v2673 = vadd.f32 %v2416, %v2672
      %v2674 = vpop.f32.mrb[0].mxu0
      %2675 = vmatprep.mubr.f32.mxu0 0.0
      %v2676 = vand.u32 %v326, 4294901760
      %2677 = vmatmul.mubr.f32.gmra.mrb[0].mxu0 %v2676
      %v2678 = vpop.f32.mrb[0].mxu0
      %v2679 = vadd.f32 %v2426, %v2678
      %v2680 = vpop.f32.mrb[0].mxu0
      %2681 = vmatprep.mubr.f32.mxu0 0.0
      %v2682 = vand.u32 %v327, 4294901760
      %2683 = vmatmul.mubr.f32.gmra.mrb[0].mxu0 %v2682
      %v2684 = vpop.f32.mrb[0].mxu0
      %v2685 = vadd.f32 %v2436, %v2684
      %v2686 = vpop.f32.mrb[0].mxu0
      %2687 = vmatprep.mubr.f32.mxu0 0.0
      %v2688 = vand.u32 %v328, 4294901760
      %2689 = vmatmul.mubr.f32.gmra.mrb[0].mxu0 %v2688
      %v2690 = vpop.f32.mrb[0].mxu0
      %v2691 = vadd.f32 %v2446, %v2690
      %v2692 = vpop.f32.mrb[0].mxu0
      %2693 = vmatprep.mubr.f32.mxu0 0.0
      %v2694 = vand.u32 %v329, 4294901760
      %2695 = vmatmul.mubr.f32.gmra.mrb[0].mxu0 %v2694
      %v2696 = vpop.f32.mrb[0].mxu0
      %v2697 = vadd.f32 %v2456, %v2696
      %v2698 = vpop.f32.mrb[0].mxu0
      %2699 = vdwg.mxu0
      %2700 = vmatprep.subr.mxu0 0.0
      %v2701 = vand.u32 %v2202, 4294901760
      %v2702 = vsub.f32 %v2202, %v2701
      %2703 = vmatpush1.msra.mxu0 %v2702
      %2704 = vmatprep.subr.mxu0 0.0
      %v2705 = vand.u32 %v2203, 4294901760
      %v2706 = vsub.f32 %v2203, %v2705
      %2707 = vmatpush1.msra.mxu0 %v2706
      %2708 = vmatprep.subr.mxu0 0.0
      %v2709 = vand.u32 %v2204, 4294901760
      %v2710 = vsub.f32 %v2204, %v2709
      %2711 = vmatpush1.msra.mxu0 %v2710
      %2712 = vmatprep.subr.mxu0 0.0
      %v2713 = vand.u32 %v2205, 4294901760
      %v2714 = vsub.f32 %v2205, %v2713
      %2715 = vmatpush1.msra.mxu0 %v2714
      %2716 = vmatprep.subr.mxu0 0.0
      %v2717 = vand.u32 %v2206, 4294901760
      %v2718 = vsub.f32 %v2206, %v2717
      %2719 = vmatpush1.msra.mxu0 %v2718
      %2720 = vmatprep.subr.mxu0 0.0
      %v2721 = vand.u32 %v2207, 4294901760
      %v2722 = vsub.f32 %v2207, %v2721
      %2723 = vmatpush1.msra.mxu0 %v2722
      %2724 = vmatprep.subr.mxu0 0.0
      %v2725 = vand.u32 %v2208, 4294901760
      %v2726 = vsub.f32 %v2208, %v2725
      %2727 = vmatpush1.msra.mxu0 %v2726
      %2728 = vmatprep.subr.mxu0 0.0
      %v2729 = vand.u32 %v2209, 4294901760
      %v2730 = vsub.f32 %v2209, %v2729
      %2731 = vmatpush1.msra.mxu0 %v2730
      %2732 = vmatprep.subr.mxu0 0.0
      %v2733 = vand.u32 %v2210, 4294901760
      %v2734 = vsub.f32 %v2210, %v2733
      %2735 = vmatpush1.msra.mxu0 %v2734
      %2736 = vmatprep.subr.mxu0 0.0
      %v2737 = vand.u32 %v2211, 4294901760
      %v2738 = vsub.f32 %v2211, %v2737
      %2739 = vmatpush1.msra.mxu0 %v2738
      %2740 = vmatprep.subr.mxu0 0.0
      %v2741 = vand.u32 %v2212, 4294901760
      %v2742 = vsub.f32 %v2212, %v2741
      %2743 = vmatpush1.msra.mxu0 %v2742
      %2744 = vmatprep.subr.mxu0 0.0
      %v2745 = vand.u32 %v2213, 4294901760
      %v2746 = vsub.f32 %v2213, %v2745
      %2747 = vmatpush1.msra.mxu0 %v2746
      %2748 = vmatprep.subr.mxu0 0.0
      %v2749 = vand.u32 %v2214, 4294901760
      %v2750 = vsub.f32 %v2214, %v2749
      %2751 = vmatpush1.msra.mxu0 %v2750
      %2752 = vmatprep.subr.mxu0 0.0
      %v2753 = vand.u32 %v2215, 4294901760
      %v2754 = vsub.f32 %v2215, %v2753
      %2755 = vmatpush1.msra.mxu0 %v2754
      %2756 = vmatprep.subr.mxu0 0.0
      %v2757 = vand.u32 %v2216, 4294901760
      %v2758 = vsub.f32 %v2216, %v2757
      %2759 = vmatpush1.msra.mxu0 %v2758
      %2760 = vmatprep.subr.mxu0 0.0
      %v2761 = vand.u32 %v2217, 4294901760
      %v2762 = vsub.f32 %v2217, %v2761
      %2763 = vmatpush1.msra.mxu0 %v2762
      %2764 = vmatprep.subr.mxu0 0.0
      %2765 = vmatpush1.msra.mxu0 0.0
      %2766 = vmatprep.subr.mxu0 0.0
      %2767 = vmatpush1.msra.mxu0 0.0
      %2768 = vmatprep.subr.mxu0 0.0
      %2769 = vmatpush1.msra.mxu0 0.0
      %2770 = vmatprep.subr.mxu0 0.0
      %2771 = vmatpush1.msra.mxu0 0.0
      %2772 = vmatprep.subr.mxu0 0.0
      %2773 = vmatpush1.msra.mxu0 0.0
      %2774 = vmatprep.subr.mxu0 0.0
      %2775 = vmatpush1.msra.mxu0 0.0
      %2776 = vmatprep.subr.mxu0 0.0
      %2777 = vmatpush1.msra.mxu0 0.0
      %2778 = vmatprep.subr.mxu0 0.0
      %2779 = vmatpush1.msra.mxu0 0.0
      %2780 = vmatprep.subr.mxu0 0.0
      %2781 = vmatpush1.msra.mxu0 0.0
      %2782 = vmatprep.subr.mxu0 0.0
      %2783 = vmatpush1.msra.mxu0 0.0
      %2784 = vmatprep.subr.mxu0 0.0
      %2785 = vmatpush1.msra.mxu0 0.0
      %2786 = vmatprep.subr.mxu0 0.0
      %2787 = vmatpush1.msra.mxu0 0.0
      %2788 = vmatprep.subr.mxu0 0.0
      %2789 = vmatpush1.msra.mxu0 0.0
      %2790 = vmatprep.subr.mxu0 0.0
      %2791 = vmatpush1.msra.mxu0 0.0
      %2792 = vmatprep.subr.mxu0 0.0
      %2793 = vmatpush1.msra.mxu0 0.0
      %2794 = vmatprep.subr.mxu0 0.0
      %2795 = vmatpush1.msra.mxu0 0.0
      %2796 = vmatprep.mubr.f32.mxu0 0.0
      %v2797 = vand.u32 %v314, 4294901760
      %v2798 = vsub.f32 %v314, %v2797
      %2799 = vmatmul.mubr.f32.gmra.mrb[0].mxu0 %v2798
      %v2800 = vpop.f32.mrb[0].mxu0
      %v2801 = vadd.f32 %v2607, %v2800
      %v2802 = vpop.f32.mrb[0].mxu0
      %2803 = vmatprep.mubr.f32.mxu0 0.0
      %v2804 = vand.u32 %v315, 4294901760
      %v2805 = vsub.f32 %v315, %v2804
      %2806 = vmatmul.mubr.f32.gmra.mrb[0].mxu0 %v2805
      %v2807 = vpop.f32.mrb[0].mxu0
      %v2808 = vadd.f32 %v2613, %v2807
      %v2809 = vpop.f32.mrb[0].mxu0
      %2810 = vmatprep.mubr.f32.mxu0 0.0
      %v2811 = vand.u32 %v316, 4294901760
      %v2812 = vsub.f32 %v316, %v2811
      %2813 = vmatmul.mubr.f32.gmra.mrb[0].mxu0 %v2812
      %v2814 = vpop.f32.mrb[0].mxu0
      %v2815 = vadd.f32 %v2619, %v2814
      %v2816 = vpop.f32.mrb[0].mxu0
      %2817 = vmatprep.mubr.f32.mxu0 0.0
      %v2818 = vand.u32 %v317, 4294901760
      %v2819 = vsub.f32 %v317, %v2818
      %2820 = vmatmul.mubr.f32.gmra.mrb[0].mxu0 %v2819
      %v2821 = vpop.f32.mrb[0].mxu0
      %v2822 = vadd.f32 %v2625, %v2821
      %v2823 = vpop.f32.mrb[0].mxu0
      %2824 = vmatprep.mubr.f32.mxu0 0.0
      %v2825 = vand.u32 %v318, 4294901760
      %v2826 = vsub.f32 %v318, %v2825
      %2827 = vmatmul.mubr.f32.gmra.mrb[0].mxu0 %v2826
      %v2828 = vpop.f32.mrb[0].mxu0
      %v2829 = vadd.f32 %v2631, %v2828
      %v2830 = vpop.f32.mrb[0].mxu0
      %2831 = vmatprep.mubr.f32.mxu0 0.0
      %v2832 = vand.u32 %v319, 4294901760
      %v2833 = vsub.f32 %v319, %v2832
      %2834 = vmatmul.mubr.f32.gmra.mrb[0].mxu0 %v2833
      %v2835 = vpop.f32.mrb[0].mxu0
      %v2836 = vadd.f32 %v2637, %v2835
      %v2837 = vpop.f32.mrb[0].mxu0
      %2838 = vmatprep.mubr.f32.mxu0 0.0
      %v2839 = vand.u32 %v320, 4294901760
      %v2840 = vsub.f32 %v320, %v2839
      %2841 = vmatmul.mubr.f32.gmra.mrb[0].mxu0 %v2840
      %v2842 = vpop.f32.mrb[0].mxu0
      %v2843 = vadd.f32 %v2643, %v2842
      %v2844 = vpop.f32.mrb[0].mxu0
      %2845 = vmatprep.mubr.f32.mxu0 0.0
      %v2846 = vand.u32 %v321, 4294901760
      %v2847 = vsub.f32 %v321, %v2846
      %2848 = vmatmul.mubr.f32.gmra.mrb[0].mxu0 %v2847
      %v2849 = vpop.f32.mrb[0].mxu0
      %v2850 = vadd.f32 %v2649, %v2849
      %v2851 = vpop.f32.mrb[0].mxu0
      %2852 = vmatprep.mubr.f32.mxu0 0.0
      %v2853 = vand.u32 %v322, 4294901760
      %v2854 = vsub.f32 %v322, %v2853
      %2855 = vmatmul.mubr.f32.gmra.mrb[0].mxu0 %v2854
      %v2856 = vpop.f32.mrb[0].mxu0
      %v2857 = vadd.f32 %v2655, %v2856
      %v2858 = vpop.f32.mrb[0].mxu0
      %2859 = vmatprep.mubr.f32.mxu0 0.0
      %v2860 = vand.u32 %v323, 4294901760
      %v2861 = vsub.f32 %v323, %v2860
      %2862 = vmatmul.mubr.f32.gmra.mrb[0].mxu0 %v2861
      %v2863 = vpop.f32.mrb[0].mxu0
      %v2864 = vadd.f32 %v2661, %v2863
      %v2865 = vpop.f32.mrb[0].mxu0
      %2866 = vmatprep.mubr.f32.mxu0 0.0
      %v2867 = vand.u32 %v324, 4294901760
      %v2868 = vsub.f32 %v324, %v2867
      %2869 = vmatmul.mubr.f32.gmra.mrb[0].mxu0 %v2868
      %v2870 = vpop.f32.mrb[0].mxu0
      %v2871 = vadd.f32 %v2667, %v2870
      %v2872 = vpop.f32.mrb[0].mxu0
      %2873 = vmatprep.mubr.f32.mxu0 0.0
      %v2874 = vand.u32 %v325, 4294901760
      %v2875 = vsub.f32 %v325, %v2874
      %2876 = vmatmul.mubr.f32.gmra.mrb[0].mxu0 %v2875
      %v2877 = vpop.f32.mrb[0].mxu0
      %v2878 = vadd.f32 %v2673, %v2877
      %v2879 = vpop.f32.mrb[0].mxu0
      %2880 = vmatprep.mubr.f32.mxu0 0.0
      %v2881 = vand.u32 %v326, 4294901760
      %v2882 = vsub.f32 %v326, %v2881
      %2883 = vmatmul.mubr.f32.gmra.mrb[0].mxu0 %v2882
      %v2884 = vpop.f32.mrb[0].mxu0
      %v2885 = vadd.f32 %v2679, %v2884
      %v2886 = vpop.f32.mrb[0].mxu0
      %2887 = vmatprep.mubr.f32.mxu0 0.0
      %v2888 = vand.u32 %v327, 4294901760
      %v2889 = vsub.f32 %v327, %v2888
      %2890 = vmatmul.mubr.f32.gmra.mrb[0].mxu0 %v2889
      %v2891 = vpop.f32.mrb[0].mxu0
      %v2892 = vadd.f32 %v2685, %v2891
      %v2893 = vpop.f32.mrb[0].mxu0
      %2894 = vmatprep.mubr.f32.mxu0 0.0
      %v2895 = vand.u32 %v328, 4294901760
      %v2896 = vsub.f32 %v328, %v2895
      %2897 = vmatmul.mubr.f32.gmra.mrb[0].mxu0 %v2896
      %v2898 = vpop.f32.mrb[0].mxu0
      %v2899 = vadd.f32 %v2691, %v2898
      %v2900 = vpop.f32.mrb[0].mxu0
      %2901 = vmatprep.mubr.f32.mxu0 0.0
      %v2902 = vand.u32 %v329, 4294901760
      %v2903 = vsub.f32 %v329, %v2902
      %2904 = vmatmul.mubr.f32.gmra.mrb[0].mxu0 %v2903
      %v2905 = vpop.f32.mrb[0].mxu0
      %v2906 = vadd.f32 %v2697, %v2905
      %v2907 = vpop.f32.mrb[0].mxu0
      %2908 = vdwg.mxu0
      %2909 = vmatprep.subr.mxu0 0.0
      %v2910 = vand.u32 %v2202, 4294901760
      %2911 = vmatpush1.msra.mxu0 %v2910
      %2912 = vmatprep.subr.mxu0 0.0
      %v2913 = vand.u32 %v2203, 4294901760
      %2914 = vmatpush1.msra.mxu0 %v2913
      %2915 = vmatprep.subr.mxu0 0.0
      %v2916 = vand.u32 %v2204, 4294901760
      %2917 = vmatpush1.msra.mxu0 %v2916
      %2918 = vmatprep.subr.mxu0 0.0
      %v2919 = vand.u32 %v2205, 4294901760
      %2920 = vmatpush1.msra.mxu0 %v2919
      %2921 = vmatprep.subr.mxu0 0.0
      %v2922 = vand.u32 %v2206, 4294901760
      %2923 = vmatpush1.msra.mxu0 %v2922
      %2924 = vmatprep.subr.mxu0 0.0
      %v2925 = vand.u32 %v2207, 4294901760
      %2926 = vmatpush1.msra.mxu0 %v2925
      %2927 = vmatprep.subr.mxu0 0.0
      %v2928 = vand.u32 %v2208, 4294901760
      %2929 = vmatpush1.msra.mxu0 %v2928
      %2930 = vmatprep.subr.mxu0 0.0
      %v2931 = vand.u32 %v2209, 4294901760
      %2932 = vmatpush1.msra.mxu0 %v2931
      %2933 = vmatprep.subr.mxu0 0.0
      %v2934 = vand.u32 %v2210, 4294901760
      %2935 = vmatpush1.msra.mxu0 %v2934
      %2936 = vmatprep.subr.mxu0 0.0
      %v2937 = vand.u32 %v2211, 4294901760
      %2938 = vmatpush1.msra.mxu0 %v2937
      %2939 = vmatprep.subr.mxu0 0.0
      %v2940 = vand.u32 %v2212, 4294901760
      %2941 = vmatpush1.msra.mxu0 %v2940
      %2942 = vmatprep.subr.mxu0 0.0
      %v2943 = vand.u32 %v2213, 4294901760
      %2944 = vmatpush1.msra.mxu0 %v2943
      %2945 = vmatprep.subr.mxu0 0.0
      %v2946 = vand.u32 %v2214, 4294901760
      %2947 = vmatpush1.msra.mxu0 %v2946
      %2948 = vmatprep.subr.mxu0 0.0
      %v2949 = vand.u32 %v2215, 4294901760
      %2950 = vmatpush1.msra.mxu0 %v2949
      %2951 = vmatprep.subr.mxu0 0.0
      %v2952 = vand.u32 %v2216, 4294901760
      %2953 = vmatpush1.msra.mxu0 %v2952
      %2954 = vmatprep.subr.mxu0 0.0
      %v2955 = vand.u32 %v2217, 4294901760
      %2956 = vmatpush1.msra.mxu0 %v2955
      %2957 = vmatprep.subr.mxu0 0.0
      %2958 = vmatpush1.msra.mxu0 0.0
      %2959 = vmatprep.subr.mxu0 0.0
      %2960 = vmatpush1.msra.mxu0 0.0
      %2961 = vmatprep.subr.mxu0 0.0
      %2962 = vmatpush1.msra.mxu0 0.0
      %2963 = vmatprep.subr.mxu0 0.0
      %2964 = vmatpush1.msra.mxu0 0.0
      %2965 = vmatprep.subr.mxu0 0.0
      %2966 = vmatpush1.msra.mxu0 0.0
      %2967 = vmatprep.subr.mxu0 0.0
      %2968 = vmatpush1.msra.mxu0 0.0
      %2969 = vmatprep.subr.mxu0 0.0
      %2970 = vmatpush1.msra.mxu0 0.0
      %2971 = vmatprep.subr.mxu0 0.0
      %2972 = vmatpush1.msra.mxu0 0.0
      %2973 = vmatprep.subr.mxu0 0.0
      %2974 = vmatpush1.msra.mxu0 0.0
      %2975 = vmatprep.subr.mxu0 0.0
      %2976 = vmatpush1.msra.mxu0 0.0
      %2977 = vmatprep.subr.mxu0 0.0
      %2978 = vmatpush1.msra.mxu0 0.0
      %2979 = vmatprep.subr.mxu0 0.0
      %2980 = vmatpush1.msra.mxu0 0.0
      %2981 = vmatprep.subr.mxu0 0.0
      %2982 = vmatpush1.msra.mxu0 0.0
      %2983 = vmatprep.subr.mxu0 0.0
      %2984 = vmatpush1.msra.mxu0 0.0
      %2985 = vmatprep.subr.mxu0 0.0
      %2986 = vmatpush1.msra.mxu0 0.0
      %2987 = vmatprep.subr.mxu0 0.0
      %2988 = vmatpush1.msra.mxu0 0.0
      %2989 = vmatprep.mubr.f32.mxu0 0.0
      %v2990 = vand.u32 %v314, 4294901760
      %v2991 = vsub.f32 %v314, %v2990
      %v2992 = vand.u32 %v2991, 4294901760
      %2993 = vmatmul.mubr.f32.gmra.mrb[0].mxu0 %v2992
      %v2994 = vpop.f32.mrb[0].mxu0
      %v2995 = vadd.f32 %v2801, %v2994
      %v2996 = vpop.f32.mrb[0].mxu0
      %2997 = vmatprep.mubr.f32.mxu0 0.0
      %v2998 = vand.u32 %v315, 4294901760
      %v2999 = vsub.f32 %v315, %v2998
      %v3000 = vand.u32 %v2999, 4294901760
      %3001 = vmatmul.mubr.f32.gmra.mrb[0].mxu0 %v3000
      %v3002 = vpop.f32.mrb[0].mxu0
      %v3003 = vadd.f32 %v2808, %v3002
      %v3004 = vpop.f32.mrb[0].mxu0
      %3005 = vmatprep.mubr.f32.mxu0 0.0
      %v3006 = vand.u32 %v316, 4294901760
      %v3007 = vsub.f32 %v316, %v3006
      %v3008 = vand.u32 %v3007, 4294901760
      %3009 = vmatmul.mubr.f32.gmra.mrb[0].mxu0 %v3008
      %v3010 = vpop.f32.mrb[0].mxu0
      %v3011 = vadd.f32 %v2815, %v3010
      %v3012 = vpop.f32.mrb[0].mxu0
      %3013 = vmatprep.mubr.f32.mxu0 0.0
      %v3014 = vand.u32 %v317, 4294901760
      %v3015 = vsub.f32 %v317, %v3014
      %v3016 = vand.u32 %v3015, 4294901760
      %3017 = vmatmul.mubr.f32.gmra.mrb[0].mxu0 %v3016
      %v3018 = vpop.f32.mrb[0].mxu0
      %v3019 = vadd.f32 %v2822, %v3018
      %v3020 = vpop.f32.mrb[0].mxu0
      %3021 = vmatprep.mubr.f32.mxu0 0.0
      %v3022 = vand.u32 %v318, 4294901760
      %v3023 = vsub.f32 %v318, %v3022
      %v3024 = vand.u32 %v3023, 4294901760
      %3025 = vmatmul.mubr.f32.gmra.mrb[0].mxu0 %v3024
      %v3026 = vpop.f32.mrb[0].mxu0
      %v3027 = vadd.f32 %v2829, %v3026
      %v3028 = vpop.f32.mrb[0].mxu0
      %3029 = vmatprep.mubr.f32.mxu0 0.0
      %v3030 = vand.u32 %v319, 4294901760
      %v3031 = vsub.f32 %v319, %v3030
      %v3032 = vand.u32 %v3031, 4294901760
      %3033 = vmatmul.mubr.f32.gmra.mrb[0].mxu0 %v3032
      %v3034 = vpop.f32.mrb[0].mxu0
      %v3035 = vadd.f32 %v2836, %v3034
      %v3036 = vpop.f32.mrb[0].mxu0
      %3037 = vmatprep.mubr.f32.mxu0 0.0
      %v3038 = vand.u32 %v320, 4294901760
      %v3039 = vsub.f32 %v320, %v3038
      %v3040 = vand.u32 %v3039, 4294901760
      %3041 = vmatmul.mubr.f32.gmra.mrb[0].mxu0 %v3040
      %v3042 = vpop.f32.mrb[0].mxu0
      %v3043 = vadd.f32 %v2843, %v3042
      %v3044 = vpop.f32.mrb[0].mxu0
      %3045 = vmatprep.mubr.f32.mxu0 0.0
      %v3046 = vand.u32 %v321, 4294901760
      %v3047 = vsub.f32 %v321, %v3046
      %v3048 = vand.u32 %v3047, 4294901760
      %3049 = vmatmul.mubr.f32.gmra.mrb[0].mxu0 %v3048
      %v3050 = vpop.f32.mrb[0].mxu0
      %v3051 = vadd.f32 %v2850, %v3050
      %v3052 = vpop.f32.mrb[0].mxu0
      %3053 = vmatprep.mubr.f32.mxu0 0.0
      %v3054 = vand.u32 %v322, 4294901760
      %v3055 = vsub.f32 %v322, %v3054
      %v3056 = vand.u32 %v3055, 4294901760
      %3057 = vmatmul.mubr.f32.gmra.mrb[0].mxu0 %v3056
      %v3058 = vpop.f32.mrb[0].mxu0
      %v3059 = vadd.f32 %v2857, %v3058
      %v3060 = vpop.f32.mrb[0].mxu0
      %3061 = vmatprep.mubr.f32.mxu0 0.0
      %v3062 = vand.u32 %v323, 4294901760
      %v3063 = vsub.f32 %v323, %v3062
      %v3064 = vand.u32 %v3063, 4294901760
      %3065 = vmatmul.mubr.f32.gmra.mrb[0].mxu0 %v3064
      %v3066 = vpop.f32.mrb[0].mxu0
      %v3067 = vadd.f32 %v2864, %v3066
      %v3068 = vpop.f32.mrb[0].mxu0
      %3069 = vmatprep.mubr.f32.mxu0 0.0
      %v3070 = vand.u32 %v324, 4294901760
      %v3071 = vsub.f32 %v324, %v3070
      %v3072 = vand.u32 %v3071, 4294901760
      %3073 = vmatmul.mubr.f32.gmra.mrb[0].mxu0 %v3072
      %v3074 = vpop.f32.mrb[0].mxu0
      %v3075 = vadd.f32 %v2871, %v3074
      %v3076 = vpop.f32.mrb[0].mxu0
      %3077 = vmatprep.mubr.f32.mxu0 0.0
      %v3078 = vand.u32 %v325, 4294901760
      %v3079 = vsub.f32 %v325, %v3078
      %v3080 = vand.u32 %v3079, 4294901760
      %3081 = vmatmul.mubr.f32.gmra.mrb[0].mxu0 %v3080
      %v3082 = vpop.f32.mrb[0].mxu0
      %v3083 = vadd.f32 %v2878, %v3082
      %v3084 = vpop.f32.mrb[0].mxu0
      %3085 = vmatprep.mubr.f32.mxu0 0.0
      %v3086 = vand.u32 %v326, 4294901760
      %v3087 = vsub.f32 %v326, %v3086
      %v3088 = vand.u32 %v3087, 4294901760
      %3089 = vmatmul.mubr.f32.gmra.mrb[0].mxu0 %v3088
      %v3090 = vpop.f32.mrb[0].mxu0
      %v3091 = vadd.f32 %v2885, %v3090
      %v3092 = vpop.f32.mrb[0].mxu0
      %3093 = vmatprep.mubr.f32.mxu0 0.0
      %v3094 = vand.u32 %v327, 4294901760
      %v3095 = vsub.f32 %v327, %v3094
      %v3096 = vand.u32 %v3095, 4294901760
      %3097 = vmatmul.mubr.f32.gmra.mrb[0].mxu0 %v3096
      %v3098 = vpop.f32.mrb[0].mxu0
      %v3099 = vadd.f32 %v2892, %v3098
      %v3100 = vpop.f32.mrb[0].mxu0
      %3101 = vmatprep.mubr.f32.mxu0 0.0
      %v3102 = vand.u32 %v328, 4294901760
      %v3103 = vsub.f32 %v328, %v3102
      %v3104 = vand.u32 %v3103, 4294901760
      %3105 = vmatmul.mubr.f32.gmra.mrb[0].mxu0 %v3104
      %v3106 = vpop.f32.mrb[0].mxu0
      %v3107 = vadd.f32 %v2899, %v3106
      %v3108 = vpop.f32.mrb[0].mxu0
      %3109 = vmatprep.mubr.f32.mxu0 0.0
      %v3110 = vand.u32 %v329, 4294901760
      %v3111 = vsub.f32 %v329, %v3110
      %v3112 = vand.u32 %v3111, 4294901760
      %3113 = vmatmul.mubr.f32.gmra.mrb[0].mxu0 %v3112
      %v3114 = vpop.f32.mrb[0].mxu0
      %v3115 = vadd.f32 %v2906, %v3114
      %v3116 = vpop.f32.mrb[0].mxu0
      %3117 = vdwg.mxu0
      %3118 = vmatprep.subr.mxu0 0.0
      %v3119 = vand.u32 %v2202, 4294901760
      %v3120 = vsub.f32 %v2202, %v3119
      %v3121 = vand.u32 %v3120, 4294901760
      %3122 = vmatpush1.msra.mxu0 %v3121
      %3123 = vmatprep.subr.mxu0 0.0
      %v3124 = vand.u32 %v2203, 4294901760
      %v3125 = vsub.f32 %v2203, %v3124
      %v3126 = vand.u32 %v3125, 4294901760
      %3127 = vmatpush1.msra.mxu0 %v3126
      %3128 = vmatprep.subr.mxu0 0.0
      %v3129 = vand.u32 %v2204, 4294901760
      %v3130 = vsub.f32 %v2204, %v3129
      %v3131 = vand.u32 %v3130, 4294901760
      %3132 = vmatpush1.msra.mxu0 %v3131
      %3133 = vmatprep.subr.mxu0 0.0
      %v3134 = vand.u32 %v2205, 4294901760
      %v3135 = vsub.f32 %v2205, %v3134
      %v3136 = vand.u32 %v3135, 4294901760
      %3137 = vmatpush1.msra.mxu0 %v3136
      %3138 = vmatprep.subr.mxu0 0.0
      %v3139 = vand.u32 %v2206, 4294901760
      %v3140 = vsub.f32 %v2206, %v3139
      %v3141 = vand.u32 %v3140, 4294901760
      %3142 = vmatpush1.msra.mxu0 %v3141
      %3143 = vmatprep.subr.mxu0 0.0
      %v3144 = vand.u32 %v2207, 4294901760
      %v3145 = vsub.f32 %v2207, %v3144
      %v3146 = vand.u32 %v3145, 4294901760
      %3147 = vmatpush1.msra.mxu0 %v3146
      %3148 = vmatprep.subr.mxu0 0.0
      %v3149 = vand.u32 %v2208, 4294901760
      %v3150 = vsub.f32 %v2208, %v3149
      %v3151 = vand.u32 %v3150, 4294901760
      %3152 = vmatpush1.msra.mxu0 %v3151
      %3153 = vmatprep.subr.mxu0 0.0
      %v3154 = vand.u32 %v2209, 4294901760
      %v3155 = vsub.f32 %v2209, %v3154
      %v3156 = vand.u32 %v3155, 4294901760
      %3157 = vmatpush1.msra.mxu0 %v3156
      %3158 = vmatprep.subr.mxu0 0.0
      %v3159 = vand.u32 %v2210, 4294901760
      %v3160 = vsub.f32 %v2210, %v3159
      %v3161 = vand.u32 %v3160, 4294901760
      %3162 = vmatpush1.msra.mxu0 %v3161
      %3163 = vmatprep.subr.mxu0 0.0
      %v3164 = vand.u32 %v2211, 4294901760
      %v3165 = vsub.f32 %v2211, %v3164
      %v3166 = vand.u32 %v3165, 4294901760
      %3167 = vmatpush1.msra.mxu0 %v3166
      %3168 = vmatprep.subr.mxu0 0.0
      %v3169 = vand.u32 %v2212, 4294901760
      %v3170 = vsub.f32 %v2212, %v3169
      %v3171 = vand.u32 %v3170, 4294901760
      %3172 = vmatpush1.msra.mxu0 %v3171
      %3173 = vmatprep.subr.mxu0 0.0
      %v3174 = vand.u32 %v2213, 4294901760
      %v3175 = vsub.f32 %v2213, %v3174
      %v3176 = vand.u32 %v3175, 4294901760
      %3177 = vmatpush1.msra.mxu0 %v3176
      %3178 = vmatprep.subr.mxu0 0.0
      %v3179 = vand.u32 %v2214, 4294901760
      %v3180 = vsub.f32 %v2214, %v3179
      %v3181 = vand.u32 %v3180, 4294901760
      %3182 = vmatpush1.msra.mxu0 %v3181
      %3183 = vmatprep.subr.mxu0 0.0
      %v3184 = vand.u32 %v2215, 4294901760
      %v3185 = vsub.f32 %v2215, %v3184
      %v3186 = vand.u32 %v3185, 4294901760
      %3187 = vmatpush1.msra.mxu0 %v3186
      %3188 = vmatprep.subr.mxu0 0.0
      %v3189 = vand.u32 %v2216, 4294901760
      %v3190 = vsub.f32 %v2216, %v3189
      %v3191 = vand.u32 %v3190, 4294901760
      %3192 = vmatpush1.msra.mxu0 %v3191
      %3193 = vmatprep.subr.mxu0 0.0
      %v3194 = vand.u32 %v2217, 4294901760
      %v3195 = vsub.f32 %v2217, %v3194
      %v3196 = vand.u32 %v3195, 4294901760
      %3197 = vmatpush1.msra.mxu0 %v3196
      %3198 = vmatprep.subr.mxu0 0.0
      %3199 = vmatpush1.msra.mxu0 0.0
      %3200 = vmatprep.subr.mxu0 0.0
      %3201 = vmatpush1.msra.mxu0 0.0
      %3202 = vmatprep.subr.mxu0 0.0
      %3203 = vmatpush1.msra.mxu0 0.0
      %3204 = vmatprep.subr.mxu0 0.0
      %3205 = vmatpush1.msra.mxu0 0.0
      %3206 = vmatprep.subr.mxu0 0.0
      %3207 = vmatpush1.msra.mxu0 0.0
      %3208 = vmatprep.subr.mxu0 0.0
      %3209 = vmatpush1.msra.mxu0 0.0
      %3210 = vmatprep.subr.mxu0 0.0
      %3211 = vmatpush1.msra.mxu0 0.0
      %3212 = vmatprep.subr.mxu0 0.0
      %3213 = vmatpush1.msra.mxu0 0.0
      %3214 = vmatprep.subr.mxu0 0.0
      %3215 = vmatpush1.msra.mxu0 0.0
      %3216 = vmatprep.subr.mxu0 0.0
      %3217 = vmatpush1.msra.mxu0 0.0
      %3218 = vmatprep.subr.mxu0 0.0
      %3219 = vmatpush1.msra.mxu0 0.0
      %3220 = vmatprep.subr.mxu0 0.0
      %3221 = vmatpush1.msra.mxu0 0.0
      %3222 = vmatprep.subr.mxu0 0.0
      %3223 = vmatpush1.msra.mxu0 0.0
      %3224 = vmatprep.subr.mxu0 0.0
      %3225 = vmatpush1.msra.mxu0 0.0
      %3226 = vmatprep.subr.mxu0 0.0
      %3227 = vmatpush1.msra.mxu0 0.0
      %3228 = vmatprep.subr.mxu0 0.0
      %3229 = vmatpush1.msra.mxu0 0.0
      %3230 = vmatprep.mubr.f32.mxu0 0.0
      %v3231 = vand.u32 %v314, 4294901760
      %3232 = vmatmul.mubr.f32.gmra.mrb[0].mxu0 %v3231
      %v3233 = vpop.f32.mrb[0].mxu0
      %v3234 = vadd.f32 %v2995, %v3233
      %v3235 = vpop.f32.mrb[0].mxu0
      %3236 = vmatprep.mubr.f32.mxu0 0.0
      %v3237 = vand.u32 %v315, 4294901760
      %3238 = vmatmul.mubr.f32.gmra.mrb[0].mxu0 %v3237
      %v3239 = vpop.f32.mrb[0].mxu0
      %v3240 = vadd.f32 %v3003, %v3239
      %v3241 = vpop.f32.mrb[0].mxu0
      %3242 = vmatprep.mubr.f32.mxu0 0.0
      %v3243 = vand.u32 %v316, 4294901760
      %3244 = vmatmul.mubr.f32.gmra.mrb[0].mxu0 %v3243
      %v3245 = vpop.f32.mrb[0].mxu0
      %v3246 = vadd.f32 %v3011, %v3245
      %v3247 = vpop.f32.mrb[0].mxu0
      %3248 = vmatprep.mubr.f32.mxu0 0.0
      %v3249 = vand.u32 %v317, 4294901760
      %3250 = vmatmul.mubr.f32.gmra.mrb[0].mxu0 %v3249
      %v3251 = vpop.f32.mrb[0].mxu0
      %v3252 = vadd.f32 %v3019, %v3251
      %v3253 = vpop.f32.mrb[0].mxu0
      %3254 = vmatprep.mubr.f32.mxu0 0.0
      %v3255 = vand.u32 %v318, 4294901760
      %3256 = vmatmul.mubr.f32.gmra.mrb[0].mxu0 %v3255
      %v3257 = vpop.f32.mrb[0].mxu0
      %v3258 = vadd.f32 %v3027, %v3257
      %v3259 = vpop.f32.mrb[0].mxu0
      %3260 = vmatprep.mubr.f32.mxu0 0.0
      %v3261 = vand.u32 %v319, 4294901760
      %3262 = vmatmul.mubr.f32.gmra.mrb[0].mxu0 %v3261
      %v3263 = vpop.f32.mrb[0].mxu0
      %v3264 = vadd.f32 %v3035, %v3263
      %v3265 = vpop.f32.mrb[0].mxu0
      %3266 = vmatprep.mubr.f32.mxu0 0.0
      %v3267 = vand.u32 %v320, 4294901760
      %3268 = vmatmul.mubr.f32.gmra.mrb[0].mxu0 %v3267
      %v3269 = vpop.f32.mrb[0].mxu0
      %v3270 = vadd.f32 %v3043, %v3269
      %v3271 = vpop.f32.mrb[0].mxu0
      %3272 = vmatprep.mubr.f32.mxu0 0.0
      %v3273 = vand.u32 %v321, 4294901760
      %3274 = vmatmul.mubr.f32.gmra.mrb[0].mxu0 %v3273
      %v3275 = vpop.f32.mrb[0].mxu0
      %v3276 = vadd.f32 %v3051, %v3275
      %v3277 = vpop.f32.mrb[0].mxu0
      %3278 = vmatprep.mubr.f32.mxu0 0.0
      %v3279 = vand.u32 %v322, 4294901760
      %3280 = vmatmul.mubr.f32.gmra.mrb[0].mxu0 %v3279
      %v3281 = vpop.f32.mrb[0].mxu0
      %v3282 = vadd.f32 %v3059, %v3281
      %v3283 = vpop.f32.mrb[0].mxu0
      %3284 = vmatprep.mubr.f32.mxu0 0.0
      %v3285 = vand.u32 %v323, 4294901760
      %3286 = vmatmul.mubr.f32.gmra.mrb[0].mxu0 %v3285
      %v3287 = vpop.f32.mrb[0].mxu0
      %v3288 = vadd.f32 %v3067, %v3287
      %v3289 = vpop.f32.mrb[0].mxu0
      %3290 = vmatprep.mubr.f32.mxu0 0.0
      %v3291 = vand.u32 %v324, 4294901760
      %3292 = vmatmul.mubr.f32.gmra.mrb[0].mxu0 %v3291
      %v3293 = vpop.f32.mrb[0].mxu0
      %v3294 = vadd.f32 %v3075, %v3293
      %v3295 = vpop.f32.mrb[0].mxu0
      %3296 = vmatprep.mubr.f32.mxu0 0.0
      %v3297 = vand.u32 %v325, 4294901760
      %3298 = vmatmul.mubr.f32.gmra.mrb[0].mxu0 %v3297
      %v3299 = vpop.f32.mrb[0].mxu0
      %v3300 = vadd.f32 %v3083, %v3299
      %v3301 = vpop.f32.mrb[0].mxu0
      %3302 = vmatprep.mubr.f32.mxu0 0.0
      %v3303 = vand.u32 %v326, 4294901760
      %3304 = vmatmul.mubr.f32.gmra.mrb[0].mxu0 %v3303
      %v3305 = vpop.f32.mrb[0].mxu0
      %v3306 = vadd.f32 %v3091, %v3305
      %v3307 = vpop.f32.mrb[0].mxu0
      %3308 = vmatprep.mubr.f32.mxu0 0.0
      %v3309 = vand.u32 %v327, 4294901760
      %3310 = vmatmul.mubr.f32.gmra.mrb[0].mxu0 %v3309
      %v3311 = vpop.f32.mrb[0].mxu0
      %v3312 = vadd.f32 %v3099, %v3311
      %v3313 = vpop.f32.mrb[0].mxu0
      %3314 = vmatprep.mubr.f32.mxu0 0.0
      %v3315 = vand.u32 %v328, 4294901760
      %3316 = vmatmul.mubr.f32.gmra.mrb[0].mxu0 %v3315
      %v3317 = vpop.f32.mrb[0].mxu0
      %v3318 = vadd.f32 %v3107, %v3317
      %v3319 = vpop.f32.mrb[0].mxu0
      %3320 = vmatprep.mubr.f32.mxu0 0.0
      %v3321 = vand.u32 %v329, 4294901760
      %3322 = vmatmul.mubr.f32.gmra.mrb[0].mxu0 %v3321
      %v3323 = vpop.f32.mrb[0].mxu0
      %v3324 = vadd.f32 %v3115, %v3323
      %v3325 = vpop.f32.mrb[0].mxu0
      %3326 = vdwg.mxu0
      %3327 = vmatprep.subr.mxu0 0.0
      %v3328 = vand.u32 %v2202, 4294901760
      %3329 = vmatpush1.msra.mxu0 %v3328
      %3330 = vmatprep.subr.mxu0 0.0
      %v3331 = vand.u32 %v2203, 4294901760
      %3332 = vmatpush1.msra.mxu0 %v3331
      %3333 = vmatprep.subr.mxu0 0.0
      %v3334 = vand.u32 %v2204, 4294901760
      %3335 = vmatpush1.msra.mxu0 %v3334
      %3336 = vmatprep.subr.mxu0 0.0
      %v3337 = vand.u32 %v2205, 4294901760
      %3338 = vmatpush1.msra.mxu0 %v3337
      %3339 = vmatprep.subr.mxu0 0.0
      %v3340 = vand.u32 %v2206, 4294901760
      %3341 = vmatpush1.msra.mxu0 %v3340
      %3342 = vmatprep.subr.mxu0 0.0
      %v3343 = vand.u32 %v2207, 4294901760
      %3344 = vmatpush1.msra.mxu0 %v3343
      %3345 = vmatprep.subr.mxu0 0.0
      %v3346 = vand.u32 %v2208, 4294901760
      %3347 = vmatpush1.msra.mxu0 %v3346
      %3348 = vmatprep.subr.mxu0 0.0
      %v3349 = vand.u32 %v2209, 4294901760
      %3350 = vmatpush1.msra.mxu0 %v3349
      %3351 = vmatprep.subr.mxu0 0.0
      %v3352 = vand.u32 %v2210, 4294901760
      %3353 = vmatpush1.msra.mxu0 %v3352
      %3354 = vmatprep.subr.mxu0 0.0
      %v3355 = vand.u32 %v2211, 4294901760
      %3356 = vmatpush1.msra.mxu0 %v3355
      %3357 = vmatprep.subr.mxu0 0.0
      %v3358 = vand.u32 %v2212, 4294901760
      %3359 = vmatpush1.msra.mxu0 %v3358
      %3360 = vmatprep.subr.mxu0 0.0
      %v3361 = vand.u32 %v2213, 4294901760
      %3362 = vmatpush1.msra.mxu0 %v3361
      %3363 = vmatprep.subr.mxu0 0.0
      %v3364 = vand.u32 %v2214, 4294901760
      %3365 = vmatpush1.msra.mxu0 %v3364
      %3366 = vmatprep.subr.mxu0 0.0
      %v3367 = vand.u32 %v2215, 4294901760
      %3368 = vmatpush1.msra.mxu0 %v3367
      %3369 = vmatprep.subr.mxu0 0.0
      %v3370 = vand.u32 %v2216, 4294901760
      %3371 = vmatpush1.msra.mxu0 %v3370
      %3372 = vmatprep.subr.mxu0 0.0
      %v3373 = vand.u32 %v2217, 4294901760
      %3374 = vmatpush1.msra.mxu0 %v3373
      %3375 = vmatprep.subr.mxu0 0.0
      %3376 = vmatpush1.msra.mxu0 0.0
      %3377 = vmatprep.subr.mxu0 0.0
      %3378 = vmatpush1.msra.mxu0 0.0
      %3379 = vmatprep.subr.mxu0 0.0
      %3380 = vmatpush1.msra.mxu0 0.0
      %3381 = vmatprep.subr.mxu0 0.0
      %3382 = vmatpush1.msra.mxu0 0.0
      %3383 = vmatprep.subr.mxu0 0.0
      %3384 = vmatpush1.msra.mxu0 0.0
      %3385 = vmatprep.subr.mxu0 0.0
      %3386 = vmatpush1.msra.mxu0 0.0
      %3387 = vmatprep.subr.mxu0 0.0
      %3388 = vmatpush1.msra.mxu0 0.0
      %3389 = vmatprep.subr.mxu0 0.0
      %3390 = vmatpush1.msra.mxu0 0.0
      %3391 = vmatprep.subr.mxu0 0.0
      %3392 = vmatpush1.msra.mxu0 0.0
      %3393 = vmatprep.subr.mxu0 0.0
      %3394 = vmatpush1.msra.mxu0 0.0
      %3395 = vmatprep.subr.mxu0 0.0
      %3396 = vmatpush1.msra.mxu0 0.0
      %3397 = vmatprep.subr.mxu0 0.0
      %3398 = vmatpush1.msra.mxu0 0.0
      %3399 = vmatprep.subr.mxu0 0.0
      %3400 = vmatpush1.msra.mxu0 0.0
      %3401 = vmatprep.subr.mxu0 0.0
      %3402 = vmatpush1.msra.mxu0 0.0
      %3403 = vmatprep.subr.mxu0 0.0
      %3404 = vmatpush1.msra.mxu0 0.0
      %3405 = vmatprep.subr.mxu0 0.0
      %3406 = vmatpush1.msra.mxu0 0.0
      %3407 = vmatprep.mubr.f32.mxu0 0.0
      %v3408 = vand.u32 %v314, 4294901760
      %3409 = vmatmul.mubr.f32.gmra.mrb[0].mxu0 %v3408
      %v3410 = vpop.f32.mrb[0].mxu0
      %v3411 = vadd.f32 %v3234, %v3410
      %v3412 = vpop.f32.mrb[0].mxu0
      %3413 = vmatprep.mubr.f32.mxu0 0.0
      %v3414 = vand.u32 %v315, 4294901760
      %3415 = vmatmul.mubr.f32.gmra.mrb[0].mxu0 %v3414
      %v3416 = vpop.f32.mrb[0].mxu0
      %v3417 = vadd.f32 %v3240, %v3416
      %v3418 = vpop.f32.mrb[0].mxu0
      %3419 = vmatprep.mubr.f32.mxu0 0.0
      %v3420 = vand.u32 %v316, 4294901760
      %3421 = vmatmul.mubr.f32.gmra.mrb[0].mxu0 %v3420
      %v3422 = vpop.f32.mrb[0].mxu0
      %v3423 = vadd.f32 %v3246, %v3422
      %v3424 = vpop.f32.mrb[0].mxu0
      %3425 = vmatprep.mubr.f32.mxu0 0.0
      %v3426 = vand.u32 %v317, 4294901760
      %3427 = vmatmul.mubr.f32.gmra.mrb[0].mxu0 %v3426
      %v3428 = vpop.f32.mrb[0].mxu0
      %v3429 = vadd.f32 %v3252, %v3428
      %v3430 = vpop.f32.mrb[0].mxu0
      %3431 = vmatprep.mubr.f32.mxu0 0.0
      %v3432 = vand.u32 %v318, 4294901760
      %3433 = vmatmul.mubr.f32.gmra.mrb[0].mxu0 %v3432
      %v3434 = vpop.f32.mrb[0].mxu0
      %v3435 = vadd.f32 %v3258, %v3434
      %v3436 = vpop.f32.mrb[0].mxu0
      %3437 = vmatprep.mubr.f32.mxu0 0.0
      %v3438 = vand.u32 %v319, 4294901760
      %3439 = vmatmul.mubr.f32.gmra.mrb[0].mxu0 %v3438
      %v3440 = vpop.f32.mrb[0].mxu0
      %v3441 = vadd.f32 %v3264, %v3440
      %v3442 = vpop.f32.mrb[0].mxu0
      %3443 = vmatprep.mubr.f32.mxu0 0.0
      %v3444 = vand.u32 %v320, 4294901760
      %3445 = vmatmul.mubr.f32.gmra.mrb[0].mxu0 %v3444
      %v3446 = vpop.f32.mrb[0].mxu0
      %v3447 = vadd.f32 %v3270, %v3446
      %v3448 = vpop.f32.mrb[0].mxu0
      %3449 = vmatprep.mubr.f32.mxu0 0.0
      %v3450 = vand.u32 %v321, 4294901760
      %3451 = vmatmul.mubr.f32.gmra.mrb[0].mxu0 %v3450
      %v3452 = vpop.f32.mrb[0].mxu0
      %v3453 = vadd.f32 %v3276, %v3452
      %v3454 = vpop.f32.mrb[0].mxu0
      %3455 = vmatprep.mubr.f32.mxu0 0.0
      %v3456 = vand.u32 %v322, 4294901760
      %3457 = vmatmul.mubr.f32.gmra.mrb[0].mxu0 %v3456
      %v3458 = vpop.f32.mrb[0].mxu0
      %v3459 = vadd.f32 %v3282, %v3458
      %v3460 = vpop.f32.mrb[0].mxu0
      %3461 = vmatprep.mubr.f32.mxu0 0.0
      %v3462 = vand.u32 %v323, 4294901760
      %3463 = vmatmul.mubr.f32.gmra.mrb[0].mxu0 %v3462
      %v3464 = vpop.f32.mrb[0].mxu0
      %v3465 = vadd.f32 %v3288, %v3464
      %v3466 = vpop.f32.mrb[0].mxu0
      %3467 = vmatprep.mubr.f32.mxu0 0.0
      %v3468 = vand.u32 %v324, 4294901760
      %3469 = vmatmul.mubr.f32.gmra.mrb[0].mxu0 %v3468
      %v3470 = vpop.f32.mrb[0].mxu0
      %v3471 = vadd.f32 %v3294, %v3470
      %v3472 = vpop.f32.mrb[0].mxu0
      %3473 = vmatprep.mubr.f32.mxu0 0.0
      %v3474 = vand.u32 %v325, 4294901760
      %3475 = vmatmul.mubr.f32.gmra.mrb[0].mxu0 %v3474
      %v3476 = vpop.f32.mrb[0].mxu0
      %v3477 = vadd.f32 %v3300, %v3476
      %v3478 = vpop.f32.mrb[0].mxu0
      %3479 = vmatprep.mubr.f32.mxu0 0.0
      %v3480 = vand.u32 %v326, 4294901760
      %3481 = vmatmul.mubr.f32.gmra.mrb[0].mxu0 %v3480
      %v3482 = vpop.f32.mrb[0].mxu0
      %v3483 = vadd.f32 %v3306, %v3482
      %v3484 = vpop.f32.mrb[0].mxu0
      %3485 = vmatprep.mubr.f32.mxu0 0.0
      %v3486 = vand.u32 %v327, 4294901760
      %3487 = vmatmul.mubr.f32.gmra.mrb[0].mxu0 %v3486
      %v3488 = vpop.f32.mrb[0].mxu0
      %v3489 = vadd.f32 %v3312, %v3488
      %v3490 = vpop.f32.mrb[0].mxu0
      %3491 = vmatprep.mubr.f32.mxu0 0.0
      %v3492 = vand.u32 %v328, 4294901760
      %3493 = vmatmul.mubr.f32.gmra.mrb[0].mxu0 %v3492
      %v3494 = vpop.f32.mrb[0].mxu0
      %v3495 = vadd.f32 %v3318, %v3494
      %v3496 = vpop.f32.mrb[0].mxu0
      %3497 = vmatprep.mubr.f32.mxu0 0.0
      %v3498 = vand.u32 %v329, 4294901760
      %3499 = vmatmul.mubr.f32.gmra.mrb[0].mxu0 %v3498
      %v3500 = vpop.f32.mrb[0].mxu0
      %v3501 = vadd.f32 %v3324, %v3500
      %v3502 = vpop.f32.mrb[0].mxu0
      %3503 = vdwg.mxu0
      %v3506 = vcombine.high %v1287, %v1287
      %v3508 = vunpack.c.l.s4 1966171168
      %v3509 = vunpack.c.0.s8 %v3508
      %v3510 = vlaneseq
      %v3511 = vshrl.u32 %v3510, 7
      %v3512 = vsub.s32 %v3509, %v3511
      %v3513 = vrot.slane %v1287, %v3512
      %v3515 = vunpack.c.l.s4 1966171168
      %v3516 = vunpack.c.0.s8 %v3515
      %v3517 = vlaneseq
      %v3518 = vshrl.u32 %v3517, 7
      %v3519 = vsub.s32 %v3516, %v3518
      %v3520 = vrot.slane %v3506, %v3519
      %v3521 = vcombine.high %v3513, %v3513
      %v3522 = vcombine.high %v3520, %v3520
      %v3524 = vunpack.c.l.s4 1966171168
      %v3525 = vunpack.c.0.s8 %v3524
      %v3526 = vlaneseq
      %v3527 = vshrl.u32 %v3526, 7
      %v3528 = vsub.s32 %v3525, %v3527
      %v3529 = vrot.slane %v3513, %v3528
      %v3531 = vunpack.c.l.s4 1966171168
      %v3532 = vunpack.c.0.s8 %v3531
      %v3533 = vlaneseq
      %v3534 = vshrl.u32 %v3533, 7
      %v3535 = vsub.s32 %v3532, %v3534
      %v3536 = vrot.slane %v3520, %v3535
      %v3538 = vunpack.c.l.s4 1966171168
      %v3539 = vunpack.c.0.s8 %v3538
      %v3540 = vlaneseq
      %v3541 = vshrl.u32 %v3540, 7
      %v3542 = vsub.s32 %v3539, %v3541
      %v3543 = vrot.slane %v3521, %v3542
      %v3545 = vunpack.c.l.s4 1966171168
      %v3546 = vunpack.c.0.s8 %v3545
      %v3547 = vlaneseq
      %v3548 = vshrl.u32 %v3547, 7
      %v3549 = vsub.s32 %v3546, %v3548
      %v3550 = vrot.slane %v3522, %v3549
      %v3551 = vcombine.high %v3529, %v3529
      %v3552 = vcombine.high %v3536, %v3536
      %v3553 = vcombine.high %v3543, %v3543
      %v3554 = vcombine.high %v3550, %v3550
      %v3555 = vcombine.high %v1294, %v1294
      %v3557 = vunpack.c.l.s4 1966171168
      %v3558 = vunpack.c.0.s8 %v3557
      %v3559 = vlaneseq
      %v3560 = vshrl.u32 %v3559, 7
      %v3561 = vsub.s32 %v3558, %v3560
      %v3562 = vrot.slane %v1294, %v3561
      %v3564 = vunpack.c.l.s4 1966171168
      %v3565 = vunpack.c.0.s8 %v3564
      %v3566 = vlaneseq
      %v3567 = vshrl.u32 %v3566, 7
      %v3568 = vsub.s32 %v3565, %v3567
      %v3569 = vrot.slane %v3555, %v3568
      %v3570 = vcombine.high %v3562, %v3562
      %v3571 = vcombine.high %v3569, %v3569
      %v3573 = vunpack.c.l.s4 1966171168
      %v3574 = vunpack.c.0.s8 %v3573
      %v3575 = vlaneseq
      %v3576 = vshrl.u32 %v3575, 7
      %v3577 = vsub.s32 %v3574, %v3576
      %v3578 = vrot.slane %v3562, %v3577
      %v3580 = vunpack.c.l.s4 1966171168
      %v3581 = vunpack.c.0.s8 %v3580
      %v3582 = vlaneseq
      %v3583 = vshrl.u32 %v3582, 7
      %v3584 = vsub.s32 %v3581, %v3583
      %v3585 = vrot.slane %v3569, %v3584
      %v3587 = vunpack.c.l.s4 1966171168
      %v3588 = vunpack.c.0.s8 %v3587
      %v3589 = vlaneseq
      %v3590 = vshrl.u32 %v3589, 7
      %v3591 = vsub.s32 %v3588, %v3590
      %v3592 = vrot.slane %v3570, %v3591
      %v3594 = vunpack.c.l.s4 1966171168
      %v3595 = vunpack.c.0.s8 %v3594
      %v3596 = vlaneseq
      %v3597 = vshrl.u32 %v3596, 7
      %v3598 = vsub.s32 %v3595, %v3597
      %v3599 = vrot.slane %v3571, %v3598
      %v3600 = vcombine.high %v3578, %v3578
      %v3601 = vcombine.high %v3585, %v3585
      %v3602 = vcombine.high %v3592, %v3592
      %v3603 = vcombine.high %v3599, %v3599
      %v3604 = vlaneseq
      %v3605 = vshrl.u32 %v3604, 7
      %v3606 = vsub.s32 0, %v3605
      %v3607 = vrot.slane %v3529, %v3606
      %v3608 = vlaneseq
      %v3609 = vshrl.u32 %v3608, 7
      %v3610 = vsub.s32 0, %v3609
      %v3611 = vrot.slane %v3543, %v3610
      %v3612 = vlaneseq
      %v3613 = vshrl.u32 %v3612, 7
      %v3614 = vsub.s32 0, %v3613
      %v3615 = vrot.slane %v3551, %v3614
      %v3616 = vlaneseq
      %v3617 = vshrl.u32 %v3616, 7
      %v3618 = vsub.s32 0, %v3617
      %v3619 = vrot.slane %v3553, %v3618
      %v3620 = vlaneseq
      %v3621 = vshrl.u32 %v3620, 7
      %v3622 = vsub.s32 0, %v3621
      %v3623 = vrot.slane %v3536, %v3622
      %v3624 = vlaneseq
      %v3625 = vshrl.u32 %v3624, 7
      %v3626 = vsub.s32 0, %v3625
      %v3627 = vrot.slane %v3550, %v3626
      %v3628 = vlaneseq
      %v3629 = vshrl.u32 %v3628, 7
      %v3630 = vsub.s32 0, %v3629
      %v3631 = vrot.slane %v3552, %v3630
      %v3632 = vlaneseq
      %v3633 = vshrl.u32 %v3632, 7
      %v3634 = vsub.s32 0, %v3633
      %v3635 = vrot.slane %v3554, %v3634
      %v3636 = vlaneseq
      %v3637 = vshrl.u32 %v3636, 7
      %v3638 = vsub.s32 0, %v3637
      %v3639 = vrot.slane %v3578, %v3638
      %v3640 = vlaneseq
      %v3641 = vshrl.u32 %v3640, 7
      %v3642 = vsub.s32 0, %v3641
      %v3643 = vrot.slane %v3592, %v3642
      %v3644 = vlaneseq
      %v3645 = vshrl.u32 %v3644, 7
      %v3646 = vsub.s32 0, %v3645
      %v3647 = vrot.slane %v3600, %v3646
      %v3648 = vlaneseq
      %v3649 = vshrl.u32 %v3648, 7
      %v3650 = vsub.s32 0, %v3649
      %v3651 = vrot.slane %v3602, %v3650
      %v3652 = vlaneseq
      %v3653 = vshrl.u32 %v3652, 7
      %v3654 = vsub.s32 0, %v3653
      %v3655 = vrot.slane %v3585, %v3654
      %v3656 = vlaneseq
      %v3657 = vshrl.u32 %v3656, 7
      %v3658 = vsub.s32 0, %v3657
      %v3659 = vrot.slane %v3599, %v3658
      %v3660 = vlaneseq
      %v3661 = vshrl.u32 %v3660, 7
      %v3662 = vsub.s32 0, %v3661
      %v3663 = vrot.slane %v3601, %v3662
      %v3664 = vlaneseq
      %v3665 = vshrl.u32 %v3664, 7
      %v3666 = vsub.s32 0, %v3665
      %v3667 = vrot.slane %v3603, %v3666
      %v3684 = vadd.f32 %v3607, %v1289
      %v3685 = vadd.f32 %v3611, %v1289
      %v3686 = vadd.f32 %v3615, %v1289
      %v3687 = vadd.f32 %v3619, %v1289
      %v3688 = vadd.f32 %v3623, %v1289
      %v3689 = vadd.f32 %v3627, %v1289
      %v3690 = vadd.f32 %v3631, %v1289
      %v3691 = vadd.f32 %v3635, %v1289
      %v3692 = vadd.f32 %v3639, %v1296
      %v3693 = vadd.f32 %v3643, %v1296
      %v3694 = vadd.f32 %v3647, %v1296
      %v3695 = vadd.f32 %v3651, %v1296
      %v3696 = vadd.f32 %v3655, %v1296
      %v3697 = vadd.f32 %v3659, %v1296
      %v3698 = vadd.f32 %v3663, %v1296
      %v3699 = vadd.f32 %v3667, %v1296
      %v3700 = vadd.f32 %v3684, %v3411
      %v3701 = vadd.f32 %v3685, %v3417
      %v3702 = vadd.f32 %v3686, %v3423
      %v3703 = vadd.f32 %v3687, %v3429
      %v3704 = vadd.f32 %v3688, %v3435
      %v3705 = vadd.f32 %v3689, %v3441
      %v3706 = vadd.f32 %v3690, %v3447
      %v3707 = vadd.f32 %v3691, %v3453
      %v3708 = vadd.f32 %v3692, %v3459
      %v3709 = vadd.f32 %v3693, %v3465
      %v3710 = vadd.f32 %v3694, %v3471
      %v3711 = vadd.f32 %v3695, %v3477
      %v3712 = vadd.f32 %v3696, %v3483
      %v3713 = vadd.f32 %v3697, %v3489
      %v3714 = vadd.f32 %v3698, %v3495
      %v3715 = vadd.f32 %v3699, %v3501
      %v3716 = vld [vmem:[%s5] sm:$0xff]
      %v3717 = vld [vmem:[%s5 + $0x8] sm:$0xff]
      %v3718 = vld [vmem:[%s5 + $0x10] sm:$0xff]
      %v3719 = vld [vmem:[%s5 + $0x18] sm:$0xff]
      %v3720 = vld [vmem:[%s5 + $0x20] sm:$0xff]
      %v3721 = vld [vmem:[%s5 + $0x28] sm:$0xff]
      %v3722 = vld [vmem:[%s5 + $0x30] sm:$0xff]
      %v3723 = vld [vmem:[%s5 + $0x38] sm:$0xff]
      %v3724 = vmul.f32 %v3700, %v3716
      %v3725 = vmul.f32 %v3701, %v3717
      %v3726 = vmul.f32 %v3702, %v3718
      %v3727 = vmul.f32 %v3703, %v3719
      %v3728 = vmul.f32 %v3704, %v3720
      %v3729 = vmul.f32 %v3705, %v3721
      %v3730 = vmul.f32 %v3706, %v3722
      %v3731 = vmul.f32 %v3707, %v3723
      %v3732 = vmul.f32 %v3708, %v3716
      %v3733 = vmul.f32 %v3709, %v3717
      %v3734 = vmul.f32 %v3710, %v3718
      %v3735 = vmul.f32 %v3711, %v3719
      %v3736 = vmul.f32 %v3712, %v3720
      %v3737 = vmul.f32 %v3713, %v3721
      %v3738 = vmul.f32 %v3714, %v3722
      %v3739 = vmul.f32 %v3715, %v3723
      %s3740 = scalar_lea.vmem %s5, 64
      %v3741 = vld [vmem:[%s3740] sm:$0xff]
      %v3742 = vld [vmem:[%s3740 + $0x8] sm:$0xff]
      %v3743 = vld [vmem:[%s3740 + $0x10] sm:$0xff]
      %v3744 = vld [vmem:[%s3740 + $0x18] sm:$0xff]
      %v3745 = vld [vmem:[%s3740 + $0x20] sm:$0xff]
      %v3746 = vld [vmem:[%s3740 + $0x28] sm:$0xff]
      %v3747 = vld [vmem:[%s3740 + $0x30] sm:$0xff]
      %v3748 = vld [vmem:[%s3740 + $0x38] sm:$0xff]
      %v3749 = vadd.f32 %v3724, %v3741
      %v3750 = vadd.f32 %v3725, %v3742
      %v3751 = vadd.f32 %v3726, %v3743
      %v3752 = vadd.f32 %v3727, %v3744
      %v3753 = vadd.f32 %v3728, %v3745
      %v3754 = vadd.f32 %v3729, %v3746
      %v3755 = vadd.f32 %v3730, %v3747
      %v3756 = vadd.f32 %v3731, %v3748
      %v3757 = vadd.f32 %v3732, %v3741
      %v3758 = vadd.f32 %v3733, %v3742
      %v3759 = vadd.f32 %v3734, %v3743
      %v3760 = vadd.f32 %v3735, %v3744
      %v3761 = vadd.f32 %v3736, %v3745
      %v3762 = vadd.f32 %v3737, %v3746
      %v3763 = vadd.f32 %v3738, %v3747
      %v3764 = vadd.f32 %v3739, %v3748
      %v3765 = vmax.f32 %v3749, 0.0
      %v3766 = vmax.f32 %v3750, 0.0
      %v3767 = vmax.f32 %v3751, 0.0
      %v3768 = vmax.f32 %v3752, 0.0
      %v3769 = vmax.f32 %v3753, 0.0
      %v3770 = vmax.f32 %v3754, 0.0
      %v3771 = vmax.f32 %v3755, 0.0
      %v3772 = vmax.f32 %v3756, 0.0
      %v3773 = vmax.f32 %v3757, 0.0
      %v3774 = vmax.f32 %v3758, 0.0
      %v3775 = vmax.f32 %v3759, 0.0
      %v3776 = vmax.f32 %v3760, 0.0
      %v3777 = vmax.f32 %v3761, 0.0
      %v3778 = vmax.f32 %v3762, 0.0
      %v3779 = vmax.f32 %v3763, 0.0
      %v3780 = vmax.f32 %v3764, 0.0
      %v3781 = vadd.f32 %v314, %v3765
      %v3782 = vadd.f32 %v315, %v3766
      %v3783 = vadd.f32 %v316, %v3767
      %v3784 = vadd.f32 %v317, %v3768
      %v3785 = vadd.f32 %v318, %v3769
      %v3786 = vadd.f32 %v319, %v3770
      %v3787 = vadd.f32 %v320, %v3771
      %v3788 = vadd.f32 %v321, %v3772
      %v3789 = vadd.f32 %v322, %v3773
      %v3790 = vadd.f32 %v323, %v3774
      %v3791 = vadd.f32 %v324, %v3775
      %v3792 = vadd.f32 %v325, %v3776
      %v3793 = vadd.f32 %v326, %v3777
      %v3794 = vadd.f32 %v327, %v3778
      %v3795 = vadd.f32 %v328, %v3779
      %v3796 = vadd.f32 %v329, %v3780
      %v3797 = vsub.f32 0.0, %v3781
      %v3798 = vsub.f32 0.0, %v3782
      %v3799 = vsub.f32 0.0, %v3783
      %v3800 = vsub.f32 0.0, %v3784
      %v3801 = vsub.f32 0.0, %v3785
      %v3802 = vsub.f32 0.0, %v3786
      %v3803 = vsub.f32 0.0, %v3787
      %v3804 = vsub.f32 0.0, %v3788
      %v3805 = vsub.f32 0.0, %v3789
      %v3806 = vsub.f32 0.0, %v3790
      %v3807 = vsub.f32 0.0, %v3791
      %v3808 = vsub.f32 0.0, %v3792
      %v3809 = vsub.f32 0.0, %v3793
      %v3810 = vsub.f32 0.0, %v3794
      %v3811 = vsub.f32 0.0, %v3795
      %v3812 = vsub.f32 0.0, %v3796
      %v3813 = vmul.f32 %v3797, 1.442695
      %v3814 = vpow.pop %v3813
      %v3815 = vmul.f32 %v3798, 1.442695
      %v3816 = vpow.pop %v3815
      %v3817 = vmul.f32 %v3799, 1.442695
      %v3818 = vpow.pop %v3817
      %v3819 = vmul.f32 %v3800, 1.442695
      %v3820 = vpow.pop %v3819
      %v3821 = vmul.f32 %v3801, 1.442695
      %v3822 = vpow.pop %v3821
      %v3823 = vmul.f32 %v3802, 1.442695
      %v3824 = vpow.pop %v3823
      %v3825 = vmul.f32 %v3803, 1.442695
      %v3826 = vpow.pop %v3825
      %v3827 = vmul.f32 %v3804, 1.442695
      %v3828 = vpow.pop %v3827
      %v3829 = vmul.f32 %v3805, 1.442695
      %v3830 = vpow.pop %v3829
      %v3831 = vmul.f32 %v3806, 1.442695
      %v3832 = vpow.pop %v3831
      %v3833 = vmul.f32 %v3807, 1.442695
      %v3834 = vpow.pop %v3833
      %v3835 = vmul.f32 %v3808, 1.442695
      %v3836 = vpow.pop %v3835
      %v3837 = vmul.f32 %v3809, 1.442695
      %v3838 = vpow.pop %v3837
      %v3839 = vmul.f32 %v3810, 1.442695
      %v3840 = vpow.pop %v3839
      %v3841 = vmul.f32 %v3811, 1.442695
      %v3842 = vpow.pop %v3841
      %v3843 = vmul.f32 %v3812, 1.442695
      %v3844 = vpow.pop %v3843
      %v3845 = vadd.f32 %v3814, 1.0
      %v3846 = vadd.f32 %v3816, 1.0
      %v3847 = vadd.f32 %v3818, 1.0
      %v3848 = vadd.f32 %v3820, 1.0
      %v3849 = vadd.f32 %v3822, 1.0
      %v3850 = vadd.f32 %v3824, 1.0
      %v3851 = vadd.f32 %v3826, 1.0
      %v3852 = vadd.f32 %v3828, 1.0
      %v3853 = vadd.f32 %v3830, 1.0
      %v3854 = vadd.f32 %v3832, 1.0
      %v3855 = vadd.f32 %v3834, 1.0
      %v3856 = vadd.f32 %v3836, 1.0
      %v3857 = vadd.f32 %v3838, 1.0
      %v3858 = vadd.f32 %v3840, 1.0
      %v3859 = vadd.f32 %v3842, 1.0
      %v3860 = vadd.f32 %v3844, 1.0
      %v3861 = vrcp.pop %v3845
      %v3862 = vmul.f32 1.0, %v3861
      %v3863 = vrcp.pop %v3846
      %v3864 = vmul.f32 1.0, %v3863
      %v3865 = vrcp.pop %v3847
      %v3866 = vmul.f32 1.0, %v3865
      %v3867 = vrcp.pop %v3848
      %v3868 = vmul.f32 1.0, %v3867
      %v3869 = vrcp.pop %v3849
      %v3870 = vmul.f32 1.0, %v3869
      %v3871 = vrcp.pop %v3850
      %v3872 = vmul.f32 1.0, %v3871
      %v3873 = vrcp.pop %v3851
      %v3874 = vmul.f32 1.0, %v3873
      %v3875 = vrcp.pop %v3852
      %v3876 = vmul.f32 1.0, %v3875
      %v3877 = vrcp.pop %v3853
      %v3878 = vmul.f32 1.0, %v3877
      %v3879 = vrcp.pop %v3854
      %v3880 = vmul.f32 1.0, %v3879
      %v3881 = vrcp.pop %v3855
      %v3882 = vmul.f32 1.0, %v3881
      %v3883 = vrcp.pop %v3856
      %v3884 = vmul.f32 1.0, %v3883
      %v3885 = vrcp.pop %v3857
      %v3886 = vmul.f32 1.0, %v3885
      %v3887 = vrcp.pop %v3858
      %v3888 = vmul.f32 1.0, %v3887
      %v3889 = vrcp.pop %v3859
      %v3890 = vmul.f32 1.0, %v3889
      %v3891 = vrcp.pop %v3860
      %v3892 = vmul.f32 1.0, %v3891
      %v3893 = vrot.slane %v3862, 4
      %v3894 = vmax.f32 %v3862, %v3893
      %v3895 = vrot.slane %v3894, 2
      %v3896 = vmax.f32 %v3894, %v3895
      %v3897 = vrot.slane %v3896, 1
      %v3898 = vmax.f32 %v3896, %v3897
      %v3899 = vrot.slane %v3864, 4
      %v3900 = vmax.f32 %v3864, %v3899
      %v3901 = vrot.slane %v3900, 2
      %v3902 = vmax.f32 %v3900, %v3901
      %v3903 = vrot.slane %v3902, 1
      %v3904 = vmax.f32 %v3902, %v3903
      %v3905 = vrot.slane %v3866, 4
      %v3906 = vmax.f32 %v3866, %v3905
      %v3907 = vrot.slane %v3906, 2
      %v3908 = vmax.f32 %v3906, %v3907
      %v3909 = vrot.slane %v3908, 1
      %v3910 = vmax.f32 %v3908, %v3909
      %v3911 = vrot.slane %v3868, 4
      %v3912 = vmax.f32 %v3868, %v3911
      %v3913 = vrot.slane %v3912, 2
      %v3914 = vmax.f32 %v3912, %v3913
      %v3915 = vrot.slane %v3914, 1
      %v3916 = vmax.f32 %v3914, %v3915
      %v3917 = vrot.slane %v3870, 4
      %v3918 = vmax.f32 %v3870, %v3917
      %v3919 = vrot.slane %v3918, 2
      %v3920 = vmax.f32 %v3918, %v3919
      %v3921 = vrot.slane %v3920, 1
      %v3922 = vmax.f32 %v3920, %v3921
      %v3923 = vrot.slane %v3872, 4
      %v3924 = vmax.f32 %v3872, %v3923
      %v3925 = vrot.slane %v3924, 2
      %v3926 = vmax.f32 %v3924, %v3925
      %v3927 = vrot.slane %v3926, 1
      %v3928 = vmax.f32 %v3926, %v3927
      %v3929 = vrot.slane %v3874, 4
      %v3930 = vmax.f32 %v3874, %v3929
      %v3931 = vrot.slane %v3930, 2
      %v3932 = vmax.f32 %v3930, %v3931
      %v3933 = vrot.slane %v3932, 1
      %v3934 = vmax.f32 %v3932, %v3933
      %v3935 = vrot.slane %v3876, 4
      %v3936 = vmax.f32 %v3876, %v3935
      %v3937 = vrot.slane %v3936, 2
      %v3938 = vmax.f32 %v3936, %v3937
      %v3939 = vrot.slane %v3938, 1
      %v3940 = vmax.f32 %v3938, %v3939
      %v3941 = vrot.slane %v3878, 4
      %v3942 = vmax.f32 %v3878, %v3941
      %v3943 = vrot.slane %v3942, 2
      %v3944 = vmax.f32 %v3942, %v3943
      %v3945 = vrot.slane %v3944, 1
      %v3946 = vmax.f32 %v3944, %v3945
      %v3947 = vrot.slane %v3880, 4
      %v3948 = vmax.f32 %v3880, %v3947
      %v3949 = vrot.slane %v3948, 2
      %v3950 = vmax.f32 %v3948, %v3949
      %v3951 = vrot.slane %v3950, 1
      %v3952 = vmax.f32 %v3950, %v3951
      %v3953 = vrot.slane %v3882, 4
      %v3954 = vmax.f32 %v3882, %v3953
      %v3955 = vrot.slane %v3954, 2
      %v3956 = vmax.f32 %v3954, %v3955
      %v3957 = vrot.slane %v3956, 1
      %v3958 = vmax.f32 %v3956, %v3957
      %v3959 = vrot.slane %v3884, 4
      %v3960 = vmax.f32 %v3884, %v3959
      %v3961 = vrot.slane %v3960, 2
      %v3962 = vmax.f32 %v3960, %v3961
      %v3963 = vrot.slane %v3962, 1
      %v3964 = vmax.f32 %v3962, %v3963
      %v3965 = vrot.slane %v3886, 4
      %v3966 = vmax.f32 %v3886, %v3965
      %v3967 = vrot.slane %v3966, 2
      %v3968 = vmax.f32 %v3966, %v3967
      %v3969 = vrot.slane %v3968, 1
      %v3970 = vmax.f32 %v3968, %v3969
      %v3971 = vrot.slane %v3888, 4
      %v3972 = vmax.f32 %v3888, %v3971
      %v3973 = vrot.slane %v3972, 2
      %v3974 = vmax.f32 %v3972, %v3973
      %v3975 = vrot.slane %v3974, 1
      %v3976 = vmax.f32 %v3974, %v3975
      %v3977 = vrot.slane %v3890, 4
      %v3978 = vmax.f32 %v3890, %v3977
      %v3979 = vrot.slane %v3978, 2
      %v3980 = vmax.f32 %v3978, %v3979
      %v3981 = vrot.slane %v3980, 1
      %v3982 = vmax.f32 %v3980, %v3981
      %v3983 = vrot.slane %v3892, 4
      %v3984 = vmax.f32 %v3892, %v3983
      %v3985 = vrot.slane %v3984, 2
      %v3986 = vmax.f32 %v3984, %v3985
      %v3987 = vrot.slane %v3986, 1
      %v3988 = vmax.f32 %v3986, %v3987
      %v3989 = vsub.f32 %v3862, %v3898
      %v3990 = vsub.f32 %v3864, %v3904
      %v3991 = vsub.f32 %v3866, %v3910
      %v3992 = vsub.f32 %v3868, %v3916
      %v3993 = vsub.f32 %v3870, %v3922
      %v3994 = vsub.f32 %v3872, %v3928
      %v3995 = vsub.f32 %v3874, %v3934
      %v3996 = vsub.f32 %v3876, %v3940
      %v3997 = vsub.f32 %v3878, %v3946
      %v3998 = vsub.f32 %v3880, %v3952
      %v3999 = vsub.f32 %v3882, %v3958
      %v4000 = vsub.f32 %v3884, %v3964
      %v4001 = vsub.f32 %v3886, %v3970
      %v4002 = vsub.f32 %v3888, %v3976
      %v4003 = vsub.f32 %v3890, %v3982
      %v4004 = vsub.f32 %v3892, %v3988
      %v4005 = vmul.f32 %v3989, 1.442695
      %v4006 = vpow.pop %v4005
      %v4007 = vmul.f32 %v3990, 1.442695
      %v4008 = vpow.pop %v4007
      %v4009 = vmul.f32 %v3991, 1.442695
      %v4010 = vpow.pop %v4009
      %v4011 = vmul.f32 %v3992, 1.442695
      %v4012 = vpow.pop %v4011
      %v4013 = vmul.f32 %v3993, 1.442695
      %v4014 = vpow.pop %v4013
      %v4015 = vmul.f32 %v3994, 1.442695
      %v4016 = vpow.pop %v4015
      %v4017 = vmul.f32 %v3995, 1.442695
      %v4018 = vpow.pop %v4017
      %v4019 = vmul.f32 %v3996, 1.442695
      %v4020 = vpow.pop %v4019
      %v4021 = vmul.f32 %v3997, 1.442695
      %v4022 = vpow.pop %v4021
      %v4023 = vmul.f32 %v3998, 1.442695
      %v4024 = vpow.pop %v4023
      %v4025 = vmul.f32 %v3999, 1.442695
      %v4026 = vpow.pop %v4025
      %v4027 = vmul.f32 %v4000, 1.442695
      %v4028 = vpow.pop %v4027
      %v4029 = vmul.f32 %v4001, 1.442695
      %v4030 = vpow.pop %v4029
      %v4031 = vmul.f32 %v4002, 1.442695
      %v4032 = vpow.pop %v4031
      %v4033 = vmul.f32 %v4003, 1.442695
      %v4034 = vpow.pop %v4033
      %v4035 = vmul.f32 %v4004, 1.442695
      %v4036 = vpow.pop %v4035
      %v4037 = vrot.slane %v4006, 4
      %v4038 = vadd.f32 %v4006, %v4037
      %v4039 = vrot.slane %v4038, 2
      %v4040 = vadd.f32 %v4038, %v4039
      %v4041 = vrot.slane %v4040, 1
      %v4042 = vadd.f32 %v4040, %v4041
      %v4043 = vrot.slane %v4008, 4
      %v4044 = vadd.f32 %v4008, %v4043
      %v4045 = vrot.slane %v4044, 2
      %v4046 = vadd.f32 %v4044, %v4045
      %v4047 = vrot.slane %v4046, 1
      %v4048 = vadd.f32 %v4046, %v4047
      %v4049 = vrot.slane %v4010, 4
      %v4050 = vadd.f32 %v4010, %v4049
      %v4051 = vrot.slane %v4050, 2
      %v4052 = vadd.f32 %v4050, %v4051
      %v4053 = vrot.slane %v4052, 1
      %v4054 = vadd.f32 %v4052, %v4053
      %v4055 = vrot.slane %v4012, 4
      %v4056 = vadd.f32 %v4012, %v4055
      %v4057 = vrot.slane %v4056, 2
      %v4058 = vadd.f32 %v4056, %v4057
      %v4059 = vrot.slane %v4058, 1
      %v4060 = vadd.f32 %v4058, %v4059
      %v4061 = vrot.slane %v4014, 4
      %v4062 = vadd.f32 %v4014, %v4061
      %v4063 = vrot.slane %v4062, 2
      %v4064 = vadd.f32 %v4062, %v4063
      %v4065 = vrot.slane %v4064, 1
      %v4066 = vadd.f32 %v4064, %v4065
      %v4067 = vrot.slane %v4016, 4
      %v4068 = vadd.f32 %v4016, %v4067
      %v4069 = vrot.slane %v4068, 2
      %v4070 = vadd.f32 %v4068, %v4069
      %v4071 = vrot.slane %v4070, 1
      %v4072 = vadd.f32 %v4070, %v4071
      %v4073 = vrot.slane %v4018, 4
      %v4074 = vadd.f32 %v4018, %v4073
      %v4075 = vrot.slane %v4074, 2
      %v4076 = vadd.f32 %v4074, %v4075
      %v4077 = vrot.slane %v4076, 1
      %v4078 = vadd.f32 %v4076, %v4077
      %v4079 = vrot.slane %v4020, 4
      %v4080 = vadd.f32 %v4020, %v4079
      %v4081 = vrot.slane %v4080, 2
      %v4082 = vadd.f32 %v4080, %v4081
      %v4083 = vrot.slane %v4082, 1
      %v4084 = vadd.f32 %v4082, %v4083
      %v4085 = vrot.slane %v4022, 4
      %v4086 = vadd.f32 %v4022, %v4085
      %v4087 = vrot.slane %v4086, 2
      %v4088 = vadd.f32 %v4086, %v4087
      %v4089 = vrot.slane %v4088, 1
      %v4090 = vadd.f32 %v4088, %v4089
      %v4091 = vrot.slane %v4024, 4
      %v4092 = vadd.f32 %v4024, %v4091
      %v4093 = vrot.slane %v4092, 2
      %v4094 = vadd.f32 %v4092, %v4093
      %v4095 = vrot.slane %v4094, 1
      %v4096 = vadd.f32 %v4094, %v4095
      %v4097 = vrot.slane %v4026, 4
      %v4098 = vadd.f32 %v4026, %v4097
      %v4099 = vrot.slane %v4098, 2
      %v4100 = vadd.f32 %v4098, %v4099
      %v4101 = vrot.slane %v4100, 1
      %v4102 = vadd.f32 %v4100, %v4101
      %v4103 = vrot.slane %v4028, 4
      %v4104 = vadd.f32 %v4028, %v4103
      %v4105 = vrot.slane %v4104, 2
      %v4106 = vadd.f32 %v4104, %v4105
      %v4107 = vrot.slane %v4106, 1
      %v4108 = vadd.f32 %v4106, %v4107
      %v4109 = vrot.slane %v4030, 4
      %v4110 = vadd.f32 %v4030, %v4109
      %v4111 = vrot.slane %v4110, 2
      %v4112 = vadd.f32 %v4110, %v4111
      %v4113 = vrot.slane %v4112, 1
      %v4114 = vadd.f32 %v4112, %v4113
      %v4115 = vrot.slane %v4032, 4
      %v4116 = vadd.f32 %v4032, %v4115
      %v4117 = vrot.slane %v4116, 2
      %v4118 = vadd.f32 %v4116, %v4117
      %v4119 = vrot.slane %v4118, 1
      %v4120 = vadd.f32 %v4118, %v4119
      %v4121 = vrot.slane %v4034, 4
      %v4122 = vadd.f32 %v4034, %v4121
      %v4123 = vrot.slane %v4122, 2
      %v4124 = vadd.f32 %v4122, %v4123
      %v4125 = vrot.slane %v4124, 1
      %v4126 = vadd.f32 %v4124, %v4125
      %v4127 = vrot.slane %v4036, 4
      %v4128 = vadd.f32 %v4036, %v4127
      %v4129 = vrot.slane %v4128, 2
      %v4130 = vadd.f32 %v4128, %v4129
      %v4131 = vrot.slane %v4130, 1
      %v4132 = vadd.f32 %v4130, %v4131
      %v4133 = vrcp.pop %v4042
      %v4134 = vrcp.pop %v4048
      %v4135 = vrcp.pop %v4054
      %v4136 = vrcp.pop %v4060
      %v4137 = vrcp.pop %v4066
      %v4138 = vrcp.pop %v4072
      %v4139 = vrcp.pop %v4078
      %v4140 = vrcp.pop %v4084
      %v4141 = vrcp.pop %v4090
      %v4142 = vrcp.pop %v4096
      %v4143 = vrcp.pop %v4102
      %v4144 = vrcp.pop %v4108
      %v4145 = vrcp.pop %v4114
      %v4146 = vrcp.pop %v4120
      %v4147 = vrcp.pop %v4126
      %v4148 = vrcp.pop %v4132
      %v4149 = vmul.f32 %v4006, %v4133
      %v4150 = vmul.f32 %v4008, %v4134
      %v4151 = vmul.f32 %v4010, %v4135
      %v4152 = vmul.f32 %v4012, %v4136
      %v4153 = vmul.f32 %v4014, %v4137
      %v4154 = vmul.f32 %v4016, %v4138
      %v4155 = vmul.f32 %v4018, %v4139
      %v4156 = vmul.f32 %v4020, %v4140
      %v4157 = vmul.f32 %v4022, %v4141
      %v4158 = vmul.f32 %v4024, %v4142
      %v4159 = vmul.f32 %v4026, %v4143
      %v4160 = vmul.f32 %v4028, %v4144
      %v4161 = vmul.f32 %v4030, %v4145
      %v4162 = vmul.f32 %v4032, %v4146
      %v4163 = vmul.f32 %v4034, %v4147
      %v4164 = vmul.f32 %v4036, %v4148
      %v4165 = vmul.f32 %v4149, %v2191
      %v4166 = vmul.f32 %v4150, %v2191
      %v4167 = vmul.f32 %v4151, %v2191
      %v4168 = vmul.f32 %v4152, %v2191
      %v4169 = vmul.f32 %v4153, %v2191
      %v4170 = vmul.f32 %v4154, %v2191
      %v4171 = vmul.f32 %v4155, %v2191
      %v4172 = vmul.f32 %v4156, %v2191
      %v4173 = vmul.f32 %v4157, %v2198
      %v4174 = vmul.f32 %v4158, %v2198
      %v4175 = vmul.f32 %v4159, %v2198
      %v4176 = vmul.f32 %v4160, %v2198
      %v4177 = vmul.f32 %v4161, %v2198
      %v4178 = vmul.f32 %v4162, %v2198
      %v4179 = vmul.f32 %v4163, %v2198
      %v4180 = vmul.f32 %v4164, %v2198
      %v4181 = vrot.slane %v4165, 4
      %v4182 = vadd.f32 %v4165, %v4181
      %v4183 = vrot.slane %v4182, 2
      %v4184 = vadd.f32 %v4182, %v4183
      %v4185 = vrot.slane %v4184, 1
      %v4186 = vadd.f32 %v4184, %v4185
      %v4187 = vrot.slane %v4166, 4
      %v4188 = vadd.f32 %v4166, %v4187
      %v4189 = vrot.slane %v4188, 2
      %v4190 = vadd.f32 %v4188, %v4189
      %v4191 = vrot.slane %v4190, 1
      %v4192 = vadd.f32 %v4190, %v4191
      %v4193 = vrot.slane %v4167, 4
      %v4194 = vadd.f32 %v4167, %v4193
      %v4195 = vrot.slane %v4194, 2
      %v4196 = vadd.f32 %v4194, %v4195
      %v4197 = vrot.slane %v4196, 1
      %v4198 = vadd.f32 %v4196, %v4197
      %v4199 = vrot.slane %v4168, 4
      %v4200 = vadd.f32 %v4168, %v4199
      %v4201 = vrot.slane %v4200, 2
      %v4202 = vadd.f32 %v4200, %v4201
      %v4203 = vrot.slane %v4202, 1
      %v4204 = vadd.f32 %v4202, %v4203
      %v4205 = vrot.slane %v4169, 4
      %v4206 = vadd.f32 %v4169, %v4205
      %v4207 = vrot.slane %v4206, 2
      %v4208 = vadd.f32 %v4206, %v4207
      %v4209 = vrot.slane %v4208, 1
      %v4210 = vadd.f32 %v4208, %v4209
      %v4211 = vrot.slane %v4170, 4
      %v4212 = vadd.f32 %v4170, %v4211
      %v4213 = vrot.slane %v4212, 2
      %v4214 = vadd.f32 %v4212, %v4213
      %v4215 = vrot.slane %v4214, 1
      %v4216 = vadd.f32 %v4214, %v4215
      %v4217 = vrot.slane %v4171, 4
      %v4218 = vadd.f32 %v4171, %v4217
      %v4219 = vrot.slane %v4218, 2
      %v4220 = vadd.f32 %v4218, %v4219
      %v4221 = vrot.slane %v4220, 1
      %v4222 = vadd.f32 %v4220, %v4221
      %v4223 = vrot.slane %v4172, 4
      %v4224 = vadd.f32 %v4172, %v4223
      %v4225 = vrot.slane %v4224, 2
      %v4226 = vadd.f32 %v4224, %v4225
      %v4227 = vrot.slane %v4226, 1
      %v4228 = vadd.f32 %v4226, %v4227
      %v4229 = vrot.slane %v4173, 4
      %v4230 = vadd.f32 %v4173, %v4229
      %v4231 = vrot.slane %v4230, 2
      %v4232 = vadd.f32 %v4230, %v4231
      %v4233 = vrot.slane %v4232, 1
      %v4234 = vadd.f32 %v4232, %v4233
      %v4235 = vrot.slane %v4174, 4
      %v4236 = vadd.f32 %v4174, %v4235
      %v4237 = vrot.slane %v4236, 2
      %v4238 = vadd.f32 %v4236, %v4237
      %v4239 = vrot.slane %v4238, 1
      %v4240 = vadd.f32 %v4238, %v4239
      %v4241 = vrot.slane %v4175, 4
      %v4242 = vadd.f32 %v4175, %v4241
      %v4243 = vrot.slane %v4242, 2
      %v4244 = vadd.f32 %v4242, %v4243
      %v4245 = vrot.slane %v4244, 1
      %v4246 = vadd.f32 %v4244, %v4245
      %v4247 = vrot.slane %v4176, 4
      %v4248 = vadd.f32 %v4176, %v4247
      %v4249 = vrot.slane %v4248, 2
      %v4250 = vadd.f32 %v4248, %v4249
      %v4251 = vrot.slane %v4250, 1
      %v4252 = vadd.f32 %v4250, %v4251
      %v4253 = vrot.slane %v4177, 4
      %v4254 = vadd.f32 %v4177, %v4253
      %v4255 = vrot.slane %v4254, 2
      %v4256 = vadd.f32 %v4254, %v4255
      %v4257 = vrot.slane %v4256, 1
      %v4258 = vadd.f32 %v4256, %v4257
      %v4259 = vrot.slane %v4178, 4
      %v4260 = vadd.f32 %v4178, %v4259
      %v4261 = vrot.slane %v4260, 2
      %v4262 = vadd.f32 %v4260, %v4261
      %v4263 = vrot.slane %v4262, 1
      %v4264 = vadd.f32 %v4262, %v4263
      %v4265 = vrot.slane %v4179, 4
      %v4266 = vadd.f32 %v4179, %v4265
      %v4267 = vrot.slane %v4266, 2
      %v4268 = vadd.f32 %v4266, %v4267
      %v4269 = vrot.slane %v4268, 1
      %v4270 = vadd.f32 %v4268, %v4269
      %v4271 = vrot.slane %v4180, 4
      %v4272 = vadd.f32 %v4180, %v4271
      %v4273 = vrot.slane %v4272, 2
      %v4274 = vadd.f32 %v4272, %v4273
      %v4275 = vrot.slane %v4274, 1
      %v4276 = vadd.f32 %v4274, %v4275
      %v4277 = vmul.f32 %v4186, 0.125
      %v4278 = vmul.f32 %v4192, 0.125
      %v4279 = vmul.f32 %v4198, 0.125
      %v4280 = vmul.f32 %v4204, 0.125
      %v4281 = vmul.f32 %v4210, 0.125
      %v4282 = vmul.f32 %v4216, 0.125
      %v4283 = vmul.f32 %v4222, 0.125
      %v4284 = vmul.f32 %v4228, 0.125
      %v4285 = vmul.f32 %v4234, 0.125
      %v4286 = vmul.f32 %v4240, 0.125
      %v4287 = vmul.f32 %v4246, 0.125
      %v4288 = vmul.f32 %v4252, 0.125
      %v4289 = vmul.f32 %v4258, 0.125
      %v4290 = vmul.f32 %v4264, 0.125
      %v4291 = vmul.f32 %v4270, 0.125
      %v4292 = vmul.f32 %v4276, 0.125
      %vm4309 = vcmask 1041409
      %v4310 = vsel %vm4309, %v4278, %v4277
      %vm4311 = vcmask 1042434
      %v4312 = vsel %vm4311, %v4279, %v4310
      %vm4313 = vcmask 1043459
      %v4314 = vsel %vm4313, %v4280, %v4312
      %vm4315 = vcmask 1044484
      %v4316 = vsel %vm4315, %v4281, %v4314
      %vm4317 = vcmask 1045509
      %v4318 = vsel %vm4317, %v4282, %v4316
      %vm4319 = vcmask 1046534
      %v4320 = vsel %vm4319, %v4283, %v4318
      %vm4321 = vcmask 1047559
      %v4322 = vsel %vm4321, %v4284, %v4320
      %v4323 = vsel %vm4309, %v4286, %v4285
      %v4324 = vsel %vm4311, %v4287, %v4323
      %v4325 = vsel %vm4313, %v4288, %v4324
      %v4326 = vsel %vm4315, %v4289, %v4325
      %v4327 = vsel %vm4317, %v4290, %v4326
      %v4328 = vsel %vm4319, %v4291, %v4327
      %v4329 = vsel %vm4321, %v4292, %v4328
      %v4332 = vadd.f32 %v2193, %v4322
      %v4333 = vadd.f32 %v2200, %v4329
      %v4334 = vld [vmem:[%s4] sm:$0xff]
      %v4335 = vmul.f32 %v4332, %v4334
      %v4336 = vmul.f32 %v4333, %v4334
      %s4337 = scalar_lea.vmem %s4, 8
      %v4338 = vld [vmem:[%s4337] sm:$0xff]
      %v4339 = vadd.f32 %v4335, %v4338
      %v4340 = vadd.f32 %v4336, %v4338
      %v4341 = vadd.f32 %v312, %v4339
      %v4342 = vadd.f32 %v313, %v4340
      %v4343 = vmax.f32 %v4341, 0.0
      %v4344 = vmax.f32 %v4342, 0.0
      %s4345 = scalar_lea.vmem %s2, 512
      %v4346 = vld [vmem:[%s4345] sm:$0xff]
      %v4347 = vld [vmem:[%s4345 + $0x8] sm:$0xff]
      %v4348 = vld [vmem:[%s4345 + $0x10] sm:$0xff]
      %v4349 = vld [vmem:[%s4345 + $0x18] sm:$0xff]
      %v4350 = vld [vmem:[%s4345 + $0x20] sm:$0xff]
      %v4351 = vld [vmem:[%s4345 + $0x28] sm:$0xff]
      %v4352 = vld [vmem:[%s4345 + $0x30] sm:$0xff]
      %v4353 = vld [vmem:[%s4345 + $0x38] sm:$0xff]
      %v4354 = vld [vmem:[%s4345 + $0x40] sm:$0xff]
      %v4355 = vld [vmem:[%s4345 + $0x48] sm:$0xff]
      %v4356 = vld [vmem:[%s4345 + $0x50] sm:$0xff]
      %v4357 = vld [vmem:[%s4345 + $0x58] sm:$0xff]
      %v4358 = vld [vmem:[%s4345 + $0x60] sm:$0xff]
      %v4359 = vld [vmem:[%s4345 + $0x68] sm:$0xff]
      %v4360 = vld [vmem:[%s4345 + $0x70] sm:$0xff]
      %v4361 = vld [vmem:[%s4345 + $0x78] sm:$0xff]
      %v4362 = vld [vmem:[%s4345 + $0x80] sm:$0xff]
      %v4363 = vld [vmem:[%s4345 + $0x88] sm:$0xff]
      %v4364 = vld [vmem:[%s4345 + $0x90] sm:$0xff]
      %v4365 = vld [vmem:[%s4345 + $0x98] sm:$0xff]
      %v4366 = vld [vmem:[%s4345 + $0xa0] sm:$0xff]
      %v4367 = vld [vmem:[%s4345 + $0xa8] sm:$0xff]
      %v4368 = vld [vmem:[%s4345 + $0xb0] sm:$0xff]
      %v4369 = vld [vmem:[%s4345 + $0xb8] sm:$0xff]
      %v4370 = vld [vmem:[%s4345 + $0xc0] sm:$0xff]
      %v4371 = vld [vmem:[%s4345 + $0xc8] sm:$0xff]
      %v4372 = vld [vmem:[%s4345 + $0xd0] sm:$0xff]
      %v4373 = vld [vmem:[%s4345 + $0xd8] sm:$0xff]
      %v4374 = vld [vmem:[%s4345 + $0xe0] sm:$0xff]
      %v4375 = vld [vmem:[%s4345 + $0xe8] sm:$0xff]
      %v4376 = vld [vmem:[%s4345 + $0xf0] sm:$0xff]
      %v4377 = vld [vmem:[%s4345 + $0xf8] sm:$0xff]
      %v4378 = vld [vmem:[%s4345 + $0x100] sm:$0xff]
      %v4379 = vld [vmem:[%s4345 + $0x108] sm:$0xff]
      %v4380 = vld [vmem:[%s4345 + $0x110] sm:$0xff]
      %v4381 = vld [vmem:[%s4345 + $0x118] sm:$0xff]
      %v4382 = vld [vmem:[%s4345 + $0x120] sm:$0xff]
      %v4383 = vld [vmem:[%s4345 + $0x128] sm:$0xff]
      %v4384 = vld [vmem:[%s4345 + $0x130] sm:$0xff]
      %v4385 = vld [vmem:[%s4345 + $0x138] sm:$0xff]
      %v4386 = vld [vmem:[%s4345 + $0x140] sm:$0xff]
      %v4387 = vld [vmem:[%s4345 + $0x148] sm:$0xff]
      %v4388 = vld [vmem:[%s4345 + $0x150] sm:$0xff]
      %v4389 = vld [vmem:[%s4345 + $0x158] sm:$0xff]
      %v4390 = vld [vmem:[%s4345 + $0x160] sm:$0xff]
      %v4391 = vld [vmem:[%s4345 + $0x168] sm:$0xff]
      %v4392 = vld [vmem:[%s4345 + $0x170] sm:$0xff]
      %v4393 = vld [vmem:[%s4345 + $0x178] sm:$0xff]
      %v4394 = vld [vmem:[%s4345 + $0x180] sm:$0xff]
      %v4395 = vld [vmem:[%s4345 + $0x188] sm:$0xff]
      %v4396 = vld [vmem:[%s4345 + $0x190] sm:$0xff]
      %v4397 = vld [vmem:[%s4345 + $0x198] sm:$0xff]
      %v4398 = vld [vmem:[%s4345 + $0x1a0] sm:$0xff]
      %v4399 = vld [vmem:[%s4345 + $0x1a8] sm:$0xff]
      %v4400 = vld [vmem:[%s4345 + $0x1b0] sm:$0xff]
      %v4401 = vld [vmem:[%s4345 + $0x1b8] sm:$0xff]
      %v4402 = vld [vmem:[%s4345 + $0x1c0] sm:$0xff]
      %v4403 = vld [vmem:[%s4345 + $0x1c8] sm:$0xff]
      %v4404 = vld [vmem:[%s4345 + $0x1d0] sm:$0xff]
      %v4405 = vld [vmem:[%s4345 + $0x1d8] sm:$0xff]
      %v4406 = vld [vmem:[%s4345 + $0x1e0] sm:$0xff]
      %v4407 = vld [vmem:[%s4345 + $0x1e8] sm:$0xff]
      %v4408 = vld [vmem:[%s4345 + $0x1f0] sm:$0xff]
      %v4409 = vld [vmem:[%s4345 + $0x1f8] sm:$0xff]
      %v4410 = vand.u32 %v4347, 4294901760
      %4411 = vmatprep.subr.mxu0 %v4410
      %v4412 = vand.u32 %v4346, 4294901760
      %4413 = vmatpush1.msra.mxu0 %v4412
      %v4414 = vand.u32 %v4351, 4294901760
      %4415 = vmatprep.subr.mxu0 %v4414
      %v4416 = vand.u32 %v4350, 4294901760
      %4417 = vmatpush1.msra.mxu0 %v4416
      %v4418 = vand.u32 %v4355, 4294901760
      %4419 = vmatprep.subr.mxu0 %v4418
      %v4420 = vand.u32 %v4354, 4294901760
      %4421 = vmatpush1.msra.mxu0 %v4420
      %v4422 = vand.u32 %v4359, 4294901760
      %4423 = vmatprep.subr.mxu0 %v4422
      %v4424 = vand.u32 %v4358, 4294901760
      %4425 = vmatpush1.msra.mxu0 %v4424
      %v4426 = vand.u32 %v4363, 4294901760
      %4427 = vmatprep.subr.mxu0 %v4426
      %v4428 = vand.u32 %v4362, 4294901760
      %4429 = vmatpush1.msra.mxu0 %v4428
      %v4430 = vand.u32 %v4367, 4294901760
      %4431 = vmatprep.subr.mxu0 %v4430
      %v4432 = vand.u32 %v4366, 4294901760
      %4433 = vmatpush1.msra.mxu0 %v4432
      %v4434 = vand.u32 %v4371, 4294901760
      %4435 = vmatprep.subr.mxu0 %v4434
      %v4436 = vand.u32 %v4370, 4294901760
      %4437 = vmatpush1.msra.mxu0 %v4436
      %v4438 = vand.u32 %v4375, 4294901760
      %4439 = vmatprep.subr.mxu0 %v4438
      %v4440 = vand.u32 %v4374, 4294901760
      %4441 = vmatpush1.msra.mxu0 %v4440
      %v4442 = vand.u32 %v4379, 4294901760
      %4443 = vmatprep.subr.mxu0 %v4442
      %v4444 = vand.u32 %v4378, 4294901760
      %4445 = vmatpush1.msra.mxu0 %v4444
      %v4446 = vand.u32 %v4383, 4294901760
      %4447 = vmatprep.subr.mxu0 %v4446
      %v4448 = vand.u32 %v4382, 4294901760
      %4449 = vmatpush1.msra.mxu0 %v4448
      %v4450 = vand.u32 %v4387, 4294901760
      %4451 = vmatprep.subr.mxu0 %v4450
      %v4452 = vand.u32 %v4386, 4294901760
      %4453 = vmatpush1.msra.mxu0 %v4452
      %v4454 = vand.u32 %v4391, 4294901760
      %4455 = vmatprep.subr.mxu0 %v4454
      %v4456 = vand.u32 %v4390, 4294901760
      %4457 = vmatpush1.msra.mxu0 %v4456
      %v4458 = vand.u32 %v4395, 4294901760
      %4459 = vmatprep.subr.mxu0 %v4458
      %v4460 = vand.u32 %v4394, 4294901760
      %4461 = vmatpush1.msra.mxu0 %v4460
      %v4462 = vand.u32 %v4399, 4294901760
      %4463 = vmatprep.subr.mxu0 %v4462
      %v4464 = vand.u32 %v4398, 4294901760
      %4465 = vmatpush1.msra.mxu0 %v4464
      %v4466 = vand.u32 %v4403, 4294901760
      %4467 = vmatprep.subr.mxu0 %v4466
      %v4468 = vand.u32 %v4402, 4294901760
      %4469 = vmatpush1.msra.mxu0 %v4468
      %v4470 = vand.u32 %v4407, 4294901760
      %4471 = vmatprep.subr.mxu0 %v4470
      %v4472 = vand.u32 %v4406, 4294901760
      %4473 = vmatpush1.msra.mxu0 %v4472
      %4474 = vmatprep.subr.mxu0 0.0
      %4475 = vmatpush1.msra.mxu0 0.0
      %4476 = vmatprep.subr.mxu0 0.0
      %4477 = vmatpush1.msra.mxu0 0.0
      %4478 = vmatprep.subr.mxu0 0.0
      %4479 = vmatpush1.msra.mxu0 0.0
      %4480 = vmatprep.subr.mxu0 0.0
      %4481 = vmatpush1.msra.mxu0 0.0
      %4482 = vmatprep.subr.mxu0 0.0
      %4483 = vmatpush1.msra.mxu0 0.0
      %4484 = vmatprep.subr.mxu0 0.0
      %4485 = vmatpush1.msra.mxu0 0.0
      %4486 = vmatprep.subr.mxu0 0.0
      %4487 = vmatpush1.msra.mxu0 0.0
      %4488 = vmatprep.subr.mxu0 0.0
      %4489 = vmatpush1.msra.mxu0 0.0
      %4490 = vmatprep.subr.mxu0 0.0
      %4491 = vmatpush1.msra.mxu0 0.0
      %4492 = vmatprep.subr.mxu0 0.0
      %4493 = vmatpush1.msra.mxu0 0.0
      %4494 = vmatprep.subr.mxu0 0.0
      %4495 = vmatpush1.msra.mxu0 0.0
      %4496 = vmatprep.subr.mxu0 0.0
      %4497 = vmatpush1.msra.mxu0 0.0
      %4498 = vmatprep.subr.mxu0 0.0
      %4499 = vmatpush1.msra.mxu0 0.0
      %4500 = vmatprep.subr.mxu0 0.0
      %4501 = vmatpush1.msra.mxu0 0.0
      %4502 = vmatprep.subr.mxu0 0.0
      %4503 = vmatpush1.msra.mxu0 0.0
      %4504 = vmatprep.subr.mxu0 0.0
      %4505 = vmatpush1.msra.mxu0 0.0
      %4506 = vmatprep.mubr.f32.mxu0 0.0
      %v4507 = vand.u32 %v4343, 4294901760
      %v4508 = vsub.f32 %v4343, %v4507
      %v4509 = vand.u32 %v4508, 4294901760
      %v4510 = vsub.f32 %v4508, %v4509
      %v4511 = vand.u32 %v4510, 4294901760
      %4512 = vmatmul.mubr.f32.gmra.mrb[0].mxu0 %v4511
      %v4513 = vpop.f32.mrb[0].mxu0
      %v4514 = vadd.f32 0.0, %v4513
      %v4515 = vpop.f32.mrb[0].mxu0
      %v4516 = vadd.f32 0.0, %v4515
      %4517 = vmatprep.mubr.f32.mxu0 0.0
      %v4518 = vand.u32 %v4344, 4294901760
      %v4519 = vsub.f32 %v4344, %v4518
      %v4520 = vand.u32 %v4519, 4294901760
      %v4521 = vsub.f32 %v4519, %v4520
      %v4522 = vand.u32 %v4521, 4294901760
      %4523 = vmatmul.mubr.f32.gmra.mrb[0].mxu0 %v4522
      %v4524 = vpop.f32.mrb[0].mxu0
      %v4525 = vadd.f32 0.0, %v4524
      %v4526 = vpop.f32.mrb[0].mxu0
      %v4527 = vadd.f32 0.0, %v4526
      %4528 = vdwg.mxu0
      %v4529 = vand.u32 %v4347, 4294901760
      %v4530 = vsub.f32 %v4347, %v4529
      %v4531 = vand.u32 %v4530, 4294901760
      %v4532 = vsub.f32 %v4530, %v4531
      %v4533 = vand.u32 %v4532, 4294901760
      %4534 = vmatprep.subr.mxu0 %v4533
      %v4535 = vand.u32 %v4346, 4294901760
      %v4536 = vsub.f32 %v4346, %v4535
      %v4537 = vand.u32 %v4536, 4294901760
      %v4538 = vsub.f32 %v4536, %v4537
      %v4539 = vand.u32 %v4538, 4294901760
      %4540 = vmatpush1.msra.mxu0 %v4539
      %v4541 = vand.u32 %v4351, 4294901760
      %v4542 = vsub.f32 %v4351, %v4541
      %v4543 = vand.u32 %v4542, 4294901760
      %v4544 = vsub.f32 %v4542, %v4543
      %v4545 = vand.u32 %v4544, 4294901760
      %4546 = vmatprep.subr.mxu0 %v4545
      %v4547 = vand.u32 %v4350, 4294901760
      %v4548 = vsub.f32 %v4350, %v4547
      %v4549 = vand.u32 %v4548, 4294901760
      %v4550 = vsub.f32 %v4548, %v4549
      %v4551 = vand.u32 %v4550, 4294901760
      %4552 = vmatpush1.msra.mxu0 %v4551
      %v4553 = vand.u32 %v4355, 4294901760
      %v4554 = vsub.f32 %v4355, %v4553
      %v4555 = vand.u32 %v4554, 4294901760
      %v4556 = vsub.f32 %v4554, %v4555
      %v4557 = vand.u32 %v4556, 4294901760
      %4558 = vmatprep.subr.mxu0 %v4557
      %v4559 = vand.u32 %v4354, 4294901760
      %v4560 = vsub.f32 %v4354, %v4559
      %v4561 = vand.u32 %v4560, 4294901760
      %v4562 = vsub.f32 %v4560, %v4561
      %v4563 = vand.u32 %v4562, 4294901760
      %4564 = vmatpush1.msra.mxu0 %v4563
      %v4565 = vand.u32 %v4359, 4294901760
      %v4566 = vsub.f32 %v4359, %v4565
      %v4567 = vand.u32 %v4566, 4294901760
      %v4568 = vsub.f32 %v4566, %v4567
      %v4569 = vand.u32 %v4568, 4294901760
      %4570 = vmatprep.subr.mxu0 %v4569
      %v4571 = vand.u32 %v4358, 4294901760
      %v4572 = vsub.f32 %v4358, %v4571
      %v4573 = vand.u32 %v4572, 4294901760
      %v4574 = vsub.f32 %v4572, %v4573
      %v4575 = vand.u32 %v4574, 4294901760
      %4576 = vmatpush1.msra.mxu0 %v4575
      %v4577 = vand.u32 %v4363, 4294901760
      %v4578 = vsub.f32 %v4363, %v4577
      %v4579 = vand.u32 %v4578, 4294901760
      %v4580 = vsub.f32 %v4578, %v4579
      %v4581 = vand.u32 %v4580, 4294901760
      %4582 = vmatprep.subr.mxu0 %v4581
      %v4583 = vand.u32 %v4362, 4294901760
      %v4584 = vsub.f32 %v4362, %v4583
      %v4585 = vand.u32 %v4584, 4294901760
      %v4586 = vsub.f32 %v4584, %v4585
      %v4587 = vand.u32 %v4586, 4294901760
      %4588 = vmatpush1.msra.mxu0 %v4587
      %v4589 = vand.u32 %v4367, 4294901760
      %v4590 = vsub.f32 %v4367, %v4589
      %v4591 = vand.u32 %v4590, 4294901760
      %v4592 = vsub.f32 %v4590, %v4591
      %v4593 = vand.u32 %v4592, 4294901760
      %4594 = vmatprep.subr.mxu0 %v4593
      %v4595 = vand.u32 %v4366, 4294901760
      %v4596 = vsub.f32 %v4366, %v4595
      %v4597 = vand.u32 %v4596, 4294901760
      %v4598 = vsub.f32 %v4596, %v4597
      %v4599 = vand.u32 %v4598, 4294901760
      %4600 = vmatpush1.msra.mxu0 %v4599
      %v4601 = vand.u32 %v4371, 4294901760
      %v4602 = vsub.f32 %v4371, %v4601
      %v4603 = vand.u32 %v4602, 4294901760
      %v4604 = vsub.f32 %v4602, %v4603
      %v4605 = vand.u32 %v4604, 4294901760
      %4606 = vmatprep.subr.mxu0 %v4605
      %v4607 = vand.u32 %v4370, 4294901760
      %v4608 = vsub.f32 %v4370, %v4607
      %v4609 = vand.u32 %v4608, 4294901760
      %v4610 = vsub.f32 %v4608, %v4609
      %v4611 = vand.u32 %v4610, 4294901760
      %4612 = vmatpush1.msra.mxu0 %v4611
      %v4613 = vand.u32 %v4375, 4294901760
      %v4614 = vsub.f32 %v4375, %v4613
      %v4615 = vand.u32 %v4614, 4294901760
      %v4616 = vsub.f32 %v4614, %v4615
      %v4617 = vand.u32 %v4616, 4294901760
      %4618 = vmatprep.subr.mxu0 %v4617
      %v4619 = vand.u32 %v4374, 4294901760
      %v4620 = vsub.f32 %v4374, %v4619
      %v4621 = vand.u32 %v4620, 4294901760
      %v4622 = vsub.f32 %v4620, %v4621
      %v4623 = vand.u32 %v4622, 4294901760
      %4624 = vmatpush1.msra.mxu0 %v4623
      %v4625 = vand.u32 %v4379, 4294901760
      %v4626 = vsub.f32 %v4379, %v4625
      %v4627 = vand.u32 %v4626, 4294901760
      %v4628 = vsub.f32 %v4626, %v4627
      %v4629 = vand.u32 %v4628, 4294901760
      %4630 = vmatprep.subr.mxu0 %v4629
      %v4631 = vand.u32 %v4378, 4294901760
      %v4632 = vsub.f32 %v4378, %v4631
      %v4633 = vand.u32 %v4632, 4294901760
      %v4634 = vsub.f32 %v4632, %v4633
      %v4635 = vand.u32 %v4634, 4294901760
      %4636 = vmatpush1.msra.mxu0 %v4635
      %v4637 = vand.u32 %v4383, 4294901760
      %v4638 = vsub.f32 %v4383, %v4637
      %v4639 = vand.u32 %v4638, 4294901760
      %v4640 = vsub.f32 %v4638, %v4639
      %v4641 = vand.u32 %v4640, 4294901760
      %4642 = vmatprep.subr.mxu0 %v4641
      %v4643 = vand.u32 %v4382, 4294901760
      %v4644 = vsub.f32 %v4382, %v4643
      %v4645 = vand.u32 %v4644, 4294901760
      %v4646 = vsub.f32 %v4644, %v4645
      %v4647 = vand.u32 %v4646, 4294901760
      %4648 = vmatpush1.msra.mxu0 %v4647
      %v4649 = vand.u32 %v4387, 4294901760
      %v4650 = vsub.f32 %v4387, %v4649
      %v4651 = vand.u32 %v4650, 4294901760
      %v4652 = vsub.f32 %v4650, %v4651
      %v4653 = vand.u32 %v4652, 4294901760
      %4654 = vmatprep.subr.mxu0 %v4653
      %v4655 = vand.u32 %v4386, 4294901760
      %v4656 = vsub.f32 %v4386, %v4655
      %v4657 = vand.u32 %v4656, 4294901760
      %v4658 = vsub.f32 %v4656, %v4657
      %v4659 = vand.u32 %v4658, 4294901760
      %4660 = vmatpush1.msra.mxu0 %v4659
      %v4661 = vand.u32 %v4391, 4294901760
      %v4662 = vsub.f32 %v4391, %v4661
      %v4663 = vand.u32 %v4662, 4294901760
      %v4664 = vsub.f32 %v4662, %v4663
      %v4665 = vand.u32 %v4664, 4294901760
      %4666 = vmatprep.subr.mxu0 %v4665
      %v4667 = vand.u32 %v4390, 4294901760
      %v4668 = vsub.f32 %v4390, %v4667
      %v4669 = vand.u32 %v4668, 4294901760
      %v4670 = vsub.f32 %v4668, %v4669
      %v4671 = vand.u32 %v4670, 4294901760
      %4672 = vmatpush1.msra.mxu0 %v4671
      %v4673 = vand.u32 %v4395, 4294901760
      %v4674 = vsub.f32 %v4395, %v4673
      %v4675 = vand.u32 %v4674, 4294901760
      %v4676 = vsub.f32 %v4674, %v4675
      %v4677 = vand.u32 %v4676, 4294901760
      %4678 = vmatprep.subr.mxu0 %v4677
      %v4679 = vand.u32 %v4394, 4294901760
      %v4680 = vsub.f32 %v4394, %v4679
      %v4681 = vand.u32 %v4680, 4294901760
      %v4682 = vsub.f32 %v4680, %v4681
      %v4683 = vand.u32 %v4682, 4294901760
      %4684 = vmatpush1.msra.mxu0 %v4683
      %v4685 = vand.u32 %v4399, 4294901760
      %v4686 = vsub.f32 %v4399, %v4685
      %v4687 = vand.u32 %v4686, 4294901760
      %v4688 = vsub.f32 %v4686, %v4687
      %v4689 = vand.u32 %v4688, 4294901760
      %4690 = vmatprep.subr.mxu0 %v4689
      %v4691 = vand.u32 %v4398, 4294901760
      %v4692 = vsub.f32 %v4398, %v4691
      %v4693 = vand.u32 %v4692, 4294901760
      %v4694 = vsub.f32 %v4692, %v4693
      %v4695 = vand.u32 %v4694, 4294901760
      %4696 = vmatpush1.msra.mxu0 %v4695
      %v4697 = vand.u32 %v4403, 4294901760
      %v4698 = vsub.f32 %v4403, %v4697
      %v4699 = vand.u32 %v4698, 4294901760
      %v4700 = vsub.f32 %v4698, %v4699
      %v4701 = vand.u32 %v4700, 4294901760
      %4702 = vmatprep.subr.mxu0 %v4701
      %v4703 = vand.u32 %v4402, 4294901760
      %v4704 = vsub.f32 %v4402, %v4703
      %v4705 = vand.u32 %v4704, 4294901760
      %v4706 = vsub.f32 %v4704, %v4705
      %v4707 = vand.u32 %v4706, 4294901760
      %4708 = vmatpush1.msra.mxu0 %v4707
      %v4709 = vand.u32 %v4407, 4294901760
      %v4710 = vsub.f32 %v4407, %v4709
      %v4711 = vand.u32 %v4710, 4294901760
      %v4712 = vsub.f32 %v4710, %v4711
      %v4713 = vand.u32 %v4712, 4294901760
      %4714 = vmatprep.subr.mxu0 %v4713
      %v4715 = vand.u32 %v4406, 4294901760
      %v4716 = vsub.f32 %v4406, %v4715
      %v4717 = vand.u32 %v4716, 4294901760
      %v4718 = vsub.f32 %v4716, %v4717
      %v4719 = vand.u32 %v4718, 4294901760
      %4720 = vmatpush1.msra.mxu0 %v4719
      %4721 = vmatprep.subr.mxu0 0.0
      %4722 = vmatpush1.msra.mxu0 0.0
      %4723 = vmatprep.subr.mxu0 0.0
      %4724 = vmatpush1.msra.mxu0 0.0
      %4725 = vmatprep.subr.mxu0 0.0
      %4726 = vmatpush1.msra.mxu0 0.0
      %4727 = vmatprep.subr.mxu0 0.0
      %4728 = vmatpush1.msra.mxu0 0.0
      %4729 = vmatprep.subr.mxu0 0.0
      %4730 = vmatpush1.msra.mxu0 0.0
      %4731 = vmatprep.subr.mxu0 0.0
      %4732 = vmatpush1.msra.mxu0 0.0
      %4733 = vmatprep.subr.mxu0 0.0
      %4734 = vmatpush1.msra.mxu0 0.0
      %4735 = vmatprep.subr.mxu0 0.0
      %4736 = vmatpush1.msra.mxu0 0.0
      %4737 = vmatprep.subr.mxu0 0.0
      %4738 = vmatpush1.msra.mxu0 0.0
      %4739 = vmatprep.subr.mxu0 0.0
      %4740 = vmatpush1.msra.mxu0 0.0
      %4741 = vmatprep.subr.mxu0 0.0
      %4742 = vmatpush1.msra.mxu0 0.0
      %4743 = vmatprep.subr.mxu0 0.0
      %4744 = vmatpush1.msra.mxu0 0.0
      %4745 = vmatprep.subr.mxu0 0.0
      %4746 = vmatpush1.msra.mxu0 0.0
      %4747 = vmatprep.subr.mxu0 0.0
      %4748 = vmatpush1.msra.mxu0 0.0
      %4749 = vmatprep.subr.mxu0 0.0
      %4750 = vmatpush1.msra.mxu0 0.0
      %4751 = vmatprep.subr.mxu0 0.0
      %4752 = vmatpush1.msra.mxu0 0.0
      %4753 = vmatprep.mubr.f32.mxu0 0.0
      %v4754 = vand.u32 %v4343, 4294901760
      %4755 = vmatmul.mubr.f32.gmra.mrb[0].mxu0 %v4754
      %v4756 = vpop.f32.mrb[0].mxu0
      %v4757 = vadd.f32 %v4514, %v4756
      %v4758 = vpop.f32.mrb[0].mxu0
      %v4759 = vadd.f32 %v4516, %v4758
      %4760 = vmatprep.mubr.f32.mxu0 0.0
      %v4761 = vand.u32 %v4344, 4294901760
      %4762 = vmatmul.mubr.f32.gmra.mrb[0].mxu0 %v4761
      %v4763 = vpop.f32.mrb[0].mxu0
      %v4764 = vadd.f32 %v4525, %v4763
      %v4765 = vpop.f32.mrb[0].mxu0
      %v4766 = vadd.f32 %v4527, %v4765
      %4767 = vdwg.mxu0
      %v4768 = vand.u32 %v4347, 4294901760
      %v4769 = vsub.f32 %v4347, %v4768
      %4770 = vmatprep.subr.mxu0 %v4769
      %v4771 = vand.u32 %v4346, 4294901760
      %v4772 = vsub.f32 %v4346, %v4771
      %4773 = vmatpush1.msra.mxu0 %v4772
      %v4774 = vand.u32 %v4351, 4294901760
      %v4775 = vsub.f32 %v4351, %v4774
      %4776 = vmatprep.subr.mxu0 %v4775
      %v4777 = vand.u32 %v4350, 4294901760
      %v4778 = vsub.f32 %v4350, %v4777
      %4779 = vmatpush1.msra.mxu0 %v4778
      %v4780 = vand.u32 %v4355, 4294901760
      %v4781 = vsub.f32 %v4355, %v4780
      %4782 = vmatprep.subr.mxu0 %v4781
      %v4783 = vand.u32 %v4354, 4294901760
      %v4784 = vsub.f32 %v4354, %v4783
      %4785 = vmatpush1.msra.mxu0 %v4784
      %v4786 = vand.u32 %v4359, 4294901760
      %v4787 = vsub.f32 %v4359, %v4786
      %4788 = vmatprep.subr.mxu0 %v4787
      %v4789 = vand.u32 %v4358, 4294901760
      %v4790 = vsub.f32 %v4358, %v4789
      %4791 = vmatpush1.msra.mxu0 %v4790
      %v4792 = vand.u32 %v4363, 4294901760
      %v4793 = vsub.f32 %v4363, %v4792
      %4794 = vmatprep.subr.mxu0 %v4793
      %v4795 = vand.u32 %v4362, 4294901760
      %v4796 = vsub.f32 %v4362, %v4795
      %4797 = vmatpush1.msra.mxu0 %v4796
      %v4798 = vand.u32 %v4367, 4294901760
      %v4799 = vsub.f32 %v4367, %v4798
      %4800 = vmatprep.subr.mxu0 %v4799
      %v4801 = vand.u32 %v4366, 4294901760
      %v4802 = vsub.f32 %v4366, %v4801
      %4803 = vmatpush1.msra.mxu0 %v4802
      %v4804 = vand.u32 %v4371, 4294901760
      %v4805 = vsub.f32 %v4371, %v4804
      %4806 = vmatprep.subr.mxu0 %v4805
      %v4807 = vand.u32 %v4370, 4294901760
      %v4808 = vsub.f32 %v4370, %v4807
      %4809 = vmatpush1.msra.mxu0 %v4808
      %v4810 = vand.u32 %v4375, 4294901760
      %v4811 = vsub.f32 %v4375, %v4810
      %4812 = vmatprep.subr.mxu0 %v4811
      %v4813 = vand.u32 %v4374, 4294901760
      %v4814 = vsub.f32 %v4374, %v4813
      %4815 = vmatpush1.msra.mxu0 %v4814
      %v4816 = vand.u32 %v4379, 4294901760
      %v4817 = vsub.f32 %v4379, %v4816
      %4818 = vmatprep.subr.mxu0 %v4817
      %v4819 = vand.u32 %v4378, 4294901760
      %v4820 = vsub.f32 %v4378, %v4819
      %4821 = vmatpush1.msra.mxu0 %v4820
      %v4822 = vand.u32 %v4383, 4294901760
      %v4823 = vsub.f32 %v4383, %v4822
      %4824 = vmatprep.subr.mxu0 %v4823
      %v4825 = vand.u32 %v4382, 4294901760
      %v4826 = vsub.f32 %v4382, %v4825
      %4827 = vmatpush1.msra.mxu0 %v4826
      %v4828 = vand.u32 %v4387, 4294901760
      %v4829 = vsub.f32 %v4387, %v4828
      %4830 = vmatprep.subr.mxu0 %v4829
      %v4831 = vand.u32 %v4386, 4294901760
      %v4832 = vsub.f32 %v4386, %v4831
      %4833 = vmatpush1.msra.mxu0 %v4832
      %v4834 = vand.u32 %v4391, 4294901760
      %v4835 = vsub.f32 %v4391, %v4834
      %4836 = vmatprep.subr.mxu0 %v4835
      %v4837 = vand.u32 %v4390, 4294901760
      %v4838 = vsub.f32 %v4390, %v4837
      %4839 = vmatpush1.msra.mxu0 %v4838
      %v4840 = vand.u32 %v4395, 4294901760
      %v4841 = vsub.f32 %v4395, %v4840
      %4842 = vmatprep.subr.mxu0 %v4841
      %v4843 = vand.u32 %v4394, 4294901760
      %v4844 = vsub.f32 %v4394, %v4843
      %4845 = vmatpush1.msra.mxu0 %v4844
      %v4846 = vand.u32 %v4399, 4294901760
      %v4847 = vsub.f32 %v4399, %v4846
      %4848 = vmatprep.subr.mxu0 %v4847
      %v4849 = vand.u32 %v4398, 4294901760
      %v4850 = vsub.f32 %v4398, %v4849
      %4851 = vmatpush1.msra.mxu0 %v4850
      %v4852 = vand.u32 %v4403, 4294901760
      %v4853 = vsub.f32 %v4403, %v4852
      %4854 = vmatprep.subr.mxu0 %v4853
      %v4855 = vand.u32 %v4402, 4294901760
      %v4856 = vsub.f32 %v4402, %v4855
      %4857 = vmatpush1.msra.mxu0 %v4856
      %v4858 = vand.u32 %v4407, 4294901760
      %v4859 = vsub.f32 %v4407, %v4858
      %4860 = vmatprep.subr.mxu0 %v4859
      %v4861 = vand.u32 %v4406, 4294901760
      %v4862 = vsub.f32 %v4406, %v4861
      %4863 = vmatpush1.msra.mxu0 %v4862
      %4864 = vmatprep.subr.mxu0 0.0
      %4865 = vmatpush1.msra.mxu0 0.0
      %4866 = vmatprep.subr.mxu0 0.0
      %4867 = vmatpush1.msra.mxu0 0.0
      %4868 = vmatprep.subr.mxu0 0.0
      %4869 = vmatpush1.msra.mxu0 0.0
      %4870 = vmatprep.subr.mxu0 0.0
      %4871 = vmatpush1.msra.mxu0 0.0
      %4872 = vmatprep.subr.mxu0 0.0
      %4873 = vmatpush1.msra.mxu0 0.0
      %4874 = vmatprep.subr.mxu0 0.0
      %4875 = vmatpush1.msra.mxu0 0.0
      %4876 = vmatprep.subr.mxu0 0.0
      %4877 = vmatpush1.msra.mxu0 0.0
      %4878 = vmatprep.subr.mxu0 0.0
      %4879 = vmatpush1.msra.mxu0 0.0
      %4880 = vmatprep.subr.mxu0 0.0
      %4881 = vmatpush1.msra.mxu0 0.0
      %4882 = vmatprep.subr.mxu0 0.0
      %4883 = vmatpush1.msra.mxu0 0.0
      %4884 = vmatprep.subr.mxu0 0.0
      %4885 = vmatpush1.msra.mxu0 0.0
      %4886 = vmatprep.subr.mxu0 0.0
      %4887 = vmatpush1.msra.mxu0 0.0
      %4888 = vmatprep.subr.mxu0 0.0
      %4889 = vmatpush1.msra.mxu0 0.0
      %4890 = vmatprep.subr.mxu0 0.0
      %4891 = vmatpush1.msra.mxu0 0.0
      %4892 = vmatprep.subr.mxu0 0.0
      %4893 = vmatpush1.msra.mxu0 0.0
      %4894 = vmatprep.subr.mxu0 0.0
      %4895 = vmatpush1.msra.mxu0 0.0
      %4896 = vmatprep.mubr.f32.mxu0 0.0
      %v4897 = vand.u32 %v4343, 4294901760
      %v4898 = vsub.f32 %v4343, %v4897
      %4899 = vmatmul.mubr.f32.gmra.mrb[0].mxu0 %v4898
      %v4900 = vpop.f32.mrb[0].mxu0
      %v4901 = vadd.f32 %v4757, %v4900
      %v4902 = vpop.f32.mrb[0].mxu0
      %v4903 = vadd.f32 %v4759, %v4902
      %4904 = vmatprep.mubr.f32.mxu0 0.0
      %v4905 = vand.u32 %v4344, 4294901760
      %v4906 = vsub.f32 %v4344, %v4905
      %4907 = vmatmul.mubr.f32.gmra.mrb[0].mxu0 %v4906
      %v4908 = vpop.f32.mrb[0].mxu0
      %v4909 = vadd.f32 %v4764, %v4908
      %v4910 = vpop.f32.mrb[0].mxu0
      %v4911 = vadd.f32 %v4766, %v4910
      %4912 = vdwg.mxu0
      %v4913 = vand.u32 %v4347, 4294901760
      %4914 = vmatprep.subr.mxu0 %v4913
      %v4915 = vand.u32 %v4346, 4294901760
      %4916 = vmatpush1.msra.mxu0 %v4915
      %v4917 = vand.u32 %v4351, 4294901760
      %4918 = vmatprep.subr.mxu0 %v4917
      %v4919 = vand.u32 %v4350, 4294901760
      %4920 = vmatpush1.msra.mxu0 %v4919
      %v4921 = vand.u32 %v4355, 4294901760
      %4922 = vmatprep.subr.mxu0 %v4921
      %v4923 = vand.u32 %v4354, 4294901760
      %4924 = vmatpush1.msra.mxu0 %v4923
      %v4925 = vand.u32 %v4359, 4294901760
      %4926 = vmatprep.subr.mxu0 %v4925
      %v4927 = vand.u32 %v4358, 4294901760
      %4928 = vmatpush1.msra.mxu0 %v4927
      %v4929 = vand.u32 %v4363, 4294901760
      %4930 = vmatprep.subr.mxu0 %v4929
      %v4931 = vand.u32 %v4362, 4294901760
      %4932 = vmatpush1.msra.mxu0 %v4931
      %v4933 = vand.u32 %v4367, 4294901760
      %4934 = vmatprep.subr.mxu0 %v4933
      %v4935 = vand.u32 %v4366, 4294901760
      %4936 = vmatpush1.msra.mxu0 %v4935
      %v4937 = vand.u32 %v4371, 4294901760
      %4938 = vmatprep.subr.mxu0 %v4937
      %v4939 = vand.u32 %v4370, 4294901760
      %4940 = vmatpush1.msra.mxu0 %v4939
      %v4941 = vand.u32 %v4375, 4294901760
      %4942 = vmatprep.subr.mxu0 %v4941
      %v4943 = vand.u32 %v4374, 4294901760
      %4944 = vmatpush1.msra.mxu0 %v4943
      %v4945 = vand.u32 %v4379, 4294901760
      %4946 = vmatprep.subr.mxu0 %v4945
      %v4947 = vand.u32 %v4378, 4294901760
      %4948 = vmatpush1.msra.mxu0 %v4947
      %v4949 = vand.u32 %v4383, 4294901760
      %4950 = vmatprep.subr.mxu0 %v4949
      %v4951 = vand.u32 %v4382, 4294901760
      %4952 = vmatpush1.msra.mxu0 %v4951
      %v4953 = vand.u32 %v4387, 4294901760
      %4954 = vmatprep.subr.mxu0 %v4953
      %v4955 = vand.u32 %v4386, 4294901760
      %4956 = vmatpush1.msra.mxu0 %v4955
      %v4957 = vand.u32 %v4391, 4294901760
      %4958 = vmatprep.subr.mxu0 %v4957
      %v4959 = vand.u32 %v4390, 4294901760
      %4960 = vmatpush1.msra.mxu0 %v4959
      %v4961 = vand.u32 %v4395, 4294901760
      %4962 = vmatprep.subr.mxu0 %v4961
      %v4963 = vand.u32 %v4394, 4294901760
      %4964 = vmatpush1.msra.mxu0 %v4963
      %v4965 = vand.u32 %v4399, 4294901760
      %4966 = vmatprep.subr.mxu0 %v4965
      %v4967 = vand.u32 %v4398, 4294901760
      %4968 = vmatpush1.msra.mxu0 %v4967
      %v4969 = vand.u32 %v4403, 4294901760
      %4970 = vmatprep.subr.mxu0 %v4969
      %v4971 = vand.u32 %v4402, 4294901760
      %4972 = vmatpush1.msra.mxu0 %v4971
      %v4973 = vand.u32 %v4407, 4294901760
      %4974 = vmatprep.subr.mxu0 %v4973
      %v4975 = vand.u32 %v4406, 4294901760
      %4976 = vmatpush1.msra.mxu0 %v4975
      %4977 = vmatprep.subr.mxu0 0.0
      %4978 = vmatpush1.msra.mxu0 0.0
      %4979 = vmatprep.subr.mxu0 0.0
      %4980 = vmatpush1.msra.mxu0 0.0
      %4981 = vmatprep.subr.mxu0 0.0
      %4982 = vmatpush1.msra.mxu0 0.0
      %4983 = vmatprep.subr.mxu0 0.0
      %4984 = vmatpush1.msra.mxu0 0.0
      %4985 = vmatprep.subr.mxu0 0.0
      %4986 = vmatpush1.msra.mxu0 0.0
      %4987 = vmatprep.subr.mxu0 0.0
      %4988 = vmatpush1.msra.mxu0 0.0
      %4989 = vmatprep.subr.mxu0 0.0
      %4990 = vmatpush1.msra.mxu0 0.0
      %4991 = vmatprep.subr.mxu0 0.0
      %4992 = vmatpush1.msra.mxu0 0.0
      %4993 = vmatprep.subr.mxu0 0.0
      %4994 = vmatpush1.msra.mxu0 0.0
      %4995 = vmatprep.subr.mxu0 0.0
      %4996 = vmatpush1.msra.mxu0 0.0
      %4997 = vmatprep.subr.mxu0 0.0
      %4998 = vmatpush1.msra.mxu0 0.0
      %4999 = vmatprep.subr.mxu0 0.0
      %5000 = vmatpush1.msra.mxu0 0.0
      %5001 = vmatprep.subr.mxu0 0.0
      %5002 = vmatpush1.msra.mxu0 0.0
      %5003 = vmatprep.subr.mxu0 0.0
      %5004 = vmatpush1.msra.mxu0 0.0
      %5005 = vmatprep.subr.mxu0 0.0
      %5006 = vmatpush1.msra.mxu0 0.0
      %5007 = vmatprep.subr.mxu0 0.0
      %5008 = vmatpush1.msra.mxu0 0.0
      %5009 = vmatprep.mubr.f32.mxu0 0.0
      %v5010 = vand.u32 %v4343, 4294901760
      %v5011 = vsub.f32 %v4343, %v5010
      %v5012 = vand.u32 %v5011, 4294901760
      %5013 = vmatmul.mubr.f32.gmra.mrb[0].mxu0 %v5012
      %v5014 = vpop.f32.mrb[0].mxu0
      %v5015 = vadd.f32 %v4901, %v5014
      %v5016 = vpop.f32.mrb[0].mxu0
      %v5017 = vadd.f32 %v4903, %v5016
      %5018 = vmatprep.mubr.f32.mxu0 0.0
      %v5019 = vand.u32 %v4344, 4294901760
      %v5020 = vsub.f32 %v4344, %v5019
      %v5021 = vand.u32 %v5020, 4294901760
      %5022 = vmatmul.mubr.f32.gmra.mrb[0].mxu0 %v5021
      %v5023 = vpop.f32.mrb[0].mxu0
      %v5024 = vadd.f32 %v4909, %v5023
      %v5025 = vpop.f32.mrb[0].mxu0
      %v5026 = vadd.f32 %v4911, %v5025
      %5027 = vdwg.mxu0
      %v5028 = vand.u32 %v4347, 4294901760
      %v5029 = vsub.f32 %v4347, %v5028
      %v5030 = vand.u32 %v5029, 4294901760
      %5031 = vmatprep.subr.mxu0 %v5030
      %v5032 = vand.u32 %v4346, 4294901760
      %v5033 = vsub.f32 %v4346, %v5032
      %v5034 = vand.u32 %v5033, 4294901760
      %5035 = vmatpush1.msra.mxu0 %v5034
      %v5036 = vand.u32 %v4351, 4294901760
      %v5037 = vsub.f32 %v4351, %v5036
      %v5038 = vand.u32 %v5037, 4294901760
      %5039 = vmatprep.subr.mxu0 %v5038
      %v5040 = vand.u32 %v4350, 4294901760
      %v5041 = vsub.f32 %v4350, %v5040
      %v5042 = vand.u32 %v5041, 4294901760
      %5043 = vmatpush1.msra.mxu0 %v5042
      %v5044 = vand.u32 %v4355, 4294901760
      %v5045 = vsub.f32 %v4355, %v5044
      %v5046 = vand.u32 %v5045, 4294901760
      %5047 = vmatprep.subr.mxu0 %v5046
      %v5048 = vand.u32 %v4354, 4294901760
      %v5049 = vsub.f32 %v4354, %v5048
      %v5050 = vand.u32 %v5049, 4294901760
      %5051 = vmatpush1.msra.mxu0 %v5050
      %v5052 = vand.u32 %v4359, 4294901760
      %v5053 = vsub.f32 %v4359, %v5052
      %v5054 = vand.u32 %v5053, 4294901760
      %5055 = vmatprep.subr.mxu0 %v5054
      %v5056 = vand.u32 %v4358, 4294901760
      %v5057 = vsub.f32 %v4358, %v5056
      %v5058 = vand.u32 %v5057, 4294901760
      %5059 = vmatpush1.msra.mxu0 %v5058
      %v5060 = vand.u32 %v4363, 4294901760
      %v5061 = vsub.f32 %v4363, %v5060
      %v5062 = vand.u32 %v5061, 4294901760
      %5063 = vmatprep.subr.mxu0 %v5062
      %v5064 = vand.u32 %v4362, 4294901760
      %v5065 = vsub.f32 %v4362, %v5064
      %v5066 = vand.u32 %v5065, 4294901760
      %5067 = vmatpush1.msra.mxu0 %v5066
      %v5068 = vand.u32 %v4367, 4294901760
      %v5069 = vsub.f32 %v4367, %v5068
      %v5070 = vand.u32 %v5069, 4294901760
      %5071 = vmatprep.subr.mxu0 %v5070
      %v5072 = vand.u32 %v4366, 4294901760
      %v5073 = vsub.f32 %v4366, %v5072
      %v5074 = vand.u32 %v5073, 4294901760
      %5075 = vmatpush1.msra.mxu0 %v5074
      %v5076 = vand.u32 %v4371, 4294901760
      %v5077 = vsub.f32 %v4371, %v5076
      %v5078 = vand.u32 %v5077, 4294901760
      %5079 = vmatprep.subr.mxu0 %v5078
      %v5080 = vand.u32 %v4370, 4294901760
      %v5081 = vsub.f32 %v4370, %v5080
      %v5082 = vand.u32 %v5081, 4294901760
      %5083 = vmatpush1.msra.mxu0 %v5082
      %v5084 = vand.u32 %v4375, 4294901760
      %v5085 = vsub.f32 %v4375, %v5084
      %v5086 = vand.u32 %v5085, 4294901760
      %5087 = vmatprep.subr.mxu0 %v5086
      %v5088 = vand.u32 %v4374, 4294901760
      %v5089 = vsub.f32 %v4374, %v5088
      %v5090 = vand.u32 %v5089, 4294901760
      %5091 = vmatpush1.msra.mxu0 %v5090
      %v5092 = vand.u32 %v4379, 4294901760
      %v5093 = vsub.f32 %v4379, %v5092
      %v5094 = vand.u32 %v5093, 4294901760
      %5095 = vmatprep.subr.mxu0 %v5094
      %v5096 = vand.u32 %v4378, 4294901760
      %v5097 = vsub.f32 %v4378, %v5096
      %v5098 = vand.u32 %v5097, 4294901760
      %5099 = vmatpush1.msra.mxu0 %v5098
      %v5100 = vand.u32 %v4383, 4294901760
      %v5101 = vsub.f32 %v4383, %v5100
      %v5102 = vand.u32 %v5101, 4294901760
      %5103 = vmatprep.subr.mxu0 %v5102
      %v5104 = vand.u32 %v4382, 4294901760
      %v5105 = vsub.f32 %v4382, %v5104
      %v5106 = vand.u32 %v5105, 4294901760
      %5107 = vmatpush1.msra.mxu0 %v5106
      %v5108 = vand.u32 %v4387, 4294901760
      %v5109 = vsub.f32 %v4387, %v5108
      %v5110 = vand.u32 %v5109, 4294901760
      %5111 = vmatprep.subr.mxu0 %v5110
      %v5112 = vand.u32 %v4386, 4294901760
      %v5113 = vsub.f32 %v4386, %v5112
      %v5114 = vand.u32 %v5113, 4294901760
      %5115 = vmatpush1.msra.mxu0 %v5114
      %v5116 = vand.u32 %v4391, 4294901760
      %v5117 = vsub.f32 %v4391, %v5116
      %v5118 = vand.u32 %v5117, 4294901760
      %5119 = vmatprep.subr.mxu0 %v5118
      %v5120 = vand.u32 %v4390, 4294901760
      %v5121 = vsub.f32 %v4390, %v5120
      %v5122 = vand.u32 %v5121, 4294901760
      %5123 = vmatpush1.msra.mxu0 %v5122
      %v5124 = vand.u32 %v4395, 4294901760
      %v5125 = vsub.f32 %v4395, %v5124
      %v5126 = vand.u32 %v5125, 4294901760
      %5127 = vmatprep.subr.mxu0 %v5126
      %v5128 = vand.u32 %v4394, 4294901760
      %v5129 = vsub.f32 %v4394, %v5128
      %v5130 = vand.u32 %v5129, 4294901760
      %5131 = vmatpush1.msra.mxu0 %v5130
      %v5132 = vand.u32 %v4399, 4294901760
      %v5133 = vsub.f32 %v4399, %v5132
      %v5134 = vand.u32 %v5133, 4294901760
      %5135 = vmatprep.subr.mxu0 %v5134
      %v5136 = vand.u32 %v4398, 4294901760
      %v5137 = vsub.f32 %v4398, %v5136
      %v5138 = vand.u32 %v5137, 4294901760
      %5139 = vmatpush1.msra.mxu0 %v5138
      %v5140 = vand.u32 %v4403, 4294901760
      %v5141 = vsub.f32 %v4403, %v5140
      %v5142 = vand.u32 %v5141, 4294901760
      %5143 = vmatprep.subr.mxu0 %v5142
      %v5144 = vand.u32 %v4402, 4294901760
      %v5145 = vsub.f32 %v4402, %v5144
      %v5146 = vand.u32 %v5145, 4294901760
      %5147 = vmatpush1.msra.mxu0 %v5146
      %v5148 = vand.u32 %v4407, 4294901760
      %v5149 = vsub.f32 %v4407, %v5148
      %v5150 = vand.u32 %v5149, 4294901760
      %5151 = vmatprep.subr.mxu0 %v5150
      %v5152 = vand.u32 %v4406, 4294901760
      %v5153 = vsub.f32 %v4406, %v5152
      %v5154 = vand.u32 %v5153, 4294901760
      %5155 = vmatpush1.msra.mxu0 %v5154
      %5156 = vmatprep.subr.mxu0 0.0
      %5157 = vmatpush1.msra.mxu0 0.0
      %5158 = vmatprep.subr.mxu0 0.0
      %5159 = vmatpush1.msra.mxu0 0.0
      %5160 = vmatprep.subr.mxu0 0.0
      %5161 = vmatpush1.msra.mxu0 0.0
      %5162 = vmatprep.subr.mxu0 0.0
      %5163 = vmatpush1.msra.mxu0 0.0
      %5164 = vmatprep.subr.mxu0 0.0
      %5165 = vmatpush1.msra.mxu0 0.0
      %5166 = vmatprep.subr.mxu0 0.0
      %5167 = vmatpush1.msra.mxu0 0.0
      %5168 = vmatprep.subr.mxu0 0.0
      %5169 = vmatpush1.msra.mxu0 0.0
      %5170 = vmatprep.subr.mxu0 0.0
      %5171 = vmatpush1.msra.mxu0 0.0
      %5172 = vmatprep.subr.mxu0 0.0
      %5173 = vmatpush1.msra.mxu0 0.0
      %5174 = vmatprep.subr.mxu0 0.0
      %5175 = vmatpush1.msra.mxu0 0.0
      %5176 = vmatprep.subr.mxu0 0.0
      %5177 = vmatpush1.msra.mxu0 0.0
      %5178 = vmatprep.subr.mxu0 0.0
      %5179 = vmatpush1.msra.mxu0 0.0
      %5180 = vmatprep.subr.mxu0 0.0
      %5181 = vmatpush1.msra.mxu0 0.0
      %5182 = vmatprep.subr.mxu0 0.0
      %5183 = vmatpush1.msra.mxu0 0.0
      %5184 = vmatprep.subr.mxu0 0.0
      %5185 = vmatpush1.msra.mxu0 0.0
      %5186 = vmatprep.subr.mxu0 0.0
      %5187 = vmatpush1.msra.mxu0 0.0
      %5188 = vmatprep.mubr.f32.mxu0 0.0
      %v5189 = vand.u32 %v4343, 4294901760
      %5190 = vmatmul.mubr.f32.gmra.mrb[0].mxu0 %v5189
      %v5191 = vpop.f32.mrb[0].mxu0
      %v5192 = vadd.f32 %v5015, %v5191
      %v5193 = vpop.f32.mrb[0].mxu0
      %v5194 = vadd.f32 %v5017, %v5193
      %5195 = vmatprep.mubr.f32.mxu0 0.0
      %v5196 = vand.u32 %v4344, 4294901760
      %5197 = vmatmul.mubr.f32.gmra.mrb[0].mxu0 %v5196
      %v5198 = vpop.f32.mrb[0].mxu0
      %v5199 = vadd.f32 %v5024, %v5198
      %v5200 = vpop.f32.mrb[0].mxu0
      %v5201 = vadd.f32 %v5026, %v5200
      %5202 = vdwg.mxu0
      %v5203 = vand.u32 %v4347, 4294901760
      %5204 = vmatprep.subr.mxu0 %v5203
      %v5205 = vand.u32 %v4346, 4294901760
      %5206 = vmatpush1.msra.mxu0 %v5205
      %v5207 = vand.u32 %v4351, 4294901760
      %5208 = vmatprep.subr.mxu0 %v5207
      %v5209 = vand.u32 %v4350, 4294901760
      %5210 = vmatpush1.msra.mxu0 %v5209
      %v5211 = vand.u32 %v4355, 4294901760
      %5212 = vmatprep.subr.mxu0 %v5211
      %v5213 = vand.u32 %v4354, 4294901760
      %5214 = vmatpush1.msra.mxu0 %v5213
      %v5215 = vand.u32 %v4359, 4294901760
      %5216 = vmatprep.subr.mxu0 %v5215
      %v5217 = vand.u32 %v4358, 4294901760
      %5218 = vmatpush1.msra.mxu0 %v5217
      %v5219 = vand.u32 %v4363, 4294901760
      %5220 = vmatprep.subr.mxu0 %v5219
      %v5221 = vand.u32 %v4362, 4294901760
      %5222 = vmatpush1.msra.mxu0 %v5221
      %v5223 = vand.u32 %v4367, 4294901760
      %5224 = vmatprep.subr.mxu0 %v5223
      %v5225 = vand.u32 %v4366, 4294901760
      %5226 = vmatpush1.msra.mxu0 %v5225
      %v5227 = vand.u32 %v4371, 4294901760
      %5228 = vmatprep.subr.mxu0 %v5227
      %v5229 = vand.u32 %v4370, 4294901760
      %5230 = vmatpush1.msra.mxu0 %v5229
      %v5231 = vand.u32 %v4375, 4294901760
      %5232 = vmatprep.subr.mxu0 %v5231
      %v5233 = vand.u32 %v4374, 4294901760
      %5234 = vmatpush1.msra.mxu0 %v5233
      %v5235 = vand.u32 %v4379, 4294901760
      %5236 = vmatprep.subr.mxu0 %v5235
      %v5237 = vand.u32 %v4378, 4294901760
      %5238 = vmatpush1.msra.mxu0 %v5237
      %v5239 = vand.u32 %v4383, 4294901760
      %5240 = vmatprep.subr.mxu0 %v5239
      %v5241 = vand.u32 %v4382, 4294901760
      %5242 = vmatpush1.msra.mxu0 %v5241
      %v5243 = vand.u32 %v4387, 4294901760
      %5244 = vmatprep.subr.mxu0 %v5243
      %v5245 = vand.u32 %v4386, 4294901760
      %5246 = vmatpush1.msra.mxu0 %v5245
      %v5247 = vand.u32 %v4391, 4294901760
      %5248 = vmatprep.subr.mxu0 %v5247
      %v5249 = vand.u32 %v4390, 4294901760
      %5250 = vmatpush1.msra.mxu0 %v5249
      %v5251 = vand.u32 %v4395, 4294901760
      %5252 = vmatprep.subr.mxu0 %v5251
      %v5253 = vand.u32 %v4394, 4294901760
      %5254 = vmatpush1.msra.mxu0 %v5253
      %v5255 = vand.u32 %v4399, 4294901760
      %5256 = vmatprep.subr.mxu0 %v5255
      %v5257 = vand.u32 %v4398, 4294901760
      %5258 = vmatpush1.msra.mxu0 %v5257
      %v5259 = vand.u32 %v4403, 4294901760
      %5260 = vmatprep.subr.mxu0 %v5259
      %v5261 = vand.u32 %v4402, 4294901760
      %5262 = vmatpush1.msra.mxu0 %v5261
      %v5263 = vand.u32 %v4407, 4294901760
      %5264 = vmatprep.subr.mxu0 %v5263
      %v5265 = vand.u32 %v4406, 4294901760
      %5266 = vmatpush1.msra.mxu0 %v5265
      %5267 = vmatprep.subr.mxu0 0.0
      %5268 = vmatpush1.msra.mxu0 0.0
      %5269 = vmatprep.subr.mxu0 0.0
      %5270 = vmatpush1.msra.mxu0 0.0
      %5271 = vmatprep.subr.mxu0 0.0
      %5272 = vmatpush1.msra.mxu0 0.0
      %5273 = vmatprep.subr.mxu0 0.0
      %5274 = vmatpush1.msra.mxu0 0.0
      %5275 = vmatprep.subr.mxu0 0.0
      %5276 = vmatpush1.msra.mxu0 0.0
      %5277 = vmatprep.subr.mxu0 0.0
      %5278 = vmatpush1.msra.mxu0 0.0
      %5279 = vmatprep.subr.mxu0 0.0
      %5280 = vmatpush1.msra.mxu0 0.0
      %5281 = vmatprep.subr.mxu0 0.0
      %5282 = vmatpush1.msra.mxu0 0.0
      %5283 = vmatprep.subr.mxu0 0.0
      %5284 = vmatpush1.msra.mxu0 0.0
      %5285 = vmatprep.subr.mxu0 0.0
      %5286 = vmatpush1.msra.mxu0 0.0
      %5287 = vmatprep.subr.mxu0 0.0
      %5288 = vmatpush1.msra.mxu0 0.0
      %5289 = vmatprep.subr.mxu0 0.0
      %5290 = vmatpush1.msra.mxu0 0.0
      %5291 = vmatprep.subr.mxu0 0.0
      %5292 = vmatpush1.msra.mxu0 0.0
      %5293 = vmatprep.subr.mxu0 0.0
      %5294 = vmatpush1.msra.mxu0 0.0
      %5295 = vmatprep.subr.mxu0 0.0
      %5296 = vmatpush1.msra.mxu0 0.0
      %5297 = vmatprep.subr.mxu0 0.0
      %5298 = vmatpush1.msra.mxu0 0.0
      %5299 = vmatprep.mubr.f32.mxu0 0.0
      %v5300 = vand.u32 %v4343, 4294901760
      %5301 = vmatmul.mubr.f32.gmra.mrb[0].mxu0 %v5300
      %v5302 = vpop.f32.mrb[0].mxu0
      %v5303 = vadd.f32 %v5192, %v5302
      %v5304 = vpop.f32.mrb[0].mxu0
      %v5305 = vadd.f32 %v5194, %v5304
      %5306 = vmatprep.mubr.f32.mxu0 0.0
      %v5307 = vand.u32 %v4344, 4294901760
      %5308 = vmatmul.mubr.f32.gmra.mrb[0].mxu0 %v5307
      %v5309 = vpop.f32.mrb[0].mxu0
      %v5310 = vadd.f32 %v5199, %v5309
      %v5311 = vpop.f32.mrb[0].mxu0
      %v5312 = vadd.f32 %v5201, %v5311
      %5313 = vdwg.mxu0
      %v5314 = vand.u32 %v4349, 4294901760
      %5315 = vmatprep.subr.mxu0 %v5314
      %v5316 = vand.u32 %v4348, 4294901760
      %5317 = vmatpush1.msra.mxu0 %v5316
      %v5318 = vand.u32 %v4353, 4294901760
      %5319 = vmatprep.subr.mxu0 %v5318
      %v5320 = vand.u32 %v4352, 4294901760
      %5321 = vmatpush1.msra.mxu0 %v5320
      %v5322 = vand.u32 %v4357, 4294901760
      %5323 = vmatprep.subr.mxu0 %v5322
      %v5324 = vand.u32 %v4356, 4294901760
      %5325 = vmatpush1.msra.mxu0 %v5324
      %v5326 = vand.u32 %v4361, 4294901760
      %5327 = vmatprep.subr.mxu0 %v5326
      %v5328 = vand.u32 %v4360, 4294901760
      %5329 = vmatpush1.msra.mxu0 %v5328
      %v5330 = vand.u32 %v4365, 4294901760
      %5331 = vmatprep.subr.mxu0 %v5330
      %v5332 = vand.u32 %v4364, 4294901760
      %5333 = vmatpush1.msra.mxu0 %v5332
      %v5334 = vand.u32 %v4369, 4294901760
      %5335 = vmatprep.subr.mxu0 %v5334
      %v5336 = vand.u32 %v4368, 4294901760
      %5337 = vmatpush1.msra.mxu0 %v5336
      %v5338 = vand.u32 %v4373, 4294901760
      %5339 = vmatprep.subr.mxu0 %v5338
      %v5340 = vand.u32 %v4372, 4294901760
      %5341 = vmatpush1.msra.mxu0 %v5340
      %v5342 = vand.u32 %v4377, 4294901760
      %5343 = vmatprep.subr.mxu0 %v5342
      %v5344 = vand.u32 %v4376, 4294901760
      %5345 = vmatpush1.msra.mxu0 %v5344
      %v5346 = vand.u32 %v4381, 4294901760
      %5347 = vmatprep.subr.mxu0 %v5346
      %v5348 = vand.u32 %v4380, 4294901760
      %5349 = vmatpush1.msra.mxu0 %v5348
      %v5350 = vand.u32 %v4385, 4294901760
      %5351 = vmatprep.subr.mxu0 %v5350
      %v5352 = vand.u32 %v4384, 4294901760
      %5353 = vmatpush1.msra.mxu0 %v5352
      %v5354 = vand.u32 %v4389, 4294901760
      %5355 = vmatprep.subr.mxu0 %v5354
      %v5356 = vand.u32 %v4388, 4294901760
      %5357 = vmatpush1.msra.mxu0 %v5356
      %v5358 = vand.u32 %v4393, 4294901760
      %5359 = vmatprep.subr.mxu0 %v5358
      %v5360 = vand.u32 %v4392, 4294901760
      %5361 = vmatpush1.msra.mxu0 %v5360
      %v5362 = vand.u32 %v4397, 4294901760
      %5363 = vmatprep.subr.mxu0 %v5362
      %v5364 = vand.u32 %v4396, 4294901760
      %5365 = vmatpush1.msra.mxu0 %v5364
      %v5366 = vand.u32 %v4401, 4294901760
      %5367 = vmatprep.subr.mxu0 %v5366
      %v5368 = vand.u32 %v4400, 4294901760
      %5369 = vmatpush1.msra.mxu0 %v5368
      %v5370 = vand.u32 %v4405, 4294901760
      %5371 = vmatprep.subr.mxu0 %v5370
      %v5372 = vand.u32 %v4404, 4294901760
      %5373 = vmatpush1.msra.mxu0 %v5372
      %v5374 = vand.u32 %v4409, 4294901760
      %5375 = vmatprep.subr.mxu0 %v5374
      %v5376 = vand.u32 %v4408, 4294901760
      %5377 = vmatpush1.msra.mxu0 %v5376
      %5378 = vmatprep.subr.mxu0 0.0
      %5379 = vmatpush1.msra.mxu0 0.0
      %5380 = vmatprep.subr.mxu0 0.0
      %5381 = vmatpush1.msra.mxu0 0.0
      %5382 = vmatprep.subr.mxu0 0.0
      %5383 = vmatpush1.msra.mxu0 0.0
      %5384 = vmatprep.subr.mxu0 0.0
      %5385 = vmatpush1.msra.mxu0 0.0
      %5386 = vmatprep.subr.mxu0 0.0
      %5387 = vmatpush1.msra.mxu0 0.0
      %5388 = vmatprep.subr.mxu0 0.0
      %5389 = vmatpush1.msra.mxu0 0.0
      %5390 = vmatprep.subr.mxu0 0.0
      %5391 = vmatpush1.msra.mxu0 0.0
      %5392 = vmatprep.subr.mxu0 0.0
      %5393 = vmatpush1.msra.mxu0 0.0
      %5394 = vmatprep.subr.mxu0 0.0
      %5395 = vmatpush1.msra.mxu0 0.0
      %5396 = vmatprep.subr.mxu0 0.0
      %5397 = vmatpush1.msra.mxu0 0.0
      %5398 = vmatprep.subr.mxu0 0.0
      %5399 = vmatpush1.msra.mxu0 0.0
      %5400 = vmatprep.subr.mxu0 0.0
      %5401 = vmatpush1.msra.mxu0 0.0
      %5402 = vmatprep.subr.mxu0 0.0
      %5403 = vmatpush1.msra.mxu0 0.0
      %5404 = vmatprep.subr.mxu0 0.0
      %5405 = vmatpush1.msra.mxu0 0.0
      %5406 = vmatprep.subr.mxu0 0.0
      %5407 = vmatpush1.msra.mxu0 0.0
      %5408 = vmatprep.subr.mxu0 0.0
      %5409 = vmatpush1.msra.mxu0 0.0
      %5410 = vmatprep.mubr.f32.mxu0 0.0
      %v5411 = vand.u32 %v4343, 4294901760
      %v5412 = vsub.f32 %v4343, %v5411
      %v5413 = vand.u32 %v5412, 4294901760
      %v5414 = vsub.f32 %v5412, %v5413
      %v5415 = vand.u32 %v5414, 4294901760
      %5416 = vmatmul.mubr.f32.gmra.mrb[0].mxu0 %v5415
      %v5417 = vpop.f32.mrb[0].mxu0
      %v5418 = vadd.f32 0.0, %v5417
      %v5419 = vpop.f32.mrb[0].mxu0
      %v5420 = vadd.f32 0.0, %v5419
      %5421 = vmatprep.mubr.f32.mxu0 0.0
      %v5422 = vand.u32 %v4344, 4294901760
      %v5423 = vsub.f32 %v4344, %v5422
      %v5424 = vand.u32 %v5423, 4294901760
      %v5425 = vsub.f32 %v5423, %v5424
      %v5426 = vand.u32 %v5425, 4294901760
      %5427 = vmatmul.mubr.f32.gmra.mrb[0].mxu0 %v5426
      %v5428 = vpop.f32.mrb[0].mxu0
      %v5429 = vadd.f32 0.0, %v5428
      %v5430 = vpop.f32.mrb[0].mxu0
      %v5431 = vadd.f32 0.0, %v5430
      %5432 = vdwg.mxu0
      %v5433 = vand.u32 %v4349, 4294901760
      %v5434 = vsub.f32 %v4349, %v5433
      %v5435 = vand.u32 %v5434, 4294901760
      %v5436 = vsub.f32 %v5434, %v5435
      %v5437 = vand.u32 %v5436, 4294901760
      %5438 = vmatprep.subr.mxu0 %v5437
      %v5439 = vand.u32 %v4348, 4294901760
      %v5440 = vsub.f32 %v4348, %v5439
      %v5441 = vand.u32 %v5440, 4294901760
      %v5442 = vsub.f32 %v5440, %v5441
      %v5443 = vand.u32 %v5442, 4294901760
      %5444 = vmatpush1.msra.mxu0 %v5443
      %v5445 = vand.u32 %v4353, 4294901760
      %v5446 = vsub.f32 %v4353, %v5445
      %v5447 = vand.u32 %v5446, 4294901760
      %v5448 = vsub.f32 %v5446, %v5447
      %v5449 = vand.u32 %v5448, 4294901760
      %5450 = vmatprep.subr.mxu0 %v5449
      %v5451 = vand.u32 %v4352, 4294901760
      %v5452 = vsub.f32 %v4352, %v5451
      %v5453 = vand.u32 %v5452, 4294901760
      %v5454 = vsub.f32 %v5452, %v5453
      %v5455 = vand.u32 %v5454, 4294901760
      %5456 = vmatpush1.msra.mxu0 %v5455
      %v5457 = vand.u32 %v4357, 4294901760
      %v5458 = vsub.f32 %v4357, %v5457
      %v5459 = vand.u32 %v5458, 4294901760
      %v5460 = vsub.f32 %v5458, %v5459
      %v5461 = vand.u32 %v5460, 4294901760
      %5462 = vmatprep.subr.mxu0 %v5461
      %v5463 = vand.u32 %v4356, 4294901760
      %v5464 = vsub.f32 %v4356, %v5463
      %v5465 = vand.u32 %v5464, 4294901760
      %v5466 = vsub.f32 %v5464, %v5465
      %v5467 = vand.u32 %v5466, 4294901760
      %5468 = vmatpush1.msra.mxu0 %v5467
      %v5469 = vand.u32 %v4361, 4294901760
      %v5470 = vsub.f32 %v4361, %v5469
      %v5471 = vand.u32 %v5470, 4294901760
      %v5472 = vsub.f32 %v5470, %v5471
      %v5473 = vand.u32 %v5472, 4294901760
      %5474 = vmatprep.subr.mxu0 %v5473
      %v5475 = vand.u32 %v4360, 4294901760
      %v5476 = vsub.f32 %v4360, %v5475
      %v5477 = vand.u32 %v5476, 4294901760
      %v5478 = vsub.f32 %v5476, %v5477
      %v5479 = vand.u32 %v5478, 4294901760
      %5480 = vmatpush1.msra.mxu0 %v5479
      %v5481 = vand.u32 %v4365, 4294901760
      %v5482 = vsub.f32 %v4365, %v5481
      %v5483 = vand.u32 %v5482, 4294901760
      %v5484 = vsub.f32 %v5482, %v5483
      %v5485 = vand.u32 %v5484, 4294901760
      %5486 = vmatprep.subr.mxu0 %v5485
      %v5487 = vand.u32 %v4364, 4294901760
      %v5488 = vsub.f32 %v4364, %v5487
      %v5489 = vand.u32 %v5488, 4294901760
      %v5490 = vsub.f32 %v5488, %v5489
      %v5491 = vand.u32 %v5490, 4294901760
      %5492 = vmatpush1.msra.mxu0 %v5491
      %v5493 = vand.u32 %v4369, 4294901760
      %v5494 = vsub.f32 %v4369, %v5493
      %v5495 = vand.u32 %v5494, 4294901760
      %v5496 = vsub.f32 %v5494, %v5495
      %v5497 = vand.u32 %v5496, 4294901760
      %5498 = vmatprep.subr.mxu0 %v5497
      %v5499 = vand.u32 %v4368, 4294901760
      %v5500 = vsub.f32 %v4368, %v5499
      %v5501 = vand.u32 %v5500, 4294901760
      %v5502 = vsub.f32 %v5500, %v5501
      %v5503 = vand.u32 %v5502, 4294901760
      %5504 = vmatpush1.msra.mxu0 %v5503
      %v5505 = vand.u32 %v4373, 4294901760
      %v5506 = vsub.f32 %v4373, %v5505
      %v5507 = vand.u32 %v5506, 4294901760
      %v5508 = vsub.f32 %v5506, %v5507
      %v5509 = vand.u32 %v5508, 4294901760
      %5510 = vmatprep.subr.mxu0 %v5509
      %v5511 = vand.u32 %v4372, 4294901760
      %v5512 = vsub.f32 %v4372, %v5511
      %v5513 = vand.u32 %v5512, 4294901760
      %v5514 = vsub.f32 %v5512, %v5513
      %v5515 = vand.u32 %v5514, 4294901760
      %5516 = vmatpush1.msra.mxu0 %v5515
      %v5517 = vand.u32 %v4377, 4294901760
      %v5518 = vsub.f32 %v4377, %v5517
      %v5519 = vand.u32 %v5518, 4294901760
      %v5520 = vsub.f32 %v5518, %v5519
      %v5521 = vand.u32 %v5520, 4294901760
      %5522 = vmatprep.subr.mxu0 %v5521
      %v5523 = vand.u32 %v4376, 4294901760
      %v5524 = vsub.f32 %v4376, %v5523
      %v5525 = vand.u32 %v5524, 4294901760
      %v5526 = vsub.f32 %v5524, %v5525
      %v5527 = vand.u32 %v5526, 4294901760
      %5528 = vmatpush1.msra.mxu0 %v5527
      %v5529 = vand.u32 %v4381, 4294901760
      %v5530 = vsub.f32 %v4381, %v5529
      %v5531 = vand.u32 %v5530, 4294901760
      %v5532 = vsub.f32 %v5530, %v5531
      %v5533 = vand.u32 %v5532, 4294901760
      %5534 = vmatprep.subr.mxu0 %v5533
      %v5535 = vand.u32 %v4380, 4294901760
      %v5536 = vsub.f32 %v4380, %v5535
      %v5537 = vand.u32 %v5536, 4294901760
      %v5538 = vsub.f32 %v5536, %v5537
      %v5539 = vand.u32 %v5538, 4294901760
      %5540 = vmatpush1.msra.mxu0 %v5539
      %v5541 = vand.u32 %v4385, 4294901760
      %v5542 = vsub.f32 %v4385, %v5541
      %v5543 = vand.u32 %v5542, 4294901760
      %v5544 = vsub.f32 %v5542, %v5543
      %v5545 = vand.u32 %v5544, 4294901760
      %5546 = vmatprep.subr.mxu0 %v5545
      %v5547 = vand.u32 %v4384, 4294901760
      %v5548 = vsub.f32 %v4384, %v5547
      %v5549 = vand.u32 %v5548, 4294901760
      %v5550 = vsub.f32 %v5548, %v5549
      %v5551 = vand.u32 %v5550, 4294901760
      %5552 = vmatpush1.msra.mxu0 %v5551
      %v5553 = vand.u32 %v4389, 4294901760
      %v5554 = vsub.f32 %v4389, %v5553
      %v5555 = vand.u32 %v5554, 4294901760
      %v5556 = vsub.f32 %v5554, %v5555
      %v5557 = vand.u32 %v5556, 4294901760
      %5558 = vmatprep.subr.mxu0 %v5557
      %v5559 = vand.u32 %v4388, 4294901760
      %v5560 = vsub.f32 %v4388, %v5559
      %v5561 = vand.u32 %v5560, 4294901760
      %v5562 = vsub.f32 %v5560, %v5561
      %v5563 = vand.u32 %v5562, 4294901760
      %5564 = vmatpush1.msra.mxu0 %v5563
      %v5565 = vand.u32 %v4393, 4294901760
      %v5566 = vsub.f32 %v4393, %v5565
      %v5567 = vand.u32 %v5566, 4294901760
      %v5568 = vsub.f32 %v5566, %v5567
      %v5569 = vand.u32 %v5568, 4294901760
      %5570 = vmatprep.subr.mxu0 %v5569
      %v5571 = vand.u32 %v4392, 4294901760
      %v5572 = vsub.f32 %v4392, %v5571
      %v5573 = vand.u32 %v5572, 4294901760
      %v5574 = vsub.f32 %v5572, %v5573
      %v5575 = vand.u32 %v5574, 4294901760
      %5576 = vmatpush1.msra.mxu0 %v5575
      %v5577 = vand.u32 %v4397, 4294901760
      %v5578 = vsub.f32 %v4397, %v5577
      %v5579 = vand.u32 %v5578, 4294901760
      %v5580 = vsub.f32 %v5578, %v5579
      %v5581 = vand.u32 %v5580, 4294901760
      %5582 = vmatprep.subr.mxu0 %v5581
      %v5583 = vand.u32 %v4396, 4294901760
      %v5584 = vsub.f32 %v4396, %v5583
      %v5585 = vand.u32 %v5584, 4294901760
      %v5586 = vsub.f32 %v5584, %v5585
      %v5587 = vand.u32 %v5586, 4294901760
      %5588 = vmatpush1.msra.mxu0 %v5587
      %v5589 = vand.u32 %v4401, 4294901760
      %v5590 = vsub.f32 %v4401, %v5589
      %v5591 = vand.u32 %v5590, 4294901760
      %v5592 = vsub.f32 %v5590, %v5591
      %v5593 = vand.u32 %v5592, 4294901760
      %5594 = vmatprep.subr.mxu0 %v5593
      %v5595 = vand.u32 %v4400, 4294901760
      %v5596 = vsub.f32 %v4400, %v5595
      %v5597 = vand.u32 %v5596, 4294901760
      %v5598 = vsub.f32 %v5596, %v5597
      %v5599 = vand.u32 %v5598, 4294901760
      %5600 = vmatpush1.msra.mxu0 %v5599
      %v5601 = vand.u32 %v4405, 4294901760
      %v5602 = vsub.f32 %v4405, %v5601
      %v5603 = vand.u32 %v5602, 4294901760
      %v5604 = vsub.f32 %v5602, %v5603
      %v5605 = vand.u32 %v5604, 4294901760
      %5606 = vmatprep.subr.mxu0 %v5605
      %v5607 = vand.u32 %v4404, 4294901760
      %v5608 = vsub.f32 %v4404, %v5607
      %v5609 = vand.u32 %v5608, 4294901760
      %v5610 = vsub.f32 %v5608, %v5609
      %v5611 = vand.u32 %v5610, 4294901760
      %5612 = vmatpush1.msra.mxu0 %v5611
      %v5613 = vand.u32 %v4409, 4294901760
      %v5614 = vsub.f32 %v4409, %v5613
      %v5615 = vand.u32 %v5614, 4294901760
      %v5616 = vsub.f32 %v5614, %v5615
      %v5617 = vand.u32 %v5616, 4294901760
      %5618 = vmatprep.subr.mxu0 %v5617
      %v5619 = vand.u32 %v4408, 4294901760
      %v5620 = vsub.f32 %v4408, %v5619
      %v5621 = vand.u32 %v5620, 4294901760
      %v5622 = vsub.f32 %v5620, %v5621
      %v5623 = vand.u32 %v5622, 4294901760
      %5624 = vmatpush1.msra.mxu0 %v5623
      %5625 = vmatprep.subr.mxu0 0.0
      %5626 = vmatpush1.msra.mxu0 0.0
      %5627 = vmatprep.subr.mxu0 0.0
      %5628 = vmatpush1.msra.mxu0 0.0
      %5629 = vmatprep.subr.mxu0 0.0
      %5630 = vmatpush1.msra.mxu0 0.0
      %5631 = vmatprep.subr.mxu0 0.0
      %5632 = vmatpush1.msra.mxu0 0.0
      %5633 = vmatprep.subr.mxu0 0.0
      %5634 = vmatpush1.msra.mxu0 0.0
      %5635 = vmatprep.subr.mxu0 0.0
      %5636 = vmatpush1.msra.mxu0 0.0
      %5637 = vmatprep.subr.mxu0 0.0
      %5638 = vmatpush1.msra.mxu0 0.0
      %5639 = vmatprep.subr.mxu0 0.0
      %5640 = vmatpush1.msra.mxu0 0.0
      %5641 = vmatprep.subr.mxu0 0.0
      %5642 = vmatpush1.msra.mxu0 0.0
      %5643 = vmatprep.subr.mxu0 0.0
      %5644 = vmatpush1.msra.mxu0 0.0
      %5645 = vmatprep.subr.mxu0 0.0
      %5646 = vmatpush1.msra.mxu0 0.0
      %5647 = vmatprep.subr.mxu0 0.0
      %5648 = vmatpush1.msra.mxu0 0.0
      %5649 = vmatprep.subr.mxu0 0.0
      %5650 = vmatpush1.msra.mxu0 0.0
      %5651 = vmatprep.subr.mxu0 0.0
      %5652 = vmatpush1.msra.mxu0 0.0
      %5653 = vmatprep.subr.mxu0 0.0
      %5654 = vmatpush1.msra.mxu0 0.0
      %5655 = vmatprep.subr.mxu0 0.0
      %5656 = vmatpush1.msra.mxu0 0.0
      %5657 = vmatprep.mubr.f32.mxu0 0.0
      %v5658 = vand.u32 %v4343, 4294901760
      %5659 = vmatmul.mubr.f32.gmra.mrb[0].mxu0 %v5658
      %v5660 = vpop.f32.mrb[0].mxu0
      %v5661 = vadd.f32 %v5418, %v5660
      %v5662 = vpop.f32.mrb[0].mxu0
      %v5663 = vadd.f32 %v5420, %v5662
      %5664 = vmatprep.mubr.f32.mxu0 0.0
      %v5665 = vand.u32 %v4344, 4294901760
      %5666 = vmatmul.mubr.f32.gmra.mrb[0].mxu0 %v5665
      %v5667 = vpop.f32.mrb[0].mxu0
      %v5668 = vadd.f32 %v5429, %v5667
      %v5669 = vpop.f32.mrb[0].mxu0
      %v5670 = vadd.f32 %v5431, %v5669
      %5671 = vdwg.mxu0
      %v5672 = vand.u32 %v4349, 4294901760
      %v5673 = vsub.f32 %v4349, %v5672
      %5674 = vmatprep.subr.mxu0 %v5673
      %v5675 = vand.u32 %v4348, 4294901760
      %v5676 = vsub.f32 %v4348, %v5675
      %5677 = vmatpush1.msra.mxu0 %v5676
      %v5678 = vand.u32 %v4353, 4294901760
      %v5679 = vsub.f32 %v4353, %v5678
      %5680 = vmatprep.subr.mxu0 %v5679
      %v5681 = vand.u32 %v4352, 4294901760
      %v5682 = vsub.f32 %v4352, %v5681
      %5683 = vmatpush1.msra.mxu0 %v5682
      %v5684 = vand.u32 %v4357, 4294901760
      %v5685 = vsub.f32 %v4357, %v5684
      %5686 = vmatprep.subr.mxu0 %v5685
      %v5687 = vand.u32 %v4356, 4294901760
      %v5688 = vsub.f32 %v4356, %v5687
      %5689 = vmatpush1.msra.mxu0 %v5688
      %v5690 = vand.u32 %v4361, 4294901760
      %v5691 = vsub.f32 %v4361, %v5690
      %5692 = vmatprep.subr.mxu0 %v5691
      %v5693 = vand.u32 %v4360, 4294901760
      %v5694 = vsub.f32 %v4360, %v5693
      %5695 = vmatpush1.msra.mxu0 %v5694
      %v5696 = vand.u32 %v4365, 4294901760
      %v5697 = vsub.f32 %v4365, %v5696
      %5698 = vmatprep.subr.mxu0 %v5697
      %v5699 = vand.u32 %v4364, 4294901760
      %v5700 = vsub.f32 %v4364, %v5699
      %5701 = vmatpush1.msra.mxu0 %v5700
      %v5702 = vand.u32 %v4369, 4294901760
      %v5703 = vsub.f32 %v4369, %v5702
      %5704 = vmatprep.subr.mxu0 %v5703
      %v5705 = vand.u32 %v4368, 4294901760
      %v5706 = vsub.f32 %v4368, %v5705
      %5707 = vmatpush1.msra.mxu0 %v5706
      %v5708 = vand.u32 %v4373, 4294901760
      %v5709 = vsub.f32 %v4373, %v5708
      %5710 = vmatprep.subr.mxu0 %v5709
      %v5711 = vand.u32 %v4372, 4294901760
      %v5712 = vsub.f32 %v4372, %v5711
      %5713 = vmatpush1.msra.mxu0 %v5712
      %v5714 = vand.u32 %v4377, 4294901760
      %v5715 = vsub.f32 %v4377, %v5714
      %5716 = vmatprep.subr.mxu0 %v5715
      %v5717 = vand.u32 %v4376, 4294901760
      %v5718 = vsub.f32 %v4376, %v5717
      %5719 = vmatpush1.msra.mxu0 %v5718
      %v5720 = vand.u32 %v4381, 4294901760
      %v5721 = vsub.f32 %v4381, %v5720
      %5722 = vmatprep.subr.mxu0 %v5721
      %v5723 = vand.u32 %v4380, 4294901760
      %v5724 = vsub.f32 %v4380, %v5723
      %5725 = vmatpush1.msra.mxu0 %v5724
      %v5726 = vand.u32 %v4385, 4294901760
      %v5727 = vsub.f32 %v4385, %v5726
      %5728 = vmatprep.subr.mxu0 %v5727
      %v5729 = vand.u32 %v4384, 4294901760
      %v5730 = vsub.f32 %v4384, %v5729
      %5731 = vmatpush1.msra.mxu0 %v5730
      %v5732 = vand.u32 %v4389, 4294901760
      %v5733 = vsub.f32 %v4389, %v5732
      %5734 = vmatprep.subr.mxu0 %v5733
      %v5735 = vand.u32 %v4388, 4294901760
      %v5736 = vsub.f32 %v4388, %v5735
      %5737 = vmatpush1.msra.mxu0 %v5736
      %v5738 = vand.u32 %v4393, 4294901760
      %v5739 = vsub.f32 %v4393, %v5738
      %5740 = vmatprep.subr.mxu0 %v5739
      %v5741 = vand.u32 %v4392, 4294901760
      %v5742 = vsub.f32 %v4392, %v5741
      %5743 = vmatpush1.msra.mxu0 %v5742
      %v5744 = vand.u32 %v4397, 4294901760
      %v5745 = vsub.f32 %v4397, %v5744
      %5746 = vmatprep.subr.mxu0 %v5745
      %v5747 = vand.u32 %v4396, 4294901760
      %v5748 = vsub.f32 %v4396, %v5747
      %5749 = vmatpush1.msra.mxu0 %v5748
      %v5750 = vand.u32 %v4401, 4294901760
      %v5751 = vsub.f32 %v4401, %v5750
      %5752 = vmatprep.subr.mxu0 %v5751
      %v5753 = vand.u32 %v4400, 4294901760
      %v5754 = vsub.f32 %v4400, %v5753
      %5755 = vmatpush1.msra.mxu0 %v5754
      %v5756 = vand.u32 %v4405, 4294901760
      %v5757 = vsub.f32 %v4405, %v5756
      %5758 = vmatprep.subr.mxu0 %v5757
      %v5759 = vand.u32 %v4404, 4294901760
      %v5760 = vsub.f32 %v4404, %v5759
      %5761 = vmatpush1.msra.mxu0 %v5760
      %v5762 = vand.u32 %v4409, 4294901760
      %v5763 = vsub.f32 %v4409, %v5762
      %5764 = vmatprep.subr.mxu0 %v5763
      %v5765 = vand.u32 %v4408, 4294901760
      %v5766 = vsub.f32 %v4408, %v5765
      %5767 = vmatpush1.msra.mxu0 %v5766
      %5768 = vmatprep.subr.mxu0 0.0
      %5769 = vmatpush1.msra.mxu0 0.0
      %5770 = vmatprep.subr.mxu0 0.0
      %5771 = vmatpush1.msra.mxu0 0.0
      %5772 = vmatprep.subr.mxu0 0.0
      %5773 = vmatpush1.msra.mxu0 0.0
      %5774 = vmatprep.subr.mxu0 0.0
      %5775 = vmatpush1.msra.mxu0 0.0
      %5776 = vmatprep.subr.mxu0 0.0
      %5777 = vmatpush1.msra.mxu0 0.0
      %5778 = vmatprep.subr.mxu0 0.0
      %5779 = vmatpush1.msra.mxu0 0.0
      %5780 = vmatprep.subr.mxu0 0.0
      %5781 = vmatpush1.msra.mxu0 0.0
      %5782 = vmatprep.subr.mxu0 0.0
      %5783 = vmatpush1.msra.mxu0 0.0
      %5784 = vmatprep.subr.mxu0 0.0
      %5785 = vmatpush1.msra.mxu0 0.0
      %5786 = vmatprep.subr.mxu0 0.0
      %5787 = vmatpush1.msra.mxu0 0.0
      %5788 = vmatprep.subr.mxu0 0.0
      %5789 = vmatpush1.msra.mxu0 0.0
      %5790 = vmatprep.subr.mxu0 0.0
      %5791 = vmatpush1.msra.mxu0 0.0
      %5792 = vmatprep.subr.mxu0 0.0
      %5793 = vmatpush1.msra.mxu0 0.0
      %5794 = vmatprep.subr.mxu0 0.0
      %5795 = vmatpush1.msra.mxu0 0.0
      %5796 = vmatprep.subr.mxu0 0.0
      %5797 = vmatpush1.msra.mxu0 0.0
      %5798 = vmatprep.subr.mxu0 0.0
      %5799 = vmatpush1.msra.mxu0 0.0
      %5800 = vmatprep.mubr.f32.mxu0 0.0
      %v5801 = vand.u32 %v4343, 4294901760
      %v5802 = vsub.f32 %v4343, %v5801
      %5803 = vmatmul.mubr.f32.gmra.mrb[0].mxu0 %v5802
      %v5804 = vpop.f32.mrb[0].mxu0
      %v5805 = vadd.f32 %v5661, %v5804
      %v5806 = vpop.f32.mrb[0].mxu0
      %v5807 = vadd.f32 %v5663, %v5806
      %5808 = vmatprep.mubr.f32.mxu0 0.0
      %v5809 = vand.u32 %v4344, 4294901760
      %v5810 = vsub.f32 %v4344, %v5809
      %5811 = vmatmul.mubr.f32.gmra.mrb[0].mxu0 %v5810
      %v5812 = vpop.f32.mrb[0].mxu0
      %v5813 = vadd.f32 %v5668, %v5812
      %v5814 = vpop.f32.mrb[0].mxu0
      %v5815 = vadd.f32 %v5670, %v5814
      %5816 = vdwg.mxu0
      %v5817 = vand.u32 %v4349, 4294901760
      %5818 = vmatprep.subr.mxu0 %v5817
      %v5819 = vand.u32 %v4348, 4294901760
      %5820 = vmatpush1.msra.mxu0 %v5819
      %v5821 = vand.u32 %v4353, 4294901760
      %5822 = vmatprep.subr.mxu0 %v5821
      %v5823 = vand.u32 %v4352, 4294901760
      %5824 = vmatpush1.msra.mxu0 %v5823
      %v5825 = vand.u32 %v4357, 4294901760
      %5826 = vmatprep.subr.mxu0 %v5825
      %v5827 = vand.u32 %v4356, 4294901760
      %5828 = vmatpush1.msra.mxu0 %v5827
      %v5829 = vand.u32 %v4361, 4294901760
      %5830 = vmatprep.subr.mxu0 %v5829
      %v5831 = vand.u32 %v4360, 4294901760
      %5832 = vmatpush1.msra.mxu0 %v5831
      %v5833 = vand.u32 %v4365, 4294901760
      %5834 = vmatprep.subr.mxu0 %v5833
      %v5835 = vand.u32 %v4364, 4294901760
      %5836 = vmatpush1.msra.mxu0 %v5835
      %v5837 = vand.u32 %v4369, 4294901760
      %5838 = vmatprep.subr.mxu0 %v5837
      %v5839 = vand.u32 %v4368, 4294901760
      %5840 = vmatpush1.msra.mxu0 %v5839
      %v5841 = vand.u32 %v4373, 4294901760
      %5842 = vmatprep.subr.mxu0 %v5841
      %v5843 = vand.u32 %v4372, 4294901760
      %5844 = vmatpush1.msra.mxu0 %v5843
      %v5845 = vand.u32 %v4377, 4294901760
      %5846 = vmatprep.subr.mxu0 %v5845
      %v5847 = vand.u32 %v4376, 4294901760
      %5848 = vmatpush1.msra.mxu0 %v5847
      %v5849 = vand.u32 %v4381, 4294901760
      %5850 = vmatprep.subr.mxu0 %v5849
      %v5851 = vand.u32 %v4380, 4294901760
      %5852 = vmatpush1.msra.mxu0 %v5851
      %v5853 = vand.u32 %v4385, 4294901760
      %5854 = vmatprep.subr.mxu0 %v5853
      %v5855 = vand.u32 %v4384, 4294901760
      %5856 = vmatpush1.msra.mxu0 %v5855
      %v5857 = vand.u32 %v4389, 4294901760
      %5858 = vmatprep.subr.mxu0 %v5857
      %v5859 = vand.u32 %v4388, 4294901760
      %5860 = vmatpush1.msra.mxu0 %v5859
      %v5861 = vand.u32 %v4393, 4294901760
      %5862 = vmatprep.subr.mxu0 %v5861
      %v5863 = vand.u32 %v4392, 4294901760
      %5864 = vmatpush1.msra.mxu0 %v5863
      %v5865 = vand.u32 %v4397, 4294901760
      %5866 = vmatprep.subr.mxu0 %v5865
      %v5867 = vand.u32 %v4396, 4294901760
      %5868 = vmatpush1.msra.mxu0 %v5867
      %v5869 = vand.u32 %v4401, 4294901760
      %5870 = vmatprep.subr.mxu0 %v5869
      %v5871 = vand.u32 %v4400, 4294901760
      %5872 = vmatpush1.msra.mxu0 %v5871
      %v5873 = vand.u32 %v4405, 4294901760
      %5874 = vmatprep.subr.mxu0 %v5873
      %v5875 = vand.u32 %v4404, 4294901760
      %5876 = vmatpush1.msra.mxu0 %v5875
      %v5877 = vand.u32 %v4409, 4294901760
      %5878 = vmatprep.subr.mxu0 %v5877
      %v5879 = vand.u32 %v4408, 4294901760
      %5880 = vmatpush1.msra.mxu0 %v5879
      %5881 = vmatprep.subr.mxu0 0.0
      %5882 = vmatpush1.msra.mxu0 0.0
      %5883 = vmatprep.subr.mxu0 0.0
      %5884 = vmatpush1.msra.mxu0 0.0
      %5885 = vmatprep.subr.mxu0 0.0
      %5886 = vmatpush1.msra.mxu0 0.0
      %5887 = vmatprep.subr.mxu0 0.0
      %5888 = vmatpush1.msra.mxu0 0.0
      %5889 = vmatprep.subr.mxu0 0.0
      %5890 = vmatpush1.msra.mxu0 0.0
      %5891 = vmatprep.subr.mxu0 0.0
      %5892 = vmatpush1.msra.mxu0 0.0
      %5893 = vmatprep.subr.mxu0 0.0
      %5894 = vmatpush1.msra.mxu0 0.0
      %5895 = vmatprep.subr.mxu0 0.0
      %5896 = vmatpush1.msra.mxu0 0.0
      %5897 = vmatprep.subr.mxu0 0.0
      %5898 = vmatpush1.msra.mxu0 0.0
      %5899 = vmatprep.subr.mxu0 0.0
      %5900 = vmatpush1.msra.mxu0 0.0
      %5901 = vmatprep.subr.mxu0 0.0
      %5902 = vmatpush1.msra.mxu0 0.0
      %5903 = vmatprep.subr.mxu0 0.0
      %5904 = vmatpush1.msra.mxu0 0.0
      %5905 = vmatprep.subr.mxu0 0.0
      %5906 = vmatpush1.msra.mxu0 0.0
      %5907 = vmatprep.subr.mxu0 0.0
      %5908 = vmatpush1.msra.mxu0 0.0
      %5909 = vmatprep.subr.mxu0 0.0
      %5910 = vmatpush1.msra.mxu0 0.0
      %5911 = vmatprep.subr.mxu0 0.0
      %5912 = vmatpush1.msra.mxu0 0.0
      %5913 = vmatprep.mubr.f32.mxu0 0.0
      %v5914 = vand.u32 %v4343, 4294901760
      %v5915 = vsub.f32 %v4343, %v5914
      %v5916 = vand.u32 %v5915, 4294901760
      %5917 = vmatmul.mubr.f32.gmra.mrb[0].mxu0 %v5916
      %v5918 = vpop.f32.mrb[0].mxu0
      %v5919 = vadd.f32 %v5805, %v5918
      %v5920 = vpop.f32.mrb[0].mxu0
      %v5921 = vadd.f32 %v5807, %v5920
      %5922 = vmatprep.mubr.f32.mxu0 0.0
      %v5923 = vand.u32 %v4344, 4294901760
      %v5924 = vsub.f32 %v4344, %v5923
      %v5925 = vand.u32 %v5924, 4294901760
      %5926 = vmatmul.mubr.f32.gmra.mrb[0].mxu0 %v5925
      %v5927 = vpop.f32.mrb[0].mxu0
      %v5928 = vadd.f32 %v5813, %v5927
      %v5929 = vpop.f32.mrb[0].mxu0
      %v5930 = vadd.f32 %v5815, %v5929
      %5931 = vdwg.mxu0
      %v5932 = vand.u32 %v4349, 4294901760
      %v5933 = vsub.f32 %v4349, %v5932
      %v5934 = vand.u32 %v5933, 4294901760
      %5935 = vmatprep.subr.mxu0 %v5934
      %v5936 = vand.u32 %v4348, 4294901760
      %v5937 = vsub.f32 %v4348, %v5936
      %v5938 = vand.u32 %v5937, 4294901760
      %5939 = vmatpush1.msra.mxu0 %v5938
      %v5940 = vand.u32 %v4353, 4294901760
      %v5941 = vsub.f32 %v4353, %v5940
      %v5942 = vand.u32 %v5941, 4294901760
      %5943 = vmatprep.subr.mxu0 %v5942
      %v5944 = vand.u32 %v4352, 4294901760
      %v5945 = vsub.f32 %v4352, %v5944
      %v5946 = vand.u32 %v5945, 4294901760
      %5947 = vmatpush1.msra.mxu0 %v5946
      %v5948 = vand.u32 %v4357, 4294901760
      %v5949 = vsub.f32 %v4357, %v5948
      %v5950 = vand.u32 %v5949, 4294901760
      %5951 = vmatprep.subr.mxu0 %v5950
      %v5952 = vand.u32 %v4356, 4294901760
      %v5953 = vsub.f32 %v4356, %v5952
      %v5954 = vand.u32 %v5953, 4294901760
      %5955 = vmatpush1.msra.mxu0 %v5954
      %v5956 = vand.u32 %v4361, 4294901760
      %v5957 = vsub.f32 %v4361, %v5956
      %v5958 = vand.u32 %v5957, 4294901760
      %5959 = vmatprep.subr.mxu0 %v5958
      %v5960 = vand.u32 %v4360, 4294901760
      %v5961 = vsub.f32 %v4360, %v5960
      %v5962 = vand.u32 %v5961, 4294901760
      %5963 = vmatpush1.msra.mxu0 %v5962
      %v5964 = vand.u32 %v4365, 4294901760
      %v5965 = vsub.f32 %v4365, %v5964
      %v5966 = vand.u32 %v5965, 4294901760
      %5967 = vmatprep.subr.mxu0 %v5966
      %v5968 = vand.u32 %v4364, 4294901760
      %v5969 = vsub.f32 %v4364, %v5968
      %v5970 = vand.u32 %v5969, 4294901760
      %5971 = vmatpush1.msra.mxu0 %v5970
      %v5972 = vand.u32 %v4369, 4294901760
      %v5973 = vsub.f32 %v4369, %v5972
      %v5974 = vand.u32 %v5973, 4294901760
      %5975 = vmatprep.subr.mxu0 %v5974
      %v5976 = vand.u32 %v4368, 4294901760
      %v5977 = vsub.f32 %v4368, %v5976
      %v5978 = vand.u32 %v5977, 4294901760
      %5979 = vmatpush1.msra.mxu0 %v5978
      %v5980 = vand.u32 %v4373, 4294901760
      %v5981 = vsub.f32 %v4373, %v5980
      %v5982 = vand.u32 %v5981, 4294901760
      %5983 = vmatprep.subr.mxu0 %v5982
      %v5984 = vand.u32 %v4372, 4294901760
      %v5985 = vsub.f32 %v4372, %v5984
      %v5986 = vand.u32 %v5985, 4294901760
      %5987 = vmatpush1.msra.mxu0 %v5986
      %v5988 = vand.u32 %v4377, 4294901760
      %v5989 = vsub.f32 %v4377, %v5988
      %v5990 = vand.u32 %v5989, 4294901760
      %5991 = vmatprep.subr.mxu0 %v5990
      %v5992 = vand.u32 %v4376, 4294901760
      %v5993 = vsub.f32 %v4376, %v5992
      %v5994 = vand.u32 %v5993, 4294901760
      %5995 = vmatpush1.msra.mxu0 %v5994
      %v5996 = vand.u32 %v4381, 4294901760
      %v5997 = vsub.f32 %v4381, %v5996
      %v5998 = vand.u32 %v5997, 4294901760
      %5999 = vmatprep.subr.mxu0 %v5998
      %v6000 = vand.u32 %v4380, 4294901760
      %v6001 = vsub.f32 %v4380, %v6000
      %v6002 = vand.u32 %v6001, 4294901760
      %6003 = vmatpush1.msra.mxu0 %v6002
      %v6004 = vand.u32 %v4385, 4294901760
      %v6005 = vsub.f32 %v4385, %v6004
      %v6006 = vand.u32 %v6005, 4294901760
      %6007 = vmatprep.subr.mxu0 %v6006
      %v6008 = vand.u32 %v4384, 4294901760
      %v6009 = vsub.f32 %v4384, %v6008
      %v6010 = vand.u32 %v6009, 4294901760
      %6011 = vmatpush1.msra.mxu0 %v6010
      %v6012 = vand.u32 %v4389, 4294901760
      %v6013 = vsub.f32 %v4389, %v6012
      %v6014 = vand.u32 %v6013, 4294901760
      %6015 = vmatprep.subr.mxu0 %v6014
      %v6016 = vand.u32 %v4388, 4294901760
      %v6017 = vsub.f32 %v4388, %v6016
      %v6018 = vand.u32 %v6017, 4294901760
      %6019 = vmatpush1.msra.mxu0 %v6018
      %v6020 = vand.u32 %v4393, 4294901760
      %v6021 = vsub.f32 %v4393, %v6020
      %v6022 = vand.u32 %v6021, 4294901760
      %6023 = vmatprep.subr.mxu0 %v6022
      %v6024 = vand.u32 %v4392, 4294901760
      %v6025 = vsub.f32 %v4392, %v6024
      %v6026 = vand.u32 %v6025, 4294901760
      %6027 = vmatpush1.msra.mxu0 %v6026
      %v6028 = vand.u32 %v4397, 4294901760
      %v6029 = vsub.f32 %v4397, %v6028
      %v6030 = vand.u32 %v6029, 4294901760
      %6031 = vmatprep.subr.mxu0 %v6030
      %v6032 = vand.u32 %v4396, 4294901760
      %v6033 = vsub.f32 %v4396, %v6032
      %v6034 = vand.u32 %v6033, 4294901760
      %6035 = vmatpush1.msra.mxu0 %v6034
      %v6036 = vand.u32 %v4401, 4294901760
      %v6037 = vsub.f32 %v4401, %v6036
      %v6038 = vand.u32 %v6037, 4294901760
      %6039 = vmatprep.subr.mxu0 %v6038
      %v6040 = vand.u32 %v4400, 4294901760
      %v6041 = vsub.f32 %v4400, %v6040
      %v6042 = vand.u32 %v6041, 4294901760
      %6043 = vmatpush1.msra.mxu0 %v6042
      %v6044 = vand.u32 %v4405, 4294901760
      %v6045 = vsub.f32 %v4405, %v6044
      %v6046 = vand.u32 %v6045, 4294901760
      %6047 = vmatprep.subr.mxu0 %v6046
      %v6048 = vand.u32 %v4404, 4294901760
      %v6049 = vsub.f32 %v4404, %v6048
      %v6050 = vand.u32 %v6049, 4294901760
      %6051 = vmatpush1.msra.mxu0 %v6050
      %v6052 = vand.u32 %v4409, 4294901760
      %v6053 = vsub.f32 %v4409, %v6052
      %v6054 = vand.u32 %v6053, 4294901760
      %6055 = vmatprep.subr.mxu0 %v6054
      %v6056 = vand.u32 %v4408, 4294901760
      %v6057 = vsub.f32 %v4408, %v6056
      %v6058 = vand.u32 %v6057, 4294901760
      %6059 = vmatpush1.msra.mxu0 %v6058
      %6060 = vmatprep.subr.mxu0 0.0
      %6061 = vmatpush1.msra.mxu0 0.0
      %6062 = vmatprep.subr.mxu0 0.0
      %6063 = vmatpush1.msra.mxu0 0.0
      %6064 = vmatprep.subr.mxu0 0.0
      %6065 = vmatpush1.msra.mxu0 0.0
      %6066 = vmatprep.subr.mxu0 0.0
      %6067 = vmatpush1.msra.mxu0 0.0
      %6068 = vmatprep.subr.mxu0 0.0
      %6069 = vmatpush1.msra.mxu0 0.0
      %6070 = vmatprep.subr.mxu0 0.0
      %6071 = vmatpush1.msra.mxu0 0.0
      %6072 = vmatprep.subr.mxu0 0.0
      %6073 = vmatpush1.msra.mxu0 0.0
      %6074 = vmatprep.subr.mxu0 0.0
      %6075 = vmatpush1.msra.mxu0 0.0
      %6076 = vmatprep.subr.mxu0 0.0
      %6077 = vmatpush1.msra.mxu0 0.0
      %6078 = vmatprep.subr.mxu0 0.0
      %6079 = vmatpush1.msra.mxu0 0.0
      %6080 = vmatprep.subr.mxu0 0.0
      %6081 = vmatpush1.msra.mxu0 0.0
      %6082 = vmatprep.subr.mxu0 0.0
      %6083 = vmatpush1.msra.mxu0 0.0
      %6084 = vmatprep.subr.mxu0 0.0
      %6085 = vmatpush1.msra.mxu0 0.0
      %6086 = vmatprep.subr.mxu0 0.0
      %6087 = vmatpush1.msra.mxu0 0.0
      %6088 = vmatprep.subr.mxu0 0.0
      %6089 = vmatpush1.msra.mxu0 0.0
      %6090 = vmatprep.subr.mxu0 0.0
      %6091 = vmatpush1.msra.mxu0 0.0
      %6092 = vmatprep.mubr.f32.mxu0 0.0
      %v6093 = vand.u32 %v4343, 4294901760
      %6094 = vmatmul.mubr.f32.gmra.mrb[0].mxu0 %v6093
      %v6095 = vpop.f32.mrb[0].mxu0
      %v6096 = vadd.f32 %v5919, %v6095
      %v6097 = vpop.f32.mrb[0].mxu0
      %v6098 = vadd.f32 %v5921, %v6097
      %6099 = vmatprep.mubr.f32.mxu0 0.0
      %v6100 = vand.u32 %v4344, 4294901760
      %6101 = vmatmul.mubr.f32.gmra.mrb[0].mxu0 %v6100
      %v6102 = vpop.f32.mrb[0].mxu0
      %v6103 = vadd.f32 %v5928, %v6102
      %v6104 = vpop.f32.mrb[0].mxu0
      %v6105 = vadd.f32 %v5930, %v6104
      %6106 = vdwg.mxu0
      %v6107 = vand.u32 %v4349, 4294901760
      %6108 = vmatprep.subr.mxu0 %v6107
      %v6109 = vand.u32 %v4348, 4294901760
      %6110 = vmatpush1.msra.mxu0 %v6109
      %v6111 = vand.u32 %v4353, 4294901760
      %6112 = vmatprep.subr.mxu0 %v6111
      %v6113 = vand.u32 %v4352, 4294901760
      %6114 = vmatpush1.msra.mxu0 %v6113
      %v6115 = vand.u32 %v4357, 4294901760
      %6116 = vmatprep.subr.mxu0 %v6115
      %v6117 = vand.u32 %v4356, 4294901760
      %6118 = vmatpush1.msra.mxu0 %v6117
      %v6119 = vand.u32 %v4361, 4294901760
      %6120 = vmatprep.subr.mxu0 %v6119
      %v6121 = vand.u32 %v4360, 4294901760
      %6122 = vmatpush1.msra.mxu0 %v6121
      %v6123 = vand.u32 %v4365, 4294901760
      %6124 = vmatprep.subr.mxu0 %v6123
      %v6125 = vand.u32 %v4364, 4294901760
      %6126 = vmatpush1.msra.mxu0 %v6125
      %v6127 = vand.u32 %v4369, 4294901760
      %6128 = vmatprep.subr.mxu0 %v6127
      %v6129 = vand.u32 %v4368, 4294901760
      %6130 = vmatpush1.msra.mxu0 %v6129
      %v6131 = vand.u32 %v4373, 4294901760
      %6132 = vmatprep.subr.mxu0 %v6131
      %v6133 = vand.u32 %v4372, 4294901760
      %6134 = vmatpush1.msra.mxu0 %v6133
      %v6135 = vand.u32 %v4377, 4294901760
      %6136 = vmatprep.subr.mxu0 %v6135
      %v6137 = vand.u32 %v4376, 4294901760
      %6138 = vmatpush1.msra.mxu0 %v6137
      %v6139 = vand.u32 %v4381, 4294901760
      %6140 = vmatprep.subr.mxu0 %v6139
      %v6141 = vand.u32 %v4380, 4294901760
      %6142 = vmatpush1.msra.mxu0 %v6141
      %v6143 = vand.u32 %v4385, 4294901760
      %6144 = vmatprep.subr.mxu0 %v6143
      %v6145 = vand.u32 %v4384, 4294901760
      %6146 = vmatpush1.msra.mxu0 %v6145
      %v6147 = vand.u32 %v4389, 4294901760
      %6148 = vmatprep.subr.mxu0 %v6147
      %v6149 = vand.u32 %v4388, 4294901760
      %6150 = vmatpush1.msra.mxu0 %v6149
      %v6151 = vand.u32 %v4393, 4294901760
      %6152 = vmatprep.subr.mxu0 %v6151
      %v6153 = vand.u32 %v4392, 4294901760
      %6154 = vmatpush1.msra.mxu0 %v6153
      %v6155 = vand.u32 %v4397, 4294901760
      %6156 = vmatprep.subr.mxu0 %v6155
      %v6157 = vand.u32 %v4396, 4294901760
      %6158 = vmatpush1.msra.mxu0 %v6157
      %v6159 = vand.u32 %v4401, 4294901760
      %6160 = vmatprep.subr.mxu0 %v6159
      %v6161 = vand.u32 %v4400, 4294901760
      %6162 = vmatpush1.msra.mxu0 %v6161
      %v6163 = vand.u32 %v4405, 4294901760
      %6164 = vmatprep.subr.mxu0 %v6163
      %v6165 = vand.u32 %v4404, 4294901760
      %6166 = vmatpush1.msra.mxu0 %v6165
      %v6167 = vand.u32 %v4409, 4294901760
      %6168 = vmatprep.subr.mxu0 %v6167
      %v6169 = vand.u32 %v4408, 4294901760
      %6170 = vmatpush1.msra.mxu0 %v6169
      %6171 = vmatprep.subr.mxu0 0.0
      %6172 = vmatpush1.msra.mxu0 0.0
      %6173 = vmatprep.subr.mxu0 0.0
      %6174 = vmatpush1.msra.mxu0 0.0
      %6175 = vmatprep.subr.mxu0 0.0
      %6176 = vmatpush1.msra.mxu0 0.0
      %6177 = vmatprep.subr.mxu0 0.0
      %6178 = vmatpush1.msra.mxu0 0.0
      %6179 = vmatprep.subr.mxu0 0.0
      %6180 = vmatpush1.msra.mxu0 0.0
      %6181 = vmatprep.subr.mxu0 0.0
      %6182 = vmatpush1.msra.mxu0 0.0
      %6183 = vmatprep.subr.mxu0 0.0
      %6184 = vmatpush1.msra.mxu0 0.0
      %6185 = vmatprep.subr.mxu0 0.0
      %6186 = vmatpush1.msra.mxu0 0.0
      %6187 = vmatprep.subr.mxu0 0.0
      %6188 = vmatpush1.msra.mxu0 0.0
      %6189 = vmatprep.subr.mxu0 0.0
      %6190 = vmatpush1.msra.mxu0 0.0
      %6191 = vmatprep.subr.mxu0 0.0
      %6192 = vmatpush1.msra.mxu0 0.0
      %6193 = vmatprep.subr.mxu0 0.0
      %6194 = vmatpush1.msra.mxu0 0.0
      %6195 = vmatprep.subr.mxu0 0.0
      %6196 = vmatpush1.msra.mxu0 0.0
      %6197 = vmatprep.subr.mxu0 0.0
      %6198 = vmatpush1.msra.mxu0 0.0
      %6199 = vmatprep.subr.mxu0 0.0
      %6200 = vmatpush1.msra.mxu0 0.0
      %6201 = vmatprep.subr.mxu0 0.0
      %6202 = vmatpush1.msra.mxu0 0.0
      %6203 = vmatprep.mubr.f32.mxu0 0.0
      %v6204 = vand.u32 %v4343, 4294901760
      %6205 = vmatmul.mubr.f32.gmra.mrb[0].mxu0 %v6204
      %v6206 = vpop.f32.mrb[0].mxu0
      %v6207 = vadd.f32 %v6096, %v6206
      %v6208 = vpop.f32.mrb[0].mxu0
      %v6209 = vadd.f32 %v6098, %v6208
      %6210 = vmatprep.mubr.f32.mxu0 0.0
      %v6211 = vand.u32 %v4344, 4294901760
      %6212 = vmatmul.mubr.f32.gmra.mrb[0].mxu0 %v6211
      %v6213 = vpop.f32.mrb[0].mxu0
      %v6214 = vadd.f32 %v6103, %v6213
      %v6215 = vpop.f32.mrb[0].mxu0
      %v6216 = vadd.f32 %v6105, %v6215
      %6217 = vdwg.mxu0
      %s6218 = scalar_lea.vmem %s3, 128
      %v6219 = vld [vmem:[%s6218] sm:$0xff]
      %v6220 = vld [vmem:[%s6218 + $0x8] sm:$0xff]
      %v6221 = vld [vmem:[%s6218 + $0x10] sm:$0xff]
      %v6222 = vld [vmem:[%s6218 + $0x18] sm:$0xff]
      %v6223 = vld [vmem:[%s6218 + $0x20] sm:$0xff]
      %v6224 = vld [vmem:[%s6218 + $0x28] sm:$0xff]
      %v6225 = vld [vmem:[%s6218 + $0x30] sm:$0xff]
      %v6226 = vld [vmem:[%s6218 + $0x38] sm:$0xff]
      %v6227 = vld [vmem:[%s6218 + $0x40] sm:$0xff]
      %v6228 = vld [vmem:[%s6218 + $0x48] sm:$0xff]
      %v6229 = vld [vmem:[%s6218 + $0x50] sm:$0xff]
      %v6230 = vld [vmem:[%s6218 + $0x58] sm:$0xff]
      %v6231 = vld [vmem:[%s6218 + $0x60] sm:$0xff]
      %v6232 = vld [vmem:[%s6218 + $0x68] sm:$0xff]
      %v6233 = vld [vmem:[%s6218 + $0x70] sm:$0xff]
      %v6234 = vld [vmem:[%s6218 + $0x78] sm:$0xff]
      %6235 = vmatprep.subr.mxu0 0.0
      %v6236 = vand.u32 %v6219, 4294901760
      %6237 = vmatpush1.msra.mxu0 %v6236
      %6238 = vmatprep.subr.mxu0 0.0
      %v6239 = vand.u32 %v6220, 4294901760
      %6240 = vmatpush1.msra.mxu0 %v6239
      %6241 = vmatprep.subr.mxu0 0.0
      %v6242 = vand.u32 %v6221, 4294901760
      %6243 = vmatpush1.msra.mxu0 %v6242
      %6244 = vmatprep.subr.mxu0 0.0
      %v6245 = vand.u32 %v6222, 4294901760
      %6246 = vmatpush1.msra.mxu0 %v6245
      %6247 = vmatprep.subr.mxu0 0.0
      %v6248 = vand.u32 %v6223, 4294901760
      %6249 = vmatpush1.msra.mxu0 %v6248
      %6250 = vmatprep.subr.mxu0 0.0
      %v6251 = vand.u32 %v6224, 4294901760
      %6252 = vmatpush1.msra.mxu0 %v6251
      %6253 = vmatprep.subr.mxu0 0.0
      %v6254 = vand.u32 %v6225, 4294901760
      %6255 = vmatpush1.msra.mxu0 %v6254
      %6256 = vmatprep.subr.mxu0 0.0
      %v6257 = vand.u32 %v6226, 4294901760
      %6258 = vmatpush1.msra.mxu0 %v6257
      %6259 = vmatprep.subr.mxu0 0.0
      %v6260 = vand.u32 %v6227, 4294901760
      %6261 = vmatpush1.msra.mxu0 %v6260
      %6262 = vmatprep.subr.mxu0 0.0
      %v6263 = vand.u32 %v6228, 4294901760
      %6264 = vmatpush1.msra.mxu0 %v6263
      %6265 = vmatprep.subr.mxu0 0.0
      %v6266 = vand.u32 %v6229, 4294901760
      %6267 = vmatpush1.msra.mxu0 %v6266
      %6268 = vmatprep.subr.mxu0 0.0
      %v6269 = vand.u32 %v6230, 4294901760
      %6270 = vmatpush1.msra.mxu0 %v6269
      %6271 = vmatprep.subr.mxu0 0.0
      %v6272 = vand.u32 %v6231, 4294901760
      %6273 = vmatpush1.msra.mxu0 %v6272
      %6274 = vmatprep.subr.mxu0 0.0
      %v6275 = vand.u32 %v6232, 4294901760
      %6276 = vmatpush1.msra.mxu0 %v6275
      %6277 = vmatprep.subr.mxu0 0.0
      %v6278 = vand.u32 %v6233, 4294901760
      %6279 = vmatpush1.msra.mxu0 %v6278
      %6280 = vmatprep.subr.mxu0 0.0
      %v6281 = vand.u32 %v6234, 4294901760
      %6282 = vmatpush1.msra.mxu0 %v6281
      %6283 = vmatprep.subr.mxu0 0.0
      %6284 = vmatpush1.msra.mxu0 0.0
      %6285 = vmatprep.subr.mxu0 0.0
      %6286 = vmatpush1.msra.mxu0 0.0
      %6287 = vmatprep.subr.mxu0 0.0
      %6288 = vmatpush1.msra.mxu0 0.0
      %6289 = vmatprep.subr.mxu0 0.0
      %6290 = vmatpush1.msra.mxu0 0.0
      %6291 = vmatprep.subr.mxu0 0.0
      %6292 = vmatpush1.msra.mxu0 0.0
      %6293 = vmatprep.subr.mxu0 0.0
      %6294 = vmatpush1.msra.mxu0 0.0
      %6295 = vmatprep.subr.mxu0 0.0
      %6296 = vmatpush1.msra.mxu0 0.0
      %6297 = vmatprep.subr.mxu0 0.0
      %6298 = vmatpush1.msra.mxu0 0.0
      %6299 = vmatprep.subr.mxu0 0.0
      %6300 = vmatpush1.msra.mxu0 0.0
      %6301 = vmatprep.subr.mxu0 0.0
      %6302 = vmatpush1.msra.mxu0 0.0
      %6303 = vmatprep.subr.mxu0 0.0
      %6304 = vmatpush1.msra.mxu0 0.0
      %6305 = vmatprep.subr.mxu0 0.0
      %6306 = vmatpush1.msra.mxu0 0.0
      %6307 = vmatprep.subr.mxu0 0.0
      %6308 = vmatpush1.msra.mxu0 0.0
      %6309 = vmatprep.subr.mxu0 0.0
      %6310 = vmatpush1.msra.mxu0 0.0
      %6311 = vmatprep.subr.mxu0 0.0
      %6312 = vmatpush1.msra.mxu0 0.0
      %6313 = vmatprep.subr.mxu0 0.0
      %6314 = vmatpush1.msra.mxu0 0.0
      %6315 = vmatprep.mubr.f32.mxu0 0.0
      %v6316 = vand.u32 %v3781, 4294901760
      %v6317 = vsub.f32 %v3781, %v6316
      %v6318 = vand.u32 %v6317, 4294901760
      %v6319 = vsub.f32 %v6317, %v6318
      %v6320 = vand.u32 %v6319, 4294901760
      %6321 = vmatmul.mubr.f32.gmra.mrb[0].mxu0 %v6320
      %v6322 = vpop.f32.mrb[0].mxu0
      %v6323 = vadd.f32 0.0, %v6322
      %v6324 = vpop.f32.mrb[0].mxu0
      %6325 = vmatprep.mubr.f32.mxu0 0.0
      %v6326 = vand.u32 %v3782, 4294901760
      %v6327 = vsub.f32 %v3782, %v6326
      %v6328 = vand.u32 %v6327, 4294901760
      %v6329 = vsub.f32 %v6327, %v6328
      %v6330 = vand.u32 %v6329, 4294901760
      %6331 = vmatmul.mubr.f32.gmra.mrb[0].mxu0 %v6330
      %v6332 = vpop.f32.mrb[0].mxu0
      %v6333 = vadd.f32 0.0, %v6332
      %v6334 = vpop.f32.mrb[0].mxu0
      %6335 = vmatprep.mubr.f32.mxu0 0.0
      %v6336 = vand.u32 %v3783, 4294901760
      %v6337 = vsub.f32 %v3783, %v6336
      %v6338 = vand.u32 %v6337, 4294901760
      %v6339 = vsub.f32 %v6337, %v6338
      %v6340 = vand.u32 %v6339, 4294901760
      %6341 = vmatmul.mubr.f32.gmra.mrb[0].mxu0 %v6340
      %v6342 = vpop.f32.mrb[0].mxu0
      %v6343 = vadd.f32 0.0, %v6342
      %v6344 = vpop.f32.mrb[0].mxu0
      %6345 = vmatprep.mubr.f32.mxu0 0.0
      %v6346 = vand.u32 %v3784, 4294901760
      %v6347 = vsub.f32 %v3784, %v6346
      %v6348 = vand.u32 %v6347, 4294901760
      %v6349 = vsub.f32 %v6347, %v6348
      %v6350 = vand.u32 %v6349, 4294901760
      %6351 = vmatmul.mubr.f32.gmra.mrb[0].mxu0 %v6350
      %v6352 = vpop.f32.mrb[0].mxu0
      %v6353 = vadd.f32 0.0, %v6352
      %v6354 = vpop.f32.mrb[0].mxu0
      %6355 = vmatprep.mubr.f32.mxu0 0.0
      %v6356 = vand.u32 %v3785, 4294901760
      %v6357 = vsub.f32 %v3785, %v6356
      %v6358 = vand.u32 %v6357, 4294901760
      %v6359 = vsub.f32 %v6357, %v6358
      %v6360 = vand.u32 %v6359, 4294901760
      %6361 = vmatmul.mubr.f32.gmra.mrb[0].mxu0 %v6360
      %v6362 = vpop.f32.mrb[0].mxu0
      %v6363 = vadd.f32 0.0, %v6362
      %v6364 = vpop.f32.mrb[0].mxu0
      %6365 = vmatprep.mubr.f32.mxu0 0.0
      %v6366 = vand.u32 %v3786, 4294901760
      %v6367 = vsub.f32 %v3786, %v6366
      %v6368 = vand.u32 %v6367, 4294901760
      %v6369 = vsub.f32 %v6367, %v6368
      %v6370 = vand.u32 %v6369, 4294901760
      %6371 = vmatmul.mubr.f32.gmra.mrb[0].mxu0 %v6370
      %v6372 = vpop.f32.mrb[0].mxu0
      %v6373 = vadd.f32 0.0, %v6372
      %v6374 = vpop.f32.mrb[0].mxu0
      %6375 = vmatprep.mubr.f32.mxu0 0.0
      %v6376 = vand.u32 %v3787, 4294901760
      %v6377 = vsub.f32 %v3787, %v6376
      %v6378 = vand.u32 %v6377, 4294901760
      %v6379 = vsub.f32 %v6377, %v6378
      %v6380 = vand.u32 %v6379, 4294901760
      %6381 = vmatmul.mubr.f32.gmra.mrb[0].mxu0 %v6380
      %v6382 = vpop.f32.mrb[0].mxu0
      %v6383 = vadd.f32 0.0, %v6382
      %v6384 = vpop.f32.mrb[0].mxu0
      %6385 = vmatprep.mubr.f32.mxu0 0.0
      %v6386 = vand.u32 %v3788, 4294901760
      %v6387 = vsub.f32 %v3788, %v6386
      %v6388 = vand.u32 %v6387, 4294901760
      %v6389 = vsub.f32 %v6387, %v6388
      %v6390 = vand.u32 %v6389, 4294901760
      %6391 = vmatmul.mubr.f32.gmra.mrb[0].mxu0 %v6390
      %v6392 = vpop.f32.mrb[0].mxu0
      %v6393 = vadd.f32 0.0, %v6392
      %v6394 = vpop.f32.mrb[0].mxu0
      %6395 = vmatprep.mubr.f32.mxu0 0.0
      %v6396 = vand.u32 %v3789, 4294901760
      %v6397 = vsub.f32 %v3789, %v6396
      %v6398 = vand.u32 %v6397, 4294901760
      %v6399 = vsub.f32 %v6397, %v6398
      %v6400 = vand.u32 %v6399, 4294901760
      %6401 = vmatmul.mubr.f32.gmra.mrb[0].mxu0 %v6400
      %v6402 = vpop.f32.mrb[0].mxu0
      %v6403 = vadd.f32 0.0, %v6402
      %v6404 = vpop.f32.mrb[0].mxu0
      %6405 = vmatprep.mubr.f32.mxu0 0.0
      %v6406 = vand.u32 %v3790, 4294901760
      %v6407 = vsub.f32 %v3790, %v6406
      %v6408 = vand.u32 %v6407, 4294901760
      %v6409 = vsub.f32 %v6407, %v6408
      %v6410 = vand.u32 %v6409, 4294901760
      %6411 = vmatmul.mubr.f32.gmra.mrb[0].mxu0 %v6410
      %v6412 = vpop.f32.mrb[0].mxu0
      %v6413 = vadd.f32 0.0, %v6412
      %v6414 = vpop.f32.mrb[0].mxu0
      %6415 = vmatprep.mubr.f32.mxu0 0.0
      %v6416 = vand.u32 %v3791, 4294901760
      %v6417 = vsub.f32 %v3791, %v6416
      %v6418 = vand.u32 %v6417, 4294901760
      %v6419 = vsub.f32 %v6417, %v6418
      %v6420 = vand.u32 %v6419, 4294901760
      %6421 = vmatmul.mubr.f32.gmra.mrb[0].mxu0 %v6420
      %v6422 = vpop.f32.mrb[0].mxu0
      %v6423 = vadd.f32 0.0, %v6422
      %v6424 = vpop.f32.mrb[0].mxu0
      %6425 = vmatprep.mubr.f32.mxu0 0.0
      %v6426 = vand.u32 %v3792, 4294901760
      %v6427 = vsub.f32 %v3792, %v6426
      %v6428 = vand.u32 %v6427, 4294901760
      %v6429 = vsub.f32 %v6427, %v6428
      %v6430 = vand.u32 %v6429, 4294901760
      %6431 = vmatmul.mubr.f32.gmra.mrb[0].mxu0 %v6430
      %v6432 = vpop.f32.mrb[0].mxu0
      %v6433 = vadd.f32 0.0, %v6432
      %v6434 = vpop.f32.mrb[0].mxu0
      %6435 = vmatprep.mubr.f32.mxu0 0.0
      %v6436 = vand.u32 %v3793, 4294901760
      %v6437 = vsub.f32 %v3793, %v6436
      %v6438 = vand.u32 %v6437, 4294901760
      %v6439 = vsub.f32 %v6437, %v6438
      %v6440 = vand.u32 %v6439, 4294901760
      %6441 = vmatmul.mubr.f32.gmra.mrb[0].mxu0 %v6440
      %v6442 = vpop.f32.mrb[0].mxu0
      %v6443 = vadd.f32 0.0, %v6442
      %v6444 = vpop.f32.mrb[0].mxu0
      %6445 = vmatprep.mubr.f32.mxu0 0.0
      %v6446 = vand.u32 %v3794, 4294901760
      %v6447 = vsub.f32 %v3794, %v6446
      %v6448 = vand.u32 %v6447, 4294901760
      %v6449 = vsub.f32 %v6447, %v6448
      %v6450 = vand.u32 %v6449, 4294901760
      %6451 = vmatmul.mubr.f32.gmra.mrb[0].mxu0 %v6450
      %v6452 = vpop.f32.mrb[0].mxu0
      %v6453 = vadd.f32 0.0, %v6452
      %v6454 = vpop.f32.mrb[0].mxu0
      %6455 = vmatprep.mubr.f32.mxu0 0.0
      %v6456 = vand.u32 %v3795, 4294901760
      %v6457 = vsub.f32 %v3795, %v6456
      %v6458 = vand.u32 %v6457, 4294901760
      %v6459 = vsub.f32 %v6457, %v6458
      %v6460 = vand.u32 %v6459, 4294901760
      %6461 = vmatmul.mubr.f32.gmra.mrb[0].mxu0 %v6460
      %v6462 = vpop.f32.mrb[0].mxu0
      %v6463 = vadd.f32 0.0, %v6462
      %v6464 = vpop.f32.mrb[0].mxu0
      %6465 = vmatprep.mubr.f32.mxu0 0.0
      %v6466 = vand.u32 %v3796, 4294901760
      %v6467 = vsub.f32 %v3796, %v6466
      %v6468 = vand.u32 %v6467, 4294901760
      %v6469 = vsub.f32 %v6467, %v6468
      %v6470 = vand.u32 %v6469, 4294901760
      %6471 = vmatmul.mubr.f32.gmra.mrb[0].mxu0 %v6470
      %v6472 = vpop.f32.mrb[0].mxu0
      %v6473 = vadd.f32 0.0, %v6472
      %v6474 = vpop.f32.mrb[0].mxu0
      %6475 = vdwg.mxu0
      %6476 = vmatprep.subr.mxu0 0.0
      %v6477 = vand.u32 %v6219, 4294901760
      %v6478 = vsub.f32 %v6219, %v6477
      %v6479 = vand.u32 %v6478, 4294901760
      %v6480 = vsub.f32 %v6478, %v6479
      %v6481 = vand.u32 %v6480, 4294901760
      %6482 = vmatpush1.msra.mxu0 %v6481
      %6483 = vmatprep.subr.mxu0 0.0
      %v6484 = vand.u32 %v6220, 4294901760
      %v6485 = vsub.f32 %v6220, %v6484
      %v6486 = vand.u32 %v6485, 4294901760
      %v6487 = vsub.f32 %v6485, %v6486
      %v6488 = vand.u32 %v6487, 4294901760
      %6489 = vmatpush1.msra.mxu0 %v6488
      %6490 = vmatprep.subr.mxu0 0.0
      %v6491 = vand.u32 %v6221, 4294901760
      %v6492 = vsub.f32 %v6221, %v6491
      %v6493 = vand.u32 %v6492, 4294901760
      %v6494 = vsub.f32 %v6492, %v6493
      %v6495 = vand.u32 %v6494, 4294901760
      %6496 = vmatpush1.msra.mxu0 %v6495
      %6497 = vmatprep.subr.mxu0 0.0
      %v6498 = vand.u32 %v6222, 4294901760
      %v6499 = vsub.f32 %v6222, %v6498
      %v6500 = vand.u32 %v6499, 4294901760
      %v6501 = vsub.f32 %v6499, %v6500
      %v6502 = vand.u32 %v6501, 4294901760
      %6503 = vmatpush1.msra.mxu0 %v6502
      %6504 = vmatprep.subr.mxu0 0.0
      %v6505 = vand.u32 %v6223, 4294901760
      %v6506 = vsub.f32 %v6223, %v6505
      %v6507 = vand.u32 %v6506, 4294901760
      %v6508 = vsub.f32 %v6506, %v6507
      %v6509 = vand.u32 %v6508, 4294901760
      %6510 = vmatpush1.msra.mxu0 %v6509
      %6511 = vmatprep.subr.mxu0 0.0
      %v6512 = vand.u32 %v6224, 4294901760
      %v6513 = vsub.f32 %v6224, %v6512
      %v6514 = vand.u32 %v6513, 4294901760
      %v6515 = vsub.f32 %v6513, %v6514
      %v6516 = vand.u32 %v6515, 4294901760
      %6517 = vmatpush1.msra.mxu0 %v6516
      %6518 = vmatprep.subr.mxu0 0.0
      %v6519 = vand.u32 %v6225, 4294901760
      %v6520 = vsub.f32 %v6225, %v6519
      %v6521 = vand.u32 %v6520, 4294901760
      %v6522 = vsub.f32 %v6520, %v6521
      %v6523 = vand.u32 %v6522, 4294901760
      %6524 = vmatpush1.msra.mxu0 %v6523
      %6525 = vmatprep.subr.mxu0 0.0
      %v6526 = vand.u32 %v6226, 4294901760
      %v6527 = vsub.f32 %v6226, %v6526
      %v6528 = vand.u32 %v6527, 4294901760
      %v6529 = vsub.f32 %v6527, %v6528
      %v6530 = vand.u32 %v6529, 4294901760
      %6531 = vmatpush1.msra.mxu0 %v6530
      %6532 = vmatprep.subr.mxu0 0.0
      %v6533 = vand.u32 %v6227, 4294901760
      %v6534 = vsub.f32 %v6227, %v6533
      %v6535 = vand.u32 %v6534, 4294901760
      %v6536 = vsub.f32 %v6534, %v6535
      %v6537 = vand.u32 %v6536, 4294901760
      %6538 = vmatpush1.msra.mxu0 %v6537
      %6539 = vmatprep.subr.mxu0 0.0
      %v6540 = vand.u32 %v6228, 4294901760
      %v6541 = vsub.f32 %v6228, %v6540
      %v6542 = vand.u32 %v6541, 4294901760
      %v6543 = vsub.f32 %v6541, %v6542
      %v6544 = vand.u32 %v6543, 4294901760
      %6545 = vmatpush1.msra.mxu0 %v6544
      %6546 = vmatprep.subr.mxu0 0.0
      %v6547 = vand.u32 %v6229, 4294901760
      %v6548 = vsub.f32 %v6229, %v6547
      %v6549 = vand.u32 %v6548, 4294901760
      %v6550 = vsub.f32 %v6548, %v6549
      %v6551 = vand.u32 %v6550, 4294901760
      %6552 = vmatpush1.msra.mxu0 %v6551
      %6553 = vmatprep.subr.mxu0 0.0
      %v6554 = vand.u32 %v6230, 4294901760
      %v6555 = vsub.f32 %v6230, %v6554
      %v6556 = vand.u32 %v6555, 4294901760
      %v6557 = vsub.f32 %v6555, %v6556
      %v6558 = vand.u32 %v6557, 4294901760
      %6559 = vmatpush1.msra.mxu0 %v6558
      %6560 = vmatprep.subr.mxu0 0.0
      %v6561 = vand.u32 %v6231, 4294901760
      %v6562 = vsub.f32 %v6231, %v6561
      %v6563 = vand.u32 %v6562, 4294901760
      %v6564 = vsub.f32 %v6562, %v6563
      %v6565 = vand.u32 %v6564, 4294901760
      %6566 = vmatpush1.msra.mxu0 %v6565
      %6567 = vmatprep.subr.mxu0 0.0
      %v6568 = vand.u32 %v6232, 4294901760
      %v6569 = vsub.f32 %v6232, %v6568
      %v6570 = vand.u32 %v6569, 4294901760
      %v6571 = vsub.f32 %v6569, %v6570
      %v6572 = vand.u32 %v6571, 4294901760
      %6573 = vmatpush1.msra.mxu0 %v6572
      %6574 = vmatprep.subr.mxu0 0.0
      %v6575 = vand.u32 %v6233, 4294901760
      %v6576 = vsub.f32 %v6233, %v6575
      %v6577 = vand.u32 %v6576, 4294901760
      %v6578 = vsub.f32 %v6576, %v6577
      %v6579 = vand.u32 %v6578, 4294901760
      %6580 = vmatpush1.msra.mxu0 %v6579
      %6581 = vmatprep.subr.mxu0 0.0
      %v6582 = vand.u32 %v6234, 4294901760
      %v6583 = vsub.f32 %v6234, %v6582
      %v6584 = vand.u32 %v6583, 4294901760
      %v6585 = vsub.f32 %v6583, %v6584
      %v6586 = vand.u32 %v6585, 4294901760
      %6587 = vmatpush1.msra.mxu0 %v6586
      %6588 = vmatprep.subr.mxu0 0.0
      %6589 = vmatpush1.msra.mxu0 0.0
      %6590 = vmatprep.subr.mxu0 0.0
      %6591 = vmatpush1.msra.mxu0 0.0
      %6592 = vmatprep.subr.mxu0 0.0
      %6593 = vmatpush1.msra.mxu0 0.0
      %6594 = vmatprep.subr.mxu0 0.0
      %6595 = vmatpush1.msra.mxu0 0.0
      %6596 = vmatprep.subr.mxu0 0.0
      %6597 = vmatpush1.msra.mxu0 0.0
      %6598 = vmatprep.subr.mxu0 0.0
      %6599 = vmatpush1.msra.mxu0 0.0
      %6600 = vmatprep.subr.mxu0 0.0
      %6601 = vmatpush1.msra.mxu0 0.0
      %6602 = vmatprep.subr.mxu0 0.0
      %6603 = vmatpush1.msra.mxu0 0.0
      %6604 = vmatprep.subr.mxu0 0.0
      %6605 = vmatpush1.msra.mxu0 0.0
      %6606 = vmatprep.subr.mxu0 0.0
      %6607 = vmatpush1.msra.mxu0 0.0
      %6608 = vmatprep.subr.mxu0 0.0
      %6609 = vmatpush1.msra.mxu0 0.0
      %6610 = vmatprep.subr.mxu0 0.0
      %6611 = vmatpush1.msra.mxu0 0.0
      %6612 = vmatprep.subr.mxu0 0.0
      %6613 = vmatpush1.msra.mxu0 0.0
      %6614 = vmatprep.subr.mxu0 0.0
      %6615 = vmatpush1.msra.mxu0 0.0
      %6616 = vmatprep.subr.mxu0 0.0
      %6617 = vmatpush1.msra.mxu0 0.0
      %6618 = vmatprep.subr.mxu0 0.0
      %6619 = vmatpush1.msra.mxu0 0.0
      %6620 = vmatprep.mubr.f32.mxu0 0.0
      %v6621 = vand.u32 %v3781, 4294901760
      %6622 = vmatmul.mubr.f32.gmra.mrb[0].mxu0 %v6621
      %v6623 = vpop.f32.mrb[0].mxu0
      %v6624 = vadd.f32 %v6323, %v6623
      %v6625 = vpop.f32.mrb[0].mxu0
      %6626 = vmatprep.mubr.f32.mxu0 0.0
      %v6627 = vand.u32 %v3782, 4294901760
      %6628 = vmatmul.mubr.f32.gmra.mrb[0].mxu0 %v6627
      %v6629 = vpop.f32.mrb[0].mxu0
      %v6630 = vadd.f32 %v6333, %v6629
      %v6631 = vpop.f32.mrb[0].mxu0
      %6632 = vmatprep.mubr.f32.mxu0 0.0
      %v6633 = vand.u32 %v3783, 4294901760
      %6634 = vmatmul.mubr.f32.gmra.mrb[0].mxu0 %v6633
      %v6635 = vpop.f32.mrb[0].mxu0
      %v6636 = vadd.f32 %v6343, %v6635
      %v6637 = vpop.f32.mrb[0].mxu0
      %6638 = vmatprep.mubr.f32.mxu0 0.0
      %v6639 = vand.u32 %v3784, 4294901760
      %6640 = vmatmul.mubr.f32.gmra.mrb[0].mxu0 %v6639
      %v6641 = vpop.f32.mrb[0].mxu0
      %v6642 = vadd.f32 %v6353, %v6641
      %v6643 = vpop.f32.mrb[0].mxu0
      %6644 = vmatprep.mubr.f32.mxu0 0.0
      %v6645 = vand.u32 %v3785, 4294901760
      %6646 = vmatmul.mubr.f32.gmra.mrb[0].mxu0 %v6645
      %v6647 = vpop.f32.mrb[0].mxu0
      %v6648 = vadd.f32 %v6363, %v6647
      %v6649 = vpop.f32.mrb[0].mxu0
      %6650 = vmatprep.mubr.f32.mxu0 0.0
      %v6651 = vand.u32 %v3786, 4294901760
      %6652 = vmatmul.mubr.f32.gmra.mrb[0].mxu0 %v6651
      %v6653 = vpop.f32.mrb[0].mxu0
      %v6654 = vadd.f32 %v6373, %v6653
      %v6655 = vpop.f32.mrb[0].mxu0
      %6656 = vmatprep.mubr.f32.mxu0 0.0
      %v6657 = vand.u32 %v3787, 4294901760
      %6658 = vmatmul.mubr.f32.gmra.mrb[0].mxu0 %v6657
      %v6659 = vpop.f32.mrb[0].mxu0
      %v6660 = vadd.f32 %v6383, %v6659
      %v6661 = vpop.f32.mrb[0].mxu0
      %6662 = vmatprep.mubr.f32.mxu0 0.0
      %v6663 = vand.u32 %v3788, 4294901760
      %6664 = vmatmul.mubr.f32.gmra.mrb[0].mxu0 %v6663
      %v6665 = vpop.f32.mrb[0].mxu0
      %v6666 = vadd.f32 %v6393, %v6665
      %v6667 = vpop.f32.mrb[0].mxu0
      %6668 = vmatprep.mubr.f32.mxu0 0.0
      %v6669 = vand.u32 %v3789, 4294901760
      %6670 = vmatmul.mubr.f32.gmra.mrb[0].mxu0 %v6669
      %v6671 = vpop.f32.mrb[0].mxu0
      %v6672 = vadd.f32 %v6403, %v6671
      %v6673 = vpop.f32.mrb[0].mxu0
      %6674 = vmatprep.mubr.f32.mxu0 0.0
      %v6675 = vand.u32 %v3790, 4294901760
      %6676 = vmatmul.mubr.f32.gmra.mrb[0].mxu0 %v6675
      %v6677 = vpop.f32.mrb[0].mxu0
      %v6678 = vadd.f32 %v6413, %v6677
      %v6679 = vpop.f32.mrb[0].mxu0
      %6680 = vmatprep.mubr.f32.mxu0 0.0
      %v6681 = vand.u32 %v3791, 4294901760
      %6682 = vmatmul.mubr.f32.gmra.mrb[0].mxu0 %v6681
      %v6683 = vpop.f32.mrb[0].mxu0
      %v6684 = vadd.f32 %v6423, %v6683
      %v6685 = vpop.f32.mrb[0].mxu0
      %6686 = vmatprep.mubr.f32.mxu0 0.0
      %v6687 = vand.u32 %v3792, 4294901760
      %6688 = vmatmul.mubr.f32.gmra.mrb[0].mxu0 %v6687
      %v6689 = vpop.f32.mrb[0].mxu0
      %v6690 = vadd.f32 %v6433, %v6689
      %v6691 = vpop.f32.mrb[0].mxu0
      %6692 = vmatprep.mubr.f32.mxu0 0.0
      %v6693 = vand.u32 %v3793, 4294901760
      %6694 = vmatmul.mubr.f32.gmra.mrb[0].mxu0 %v6693
      %v6695 = vpop.f32.mrb[0].mxu0
      %v6696 = vadd.f32 %v6443, %v6695
      %v6697 = vpop.f32.mrb[0].mxu0
      %6698 = vmatprep.mubr.f32.mxu0 0.0
      %v6699 = vand.u32 %v3794, 4294901760
      %6700 = vmatmul.mubr.f32.gmra.mrb[0].mxu0 %v6699
      %v6701 = vpop.f32.mrb[0].mxu0
      %v6702 = vadd.f32 %v6453, %v6701
      %v6703 = vpop.f32.mrb[0].mxu0
      %6704 = vmatprep.mubr.f32.mxu0 0.0
      %v6705 = vand.u32 %v3795, 4294901760
      %6706 = vmatmul.mubr.f32.gmra.mrb[0].mxu0 %v6705
      %v6707 = vpop.f32.mrb[0].mxu0
      %v6708 = vadd.f32 %v6463, %v6707
      %v6709 = vpop.f32.mrb[0].mxu0
      %6710 = vmatprep.mubr.f32.mxu0 0.0
      %v6711 = vand.u32 %v3796, 4294901760
      %6712 = vmatmul.mubr.f32.gmra.mrb[0].mxu0 %v6711
      %v6713 = vpop.f32.mrb[0].mxu0
      %v6714 = vadd.f32 %v6473, %v6713
      %v6715 = vpop.f32.mrb[0].mxu0
      %6716 = vdwg.mxu0
      %6717 = vmatprep.subr.mxu0 0.0
      %v6718 = vand.u32 %v6219, 4294901760
      %v6719 = vsub.f32 %v6219, %v6718
      %6720 = vmatpush1.msra.mxu0 %v6719
      %6721 = vmatprep.subr.mxu0 0.0
      %v6722 = vand.u32 %v6220, 4294901760
      %v6723 = vsub.f32 %v6220, %v6722
      %6724 = vmatpush1.msra.mxu0 %v6723
      %6725 = vmatprep.subr.mxu0 0.0
      %v6726 = vand.u32 %v6221, 4294901760
      %v6727 = vsub.f32 %v6221, %v6726
      %6728 = vmatpush1.msra.mxu0 %v6727
      %6729 = vmatprep.subr.mxu0 0.0
      %v6730 = vand.u32 %v6222, 4294901760
      %v6731 = vsub.f32 %v6222, %v6730
      %6732 = vmatpush1.msra.mxu0 %v6731
      %6733 = vmatprep.subr.mxu0 0.0
      %v6734 = vand.u32 %v6223, 4294901760
      %v6735 = vsub.f32 %v6223, %v6734
      %6736 = vmatpush1.msra.mxu0 %v6735
      %6737 = vmatprep.subr.mxu0 0.0
      %v6738 = vand.u32 %v6224, 4294901760
      %v6739 = vsub.f32 %v6224, %v6738
      %6740 = vmatpush1.msra.mxu0 %v6739
      %6741 = vmatprep.subr.mxu0 0.0
      %v6742 = vand.u32 %v6225, 4294901760
      %v6743 = vsub.f32 %v6225, %v6742
      %6744 = vmatpush1.msra.mxu0 %v6743
      %6745 = vmatprep.subr.mxu0 0.0
      %v6746 = vand.u32 %v6226, 4294901760
      %v6747 = vsub.f32 %v6226, %v6746
      %6748 = vmatpush1.msra.mxu0 %v6747
      %6749 = vmatprep.subr.mxu0 0.0
      %v6750 = vand.u32 %v6227, 4294901760
      %v6751 = vsub.f32 %v6227, %v6750
      %6752 = vmatpush1.msra.mxu0 %v6751
      %6753 = vmatprep.subr.mxu0 0.0
      %v6754 = vand.u32 %v6228, 4294901760
      %v6755 = vsub.f32 %v6228, %v6754
      %6756 = vmatpush1.msra.mxu0 %v6755
      %6757 = vmatprep.subr.mxu0 0.0
      %v6758 = vand.u32 %v6229, 4294901760
      %v6759 = vsub.f32 %v6229, %v6758
      %6760 = vmatpush1.msra.mxu0 %v6759
      %6761 = vmatprep.subr.mxu0 0.0
      %v6762 = vand.u32 %v6230, 4294901760
      %v6763 = vsub.f32 %v6230, %v6762
      %6764 = vmatpush1.msra.mxu0 %v6763
      %6765 = vmatprep.subr.mxu0 0.0
      %v6766 = vand.u32 %v6231, 4294901760
      %v6767 = vsub.f32 %v6231, %v6766
      %6768 = vmatpush1.msra.mxu0 %v6767
      %6769 = vmatprep.subr.mxu0 0.0
      %v6770 = vand.u32 %v6232, 4294901760
      %v6771 = vsub.f32 %v6232, %v6770
      %6772 = vmatpush1.msra.mxu0 %v6771
      %6773 = vmatprep.subr.mxu0 0.0
      %v6774 = vand.u32 %v6233, 4294901760
      %v6775 = vsub.f32 %v6233, %v6774
      %6776 = vmatpush1.msra.mxu0 %v6775
      %6777 = vmatprep.subr.mxu0 0.0
      %v6778 = vand.u32 %v6234, 4294901760
      %v6779 = vsub.f32 %v6234, %v6778
      %6780 = vmatpush1.msra.mxu0 %v6779
      %6781 = vmatprep.subr.mxu0 0.0
      %6782 = vmatpush1.msra.mxu0 0.0
      %6783 = vmatprep.subr.mxu0 0.0
      %6784 = vmatpush1.msra.mxu0 0.0
      %6785 = vmatprep.subr.mxu0 0.0
      %6786 = vmatpush1.msra.mxu0 0.0
      %6787 = vmatprep.subr.mxu0 0.0
      %6788 = vmatpush1.msra.mxu0 0.0
      %6789 = vmatprep.subr.mxu0 0.0
      %6790 = vmatpush1.msra.mxu0 0.0
      %6791 = vmatprep.subr.mxu0 0.0
      %6792 = vmatpush1.msra.mxu0 0.0
      %6793 = vmatprep.subr.mxu0 0.0
      %6794 = vmatpush1.msra.mxu0 0.0
      %6795 = vmatprep.subr.mxu0 0.0
      %6796 = vmatpush1.msra.mxu0 0.0
      %6797 = vmatprep.subr.mxu0 0.0
      %6798 = vmatpush1.msra.mxu0 0.0
      %6799 = vmatprep.subr.mxu0 0.0
      %6800 = vmatpush1.msra.mxu0 0.0
      %6801 = vmatprep.subr.mxu0 0.0
      %6802 = vmatpush1.msra.mxu0 0.0
      %6803 = vmatprep.subr.mxu0 0.0
      %6804 = vmatpush1.msra.mxu0 0.0
      %6805 = vmatprep.subr.mxu0 0.0
      %6806 = vmatpush1.msra.mxu0 0.0
      %6807 = vmatprep.subr.mxu0 0.0
      %6808 = vmatpush1.msra.mxu0 0.0
      %6809 = vmatprep.subr.mxu0 0.0
      %6810 = vmatpush1.msra.mxu0 0.0
      %6811 = vmatprep.subr.mxu0 0.0
      %6812 = vmatpush1.msra.mxu0 0.0
      %6813 = vmatprep.mubr.f32.mxu0 0.0
      %v6814 = vand.u32 %v3781, 4294901760
      %v6815 = vsub.f32 %v3781, %v6814
      %6816 = vmatmul.mubr.f32.gmra.mrb[0].mxu0 %v6815
      %v6817 = vpop.f32.mrb[0].mxu0
      %v6818 = vadd.f32 %v6624, %v6817
      %v6819 = vpop.f32.mrb[0].mxu0
      %6820 = vmatprep.mubr.f32.mxu0 0.0
      %v6821 = vand.u32 %v3782, 4294901760
      %v6822 = vsub.f32 %v3782, %v6821
      %6823 = vmatmul.mubr.f32.gmra.mrb[0].mxu0 %v6822
      %v6824 = vpop.f32.mrb[0].mxu0
      %v6825 = vadd.f32 %v6630, %v6824
      %v6826 = vpop.f32.mrb[0].mxu0
      %6827 = vmatprep.mubr.f32.mxu0 0.0
      %v6828 = vand.u32 %v3783, 4294901760
      %v6829 = vsub.f32 %v3783, %v6828
      %6830 = vmatmul.mubr.f32.gmra.mrb[0].mxu0 %v6829
      %v6831 = vpop.f32.mrb[0].mxu0
      %v6832 = vadd.f32 %v6636, %v6831
      %v6833 = vpop.f32.mrb[0].mxu0
      %6834 = vmatprep.mubr.f32.mxu0 0.0
      %v6835 = vand.u32 %v3784, 4294901760
      %v6836 = vsub.f32 %v3784, %v6835
      %6837 = vmatmul.mubr.f32.gmra.mrb[0].mxu0 %v6836
      %v6838 = vpop.f32.mrb[0].mxu0
      %v6839 = vadd.f32 %v6642, %v6838
      %v6840 = vpop.f32.mrb[0].mxu0
      %6841 = vmatprep.mubr.f32.mxu0 0.0
      %v6842 = vand.u32 %v3785, 4294901760
      %v6843 = vsub.f32 %v3785, %v6842
      %6844 = vmatmul.mubr.f32.gmra.mrb[0].mxu0 %v6843
      %v6845 = vpop.f32.mrb[0].mxu0
      %v6846 = vadd.f32 %v6648, %v6845
      %v6847 = vpop.f32.mrb[0].mxu0
      %6848 = vmatprep.mubr.f32.mxu0 0.0
      %v6849 = vand.u32 %v3786, 4294901760
      %v6850 = vsub.f32 %v3786, %v6849
      %6851 = vmatmul.mubr.f32.gmra.mrb[0].mxu0 %v6850
      %v6852 = vpop.f32.mrb[0].mxu0
      %v6853 = vadd.f32 %v6654, %v6852
      %v6854 = vpop.f32.mrb[0].mxu0
      %6855 = vmatprep.mubr.f32.mxu0 0.0
      %v6856 = vand.u32 %v3787, 4294901760
      %v6857 = vsub.f32 %v3787, %v6856
      %6858 = vmatmul.mubr.f32.gmra.mrb[0].mxu0 %v6857
      %v6859 = vpop.f32.mrb[0].mxu0
      %v6860 = vadd.f32 %v6660, %v6859
      %v6861 = vpop.f32.mrb[0].mxu0
      %6862 = vmatprep.mubr.f32.mxu0 0.0
      %v6863 = vand.u32 %v3788, 4294901760
      %v6864 = vsub.f32 %v3788, %v6863
      %6865 = vmatmul.mubr.f32.gmra.mrb[0].mxu0 %v6864
      %v6866 = vpop.f32.mrb[0].mxu0
      %v6867 = vadd.f32 %v6666, %v6866
      %v6868 = vpop.f32.mrb[0].mxu0
      %6869 = vmatprep.mubr.f32.mxu0 0.0
      %v6870 = vand.u32 %v3789, 4294901760
      %v6871 = vsub.f32 %v3789, %v6870
      %6872 = vmatmul.mubr.f32.gmra.mrb[0].mxu0 %v6871
      %v6873 = vpop.f32.mrb[0].mxu0
      %v6874 = vadd.f32 %v6672, %v6873
      %v6875 = vpop.f32.mrb[0].mxu0
      %6876 = vmatprep.mubr.f32.mxu0 0.0
      %v6877 = vand.u32 %v3790, 4294901760
      %v6878 = vsub.f32 %v3790, %v6877
      %6879 = vmatmul.mubr.f32.gmra.mrb[0].mxu0 %v6878
      %v6880 = vpop.f32.mrb[0].mxu0
      %v6881 = vadd.f32 %v6678, %v6880
      %v6882 = vpop.f32.mrb[0].mxu0
      %6883 = vmatprep.mubr.f32.mxu0 0.0
      %v6884 = vand.u32 %v3791, 4294901760
      %v6885 = vsub.f32 %v3791, %v6884
      %6886 = vmatmul.mubr.f32.gmra.mrb[0].mxu0 %v6885
      %v6887 = vpop.f32.mrb[0].mxu0
      %v6888 = vadd.f32 %v6684, %v6887
      %v6889 = vpop.f32.mrb[0].mxu0
      %6890 = vmatprep.mubr.f32.mxu0 0.0
      %v6891 = vand.u32 %v3792, 4294901760
      %v6892 = vsub.f32 %v3792, %v6891
      %6893 = vmatmul.mubr.f32.gmra.mrb[0].mxu0 %v6892
      %v6894 = vpop.f32.mrb[0].mxu0
      %v6895 = vadd.f32 %v6690, %v6894
      %v6896 = vpop.f32.mrb[0].mxu0
      %6897 = vmatprep.mubr.f32.mxu0 0.0
      %v6898 = vand.u32 %v3793, 4294901760
      %v6899 = vsub.f32 %v3793, %v6898
      %6900 = vmatmul.mubr.f32.gmra.mrb[0].mxu0 %v6899
      %v6901 = vpop.f32.mrb[0].mxu0
      %v6902 = vadd.f32 %v6696, %v6901
      %v6903 = vpop.f32.mrb[0].mxu0
      %6904 = vmatprep.mubr.f32.mxu0 0.0
      %v6905 = vand.u32 %v3794, 4294901760
      %v6906 = vsub.f32 %v3794, %v6905
      %6907 = vmatmul.mubr.f32.gmra.mrb[0].mxu0 %v6906
      %v6908 = vpop.f32.mrb[0].mxu0
      %v6909 = vadd.f32 %v6702, %v6908
      %v6910 = vpop.f32.mrb[0].mxu0
      %6911 = vmatprep.mubr.f32.mxu0 0.0
      %v6912 = vand.u32 %v3795, 4294901760
      %v6913 = vsub.f32 %v3795, %v6912
      %6914 = vmatmul.mubr.f32.gmra.mrb[0].mxu0 %v6913
      %v6915 = vpop.f32.mrb[0].mxu0
      %v6916 = vadd.f32 %v6708, %v6915
      %v6917 = vpop.f32.mrb[0].mxu0
      %6918 = vmatprep.mubr.f32.mxu0 0.0
      %v6919 = vand.u32 %v3796, 4294901760
      %v6920 = vsub.f32 %v3796, %v6919
      %6921 = vmatmul.mubr.f32.gmra.mrb[0].mxu0 %v6920
      %v6922 = vpop.f32.mrb[0].mxu0
      %v6923 = vadd.f32 %v6714, %v6922
      %v6924 = vpop.f32.mrb[0].mxu0
      %6925 = vdwg.mxu0
      %6926 = vmatprep.subr.mxu0 0.0
      %v6927 = vand.u32 %v6219, 4294901760
      %6928 = vmatpush1.msra.mxu0 %v6927
      %6929 = vmatprep.subr.mxu0 0.0
      %v6930 = vand.u32 %v6220, 4294901760
      %6931 = vmatpush1.msra.mxu0 %v6930
      %6932 = vmatprep.subr.mxu0 0.0
      %v6933 = vand.u32 %v6221, 4294901760
      %6934 = vmatpush1.msra.mxu0 %v6933
      %6935 = vmatprep.subr.mxu0 0.0
      %v6936 = vand.u32 %v6222, 4294901760
      %6937 = vmatpush1.msra.mxu0 %v6936
      %6938 = vmatprep.subr.mxu0 0.0
      %v6939 = vand.u32 %v6223, 4294901760
      %6940 = vmatpush1.msra.mxu0 %v6939
      %6941 = vmatprep.subr.mxu0 0.0
      %v6942 = vand.u32 %v6224, 4294901760
      %6943 = vmatpush1.msra.mxu0 %v6942
      %6944 = vmatprep.subr.mxu0 0.0
      %v6945 = vand.u32 %v6225, 4294901760
      %6946 = vmatpush1.msra.mxu0 %v6945
      %6947 = vmatprep.subr.mxu0 0.0
      %v6948 = vand.u32 %v6226, 4294901760
      %6949 = vmatpush1.msra.mxu0 %v6948
      %6950 = vmatprep.subr.mxu0 0.0
      %v6951 = vand.u32 %v6227, 4294901760
      %6952 = vmatpush1.msra.mxu0 %v6951
      %6953 = vmatprep.subr.mxu0 0.0
      %v6954 = vand.u32 %v6228, 4294901760
      %6955 = vmatpush1.msra.mxu0 %v6954
      %6956 = vmatprep.subr.mxu0 0.0
      %v6957 = vand.u32 %v6229, 4294901760
      %6958 = vmatpush1.msra.mxu0 %v6957
      %6959 = vmatprep.subr.mxu0 0.0
      %v6960 = vand.u32 %v6230, 4294901760
      %6961 = vmatpush1.msra.mxu0 %v6960
      %6962 = vmatprep.subr.mxu0 0.0
      %v6963 = vand.u32 %v6231, 4294901760
      %6964 = vmatpush1.msra.mxu0 %v6963
      %6965 = vmatprep.subr.mxu0 0.0
      %v6966 = vand.u32 %v6232, 4294901760
      %6967 = vmatpush1.msra.mxu0 %v6966
      %6968 = vmatprep.subr.mxu0 0.0
      %v6969 = vand.u32 %v6233, 4294901760
      %6970 = vmatpush1.msra.mxu0 %v6969
      %6971 = vmatprep.subr.mxu0 0.0
      %v6972 = vand.u32 %v6234, 4294901760
      %6973 = vmatpush1.msra.mxu0 %v6972
      %6974 = vmatprep.subr.mxu0 0.0
      %6975 = vmatpush1.msra.mxu0 0.0
      %6976 = vmatprep.subr.mxu0 0.0
      %6977 = vmatpush1.msra.mxu0 0.0
      %6978 = vmatprep.subr.mxu0 0.0
      %6979 = vmatpush1.msra.mxu0 0.0
      %6980 = vmatprep.subr.mxu0 0.0
      %6981 = vmatpush1.msra.mxu0 0.0
      %6982 = vmatprep.subr.mxu0 0.0
      %6983 = vmatpush1.msra.mxu0 0.0
      %6984 = vmatprep.subr.mxu0 0.0
      %6985 = vmatpush1.msra.mxu0 0.0
      %6986 = vmatprep.subr.mxu0 0.0
      %6987 = vmatpush1.msra.mxu0 0.0
      %6988 = vmatprep.subr.mxu0 0.0
      %6989 = vmatpush1.msra.mxu0 0.0
      %6990 = vmatprep.subr.mxu0 0.0
      %6991 = vmatpush1.msra.mxu0 0.0
      %6992 = vmatprep.subr.mxu0 0.0
      %6993 = vmatpush1.msra.mxu0 0.0
      %6994 = vmatprep.subr.mxu0 0.0
      %6995 = vmatpush1.msra.mxu0 0.0
      %6996 = vmatprep.subr.mxu0 0.0
      %6997 = vmatpush1.msra.mxu0 0.0
      %6998 = vmatprep.subr.mxu0 0.0
      %6999 = vmatpush1.msra.mxu0 0.0
      %7000 = vmatprep.subr.mxu0 0.0
      %7001 = vmatpush1.msra.mxu0 0.0
      %7002 = vmatprep.subr.mxu0 0.0
      %7003 = vmatpush1.msra.mxu0 0.0
      %7004 = vmatprep.subr.mxu0 0.0
      %7005 = vmatpush1.msra.mxu0 0.0
      %7006 = vmatprep.mubr.f32.mxu0 0.0
      %v7007 = vand.u32 %v3781, 4294901760
      %v7008 = vsub.f32 %v3781, %v7007
      %v7009 = vand.u32 %v7008, 4294901760
      %7010 = vmatmul.mubr.f32.gmra.mrb[0].mxu0 %v7009
      %v7011 = vpop.f32.mrb[0].mxu0
      %v7012 = vadd.f32 %v6818, %v7011
      %v7013 = vpop.f32.mrb[0].mxu0
      %7014 = vmatprep.mubr.f32.mxu0 0.0
      %v7015 = vand.u32 %v3782, 4294901760
      %v7016 = vsub.f32 %v3782, %v7015
      %v7017 = vand.u32 %v7016, 4294901760
      %7018 = vmatmul.mubr.f32.gmra.mrb[0].mxu0 %v7017
      %v7019 = vpop.f32.mrb[0].mxu0
      %v7020 = vadd.f32 %v6825, %v7019
      %v7021 = vpop.f32.mrb[0].mxu0
      %7022 = vmatprep.mubr.f32.mxu0 0.0
      %v7023 = vand.u32 %v3783, 4294901760
      %v7024 = vsub.f32 %v3783, %v7023
      %v7025 = vand.u32 %v7024, 4294901760
      %7026 = vmatmul.mubr.f32.gmra.mrb[0].mxu0 %v7025
      %v7027 = vpop.f32.mrb[0].mxu0
      %v7028 = vadd.f32 %v6832, %v7027
      %v7029 = vpop.f32.mrb[0].mxu0
      %7030 = vmatprep.mubr.f32.mxu0 0.0
      %v7031 = vand.u32 %v3784, 4294901760
      %v7032 = vsub.f32 %v3784, %v7031
      %v7033 = vand.u32 %v7032, 4294901760
      %7034 = vmatmul.mubr.f32.gmra.mrb[0].mxu0 %v7033
      %v7035 = vpop.f32.mrb[0].mxu0
      %v7036 = vadd.f32 %v6839, %v7035
      %v7037 = vpop.f32.mrb[0].mxu0
      %7038 = vmatprep.mubr.f32.mxu0 0.0
      %v7039 = vand.u32 %v3785, 4294901760
      %v7040 = vsub.f32 %v3785, %v7039
      %v7041 = vand.u32 %v7040, 4294901760
      %7042 = vmatmul.mubr.f32.gmra.mrb[0].mxu0 %v7041
      %v7043 = vpop.f32.mrb[0].mxu0
      %v7044 = vadd.f32 %v6846, %v7043
      %v7045 = vpop.f32.mrb[0].mxu0
      %7046 = vmatprep.mubr.f32.mxu0 0.0
      %v7047 = vand.u32 %v3786, 4294901760
      %v7048 = vsub.f32 %v3786, %v7047
      %v7049 = vand.u32 %v7048, 4294901760
      %7050 = vmatmul.mubr.f32.gmra.mrb[0].mxu0 %v7049
      %v7051 = vpop.f32.mrb[0].mxu0
      %v7052 = vadd.f32 %v6853, %v7051
      %v7053 = vpop.f32.mrb[0].mxu0
      %7054 = vmatprep.mubr.f32.mxu0 0.0
      %v7055 = vand.u32 %v3787, 4294901760
      %v7056 = vsub.f32 %v3787, %v7055
      %v7057 = vand.u32 %v7056, 4294901760
      %7058 = vmatmul.mubr.f32.gmra.mrb[0].mxu0 %v7057
      %v7059 = vpop.f32.mrb[0].mxu0
      %v7060 = vadd.f32 %v6860, %v7059
      %v7061 = vpop.f32.mrb[0].mxu0
      %7062 = vmatprep.mubr.f32.mxu0 0.0
      %v7063 = vand.u32 %v3788, 4294901760
      %v7064 = vsub.f32 %v3788, %v7063
      %v7065 = vand.u32 %v7064, 4294901760
      %7066 = vmatmul.mubr.f32.gmra.mrb[0].mxu0 %v7065
      %v7067 = vpop.f32.mrb[0].mxu0
      %v7068 = vadd.f32 %v6867, %v7067
      %v7069 = vpop.f32.mrb[0].mxu0
      %7070 = vmatprep.mubr.f32.mxu0 0.0
      %v7071 = vand.u32 %v3789, 4294901760
      %v7072 = vsub.f32 %v3789, %v7071
      %v7073 = vand.u32 %v7072, 4294901760
      %7074 = vmatmul.mubr.f32.gmra.mrb[0].mxu0 %v7073
      %v7075 = vpop.f32.mrb[0].mxu0
      %v7076 = vadd.f32 %v6874, %v7075
      %v7077 = vpop.f32.mrb[0].mxu0
      %7078 = vmatprep.mubr.f32.mxu0 0.0
      %v7079 = vand.u32 %v3790, 4294901760
      %v7080 = vsub.f32 %v3790, %v7079
      %v7081 = vand.u32 %v7080, 4294901760
      %7082 = vmatmul.mubr.f32.gmra.mrb[0].mxu0 %v7081
      %v7083 = vpop.f32.mrb[0].mxu0
      %v7084 = vadd.f32 %v6881, %v7083
      %v7085 = vpop.f32.mrb[0].mxu0
      %7086 = vmatprep.mubr.f32.mxu0 0.0
      %v7087 = vand.u32 %v3791, 4294901760
      %v7088 = vsub.f32 %v3791, %v7087
      %v7089 = vand.u32 %v7088, 4294901760
      %7090 = vmatmul.mubr.f32.gmra.mrb[0].mxu0 %v7089
      %v7091 = vpop.f32.mrb[0].mxu0
      %v7092 = vadd.f32 %v6888, %v7091
      %v7093 = vpop.f32.mrb[0].mxu0
      %7094 = vmatprep.mubr.f32.mxu0 0.0
      %v7095 = vand.u32 %v3792, 4294901760
      %v7096 = vsub.f32 %v3792, %v7095
      %v7097 = vand.u32 %v7096, 4294901760
      %7098 = vmatmul.mubr.f32.gmra.mrb[0].mxu0 %v7097
      %v7099 = vpop.f32.mrb[0].mxu0
      %v7100 = vadd.f32 %v6895, %v7099
      %v7101 = vpop.f32.mrb[0].mxu0
      %7102 = vmatprep.mubr.f32.mxu0 0.0
      %v7103 = vand.u32 %v3793, 4294901760
      %v7104 = vsub.f32 %v3793, %v7103
      %v7105 = vand.u32 %v7104, 4294901760
      %7106 = vmatmul.mubr.f32.gmra.mrb[0].mxu0 %v7105
      %v7107 = vpop.f32.mrb[0].mxu0
      %v7108 = vadd.f32 %v6902, %v7107
      %v7109 = vpop.f32.mrb[0].mxu0
      %7110 = vmatprep.mubr.f32.mxu0 0.0
      %v7111 = vand.u32 %v3794, 4294901760
      %v7112 = vsub.f32 %v3794, %v7111
      %v7113 = vand.u32 %v7112, 4294901760
      %7114 = vmatmul.mubr.f32.gmra.mrb[0].mxu0 %v7113
      %v7115 = vpop.f32.mrb[0].mxu0
      %v7116 = vadd.f32 %v6909, %v7115
      %v7117 = vpop.f32.mrb[0].mxu0
      %7118 = vmatprep.mubr.f32.mxu0 0.0
      %v7119 = vand.u32 %v3795, 4294901760
      %v7120 = vsub.f32 %v3795, %v7119
      %v7121 = vand.u32 %v7120, 4294901760
      %7122 = vmatmul.mubr.f32.gmra.mrb[0].mxu0 %v7121
      %v7123 = vpop.f32.mrb[0].mxu0
      %v7124 = vadd.f32 %v6916, %v7123
      %v7125 = vpop.f32.mrb[0].mxu0
      %7126 = vmatprep.mubr.f32.mxu0 0.0
      %v7127 = vand.u32 %v3796, 4294901760
      %v7128 = vsub.f32 %v3796, %v7127
      %v7129 = vand.u32 %v7128, 4294901760
      %7130 = vmatmul.mubr.f32.gmra.mrb[0].mxu0 %v7129
      %v7131 = vpop.f32.mrb[0].mxu0
      %v7132 = vadd.f32 %v6923, %v7131
      %v7133 = vpop.f32.mrb[0].mxu0
      %7134 = vdwg.mxu0
      %7135 = vmatprep.subr.mxu0 0.0
      %v7136 = vand.u32 %v6219, 4294901760
      %v7137 = vsub.f32 %v6219, %v7136
      %v7138 = vand.u32 %v7137, 4294901760
      %7139 = vmatpush1.msra.mxu0 %v7138
      %7140 = vmatprep.subr.mxu0 0.0
      %v7141 = vand.u32 %v6220, 4294901760
      %v7142 = vsub.f32 %v6220, %v7141
      %v7143 = vand.u32 %v7142, 4294901760
      %7144 = vmatpush1.msra.mxu0 %v7143
      %7145 = vmatprep.subr.mxu0 0.0
      %v7146 = vand.u32 %v6221, 4294901760
      %v7147 = vsub.f32 %v6221, %v7146
      %v7148 = vand.u32 %v7147, 4294901760
      %7149 = vmatpush1.msra.mxu0 %v7148
      %7150 = vmatprep.subr.mxu0 0.0
      %v7151 = vand.u32 %v6222, 4294901760
      %v7152 = vsub.f32 %v6222, %v7151
      %v7153 = vand.u32 %v7152, 4294901760
      %7154 = vmatpush1.msra.mxu0 %v7153
      %7155 = vmatprep.subr.mxu0 0.0
      %v7156 = vand.u32 %v6223, 4294901760
      %v7157 = vsub.f32 %v6223, %v7156
      %v7158 = vand.u32 %v7157, 4294901760
      %7159 = vmatpush1.msra.mxu0 %v7158
      %7160 = vmatprep.subr.mxu0 0.0
      %v7161 = vand.u32 %v6224, 4294901760
      %v7162 = vsub.f32 %v6224, %v7161
      %v7163 = vand.u32 %v7162, 4294901760
      %7164 = vmatpush1.msra.mxu0 %v7163
      %7165 = vmatprep.subr.mxu0 0.0
      %v7166 = vand.u32 %v6225, 4294901760
      %v7167 = vsub.f32 %v6225, %v7166
      %v7168 = vand.u32 %v7167, 4294901760
      %7169 = vmatpush1.msra.mxu0 %v7168
      %7170 = vmatprep.subr.mxu0 0.0
      %v7171 = vand.u32 %v6226, 4294901760
      %v7172 = vsub.f32 %v6226, %v7171
      %v7173 = vand.u32 %v7172, 4294901760
      %7174 = vmatpush1.msra.mxu0 %v7173
      %7175 = vmatprep.subr.mxu0 0.0
      %v7176 = vand.u32 %v6227, 4294901760
      %v7177 = vsub.f32 %v6227, %v7176
      %v7178 = vand.u32 %v7177, 4294901760
      %7179 = vmatpush1.msra.mxu0 %v7178
      %7180 = vmatprep.subr.mxu0 0.0
      %v7181 = vand.u32 %v6228, 4294901760
      %v7182 = vsub.f32 %v6228, %v7181
      %v7183 = vand.u32 %v7182, 4294901760
      %7184 = vmatpush1.msra.mxu0 %v7183
      %7185 = vmatprep.subr.mxu0 0.0
      %v7186 = vand.u32 %v6229, 4294901760
      %v7187 = vsub.f32 %v6229, %v7186
      %v7188 = vand.u32 %v7187, 4294901760
      %7189 = vmatpush1.msra.mxu0 %v7188
      %7190 = vmatprep.subr.mxu0 0.0
      %v7191 = vand.u32 %v6230, 4294901760
      %v7192 = vsub.f32 %v6230, %v7191
      %v7193 = vand.u32 %v7192, 4294901760
      %7194 = vmatpush1.msra.mxu0 %v7193
      %7195 = vmatprep.subr.mxu0 0.0
      %v7196 = vand.u32 %v6231, 4294901760
      %v7197 = vsub.f32 %v6231, %v7196
      %v7198 = vand.u32 %v7197, 4294901760
      %7199 = vmatpush1.msra.mxu0 %v7198
      %7200 = vmatprep.subr.mxu0 0.0
      %v7201 = vand.u32 %v6232, 4294901760
      %v7202 = vsub.f32 %v6232, %v7201
      %v7203 = vand.u32 %v7202, 4294901760
      %7204 = vmatpush1.msra.mxu0 %v7203
      %7205 = vmatprep.subr.mxu0 0.0
      %v7206 = vand.u32 %v6233, 4294901760
      %v7207 = vsub.f32 %v6233, %v7206
      %v7208 = vand.u32 %v7207, 4294901760
      %7209 = vmatpush1.msra.mxu0 %v7208
      %7210 = vmatprep.subr.mxu0 0.0
      %v7211 = vand.u32 %v6234, 4294901760
      %v7212 = vsub.f32 %v6234, %v7211
      %v7213 = vand.u32 %v7212, 4294901760
      %7214 = vmatpush1.msra.mxu0 %v7213
      %7215 = vmatprep.subr.mxu0 0.0
      %7216 = vmatpush1.msra.mxu0 0.0
      %7217 = vmatprep.subr.mxu0 0.0
      %7218 = vmatpush1.msra.mxu0 0.0
      %7219 = vmatprep.subr.mxu0 0.0
      %7220 = vmatpush1.msra.mxu0 0.0
      %7221 = vmatprep.subr.mxu0 0.0
      %7222 = vmatpush1.msra.mxu0 0.0
      %7223 = vmatprep.subr.mxu0 0.0
      %7224 = vmatpush1.msra.mxu0 0.0
      %7225 = vmatprep.subr.mxu0 0.0
      %7226 = vmatpush1.msra.mxu0 0.0
      %7227 = vmatprep.subr.mxu0 0.0
      %7228 = vmatpush1.msra.mxu0 0.0
      %7229 = vmatprep.subr.mxu0 0.0
      %7230 = vmatpush1.msra.mxu0 0.0
      %7231 = vmatprep.subr.mxu0 0.0
      %7232 = vmatpush1.msra.mxu0 0.0
      %7233 = vmatprep.subr.mxu0 0.0
      %7234 = vmatpush1.msra.mxu0 0.0
      %7235 = vmatprep.subr.mxu0 0.0
      %7236 = vmatpush1.msra.mxu0 0.0
      %7237 = vmatprep.subr.mxu0 0.0
      %7238 = vmatpush1.msra.mxu0 0.0
      %7239 = vmatprep.subr.mxu0 0.0
      %7240 = vmatpush1.msra.mxu0 0.0
      %7241 = vmatprep.subr.mxu0 0.0
      %7242 = vmatpush1.msra.mxu0 0.0
      %7243 = vmatprep.subr.mxu0 0.0
      %7244 = vmatpush1.msra.mxu0 0.0
      %7245 = vmatprep.subr.mxu0 0.0
      %7246 = vmatpush1.msra.mxu0 0.0
      %7247 = vmatprep.mubr.f32.mxu0 0.0
      %v7248 = vand.u32 %v3781, 4294901760
      %7249 = vmatmul.mubr.f32.gmra.mrb[0].mxu0 %v7248
      %v7250 = vpop.f32.mrb[0].mxu0
      %v7251 = vadd.f32 %v7012, %v7250
      %v7252 = vpop.f32.mrb[0].mxu0
      %7253 = vmatprep.mubr.f32.mxu0 0.0
      %v7254 = vand.u32 %v3782, 4294901760
      %7255 = vmatmul.mubr.f32.gmra.mrb[0].mxu0 %v7254
      %v7256 = vpop.f32.mrb[0].mxu0
      %v7257 = vadd.f32 %v7020, %v7256
      %v7258 = vpop.f32.mrb[0].mxu0
      %7259 = vmatprep.mubr.f32.mxu0 0.0
      %v7260 = vand.u32 %v3783, 4294901760
      %7261 = vmatmul.mubr.f32.gmra.mrb[0].mxu0 %v7260
      %v7262 = vpop.f32.mrb[0].mxu0
      %v7263 = vadd.f32 %v7028, %v7262
      %v7264 = vpop.f32.mrb[0].mxu0
      %7265 = vmatprep.mubr.f32.mxu0 0.0
      %v7266 = vand.u32 %v3784, 4294901760
      %7267 = vmatmul.mubr.f32.gmra.mrb[0].mxu0 %v7266
      %v7268 = vpop.f32.mrb[0].mxu0
      %v7269 = vadd.f32 %v7036, %v7268
      %v7270 = vpop.f32.mrb[0].mxu0
      %7271 = vmatprep.mubr.f32.mxu0 0.0
      %v7272 = vand.u32 %v3785, 4294901760
      %7273 = vmatmul.mubr.f32.gmra.mrb[0].mxu0 %v7272
      %v7274 = vpop.f32.mrb[0].mxu0
      %v7275 = vadd.f32 %v7044, %v7274
      %v7276 = vpop.f32.mrb[0].mxu0
      %7277 = vmatprep.mubr.f32.mxu0 0.0
      %v7278 = vand.u32 %v3786, 4294901760
      %7279 = vmatmul.mubr.f32.gmra.mrb[0].mxu0 %v7278
      %v7280 = vpop.f32.mrb[0].mxu0
      %v7281 = vadd.f32 %v7052, %v7280
      %v7282 = vpop.f32.mrb[0].mxu0
      %7283 = vmatprep.mubr.f32.mxu0 0.0
      %v7284 = vand.u32 %v3787, 4294901760
      %7285 = vmatmul.mubr.f32.gmra.mrb[0].mxu0 %v7284
      %v7286 = vpop.f32.mrb[0].mxu0
      %v7287 = vadd.f32 %v7060, %v7286
      %v7288 = vpop.f32.mrb[0].mxu0
      %7289 = vmatprep.mubr.f32.mxu0 0.0
      %v7290 = vand.u32 %v3788, 4294901760
      %7291 = vmatmul.mubr.f32.gmra.mrb[0].mxu0 %v7290
      %v7292 = vpop.f32.mrb[0].mxu0
      %v7293 = vadd.f32 %v7068, %v7292
      %v7294 = vpop.f32.mrb[0].mxu0
      %7295 = vmatprep.mubr.f32.mxu0 0.0
      %v7296 = vand.u32 %v3789, 4294901760
      %7297 = vmatmul.mubr.f32.gmra.mrb[0].mxu0 %v7296
      %v7298 = vpop.f32.mrb[0].mxu0
      %v7299 = vadd.f32 %v7076, %v7298
      %v7300 = vpop.f32.mrb[0].mxu0
      %7301 = vmatprep.mubr.f32.mxu0 0.0
      %v7302 = vand.u32 %v3790, 4294901760
      %7303 = vmatmul.mubr.f32.gmra.mrb[0].mxu0 %v7302
      %v7304 = vpop.f32.mrb[0].mxu0
      %v7305 = vadd.f32 %v7084, %v7304
      %v7306 = vpop.f32.mrb[0].mxu0
      %7307 = vmatprep.mubr.f32.mxu0 0.0
      %v7308 = vand.u32 %v3791, 4294901760
      %7309 = vmatmul.mubr.f32.gmra.mrb[0].mxu0 %v7308
      %v7310 = vpop.f32.mrb[0].mxu0
      %v7311 = vadd.f32 %v7092, %v7310
      %v7312 = vpop.f32.mrb[0].mxu0
      %7313 = vmatprep.mubr.f32.mxu0 0.0
      %v7314 = vand.u32 %v3792, 4294901760
      %7315 = vmatmul.mubr.f32.gmra.mrb[0].mxu0 %v7314
      %v7316 = vpop.f32.mrb[0].mxu0
      %v7317 = vadd.f32 %v7100, %v7316
      %v7318 = vpop.f32.mrb[0].mxu0
      %7319 = vmatprep.mubr.f32.mxu0 0.0
      %v7320 = vand.u32 %v3793, 4294901760
      %7321 = vmatmul.mubr.f32.gmra.mrb[0].mxu0 %v7320
      %v7322 = vpop.f32.mrb[0].mxu0
      %v7323 = vadd.f32 %v7108, %v7322
      %v7324 = vpop.f32.mrb[0].mxu0
      %7325 = vmatprep.mubr.f32.mxu0 0.0
      %v7326 = vand.u32 %v3794, 4294901760
      %7327 = vmatmul.mubr.f32.gmra.mrb[0].mxu0 %v7326
      %v7328 = vpop.f32.mrb[0].mxu0
      %v7329 = vadd.f32 %v7116, %v7328
      %v7330 = vpop.f32.mrb[0].mxu0
      %7331 = vmatprep.mubr.f32.mxu0 0.0
      %v7332 = vand.u32 %v3795, 4294901760
      %7333 = vmatmul.mubr.f32.gmra.mrb[0].mxu0 %v7332
      %v7334 = vpop.f32.mrb[0].mxu0
      %v7335 = vadd.f32 %v7124, %v7334
      %v7336 = vpop.f32.mrb[0].mxu0
      %7337 = vmatprep.mubr.f32.mxu0 0.0
      %v7338 = vand.u32 %v3796, 4294901760
      %7339 = vmatmul.mubr.f32.gmra.mrb[0].mxu0 %v7338
      %v7340 = vpop.f32.mrb[0].mxu0
      %v7341 = vadd.f32 %v7132, %v7340
      %v7342 = vpop.f32.mrb[0].mxu0
      %7343 = vdwg.mxu0
      %7344 = vmatprep.subr.mxu0 0.0
      %v7345 = vand.u32 %v6219, 4294901760
      %7346 = vmatpush1.msra.mxu0 %v7345
      %7347 = vmatprep.subr.mxu0 0.0
      %v7348 = vand.u32 %v6220, 4294901760
      %7349 = vmatpush1.msra.mxu0 %v7348
      %7350 = vmatprep.subr.mxu0 0.0
      %v7351 = vand.u32 %v6221, 4294901760
      %7352 = vmatpush1.msra.mxu0 %v7351
      %7353 = vmatprep.subr.mxu0 0.0
      %v7354 = vand.u32 %v6222, 4294901760
      %7355 = vmatpush1.msra.mxu0 %v7354
      %7356 = vmatprep.subr.mxu0 0.0
      %v7357 = vand.u32 %v6223, 4294901760
      %7358 = vmatpush1.msra.mxu0 %v7357
      %7359 = vmatprep.subr.mxu0 0.0
      %v7360 = vand.u32 %v6224, 4294901760
      %7361 = vmatpush1.msra.mxu0 %v7360
      %7362 = vmatprep.subr.mxu0 0.0
      %v7363 = vand.u32 %v6225, 4294901760
      %7364 = vmatpush1.msra.mxu0 %v7363
      %7365 = vmatprep.subr.mxu0 0.0
      %v7366 = vand.u32 %v6226, 4294901760
      %7367 = vmatpush1.msra.mxu0 %v7366
      %7368 = vmatprep.subr.mxu0 0.0
      %v7369 = vand.u32 %v6227, 4294901760
      %7370 = vmatpush1.msra.mxu0 %v7369
      %7371 = vmatprep.subr.mxu0 0.0
      %v7372 = vand.u32 %v6228, 4294901760
      %7373 = vmatpush1.msra.mxu0 %v7372
      %7374 = vmatprep.subr.mxu0 0.0
      %v7375 = vand.u32 %v6229, 4294901760
      %7376 = vmatpush1.msra.mxu0 %v7375
      %7377 = vmatprep.subr.mxu0 0.0
      %v7378 = vand.u32 %v6230, 4294901760
      %7379 = vmatpush1.msra.mxu0 %v7378
      %7380 = vmatprep.subr.mxu0 0.0
      %v7381 = vand.u32 %v6231, 4294901760
      %7382 = vmatpush1.msra.mxu0 %v7381
      %7383 = vmatprep.subr.mxu0 0.0
      %v7384 = vand.u32 %v6232, 4294901760
      %7385 = vmatpush1.msra.mxu0 %v7384
      %7386 = vmatprep.subr.mxu0 0.0
      %v7387 = vand.u32 %v6233, 4294901760
      %7388 = vmatpush1.msra.mxu0 %v7387
      %7389 = vmatprep.subr.mxu0 0.0
      %v7390 = vand.u32 %v6234, 4294901760
      %7391 = vmatpush1.msra.mxu0 %v7390
      %7392 = vmatprep.subr.mxu0 0.0
      %7393 = vmatpush1.msra.mxu0 0.0
      %7394 = vmatprep.subr.mxu0 0.0
      %7395 = vmatpush1.msra.mxu0 0.0
      %7396 = vmatprep.subr.mxu0 0.0
      %7397 = vmatpush1.msra.mxu0 0.0
      %7398 = vmatprep.subr.mxu0 0.0
      %7399 = vmatpush1.msra.mxu0 0.0
      %7400 = vmatprep.subr.mxu0 0.0
      %7401 = vmatpush1.msra.mxu0 0.0
      %7402 = vmatprep.subr.mxu0 0.0
      %7403 = vmatpush1.msra.mxu0 0.0
      %7404 = vmatprep.subr.mxu0 0.0
      %7405 = vmatpush1.msra.mxu0 0.0
      %7406 = vmatprep.subr.mxu0 0.0
      %7407 = vmatpush1.msra.mxu0 0.0
      %7408 = vmatprep.subr.mxu0 0.0
      %7409 = vmatpush1.msra.mxu0 0.0
      %7410 = vmatprep.subr.mxu0 0.0
      %7411 = vmatpush1.msra.mxu0 0.0
      %7412 = vmatprep.subr.mxu0 0.0
      %7413 = vmatpush1.msra.mxu0 0.0
      %7414 = vmatprep.subr.mxu0 0.0
      %7415 = vmatpush1.msra.mxu0 0.0
      %7416 = vmatprep.subr.mxu0 0.0
      %7417 = vmatpush1.msra.mxu0 0.0
      %7418 = vmatprep.subr.mxu0 0.0
      %7419 = vmatpush1.msra.mxu0 0.0
      %7420 = vmatprep.subr.mxu0 0.0
      %7421 = vmatpush1.msra.mxu0 0.0
      %7422 = vmatprep.subr.mxu0 0.0
      %7423 = vmatpush1.msra.mxu0 0.0
      %7424 = vmatprep.mubr.f32.mxu0 0.0
      %v7425 = vand.u32 %v3781, 4294901760
      %7426 = vmatmul.mubr.f32.gmra.mrb[0].mxu0 %v7425
      %v7427 = vpop.f32.mrb[0].mxu0
      %v7428 = vadd.f32 %v7251, %v7427
      %v7429 = vpop.f32.mrb[0].mxu0
      %7430 = vmatprep.mubr.f32.mxu0 0.0
      %v7431 = vand.u32 %v3782, 4294901760
      %7432 = vmatmul.mubr.f32.gmra.mrb[0].mxu0 %v7431
      %v7433 = vpop.f32.mrb[0].mxu0
      %v7434 = vadd.f32 %v7257, %v7433
      %v7435 = vpop.f32.mrb[0].mxu0
      %7436 = vmatprep.mubr.f32.mxu0 0.0
      %v7437 = vand.u32 %v3783, 4294901760
      %7438 = vmatmul.mubr.f32.gmra.mrb[0].mxu0 %v7437
      %v7439 = vpop.f32.mrb[0].mxu0
      %v7440 = vadd.f32 %v7263, %v7439
      %v7441 = vpop.f32.mrb[0].mxu0
      %7442 = vmatprep.mubr.f32.mxu0 0.0
      %v7443 = vand.u32 %v3784, 4294901760
      %7444 = vmatmul.mubr.f32.gmra.mrb[0].mxu0 %v7443
      %v7445 = vpop.f32.mrb[0].mxu0
      %v7446 = vadd.f32 %v7269, %v7445
      %v7447 = vpop.f32.mrb[0].mxu0
      %7448 = vmatprep.mubr.f32.mxu0 0.0
      %v7449 = vand.u32 %v3785, 4294901760
      %7450 = vmatmul.mubr.f32.gmra.mrb[0].mxu0 %v7449
      %v7451 = vpop.f32.mrb[0].mxu0
      %v7452 = vadd.f32 %v7275, %v7451
      %v7453 = vpop.f32.mrb[0].mxu0
      %7454 = vmatprep.mubr.f32.mxu0 0.0
      %v7455 = vand.u32 %v3786, 4294901760
      %7456 = vmatmul.mubr.f32.gmra.mrb[0].mxu0 %v7455
      %v7457 = vpop.f32.mrb[0].mxu0
      %v7458 = vadd.f32 %v7281, %v7457
      %v7459 = vpop.f32.mrb[0].mxu0
      %7460 = vmatprep.mubr.f32.mxu0 0.0
      %v7461 = vand.u32 %v3787, 4294901760
      %7462 = vmatmul.mubr.f32.gmra.mrb[0].mxu0 %v7461
      %v7463 = vpop.f32.mrb[0].mxu0
      %v7464 = vadd.f32 %v7287, %v7463
      %v7465 = vpop.f32.mrb[0].mxu0
      %7466 = vmatprep.mubr.f32.mxu0 0.0
      %v7467 = vand.u32 %v3788, 4294901760
      %7468 = vmatmul.mubr.f32.gmra.mrb[0].mxu0 %v7467
      %v7469 = vpop.f32.mrb[0].mxu0
      %v7470 = vadd.f32 %v7293, %v7469
      %v7471 = vpop.f32.mrb[0].mxu0
      %7472 = vmatprep.mubr.f32.mxu0 0.0
      %v7473 = vand.u32 %v3789, 4294901760
      %7474 = vmatmul.mubr.f32.gmra.mrb[0].mxu0 %v7473
      %v7475 = vpop.f32.mrb[0].mxu0
      %v7476 = vadd.f32 %v7299, %v7475
      %v7477 = vpop.f32.mrb[0].mxu0
      %7478 = vmatprep.mubr.f32.mxu0 0.0
      %v7479 = vand.u32 %v3790, 4294901760
      %7480 = vmatmul.mubr.f32.gmra.mrb[0].mxu0 %v7479
      %v7481 = vpop.f32.mrb[0].mxu0
      %v7482 = vadd.f32 %v7305, %v7481
      %v7483 = vpop.f32.mrb[0].mxu0
      %7484 = vmatprep.mubr.f32.mxu0 0.0
      %v7485 = vand.u32 %v3791, 4294901760
      %7486 = vmatmul.mubr.f32.gmra.mrb[0].mxu0 %v7485
      %v7487 = vpop.f32.mrb[0].mxu0
      %v7488 = vadd.f32 %v7311, %v7487
      %v7489 = vpop.f32.mrb[0].mxu0
      %7490 = vmatprep.mubr.f32.mxu0 0.0
      %v7491 = vand.u32 %v3792, 4294901760
      %7492 = vmatmul.mubr.f32.gmra.mrb[0].mxu0 %v7491
      %v7493 = vpop.f32.mrb[0].mxu0
      %v7494 = vadd.f32 %v7317, %v7493
      %v7495 = vpop.f32.mrb[0].mxu0
      %7496 = vmatprep.mubr.f32.mxu0 0.0
      %v7497 = vand.u32 %v3793, 4294901760
      %7498 = vmatmul.mubr.f32.gmra.mrb[0].mxu0 %v7497
      %v7499 = vpop.f32.mrb[0].mxu0
      %v7500 = vadd.f32 %v7323, %v7499
      %v7501 = vpop.f32.mrb[0].mxu0
      %7502 = vmatprep.mubr.f32.mxu0 0.0
      %v7503 = vand.u32 %v3794, 4294901760
      %7504 = vmatmul.mubr.f32.gmra.mrb[0].mxu0 %v7503
      %v7505 = vpop.f32.mrb[0].mxu0
      %v7506 = vadd.f32 %v7329, %v7505
      %v7507 = vpop.f32.mrb[0].mxu0
      %7508 = vmatprep.mubr.f32.mxu0 0.0
      %v7509 = vand.u32 %v3795, 4294901760
      %7510 = vmatmul.mubr.f32.gmra.mrb[0].mxu0 %v7509
      %v7511 = vpop.f32.mrb[0].mxu0
      %v7512 = vadd.f32 %v7335, %v7511
      %v7513 = vpop.f32.mrb[0].mxu0
      %7514 = vmatprep.mubr.f32.mxu0 0.0
      %v7515 = vand.u32 %v3796, 4294901760
      %7516 = vmatmul.mubr.f32.gmra.mrb[0].mxu0 %v7515
      %v7517 = vpop.f32.mrb[0].mxu0
      %v7518 = vadd.f32 %v7341, %v7517
      %v7519 = vpop.f32.mrb[0].mxu0
      %7520 = vdwg.mxu0
      %v7523 = vcombine.high %v5303, %v5303
      %v7525 = vunpack.c.l.s4 1966171168
      %v7526 = vunpack.c.0.s8 %v7525
      %v7527 = vlaneseq
      %v7528 = vshrl.u32 %v7527, 7
      %v7529 = vsub.s32 %v7526, %v7528
      %v7530 = vrot.slane %v5303, %v7529
      %v7532 = vunpack.c.l.s4 1966171168
      %v7533 = vunpack.c.0.s8 %v7532
      %v7534 = vlaneseq
      %v7535 = vshrl.u32 %v7534, 7
      %v7536 = vsub.s32 %v7533, %v7535
      %v7537 = vrot.slane %v7523, %v7536
      %v7538 = vcombine.high %v7530, %v7530
      %v7539 = vcombine.high %v7537, %v7537
      %v7541 = vunpack.c.l.s4 1966171168
      %v7542 = vunpack.c.0.s8 %v7541
      %v7543 = vlaneseq
      %v7544 = vshrl.u32 %v7543, 7
      %v7545 = vsub.s32 %v7542, %v7544
      %v7546 = vrot.slane %v7530, %v7545
      %v7548 = vunpack.c.l.s4 1966171168
      %v7549 = vunpack.c.0.s8 %v7548
      %v7550 = vlaneseq
      %v7551 = vshrl.u32 %v7550, 7
      %v7552 = vsub.s32 %v7549, %v7551
      %v7553 = vrot.slane %v7537, %v7552
      %v7555 = vunpack.c.l.s4 1966171168
      %v7556 = vunpack.c.0.s8 %v7555
      %v7557 = vlaneseq
      %v7558 = vshrl.u32 %v7557, 7
      %v7559 = vsub.s32 %v7556, %v7558
      %v7560 = vrot.slane %v7538, %v7559
      %v7562 = vunpack.c.l.s4 1966171168
      %v7563 = vunpack.c.0.s8 %v7562
      %v7564 = vlaneseq
      %v7565 = vshrl.u32 %v7564, 7
      %v7566 = vsub.s32 %v7563, %v7565
      %v7567 = vrot.slane %v7539, %v7566
      %v7568 = vcombine.high %v7546, %v7546
      %v7569 = vcombine.high %v7553, %v7553
      %v7570 = vcombine.high %v7560, %v7560
      %v7571 = vcombine.high %v7567, %v7567
      %v7572 = vcombine.high %v5310, %v5310
      %v7574 = vunpack.c.l.s4 1966171168
      %v7575 = vunpack.c.0.s8 %v7574
      %v7576 = vlaneseq
      %v7577 = vshrl.u32 %v7576, 7
      %v7578 = vsub.s32 %v7575, %v7577
      %v7579 = vrot.slane %v5310, %v7578
      %v7581 = vunpack.c.l.s4 1966171168
      %v7582 = vunpack.c.0.s8 %v7581
      %v7583 = vlaneseq
      %v7584 = vshrl.u32 %v7583, 7
      %v7585 = vsub.s32 %v7582, %v7584
      %v7586 = vrot.slane %v7572, %v7585
      %v7587 = vcombine.high %v7579, %v7579
      %v7588 = vcombine.high %v7586, %v7586
      %v7590 = vunpack.c.l.s4 1966171168
      %v7591 = vunpack.c.0.s8 %v7590
      %v7592 = vlaneseq
      %v7593 = vshrl.u32 %v7592, 7
      %v7594 = vsub.s32 %v7591, %v7593
      %v7595 = vrot.slane %v7579, %v7594
      %v7597 = vunpack.c.l.s4 1966171168
      %v7598 = vunpack.c.0.s8 %v7597
      %v7599 = vlaneseq
      %v7600 = vshrl.u32 %v7599, 7
      %v7601 = vsub.s32 %v7598, %v7600
      %v7602 = vrot.slane %v7586, %v7601
      %v7604 = vunpack.c.l.s4 1966171168
      %v7605 = vunpack.c.0.s8 %v7604
      %v7606 = vlaneseq
      %v7607 = vshrl.u32 %v7606, 7
      %v7608 = vsub.s32 %v7605, %v7607
      %v7609 = vrot.slane %v7587, %v7608
      %v7611 = vunpack.c.l.s4 1966171168
      %v7612 = vunpack.c.0.s8 %v7611
      %v7613 = vlaneseq
      %v7614 = vshrl.u32 %v7613, 7
      %v7615 = vsub.s32 %v7612, %v7614
      %v7616 = vrot.slane %v7588, %v7615
      %v7617 = vcombine.high %v7595, %v7595
      %v7618 = vcombine.high %v7602, %v7602
      %v7619 = vcombine.high %v7609, %v7609
      %v7620 = vcombine.high %v7616, %v7616
      %v7621 = vlaneseq
      %v7622 = vshrl.u32 %v7621, 7
      %v7623 = vsub.s32 0, %v7622
      %v7624 = vrot.slane %v7546, %v7623
      %v7625 = vlaneseq
      %v7626 = vshrl.u32 %v7625, 7
      %v7627 = vsub.s32 0, %v7626
      %v7628 = vrot.slane %v7560, %v7627
      %v7629 = vlaneseq
      %v7630 = vshrl.u32 %v7629, 7
      %v7631 = vsub.s32 0, %v7630
      %v7632 = vrot.slane %v7568, %v7631
      %v7633 = vlaneseq
      %v7634 = vshrl.u32 %v7633, 7
      %v7635 = vsub.s32 0, %v7634
      %v7636 = vrot.slane %v7570, %v7635
      %v7637 = vlaneseq
      %v7638 = vshrl.u32 %v7637, 7
      %v7639 = vsub.s32 0, %v7638
      %v7640 = vrot.slane %v7553, %v7639
      %v7641 = vlaneseq
      %v7642 = vshrl.u32 %v7641, 7
      %v7643 = vsub.s32 0, %v7642
      %v7644 = vrot.slane %v7567, %v7643
      %v7645 = vlaneseq
      %v7646 = vshrl.u32 %v7645, 7
      %v7647 = vsub.s32 0, %v7646
      %v7648 = vrot.slane %v7569, %v7647
      %v7649 = vlaneseq
      %v7650 = vshrl.u32 %v7649, 7
      %v7651 = vsub.s32 0, %v7650
      %v7652 = vrot.slane %v7571, %v7651
      %v7653 = vlaneseq
      %v7654 = vshrl.u32 %v7653, 7
      %v7655 = vsub.s32 0, %v7654
      %v7656 = vrot.slane %v7595, %v7655
      %v7657 = vlaneseq
      %v7658 = vshrl.u32 %v7657, 7
      %v7659 = vsub.s32 0, %v7658
      %v7660 = vrot.slane %v7609, %v7659
      %v7661 = vlaneseq
      %v7662 = vshrl.u32 %v7661, 7
      %v7663 = vsub.s32 0, %v7662
      %v7664 = vrot.slane %v7617, %v7663
      %v7665 = vlaneseq
      %v7666 = vshrl.u32 %v7665, 7
      %v7667 = vsub.s32 0, %v7666
      %v7668 = vrot.slane %v7619, %v7667
      %v7669 = vlaneseq
      %v7670 = vshrl.u32 %v7669, 7
      %v7671 = vsub.s32 0, %v7670
      %v7672 = vrot.slane %v7602, %v7671
      %v7673 = vlaneseq
      %v7674 = vshrl.u32 %v7673, 7
      %v7675 = vsub.s32 0, %v7674
      %v7676 = vrot.slane %v7616, %v7675
      %v7677 = vlaneseq
      %v7678 = vshrl.u32 %v7677, 7
      %v7679 = vsub.s32 0, %v7678
      %v7680 = vrot.slane %v7618, %v7679
      %v7681 = vlaneseq
      %v7682 = vshrl.u32 %v7681, 7
      %v7683 = vsub.s32 0, %v7682
      %v7684 = vrot.slane %v7620, %v7683
      %v7701 = vadd.f32 %v7624, %v5305
      %v7702 = vadd.f32 %v7628, %v5305
      %v7703 = vadd.f32 %v7632, %v5305
      %v7704 = vadd.f32 %v7636, %v5305
      %v7705 = vadd.f32 %v7640, %v5305
      %v7706 = vadd.f32 %v7644, %v5305
      %v7707 = vadd.f32 %v7648, %v5305
      %v7708 = vadd.f32 %v7652, %v5305
      %v7709 = vadd.f32 %v7656, %v5312
      %v7710 = vadd.f32 %v7660, %v5312
      %v7711 = vadd.f32 %v7664, %v5312
      %v7712 = vadd.f32 %v7668, %v5312
      %v7713 = vadd.f32 %v7672, %v5312
      %v7714 = vadd.f32 %v7676, %v5312
      %v7715 = vadd.f32 %v7680, %v5312
      %v7716 = vadd.f32 %v7684, %v5312
      %v7717 = vadd.f32 %v7701, %v7428
      %v7718 = vadd.f32 %v7702, %v7434
      %v7719 = vadd.f32 %v7703, %v7440
      %v7720 = vadd.f32 %v7704, %v7446
      %v7721 = vadd.f32 %v7705, %v7452
      %v7722 = vadd.f32 %v7706, %v7458
      %v7723 = vadd.f32 %v7707, %v7464
      %v7724 = vadd.f32 %v7708, %v7470
      %v7725 = vadd.f32 %v7709, %v7476
      %v7726 = vadd.f32 %v7710, %v7482
      %v7727 = vadd.f32 %v7711, %v7488
      %v7728 = vadd.f32 %v7712, %v7494
      %v7729 = vadd.f32 %v7713, %v7500
      %v7730 = vadd.f32 %v7714, %v7506
      %v7731 = vadd.f32 %v7715, %v7512
      %v7732 = vadd.f32 %v7716, %v7518
      %s7733 = scalar_lea.vmem %s5, 128
      %v7734 = vld [vmem:[%s7733] sm:$0xff]
      %v7735 = vld [vmem:[%s7733 + $0x8] sm:$0xff]
      %v7736 = vld [vmem:[%s7733 + $0x10] sm:$0xff]
      %v7737 = vld [vmem:[%s7733 + $0x18] sm:$0xff]
      %v7738 = vld [vmem:[%s7733 + $0x20] sm:$0xff]
      %v7739 = vld [vmem:[%s7733 + $0x28] sm:$0xff]
      %v7740 = vld [vmem:[%s7733 + $0x30] sm:$0xff]
      %v7741 = vld [vmem:[%s7733 + $0x38] sm:$0xff]
      %v7742 = vmul.f32 %v7717, %v7734
      %v7743 = vmul.f32 %v7718, %v7735
      %v7744 = vmul.f32 %v7719, %v7736
      %v7745 = vmul.f32 %v7720, %v7737
      %v7746 = vmul.f32 %v7721, %v7738
      %v7747 = vmul.f32 %v7722, %v7739
      %v7748 = vmul.f32 %v7723, %v7740
      %v7749 = vmul.f32 %v7724, %v7741
      %v7750 = vmul.f32 %v7725, %v7734
      %v7751 = vmul.f32 %v7726, %v7735
      %v7752 = vmul.f32 %v7727, %v7736
      %v7753 = vmul.f32 %v7728, %v7737
      %v7754 = vmul.f32 %v7729, %v7738
      %v7755 = vmul.f32 %v7730, %v7739
      %v7756 = vmul.f32 %v7731, %v7740
      %v7757 = vmul.f32 %v7732, %v7741
      %s7758 = scalar_lea.vmem %s5, 192
      %v7759 = vld [vmem:[%s7758] sm:$0xff]
      %v7760 = vld [vmem:[%s7758 + $0x8] sm:$0xff]
      %v7761 = vld [vmem:[%s7758 + $0x10] sm:$0xff]
      %v7762 = vld [vmem:[%s7758 + $0x18] sm:$0xff]
      %v7763 = vld [vmem:[%s7758 + $0x20] sm:$0xff]
      %v7764 = vld [vmem:[%s7758 + $0x28] sm:$0xff]
      %v7765 = vld [vmem:[%s7758 + $0x30] sm:$0xff]
      %v7766 = vld [vmem:[%s7758 + $0x38] sm:$0xff]
      %v7767 = vadd.f32 %v7742, %v7759
      %v7768 = vadd.f32 %v7743, %v7760
      %v7769 = vadd.f32 %v7744, %v7761
      %v7770 = vadd.f32 %v7745, %v7762
      %v7771 = vadd.f32 %v7746, %v7763
      %v7772 = vadd.f32 %v7747, %v7764
      %v7773 = vadd.f32 %v7748, %v7765
      %v7774 = vadd.f32 %v7749, %v7766
      %v7775 = vadd.f32 %v7750, %v7759
      %v7776 = vadd.f32 %v7751, %v7760
      %v7777 = vadd.f32 %v7752, %v7761
      %v7778 = vadd.f32 %v7753, %v7762
      %v7779 = vadd.f32 %v7754, %v7763
      %v7780 = vadd.f32 %v7755, %v7764
      %v7781 = vadd.f32 %v7756, %v7765
      %v7782 = vadd.f32 %v7757, %v7766
      %v7783 = vmax.f32 %v7767, 0.0
      %v7784 = vmax.f32 %v7768, 0.0
      %v7785 = vmax.f32 %v7769, 0.0
      %v7786 = vmax.f32 %v7770, 0.0
      %v7787 = vmax.f32 %v7771, 0.0
      %v7788 = vmax.f32 %v7772, 0.0
      %v7789 = vmax.f32 %v7773, 0.0
      %v7790 = vmax.f32 %v7774, 0.0
      %v7791 = vmax.f32 %v7775, 0.0
      %v7792 = vmax.f32 %v7776, 0.0
      %v7793 = vmax.f32 %v7777, 0.0
      %v7794 = vmax.f32 %v7778, 0.0
      %v7795 = vmax.f32 %v7779, 0.0
      %v7796 = vmax.f32 %v7780, 0.0
      %v7797 = vmax.f32 %v7781, 0.0
      %v7798 = vmax.f32 %v7782, 0.0
      %v7799 = vadd.f32 %v3781, %v7783
      %v7800 = vadd.f32 %v3782, %v7784
      %v7801 = vadd.f32 %v3783, %v7785
      %v7802 = vadd.f32 %v3784, %v7786
      %v7803 = vadd.f32 %v3785, %v7787
      %v7804 = vadd.f32 %v3786, %v7788
      %v7805 = vadd.f32 %v3787, %v7789
      %v7806 = vadd.f32 %v3788, %v7790
      %v7807 = vadd.f32 %v3789, %v7791
      %v7808 = vadd.f32 %v3790, %v7792
      %v7809 = vadd.f32 %v3791, %v7793
      %v7810 = vadd.f32 %v3792, %v7794
      %v7811 = vadd.f32 %v3793, %v7795
      %v7812 = vadd.f32 %v3794, %v7796
      %v7813 = vadd.f32 %v3795, %v7797
      %v7814 = vadd.f32 %v3796, %v7798
      %v7815 = vsub.f32 0.0, %v7799
      %v7816 = vsub.f32 0.0, %v7800
      %v7817 = vsub.f32 0.0, %v7801
      %v7818 = vsub.f32 0.0, %v7802
      %v7819 = vsub.f32 0.0, %v7803
      %v7820 = vsub.f32 0.0, %v7804
      %v7821 = vsub.f32 0.0, %v7805
      %v7822 = vsub.f32 0.0, %v7806
      %v7823 = vsub.f32 0.0, %v7807
      %v7824 = vsub.f32 0.0, %v7808
      %v7825 = vsub.f32 0.0, %v7809
      %v7826 = vsub.f32 0.0, %v7810
      %v7827 = vsub.f32 0.0, %v7811
      %v7828 = vsub.f32 0.0, %v7812
      %v7829 = vsub.f32 0.0, %v7813
      %v7830 = vsub.f32 0.0, %v7814
      %v7831 = vmul.f32 %v7815, 1.442695
      %v7832 = vpow.pop %v7831
      %v7833 = vmul.f32 %v7816, 1.442695
      %v7834 = vpow.pop %v7833
      %v7835 = vmul.f32 %v7817, 1.442695
      %v7836 = vpow.pop %v7835
      %v7837 = vmul.f32 %v7818, 1.442695
      %v7838 = vpow.pop %v7837
      %v7839 = vmul.f32 %v7819, 1.442695
      %v7840 = vpow.pop %v7839
      %v7841 = vmul.f32 %v7820, 1.442695
      %v7842 = vpow.pop %v7841
      %v7843 = vmul.f32 %v7821, 1.442695
      %v7844 = vpow.pop %v7843
      %v7845 = vmul.f32 %v7822, 1.442695
      %v7846 = vpow.pop %v7845
      %v7847 = vmul.f32 %v7823, 1.442695
      %v7848 = vpow.pop %v7847
      %v7849 = vmul.f32 %v7824, 1.442695
      %v7850 = vpow.pop %v7849
      %v7851 = vmul.f32 %v7825, 1.442695
      %v7852 = vpow.pop %v7851
      %v7853 = vmul.f32 %v7826, 1.442695
      %v7854 = vpow.pop %v7853
      %v7855 = vmul.f32 %v7827, 1.442695
      %v7856 = vpow.pop %v7855
      %v7857 = vmul.f32 %v7828, 1.442695
      %v7858 = vpow.pop %v7857
      %v7859 = vmul.f32 %v7829, 1.442695
      %v7860 = vpow.pop %v7859
      %v7861 = vmul.f32 %v7830, 1.442695
      %v7862 = vpow.pop %v7861
      %v7863 = vadd.f32 %v7832, 1.0
      %v7864 = vadd.f32 %v7834, 1.0
      %v7865 = vadd.f32 %v7836, 1.0
      %v7866 = vadd.f32 %v7838, 1.0
      %v7867 = vadd.f32 %v7840, 1.0
      %v7868 = vadd.f32 %v7842, 1.0
      %v7869 = vadd.f32 %v7844, 1.0
      %v7870 = vadd.f32 %v7846, 1.0
      %v7871 = vadd.f32 %v7848, 1.0
      %v7872 = vadd.f32 %v7850, 1.0
      %v7873 = vadd.f32 %v7852, 1.0
      %v7874 = vadd.f32 %v7854, 1.0
      %v7875 = vadd.f32 %v7856, 1.0
      %v7876 = vadd.f32 %v7858, 1.0
      %v7877 = vadd.f32 %v7860, 1.0
      %v7878 = vadd.f32 %v7862, 1.0
      %v7879 = vrcp.pop %v7863
      %v7880 = vmul.f32 1.0, %v7879
      %v7881 = vrcp.pop %v7864
      %v7882 = vmul.f32 1.0, %v7881
      %v7883 = vrcp.pop %v7865
      %v7884 = vmul.f32 1.0, %v7883
      %v7885 = vrcp.pop %v7866
      %v7886 = vmul.f32 1.0, %v7885
      %v7887 = vrcp.pop %v7867
      %v7888 = vmul.f32 1.0, %v7887
      %v7889 = vrcp.pop %v7868
      %v7890 = vmul.f32 1.0, %v7889
      %v7891 = vrcp.pop %v7869
      %v7892 = vmul.f32 1.0, %v7891
      %v7893 = vrcp.pop %v7870
      %v7894 = vmul.f32 1.0, %v7893
      %v7895 = vrcp.pop %v7871
      %v7896 = vmul.f32 1.0, %v7895
      %v7897 = vrcp.pop %v7872
      %v7898 = vmul.f32 1.0, %v7897
      %v7899 = vrcp.pop %v7873
      %v7900 = vmul.f32 1.0, %v7899
      %v7901 = vrcp.pop %v7874
      %v7902 = vmul.f32 1.0, %v7901
      %v7903 = vrcp.pop %v7875
      %v7904 = vmul.f32 1.0, %v7903
      %v7905 = vrcp.pop %v7876
      %v7906 = vmul.f32 1.0, %v7905
      %v7907 = vrcp.pop %v7877
      %v7908 = vmul.f32 1.0, %v7907
      %v7909 = vrcp.pop %v7878
      %v7910 = vmul.f32 1.0, %v7909
      %v7911 = vrot.slane %v7880, 4
      %v7912 = vmax.f32 %v7880, %v7911
      %v7913 = vrot.slane %v7912, 2
      %v7914 = vmax.f32 %v7912, %v7913
      %v7915 = vrot.slane %v7914, 1
      %v7916 = vmax.f32 %v7914, %v7915
      %v7917 = vrot.slane %v7882, 4
      %v7918 = vmax.f32 %v7882, %v7917
      %v7919 = vrot.slane %v7918, 2
      %v7920 = vmax.f32 %v7918, %v7919
      %v7921 = vrot.slane %v7920, 1
      %v7922 = vmax.f32 %v7920, %v7921
      %v7923 = vrot.slane %v7884, 4
      %v7924 = vmax.f32 %v7884, %v7923
      %v7925 = vrot.slane %v7924, 2
      %v7926 = vmax.f32 %v7924, %v7925
      %v7927 = vrot.slane %v7926, 1
      %v7928 = vmax.f32 %v7926, %v7927
      %v7929 = vrot.slane %v7886, 4
      %v7930 = vmax.f32 %v7886, %v7929
      %v7931 = vrot.slane %v7930, 2
      %v7932 = vmax.f32 %v7930, %v7931
      %v7933 = vrot.slane %v7932, 1
      %v7934 = vmax.f32 %v7932, %v7933
      %v7935 = vrot.slane %v7888, 4
      %v7936 = vmax.f32 %v7888, %v7935
      %v7937 = vrot.slane %v7936, 2
      %v7938 = vmax.f32 %v7936, %v7937
      %v7939 = vrot.slane %v7938, 1
      %v7940 = vmax.f32 %v7938, %v7939
      %v7941 = vrot.slane %v7890, 4
      %v7942 = vmax.f32 %v7890, %v7941
      %v7943 = vrot.slane %v7942, 2
      %v7944 = vmax.f32 %v7942, %v7943
      %v7945 = vrot.slane %v7944, 1
      %v7946 = vmax.f32 %v7944, %v7945
      %v7947 = vrot.slane %v7892, 4
      %v7948 = vmax.f32 %v7892, %v7947
      %v7949 = vrot.slane %v7948, 2
      %v7950 = vmax.f32 %v7948, %v7949
      %v7951 = vrot.slane %v7950, 1
      %v7952 = vmax.f32 %v7950, %v7951
      %v7953 = vrot.slane %v7894, 4
      %v7954 = vmax.f32 %v7894, %v7953
      %v7955 = vrot.slane %v7954, 2
      %v7956 = vmax.f32 %v7954, %v7955
      %v7957 = vrot.slane %v7956, 1
      %v7958 = vmax.f32 %v7956, %v7957
      %v7959 = vrot.slane %v7896, 4
      %v7960 = vmax.f32 %v7896, %v7959
      %v7961 = vrot.slane %v7960, 2
      %v7962 = vmax.f32 %v7960, %v7961
      %v7963 = vrot.slane %v7962, 1
      %v7964 = vmax.f32 %v7962, %v7963
      %v7965 = vrot.slane %v7898, 4
      %v7966 = vmax.f32 %v7898, %v7965
      %v7967 = vrot.slane %v7966, 2
      %v7968 = vmax.f32 %v7966, %v7967
      %v7969 = vrot.slane %v7968, 1
      %v7970 = vmax.f32 %v7968, %v7969
      %v7971 = vrot.slane %v7900, 4
      %v7972 = vmax.f32 %v7900, %v7971
      %v7973 = vrot.slane %v7972, 2
      %v7974 = vmax.f32 %v7972, %v7973
      %v7975 = vrot.slane %v7974, 1
      %v7976 = vmax.f32 %v7974, %v7975
      %v7977 = vrot.slane %v7902, 4
      %v7978 = vmax.f32 %v7902, %v7977
      %v7979 = vrot.slane %v7978, 2
      %v7980 = vmax.f32 %v7978, %v7979
      %v7981 = vrot.slane %v7980, 1
      %v7982 = vmax.f32 %v7980, %v7981
      %v7983 = vrot.slane %v7904, 4
      %v7984 = vmax.f32 %v7904, %v7983
      %v7985 = vrot.slane %v7984, 2
      %v7986 = vmax.f32 %v7984, %v7985
      %v7987 = vrot.slane %v7986, 1
      %v7988 = vmax.f32 %v7986, %v7987
      %v7989 = vrot.slane %v7906, 4
      %v7990 = vmax.f32 %v7906, %v7989
      %v7991 = vrot.slane %v7990, 2
      %v7992 = vmax.f32 %v7990, %v7991
      %v7993 = vrot.slane %v7992, 1
      %v7994 = vmax.f32 %v7992, %v7993
      %v7995 = vrot.slane %v7908, 4
      %v7996 = vmax.f32 %v7908, %v7995
      %v7997 = vrot.slane %v7996, 2
      %v7998 = vmax.f32 %v7996, %v7997
      %v7999 = vrot.slane %v7998, 1
      %v8000 = vmax.f32 %v7998, %v7999
      %v8001 = vrot.slane %v7910, 4
      %v8002 = vmax.f32 %v7910, %v8001
      %v8003 = vrot.slane %v8002, 2
      %v8004 = vmax.f32 %v8002, %v8003
      %v8005 = vrot.slane %v8004, 1
      %v8006 = vmax.f32 %v8004, %v8005
      %v8007 = vsub.f32 %v7880, %v7916
      %v8008 = vsub.f32 %v7882, %v7922
      %v8009 = vsub.f32 %v7884, %v7928
      %v8010 = vsub.f32 %v7886, %v7934
      %v8011 = vsub.f32 %v7888, %v7940
      %v8012 = vsub.f32 %v7890, %v7946
      %v8013 = vsub.f32 %v7892, %v7952
      %v8014 = vsub.f32 %v7894, %v7958
      %v8015 = vsub.f32 %v7896, %v7964
      %v8016 = vsub.f32 %v7898, %v7970
      %v8017 = vsub.f32 %v7900, %v7976
      %v8018 = vsub.f32 %v7902, %v7982
      %v8019 = vsub.f32 %v7904, %v7988
      %v8020 = vsub.f32 %v7906, %v7994
      %v8021 = vsub.f32 %v7908, %v8000
      %v8022 = vsub.f32 %v7910, %v8006
      %v8023 = vmul.f32 %v8007, 1.442695
      %v8024 = vpow.pop %v8023
      %v8025 = vmul.f32 %v8008, 1.442695
      %v8026 = vpow.pop %v8025
      %v8027 = vmul.f32 %v8009, 1.442695
      %v8028 = vpow.pop %v8027
      %v8029 = vmul.f32 %v8010, 1.442695
      %v8030 = vpow.pop %v8029
      %v8031 = vmul.f32 %v8011, 1.442695
      %v8032 = vpow.pop %v8031
      %v8033 = vmul.f32 %v8012, 1.442695
      %v8034 = vpow.pop %v8033
      %v8035 = vmul.f32 %v8013, 1.442695
      %v8036 = vpow.pop %v8035
      %v8037 = vmul.f32 %v8014, 1.442695
      %v8038 = vpow.pop %v8037
      %v8039 = vmul.f32 %v8015, 1.442695
      %v8040 = vpow.pop %v8039
      %v8041 = vmul.f32 %v8016, 1.442695
      %v8042 = vpow.pop %v8041
      %v8043 = vmul.f32 %v8017, 1.442695
      %v8044 = vpow.pop %v8043
      %v8045 = vmul.f32 %v8018, 1.442695
      %v8046 = vpow.pop %v8045
      %v8047 = vmul.f32 %v8019, 1.442695
      %v8048 = vpow.pop %v8047
      %v8049 = vmul.f32 %v8020, 1.442695
      %v8050 = vpow.pop %v8049
      %v8051 = vmul.f32 %v8021, 1.442695
      %v8052 = vpow.pop %v8051
      %v8053 = vmul.f32 %v8022, 1.442695
      %v8054 = vpow.pop %v8053
      %v8055 = vrot.slane %v8024, 4
      %v8056 = vadd.f32 %v8024, %v8055
      %v8057 = vrot.slane %v8056, 2
      %v8058 = vadd.f32 %v8056, %v8057
      %v8059 = vrot.slane %v8058, 1
      %v8060 = vadd.f32 %v8058, %v8059
      %v8061 = vrot.slane %v8026, 4
      %v8062 = vadd.f32 %v8026, %v8061
      %v8063 = vrot.slane %v8062, 2
      %v8064 = vadd.f32 %v8062, %v8063
      %v8065 = vrot.slane %v8064, 1
      %v8066 = vadd.f32 %v8064, %v8065
      %v8067 = vrot.slane %v8028, 4
      %v8068 = vadd.f32 %v8028, %v8067
      %v8069 = vrot.slane %v8068, 2
      %v8070 = vadd.f32 %v8068, %v8069
      %v8071 = vrot.slane %v8070, 1
      %v8072 = vadd.f32 %v8070, %v8071
      %v8073 = vrot.slane %v8030, 4
      %v8074 = vadd.f32 %v8030, %v8073
      %v8075 = vrot.slane %v8074, 2
      %v8076 = vadd.f32 %v8074, %v8075
      %v8077 = vrot.slane %v8076, 1
      %v8078 = vadd.f32 %v8076, %v8077
      %v8079 = vrot.slane %v8032, 4
      %v8080 = vadd.f32 %v8032, %v8079
      %v8081 = vrot.slane %v8080, 2
      %v8082 = vadd.f32 %v8080, %v8081
      %v8083 = vrot.slane %v8082, 1
      %v8084 = vadd.f32 %v8082, %v8083
      %v8085 = vrot.slane %v8034, 4
      %v8086 = vadd.f32 %v8034, %v8085
      %v8087 = vrot.slane %v8086, 2
      %v8088 = vadd.f32 %v8086, %v8087
      %v8089 = vrot.slane %v8088, 1
      %v8090 = vadd.f32 %v8088, %v8089
      %v8091 = vrot.slane %v8036, 4
      %v8092 = vadd.f32 %v8036, %v8091
      %v8093 = vrot.slane %v8092, 2
      %v8094 = vadd.f32 %v8092, %v8093
      %v8095 = vrot.slane %v8094, 1
      %v8096 = vadd.f32 %v8094, %v8095
      %v8097 = vrot.slane %v8038, 4
      %v8098 = vadd.f32 %v8038, %v8097
      %v8099 = vrot.slane %v8098, 2
      %v8100 = vadd.f32 %v8098, %v8099
      %v8101 = vrot.slane %v8100, 1
      %v8102 = vadd.f32 %v8100, %v8101
      %v8103 = vrot.slane %v8040, 4
      %v8104 = vadd.f32 %v8040, %v8103
      %v8105 = vrot.slane %v8104, 2
      %v8106 = vadd.f32 %v8104, %v8105
      %v8107 = vrot.slane %v8106, 1
      %v8108 = vadd.f32 %v8106, %v8107
      %v8109 = vrot.slane %v8042, 4
      %v8110 = vadd.f32 %v8042, %v8109
      %v8111 = vrot.slane %v8110, 2
      %v8112 = vadd.f32 %v8110, %v8111
      %v8113 = vrot.slane %v8112, 1
      %v8114 = vadd.f32 %v8112, %v8113
      %v8115 = vrot.slane %v8044, 4
      %v8116 = vadd.f32 %v8044, %v8115
      %v8117 = vrot.slane %v8116, 2
      %v8118 = vadd.f32 %v8116, %v8117
      %v8119 = vrot.slane %v8118, 1
      %v8120 = vadd.f32 %v8118, %v8119
      %v8121 = vrot.slane %v8046, 4
      %v8122 = vadd.f32 %v8046, %v8121
      %v8123 = vrot.slane %v8122, 2
      %v8124 = vadd.f32 %v8122, %v8123
      %v8125 = vrot.slane %v8124, 1
      %v8126 = vadd.f32 %v8124, %v8125
      %v8127 = vrot.slane %v8048, 4
      %v8128 = vadd.f32 %v8048, %v8127
      %v8129 = vrot.slane %v8128, 2
      %v8130 = vadd.f32 %v8128, %v8129
      %v8131 = vrot.slane %v8130, 1
      %v8132 = vadd.f32 %v8130, %v8131
      %v8133 = vrot.slane %v8050, 4
      %v8134 = vadd.f32 %v8050, %v8133
      %v8135 = vrot.slane %v8134, 2
      %v8136 = vadd.f32 %v8134, %v8135
      %v8137 = vrot.slane %v8136, 1
      %v8138 = vadd.f32 %v8136, %v8137
      %v8139 = vrot.slane %v8052, 4
      %v8140 = vadd.f32 %v8052, %v8139
      %v8141 = vrot.slane %v8140, 2
      %v8142 = vadd.f32 %v8140, %v8141
      %v8143 = vrot.slane %v8142, 1
      %v8144 = vadd.f32 %v8142, %v8143
      %v8145 = vrot.slane %v8054, 4
      %v8146 = vadd.f32 %v8054, %v8145
      %v8147 = vrot.slane %v8146, 2
      %v8148 = vadd.f32 %v8146, %v8147
      %v8149 = vrot.slane %v8148, 1
      %v8150 = vadd.f32 %v8148, %v8149
      %v8151 = vrcp.pop %v8060
      %v8152 = vrcp.pop %v8066
      %v8153 = vrcp.pop %v8072
      %v8154 = vrcp.pop %v8078
      %v8155 = vrcp.pop %v8084
      %v8156 = vrcp.pop %v8090
      %v8157 = vrcp.pop %v8096
      %v8158 = vrcp.pop %v8102
      %v8159 = vrcp.pop %v8108
      %v8160 = vrcp.pop %v8114
      %v8161 = vrcp.pop %v8120
      %v8162 = vrcp.pop %v8126
      %v8163 = vrcp.pop %v8132
      %v8164 = vrcp.pop %v8138
      %v8165 = vrcp.pop %v8144
      %v8166 = vrcp.pop %v8150
      %v8167 = vmul.f32 %v8024, %v8151
      %v8168 = vmul.f32 %v8026, %v8152
      %v8169 = vmul.f32 %v8028, %v8153
      %v8170 = vmul.f32 %v8030, %v8154
      %v8171 = vmul.f32 %v8032, %v8155
      %v8172 = vmul.f32 %v8034, %v8156
      %v8173 = vmul.f32 %v8036, %v8157
      %v8174 = vmul.f32 %v8038, %v8158
      %v8175 = vmul.f32 %v8040, %v8159
      %v8176 = vmul.f32 %v8042, %v8160
      %v8177 = vmul.f32 %v8044, %v8161
      %v8178 = vmul.f32 %v8046, %v8162
      %v8179 = vmul.f32 %v8048, %v8163
      %v8180 = vmul.f32 %v8050, %v8164
      %v8181 = vmul.f32 %v8052, %v8165
      %v8182 = vmul.f32 %v8054, %v8166
      %v8183 = vmul.f32 %v8167, %v6207
      %v8184 = vmul.f32 %v8168, %v6207
      %v8185 = vmul.f32 %v8169, %v6207
      %v8186 = vmul.f32 %v8170, %v6207
      %v8187 = vmul.f32 %v8171, %v6207
      %v8188 = vmul.f32 %v8172, %v6207
      %v8189 = vmul.f32 %v8173, %v6207
      %v8190 = vmul.f32 %v8174, %v6207
      %v8191 = vmul.f32 %v8175, %v6214
      %v8192 = vmul.f32 %v8176, %v6214
      %v8193 = vmul.f32 %v8177, %v6214
      %v8194 = vmul.f32 %v8178, %v6214
      %v8195 = vmul.f32 %v8179, %v6214
      %v8196 = vmul.f32 %v8180, %v6214
      %v8197 = vmul.f32 %v8181, %v6214
      %v8198 = vmul.f32 %v8182, %v6214
      %v8199 = vrot.slane %v8183, 4
      %v8200 = vadd.f32 %v8183, %v8199
      %v8201 = vrot.slane %v8200, 2
      %v8202 = vadd.f32 %v8200, %v8201
      %v8203 = vrot.slane %v8202, 1
      %v8204 = vadd.f32 %v8202, %v8203
      %v8205 = vrot.slane %v8184, 4
      %v8206 = vadd.f32 %v8184, %v8205
      %v8207 = vrot.slane %v8206, 2
      %v8208 = vadd.f32 %v8206, %v8207
      %v8209 = vrot.slane %v8208, 1
      %v8210 = vadd.f32 %v8208, %v8209
      %v8211 = vrot.slane %v8185, 4
      %v8212 = vadd.f32 %v8185, %v8211
      %v8213 = vrot.slane %v8212, 2
      %v8214 = vadd.f32 %v8212, %v8213
      %v8215 = vrot.slane %v8214, 1
      %v8216 = vadd.f32 %v8214, %v8215
      %v8217 = vrot.slane %v8186, 4
      %v8218 = vadd.f32 %v8186, %v8217
      %v8219 = vrot.slane %v8218, 2
      %v8220 = vadd.f32 %v8218, %v8219
      %v8221 = vrot.slane %v8220, 1
      %v8222 = vadd.f32 %v8220, %v8221
      %v8223 = vrot.slane %v8187, 4
      %v8224 = vadd.f32 %v8187, %v8223
      %v8225 = vrot.slane %v8224, 2
      %v8226 = vadd.f32 %v8224, %v8225
      %v8227 = vrot.slane %v8226, 1
      %v8228 = vadd.f32 %v8226, %v8227
      %v8229 = vrot.slane %v8188, 4
      %v8230 = vadd.f32 %v8188, %v8229
      %v8231 = vrot.slane %v8230, 2
      %v8232 = vadd.f32 %v8230, %v8231
      %v8233 = vrot.slane %v8232, 1
      %v8234 = vadd.f32 %v8232, %v8233
      %v8235 = vrot.slane %v8189, 4
      %v8236 = vadd.f32 %v8189, %v8235
      %v8237 = vrot.slane %v8236, 2
      %v8238 = vadd.f32 %v8236, %v8237
      %v8239 = vrot.slane %v8238, 1
      %v8240 = vadd.f32 %v8238, %v8239
      %v8241 = vrot.slane %v8190, 4
      %v8242 = vadd.f32 %v8190, %v8241
      %v8243 = vrot.slane %v8242, 2
      %v8244 = vadd.f32 %v8242, %v8243
      %v8245 = vrot.slane %v8244, 1
      %v8246 = vadd.f32 %v8244, %v8245
      %v8247 = vrot.slane %v8191, 4
      %v8248 = vadd.f32 %v8191, %v8247
      %v8249 = vrot.slane %v8248, 2
      %v8250 = vadd.f32 %v8248, %v8249
      %v8251 = vrot.slane %v8250, 1
      %v8252 = vadd.f32 %v8250, %v8251
      %v8253 = vrot.slane %v8192, 4
      %v8254 = vadd.f32 %v8192, %v8253
      %v8255 = vrot.slane %v8254, 2
      %v8256 = vadd.f32 %v8254, %v8255
      %v8257 = vrot.slane %v8256, 1
      %v8258 = vadd.f32 %v8256, %v8257
      %v8259 = vrot.slane %v8193, 4
      %v8260 = vadd.f32 %v8193, %v8259
      %v8261 = vrot.slane %v8260, 2
      %v8262 = vadd.f32 %v8260, %v8261
      %v8263 = vrot.slane %v8262, 1
      %v8264 = vadd.f32 %v8262, %v8263
      %v8265 = vrot.slane %v8194, 4
      %v8266 = vadd.f32 %v8194, %v8265
      %v8267 = vrot.slane %v8266, 2
      %v8268 = vadd.f32 %v8266, %v8267
      %v8269 = vrot.slane %v8268, 1
      %v8270 = vadd.f32 %v8268, %v8269
      %v8271 = vrot.slane %v8195, 4
      %v8272 = vadd.f32 %v8195, %v8271
      %v8273 = vrot.slane %v8272, 2
      %v8274 = vadd.f32 %v8272, %v8273
      %v8275 = vrot.slane %v8274, 1
      %v8276 = vadd.f32 %v8274, %v8275
      %v8277 = vrot.slane %v8196, 4
      %v8278 = vadd.f32 %v8196, %v8277
      %v8279 = vrot.slane %v8278, 2
      %v8280 = vadd.f32 %v8278, %v8279
      %v8281 = vrot.slane %v8280, 1
      %v8282 = vadd.f32 %v8280, %v8281
      %v8283 = vrot.slane %v8197, 4
      %v8284 = vadd.f32 %v8197, %v8283
      %v8285 = vrot.slane %v8284, 2
      %v8286 = vadd.f32 %v8284, %v8285
      %v8287 = vrot.slane %v8286, 1
      %v8288 = vadd.f32 %v8286, %v8287
      %v8289 = vrot.slane %v8198, 4
      %v8290 = vadd.f32 %v8198, %v8289
      %v8291 = vrot.slane %v8290, 2
      %v8292 = vadd.f32 %v8290, %v8291
      %v8293 = vrot.slane %v8292, 1
      %v8294 = vadd.f32 %v8292, %v8293
      %v8295 = vmul.f32 %v8204, 0.125
      %v8296 = vmul.f32 %v8210, 0.125
      %v8297 = vmul.f32 %v8216, 0.125
      %v8298 = vmul.f32 %v8222, 0.125
      %v8299 = vmul.f32 %v8228, 0.125
      %v8300 = vmul.f32 %v8234, 0.125
      %v8301 = vmul.f32 %v8240, 0.125
      %v8302 = vmul.f32 %v8246, 0.125
      %v8303 = vmul.f32 %v8252, 0.125
      %v8304 = vmul.f32 %v8258, 0.125
      %v8305 = vmul.f32 %v8264, 0.125
      %v8306 = vmul.f32 %v8270, 0.125
      %v8307 = vmul.f32 %v8276, 0.125
      %v8308 = vmul.f32 %v8282, 0.125
      %v8309 = vmul.f32 %v8288, 0.125
      %v8310 = vmul.f32 %v8294, 0.125
      %v8327 = vsel %vm4309, %v8296, %v8295
      %v8328 = vsel %vm4311, %v8297, %v8327
      %v8329 = vsel %vm4313, %v8298, %v8328
      %v8330 = vsel %vm4315, %v8299, %v8329
      %v8331 = vsel %vm4317, %v8300, %v8330
      %v8332 = vsel %vm4319, %v8301, %v8331
      %v8333 = vsel %vm4321, %v8302, %v8332
      %v8334 = vsel %vm4309, %v8304, %v8303
      %v8335 = vsel %vm4311, %v8305, %v8334
      %v8336 = vsel %vm4313, %v8306, %v8335
      %v8337 = vsel %vm4315, %v8307, %v8336
      %v8338 = vsel %vm4317, %v8308, %v8337
      %v8339 = vsel %vm4319, %v8309, %v8338
      %v8340 = vsel %vm4321, %v8310, %v8339
      %v8343 = vadd.f32 %v6209, %v8333
      %v8344 = vadd.f32 %v6216, %v8340
      %s8345 = scalar_lea.vmem %s4, 16
      %v8346 = vld [vmem:[%s8345] sm:$0xff]
      %v8347 = vmul.f32 %v8343, %v8346
      %v8348 = vmul.f32 %v8344, %v8346
      %s8349 = scalar_lea.vmem %s4, 24
      %v8350 = vld [vmem:[%s8349] sm:$0xff]
      %v8351 = vadd.f32 %v8347, %v8350
      %v8352 = vadd.f32 %v8348, %v8350
      %v8353 = vadd.f32 %v4343, %v8351
      %v8354 = vadd.f32 %v4344, %v8352
      %v8355 = vmax.f32 %v8353, 0.0
      %v8356 = vmax.f32 %v8354, 0.0
      %8357 = vst [vmem:[%s306] sm:$0xff] %v8355
      %8358 = vst [vmem:[%s306 + $0x8] sm:$0xff] %v8356
      %8359 = vst [vmem:[%s311] sm:$0xff] %v7799
      %8360 = vst [vmem:[%s311 + $0x8] sm:$0xff] %v7800
      %8361 = vst [vmem:[%s311 + $0x10] sm:$0xff] %v7801
      %8362 = vst [vmem:[%s311 + $0x18] sm:$0xff] %v7802
      %8363 = vst [vmem:[%s311 + $0x20] sm:$0xff] %v7803
      %8364 = vst [vmem:[%s311 + $0x28] sm:$0xff] %v7804
      %8365 = vst [vmem:[%s311 + $0x30] sm:$0xff] %v7805
      %8366 = vst [vmem:[%s311 + $0x38] sm:$0xff] %v7806
      %8367 = vst [vmem:[%s311 + $0x40] sm:$0xff] %v7807
      %8368 = vst [vmem:[%s311 + $0x48] sm:$0xff] %v7808
      %8369 = vst [vmem:[%s311 + $0x50] sm:$0xff] %v7809
      %8370 = vst [vmem:[%s311 + $0x58] sm:$0xff] %v7810
      %8371 = vst [vmem:[%s311 + $0x60] sm:$0xff] %v7811
      %8372 = vst [vmem:[%s311 + $0x68] sm:$0xff] %v7812
      %8373 = vst [vmem:[%s311 + $0x70] sm:$0xff] %v7813
      %8374 = vst [vmem:[%s311 + $0x78] sm:$0xff] %v7814
      %p8375 = scmp.lt.s32.totalorder %s19, 1
      %s8376 = scalar_select %p8375, %s19, 1
      %s8377 = smul.addr %s8376, 2
      %s8378 = smul.addr %s8377, 8
      %s8379 = scalar_lea.vmem %s6, %s8378
      %p8380 = scmp.lt.s32.totalorder %s19, 1
      %s8381 = scalar_select %p8380, %s19, 1
      %s8382 = smul.addr %s8381, 16
      %s8383 = smul.addr %s8382, 8
      %s8384 = scalar_lea.vmem %s7, %s8383
      // Predicated region
      $region45: #{gnn_forward.1} parent=43 // pred_check
        %p8385 = pneg %p173
      $region46: #{gnn_forward.1} parent=43 // pred_check_branch
        %8387 = sbr.rel (%p8385) target = $region48
      $region47: #{gnn_forward.1} parent=43 // pred_region
        _
      $region48: #{gnn_forward.1} parent=43 // pred_fallthru
        _
      // Predicated region
      $region49: #{gnn_forward.1} parent=43 // pred_check
        %p8388 = pneg %p199
      $region50: #{gnn_forward.1} parent=43 // pred_check_branch
        %8390 = sbr.rel (%p8388) target = $region52
      $region51: #{gnn_forward.1} parent=43 // pred_region
        _
      $region52: #{gnn_forward.1} parent=43 // pred_fallthru
        _
    $region44: #{gnn_forward.1} parent=5 // pred_fallthru
      _
    %p8391 = scmp.le.s32.totalorder 2, %s14
    // Predicated region
    $region53: #{gnn_forward.1} parent=5 // pred_check
      %p8392 = pneg %p8391
    $region54: #{gnn_forward.1} parent=5 // pred_check_branch
      %8394 = sbr.rel (%p8392) target = $region56
    $region55: #{gnn_forward.1} parent=5 // pred_region
      %s8395 = ssub.s32 %s14, 2
      // Predicated region
      $region57: #{gnn_forward.1} parent=55 // pred_check
        %p8396 = pneg %p179
      $region58: #{gnn_forward.1} parent=55 // pred_check_branch
        %8398 = sbr.rel (%p8396) target = $region60
      $region59: #{gnn_forward.1} parent=55 // pred_region
        %p8399 = scmp.lt.s32.totalorder %s20, 1
        %s8400 = scalar_select %p8399, %s20, 1
        %s8401 = smul.addr %s8400, 2
        %s8402 = smul.addr %s8401, 8
        %s8403 = scalar_lea.vmem %s6, %s8402
      $region60: #{gnn_forward.1} parent=55 // pred_fallthru
        _
      // Predicated region
      $region61: #{gnn_forward.1} parent=55 // pred_check
        %p8404 = pneg %p205
      $region62: #{gnn_forward.1} parent=55 // pred_check_branch
        %8406 = sbr.rel (%p8404) target = $region64
      $region63: #{gnn_forward.1} parent=55 // pred_region
        %p8407 = scmp.lt.s32.totalorder %s20, 1
        %s8408 = scalar_select %p8407, %s20, 1
        %s8409 = smul.addr %s8408, 16
        %s8410 = smul.addr %s8409, 8
        %s8411 = scalar_lea.vmem %s7, %s8410
      $region64: #{gnn_forward.1} parent=55 // pred_fallthru
        _
    $region56: #{gnn_forward.1} parent=5 // pred_fallthru
      _
  $region6: #{gnn_forward.1} parent=0 // loop_footer
    %s18 = sadd.s32 1, %s14
  $region7: #{gnn_forward.1} parent=0 // loop_footer_branch
    %13 = sbr.rel target = $region3
  $region8: #{gnn_forward.1} parent=0 // loop_exit
    _

</llo_original>
